<compile_context>
chip_gen: v6e
topology: v6e:2x2x1
jax: 0.10.0
libtpu: 0.0.40
codegen_flags: <defaults>
</compile_context>

<pallas_src>
import functools

import jax
import jax.numpy as jnp
from jax.experimental import pallas as pl
from jax.experimental.pallas import tpu as pltpu


# ----------------------------------------------------------------------------
# Pallas kernel: one grid step == one chunk of TC consecutive time steps.
# ----------------------------------------------------------------------------
def _encoder_chunk_kernel(
    x_ref,        # (TC, B, N)  input series for this time chunk
    dterm_ref,    # (B, N)      hoisted attention data term (time-invariant)
    w_h_ref,      # (1, H)      attn weight on hidden
    w_c_ref,      # (1, H)      attn weight on cell
    b_attn_ref,   # (1, 1)      attn bias
    w_cat_ref,    # (N+H, 4H)   fused LSTM weights [w_ih^T ; w_hh^T]
    b_lstm_ref,   # (1, 4H)     b_ih + b_hh
    out_w_ref,    # (TC, B, N)  weighted inputs for this chunk (VMEM-resident)
    out_e_ref,    # (TC, B, H)  encoded hidden states for this chunk
    h_scr,        # VMEM (B, H) persistent hidden state carry
    c_scr,        # VMEM (B, H) persistent cell state carry
    *,
    hidden_size: int,
    chunk: int,
):
    H = hidden_size

    @pl.when(pl.program_id(0) == 0)
    def _():
        h_scr[...] = jnp.zeros_like(h_scr)
        c_scr[...] = jnp.zeros_like(c_scr)

    # Loop-invariant loads (hoisted out of the unrolled recurrence).
    dterm = dterm_ref[...]          # (B, N)
    w_h = w_h_ref[...]              # (1, H)
    w_c = w_c_ref[...]              # (1, H)
    b_a = b_attn_ref[...]           # (1, 1)
    w_cat = w_cat_ref[...]          # (N+H, 4H)
    b_lstm = b_lstm_ref[...]        # (1, 4H)

    def step(i, carry):
        h, c = carry                # (B, H), (B, H) carried in vregs

        # ---- input attention -------------------------------------------------
        # logits[b, n] = w_h.h[b] + w_c.c[b] + data_term[b, n] + b
        # (single cross-lane reduce for the h/c contribution).
        const = jnp.sum(h * w_h + c * w_c, axis=1, keepdims=True) + b_a   # (B, 1)
        logits = const + dterm                                            # (B, N)
        m = jnp.max(logits, axis=1, keepdims=True)
        e = jnp.exp(logits - m)
        denom = jnp.sum(e, axis=1, keepdims=True)
        attn = e * pl.reciprocal(denom, approx=False)                     # softmax over N
        # TODO(synk): attn_dropout is identity (module default linear_dropout=0).

        weighted = attn * x_ref[i]                                        # (B, N)

        # ---- LSTM cell, fused gate matmul (PyTorch gate order i, f, g, o) ----
        feats = jnp.concatenate([weighted, h], axis=1)                    # (B, N+H)
        # Precision.HIGHEST kept so the tiny f32 matmul matches the reference;
        # relax to DEFAULT / bf16 operands at production N/H after re-validating.
        gates = jnp.dot(feats, w_cat,
                        precision=jax.lax.Precision.HIGHEST,
                        preferred_element_type=jnp.float32) + b_lstm      # (B, 4H)

        i_g = jax.nn.sigmoid(gates[:, 0 * H:1 * H])
        f_g = jax.nn.sigmoid(gates[:, 1 * H:2 * H])
        g_g = jnp.tanh(gates[:, 2 * H:3 * H])
        o_g = jax.nn.sigmoid(gates[:, 3 * H:4 * H])

        c_new = f_g * c + i_g * g_g
        h_new = o_g * jnp.tanh(c_new)

        # Store into the VMEM-resident chunk blocks; HBM writeback happens once
        # per chunk when the grid step finishes.
        out_w_ref[i] = weighted
        out_e_ref[i] = h_new
        return (h_new, c_new)

    h_f, c_f = jax.lax.fori_loop(
        0, chunk, step, (h_scr[...], c_scr[...]), unroll=True)
    h_scr[...] = h_f
    c_scr[...] = c_f


# ----------------------------------------------------------------------------
# Chunk-size selection: keep the double-buffered input chunk + resident output
# blocks well under VMEM budget (v7x has only 64 MiB physical / 32 MiB scoped).
# ----------------------------------------------------------------------------
def _pick_time_chunk(T, B, N, H, vmem_budget_bytes=24 * 1024 * 1024):
    per_step_bytes = 4 * (2 * B * N + B * N + B * H)   # f32: 2x input buf + outs
    tc = vmem_budget_bytes // max(per_step_bytes, 1)
    return int(max(1, min(T, tc, 32)))                 # cap fully-unrolled length


# ----------------------------------------------------------------------------
# Wrapper: batch-major in/out (PyTorch convention), time-major inside.
# ----------------------------------------------------------------------------
def encoder_forward(x_btn, params, hidden_size: int, time_chunk=None):
    """x_btn: (B, T, N) float32. Returns (input_weighted (B,T,N), input_encoded (B,T,H))."""
    B, T, N = x_btn.shape
    H = hidden_size

    w_attn = params["w_attn"].astype(jnp.float32)      # (2H + T,)
    b_attn = params["b_attn"]                          # ()
    w_ih = params["w_ih"].astype(jnp.float32)          # (4H, N)
    w_hh = params["w_hh"].astype(jnp.float32)          # (4H, H)
    b_ih = params["b_ih"].astype(jnp.float32)          # (4H,)
    b_hh = params["b_hh"].astype(jnp.float32)          # (4H,)

    # Parameter plumbing (plain JAX glue).
    w_h = w_attn[:H].reshape(1, H)
    w_c = w_attn[H:2 * H].reshape(1, H)
    w_x = w_attn[2 * H:]                                        # (T,)
    b_a = jnp.asarray(b_attn, jnp.float32).reshape(1, 1)
    w_cat = jnp.concatenate([w_ih.T, w_hh.T], axis=0)           # (N+H, 4H)
    b_lstm = (b_ih + b_hh).reshape(1, 4 * H)

    x_tbn = jnp.transpose(x_btn, (1, 0, 2)).astype(jnp.float32)  # (T, B, N)

    # Hoisted time-invariant attention data term (one XLA contraction).
    data_term = jnp.einsum("tbn,t->bn", x_tbn, w_x,
                           precision=jax.lax.Precision.HIGHEST)  # (B, N)

    if time_chunk is None:
        time_chunk = _pick_time_chunk(T, B, N, H)
    TC = int(min(time_chunk, T))
    n_chunks = -(-T // TC)
    T_pad = n_chunks * TC
    if T_pad != T:
        # Padded tail steps compute harmless garbage state after the real
        # sequence ends; their outputs are sliced away below.
        x_tbn = jnp.pad(x_tbn, ((0, T_pad - T), (0, 0), (0, 0)))

    kernel = functools.partial(_encoder_chunk_kernel, hidden_size=H, chunk=TC)

    out_w_tbn, out_e_tbh = pl.pallas_call(
        kernel,
        out_shape=(
            jax.ShapeDtypeStruct((T_pad, B, N), jnp.float32),
            jax.ShapeDtypeStruct((T_pad, B, H), jnp.float32),
        ),
        grid_spec=pltpu.PrefetchScalarGridSpec(
            num_scalar_prefetch=0,
            grid=(n_chunks,),
            in_specs=[
                pl.BlockSpec((TC, B, N), lambda i: (i, 0, 0)),      # x chunk
                pl.BlockSpec((B, N), lambda i: (0, 0)),             # data term
                pl.BlockSpec((1, H), lambda i: (0, 0)),             # w_h
                pl.BlockSpec((1, H), lambda i: (0, 0)),             # w_c
                pl.BlockSpec((1, 1), lambda i: (0, 0)),             # b_attn
                pl.BlockSpec((N + H, 4 * H), lambda i: (0, 0)),     # fused W
                pl.BlockSpec((1, 4 * H), lambda i: (0, 0)),         # fused bias
            ],
            out_specs=[
                pl.BlockSpec((TC, B, N), lambda i: (i, 0, 0)),
                pl.BlockSpec((TC, B, H), lambda i: (i, 0, 0)),
            ],
            scratch_shapes=[
                pltpu.VMEM((B, H), jnp.float32),   # hidden state carry
                pltpu.VMEM((B, H), jnp.float32),   # cell state carry
            ],
        ),
        compiler_params=pltpu.CompilerParams(
            # Sequential recurrence over the time chunks.
            # TODO(synk): for large B on v7x, add a leading 'parallel' batch
            # axis (per-chunk h/c scratch) to use the second TensorCore.
            dimension_semantics=("arbitrary",),
            vmem_limit_bytes=32 * 1024 * 1024,
        ),
    )(x_tbn, data_term, w_h, w_c, b_a, w_cat, b_lstm)

    input_weighted = jnp.transpose(out_w_tbn[:T], (1, 0, 2))    # (B, T, N)
    input_encoded = jnp.transpose(out_e_tbh[:T], (1, 0, 2))     # (B, T, H)
    return input_weighted, input_encoded


# ----------------------------------------------------------------------------
# Pure-JAX reference (mirrors the PyTorch forward literally) for validation.
# ----------------------------------------------------------------------------
def encoder_reference(x, params, H):
    B, T, N = x.shape
    w_attn, b_attn = params["w_attn"], params["b_attn"]
    w_ih, w_hh, b_ih, b_hh = params["w_ih"], params["w_hh"], params["b_ih"], params["b_hh"]

    h = jnp.zeros((B, H), jnp.float32)
    c = jnp.zeros((B, H), jnp.float32)
    iw, ie = [], []
    xp = jnp.transpose(x, (0, 2, 1))                         # (B, N, T)
    for t in range(T):
        hrep = jnp.broadcast_to(h[:, None, :], (B, N, H))
        crep = jnp.broadcast_to(c[:, None, :], (B, N, H))
        cat = jnp.concatenate([hrep, crep, xp], axis=2)      # (B, N, 2H+T)
        logits = jnp.dot(cat, w_attn,
                         precision=jax.lax.Precision.HIGHEST) + b_attn   # (B, N)
        attn = jax.nn.softmax(logits, axis=1)
        weighted = attn * x[:, t, :]
        gates = (jnp.dot(weighted, w_ih.T, precision=jax.lax.Precision.HIGHEST) + b_ih
                 + jnp.dot(h, w_hh.T, precision=jax.lax.Precision.HIGHEST) + b_hh)
        i_g = jax.nn.sigmoid(gates[:, :H])
        f_g = jax.nn.sigmoid(gates[:, H:2 * H])
        g_g = jnp.tanh(gates[:, 2 * H:3 * H])
        o_g = jax.nn.sigmoid(gates[:, 3 * H:])
        c = f_g * c + i_g * g_g
        h = o_g * jnp.tanh(c)
        iw.append(weighted)
        ie.append(h)
    return jnp.stack(iw, axis=1), jnp.stack(ie, axis=1)


# ----------------------------------------------------------------------------
def make_params(key, input_size, hidden_size, T):
    """Deterministic PyTorch-style uniform init for all Encoder parameters."""
    N, H = input_size, hidden_size
    k_lin = 1.0 / jnp.sqrt(jnp.float32(2 * H + T))
    k_lstm = 1.0 / jnp.sqrt(jnp.float32(H))
    keys = jax.random.split(key, 6)
    return {
        "w_attn": jax.random.uniform(keys[0], (2 * H + T,), jnp.float32, -k_lin, k_lin),
        "b_attn": jax.random.uniform(keys[1], (), jnp.float32, -k_lin, k_lin),
        "w_ih": jax.random.uniform(keys[2], (4 * H, N), jnp.float32, -k_lstm, k_lstm),
        "w_hh": jax.random.uniform(keys[3], (4 * H, H), jnp.float32, -k_lstm, k_lstm),
        "b_ih": jax.random.uniform(keys[4], (4 * H,), jnp.float32, -k_lstm, k_lstm),
        "b_hh": jax.random.uniform(keys[5], (4 * H,), jnp.float32, -k_lstm, k_lstm),
    }


if __name__ == "__main__":
    B, N, T, H = 2, 8, 10, 16     # batch, input_size (drivers), time steps, hidden

    root = jax.random.PRNGKey(0)
    k_x, k_p = jax.random.split(root)
    x = jax.random.normal(k_x, (B, T, N), jnp.float32)
    params = make_params(k_p, N, H, T)

    iw, ie = encoder_forward(x, params, H)
    iw, ie = jax.block_until_ready((iw, ie))

    iw_ref, ie_ref = encoder_reference(x, params, H)
    assert iw.shape == (B, T, N) and ie.shape == (B, T, H)
    assert jnp.allclose(iw, iw_ref, rtol=1e-3, atol=1e-3), "input_weighted mismatch"
    assert jnp.allclose(ie, ie_ref, rtol=1e-3, atol=1e-3), "input_encoded mismatch"

    print("KERNEL_OK")
</pallas_src>

<mosaic_0001>
module attributes {stable_mosaic.version = 11 : i64} {
  func.func @_encoder_chunk_kernel(%arg0: i32, %arg1: memref<10x2x8xf32, #tpu.memory_space<vmem>>, %arg2: memref<2x8xf32, #tpu.memory_space<vmem>>, %arg3: memref<1x16xf32, #tpu.memory_space<vmem>>, %arg4: memref<1x16xf32, #tpu.memory_space<vmem>>, %arg5: memref<1x1xf32, #tpu.memory_space<vmem>>, %arg6: memref<24x64xf32, #tpu.memory_space<vmem>>, %arg7: memref<1x64xf32, #tpu.memory_space<vmem>>, %arg8: memref<10x2x8xf32, #tpu.memory_space<vmem>>, %arg9: memref<10x2x16xf32, #tpu.memory_space<vmem>>, %arg10: memref<2x16xf32, #tpu.memory_space<vmem>>, %arg11: memref<2x16xf32, #tpu.memory_space<vmem>>) attributes {dimension_semantics = [#tpu.dimension_semantics<arbitrary>], iteration_bounds = array<i64: 1>, scalar_prefetch = 0 : i64, scratch_operands = 2 : i64, tpu.core_type = #tpu.core_type<tc>, window_params = [{transform_indices = @transform_0, window_bounds = array<i64: 10, 2, 8>}, {pipeline_mode = #tpu.pipeline_mode<synchronous>, transform_indices = @transform_1, window_bounds = array<i64: 2, 8>}, {pipeline_mode = #tpu.pipeline_mode<synchronous>, transform_indices = @transform_2, window_bounds = array<i64: 1, 16>}, {pipeline_mode = #tpu.pipeline_mode<synchronous>, transform_indices = @transform_3, window_bounds = array<i64: 1, 16>}, {pipeline_mode = #tpu.pipeline_mode<synchronous>, transform_indices = @transform_4, window_bounds = array<i64: 1, 1>}, {pipeline_mode = #tpu.pipeline_mode<synchronous>, transform_indices = @transform_5, window_bounds = array<i64: 24, 64>}, {pipeline_mode = #tpu.pipeline_mode<synchronous>, transform_indices = @transform_6, window_bounds = array<i64: 1, 64>}, {transform_indices = @transform_7, window_bounds = array<i64: 10, 2, 8>}, {transform_indices = @transform_8, window_bounds = array<i64: 10, 2, 16>}]} {
    %c0_i32 = arith.constant 0 : i32
    %0 = arith.cmpi eq, %arg0, %c0_i32 : i32
    %1 = arith.extui %0 : i1 to i32
    %c0_i32_0 = arith.constant 0 : i32
    %2 = arith.cmpi ne, %1, %c0_i32_0 : i32
    scf.if %2 {
      %cst_150 = arith.constant 0.000000e+00 : f32
      %633 = vector.broadcast %cst_150 : f32 to vector<2x16xf32>
      %c0_151 = arith.constant 0 : index
      %c0_152 = arith.constant 0 : index
      %634 = vector.load %arg10[%c0_151, %c0_152] : memref<2x16xf32, #tpu.memory_space<vmem>>, vector<2x16xf32>
      tpu.vector_store %arg10[%c0_151, %c0_152], %633 {strides = array<i32>} : memref<2x16xf32, #tpu.memory_space<vmem>>, vector<2x16xf32>,
      %cst_153 = arith.constant 0.000000e+00 : f32
      %635 = vector.broadcast %cst_153 : f32 to vector<2x16xf32>
      %c0_154 = arith.constant 0 : index
      %c0_155 = arith.constant 0 : index
      %636 = vector.load %arg11[%c0_154, %c0_155] : memref<2x16xf32, #tpu.memory_space<vmem>>, vector<2x16xf32>
      tpu.vector_store %arg11[%c0_154, %c0_155], %635 {strides = array<i32>} : memref<2x16xf32, #tpu.memory_space<vmem>>, vector<2x16xf32>,
    } else {
    }
    %c0 = arith.constant 0 : index
    %c0_1 = arith.constant 0 : index
    %3 = vector.load %arg2[%c0, %c0_1] : memref<2x8xf32, #tpu.memory_space<vmem>>, vector<2x8xf32>
    %c0_2 = arith.constant 0 : index
    %c0_3 = arith.constant 0 : index
    %4 = vector.load %arg3[%c0_2, %c0_3] : memref<1x16xf32, #tpu.memory_space<vmem>>, vector<1x16xf32>
    %c0_4 = arith.constant 0 : index
    %c0_5 = arith.constant 0 : index
    %5 = vector.load %arg4[%c0_4, %c0_5] : memref<1x16xf32, #tpu.memory_space<vmem>>, vector<1x16xf32>
    %c0_6 = arith.constant 0 : index
    %c0_7 = arith.constant 0 : index
    %6 = vector.load %arg5[%c0_6, %c0_7] : memref<1x1xf32, #tpu.memory_space<vmem>>, vector<1x1xf32>
    %c0_8 = arith.constant 0 : index
    %c0_9 = arith.constant 0 : index
    %7 = vector.load %arg6[%c0_8, %c0_9] : memref<24x64xf32, #tpu.memory_space<vmem>>, vector<24x64xf32>
    %c0_10 = arith.constant 0 : index
    %c0_11 = arith.constant 0 : index
    %8 = vector.load %arg7[%c0_10, %c0_11] : memref<1x64xf32, #tpu.memory_space<vmem>>, vector<1x64xf32>
    %c0_12 = arith.constant 0 : index
    %c0_13 = arith.constant 0 : index
    %9 = vector.load %arg10[%c0_12, %c0_13] : memref<2x16xf32, #tpu.memory_space<vmem>>, vector<2x16xf32>
    %c0_14 = arith.constant 0 : index
    %c0_15 = arith.constant 0 : index
    %10 = vector.load %arg11[%c0_14, %c0_15] : memref<2x16xf32, #tpu.memory_space<vmem>>, vector<2x16xf32>
    %c0_i32_16 = arith.constant 0 : i32
    %11 = vector.broadcast %4 : vector<1x16xf32> to vector<2x16xf32>
    %12 = arith.mulf %9, %11 : vector<2x16xf32>
    %13 = vector.broadcast %5 : vector<1x16xf32> to vector<2x16xf32>
    %14 = arith.mulf %10, %13 : vector<2x16xf32>
    %15 = arith.addf %12, %14 : vector<2x16xf32>
    %cst = arith.constant dense<0.000000e+00> : vector<2xf32>
    %16 = vector.multi_reduction <add>, %15, %cst [1] : vector<2x16xf32> to vector<2xf32>
    %17 = vector.shape_cast %16 : vector<2xf32> to vector<2x1xf32>
    %18 = vector.broadcast %6 : vector<1x1xf32> to vector<2x1xf32>
    %19 = arith.addf %17, %18 : vector<2x1xf32>
    %20 = vector.broadcast %19 : vector<2x1xf32> to vector<2x8xf32>
    %21 = arith.addf %20, %3 : vector<2x8xf32>
    %cst_17 = arith.constant dense<0xFF800000> : vector<2xf32>
    %22 = vector.multi_reduction <maximumf>, %21, %cst_17 [1] : vector<2x8xf32> to vector<2xf32>
    %23 = vector.shape_cast %22 : vector<2xf32> to vector<2x1xf32>
    %24 = vector.broadcast %23 : vector<2x1xf32> to vector<2x8xf32>
    %25 = arith.subf %21, %24 : vector<2x8xf32>
    %26 = math.exp %25 : vector<2x8xf32>
    %cst_18 = arith.constant dense<0.000000e+00> : vector<2xf32>
    %27 = vector.multi_reduction <add>, %26, %cst_18 [1] : vector<2x8xf32> to vector<2xf32>
    %28 = vector.shape_cast %27 : vector<2xf32> to vector<2x1xf32>
    %29 = tpu.reciprocal %28 : vector<2x1xf32> -> vector<2x1xf32>
    %30 = vector.broadcast %29 : vector<2x1xf32> to vector<2x8xf32>
    %31 = arith.mulf %26, %30 : vector<2x8xf32>
    %32 = arith.index_cast %c0_i32_16 : i32 to index
    %c0_19 = arith.constant 0 : index
    %c0_20 = arith.constant 0 : index
    %33 = vector.load %arg1[%32, %c0_19, %c0_20] : memref<10x2x8xf32, #tpu.memory_space<vmem>>, vector<1x2x8xf32>
    %34 = vector.shape_cast %33 : vector<1x2x8xf32> to vector<2x8xf32>
    %35 = arith.mulf %31, %34 : vector<2x8xf32>
    %36 = tpu.concatenate %35, %9 in 1 : vector<2x8xf32>, vector<2x16xf32> -> vector<2x24xf32>
    %cst_21 = arith.constant dense<0.000000e+00> : vector<2x64xf32>
    %37 = tpu.matmul %36, %7, %cst_21 {dimension_numbers = #tpu.dot_dimension_numbers<[1], [0], [0], [1], [0, 0, 1, 1], [], []>, precision = #tpu.contract_precision<fp32>} : vector<2x24xf32>, vector<24x64xf32>, vector<2x64xf32> -> vector<2x64xf32>
    %38 = vector.broadcast %8 : vector<1x64xf32> to vector<2x64xf32>
    %39 = arith.addf %37, %38 : vector<2x64xf32>
    %40 = vector.extract_strided_slice %39 {offsets = [0, 0], sizes = [2, 16], strides = [1, 1]} : vector<2x64xf32> to vector<2x16xf32>
    %41 = arith.negf %40 : vector<2x16xf32>
    %42 = math.exp %41 : vector<2x16xf32>
    %cst_22 = arith.constant 1.000000e+00 : f32
    %43 = vector.broadcast %cst_22 : f32 to vector<2x16xf32>
    %44 = arith.addf %43, %42 : vector<2x16xf32>
    %45 = arith.divf %43, %44 : vector<2x16xf32>
    %46 = vector.extract_strided_slice %39 {offsets = [0, 16], sizes = [2, 16], strides = [1, 1]} : vector<2x64xf32> to vector<2x16xf32>
    %47 = arith.negf %46 : vector<2x16xf32>
    %48 = math.exp %47 : vector<2x16xf32>
    %cst_23 = arith.constant 1.000000e+00 : f32
    %49 = vector.broadcast %cst_23 : f32 to vector<2x16xf32>
    %50 = arith.addf %49, %48 : vector<2x16xf32>
    %51 = arith.divf %49, %50 : vector<2x16xf32>
    %52 = vector.extract_strided_slice %39 {offsets = [0, 32], sizes = [2, 16], strides = [1, 1]} : vector<2x64xf32> to vector<2x16xf32>
    %53 = math.tanh %52 : vector<2x16xf32>
    %54 = vector.extract_strided_slice %39 {offsets = [0, 48], sizes = [2, 16], strides = [1, 1]} : vector<2x64xf32> to vector<2x16xf32>
    %55 = arith.negf %54 : vector<2x16xf32>
    %56 = math.exp %55 : vector<2x16xf32>
    %cst_24 = arith.constant 1.000000e+00 : f32
    %57 = vector.broadcast %cst_24 : f32 to vector<2x16xf32>
    %58 = arith.addf %57, %56 : vector<2x16xf32>
    %59 = arith.divf %57, %58 : vector<2x16xf32>
    %60 = arith.mulf %51, %10 : vector<2x16xf32>
    %61 = arith.mulf %45, %53 : vector<2x16xf32>
    %62 = arith.addf %60, %61 : vector<2x16xf32>
    %63 = math.tanh %62 : vector<2x16xf32>
    %64 = arith.mulf %59, %63 : vector<2x16xf32>
    %65 = arith.index_cast %c0_i32_16 : i32 to index
    %c0_25 = arith.constant 0 : index
    %c0_26 = arith.constant 0 : index
    %66 = vector.load %arg8[%65, %c0_25, %c0_26] : memref<10x2x8xf32, #tpu.memory_space<vmem>>, vector<1x2x8xf32>
    %67 = vector.shape_cast %66 : vector<1x2x8xf32> to vector<2x8xf32>
    %68 = vector.shape_cast %35 : vector<2x8xf32> to vector<1x2x8xf32>
    tpu.vector_store %arg8[%65, %c0_25, %c0_26], %68 {strides = array<i32>} : memref<10x2x8xf32, #tpu.memory_space<vmem>>, vector<1x2x8xf32>,
    %69 = arith.index_cast %c0_i32_16 : i32 to index
    %c0_27 = arith.constant 0 : index
    %c0_28 = arith.constant 0 : index
    %70 = vector.load %arg9[%69, %c0_27, %c0_28] : memref<10x2x16xf32, #tpu.memory_space<vmem>>, vector<1x2x16xf32>
    %71 = vector.shape_cast %70 : vector<1x2x16xf32> to vector<2x16xf32>
    %72 = vector.shape_cast %64 : vector<2x16xf32> to vector<1x2x16xf32>
    tpu.vector_store %arg9[%69, %c0_27, %c0_28], %72 {strides = array<i32>} : memref<10x2x16xf32, #tpu.memory_space<vmem>>, vector<1x2x16xf32>,
    %c1_i32 = arith.constant 1 : i32
    %73 = vector.broadcast %4 : vector<1x16xf32> to vector<2x16xf32>
    %74 = arith.mulf %64, %73 : vector<2x16xf32>
    %75 = vector.broadcast %5 : vector<1x16xf32> to vector<2x16xf32>
    %76 = arith.mulf %62, %75 : vector<2x16xf32>
    %77 = arith.addf %74, %76 : vector<2x16xf32>
    %cst_29 = arith.constant dense<0.000000e+00> : vector<2xf32>
    %78 = vector.multi_reduction <add>, %77, %cst_29 [1] : vector<2x16xf32> to vector<2xf32>
    %79 = vector.shape_cast %78 : vector<2xf32> to vector<2x1xf32>
    %80 = vector.broadcast %6 : vector<1x1xf32> to vector<2x1xf32>
    %81 = arith.addf %79, %80 : vector<2x1xf32>
    %82 = vector.broadcast %81 : vector<2x1xf32> to vector<2x8xf32>
    %83 = arith.addf %82, %3 : vector<2x8xf32>
    %cst_30 = arith.constant dense<0xFF800000> : vector<2xf32>
    %84 = vector.multi_reduction <maximumf>, %83, %cst_30 [1] : vector<2x8xf32> to vector<2xf32>
    %85 = vector.shape_cast %84 : vector<2xf32> to vector<2x1xf32>
    %86 = vector.broadcast %85 : vector<2x1xf32> to vector<2x8xf32>
    %87 = arith.subf %83, %86 : vector<2x8xf32>
    %88 = math.exp %87 : vector<2x8xf32>
    %cst_31 = arith.constant dense<0.000000e+00> : vector<2xf32>
    %89 = vector.multi_reduction <add>, %88, %cst_31 [1] : vector<2x8xf32> to vector<2xf32>
    %90 = vector.shape_cast %89 : vector<2xf32> to vector<2x1xf32>
    %91 = tpu.reciprocal %90 : vector<2x1xf32> -> vector<2x1xf32>
    %92 = vector.broadcast %91 : vector<2x1xf32> to vector<2x8xf32>
    %93 = arith.mulf %88, %92 : vector<2x8xf32>
    %94 = arith.index_cast %c1_i32 : i32 to index
    %c0_32 = arith.constant 0 : index
    %c0_33 = arith.constant 0 : index
    %95 = vector.load %arg1[%94, %c0_32, %c0_33] : memref<10x2x8xf32, #tpu.memory_space<vmem>>, vector<1x2x8xf32>
    %96 = vector.shape_cast %95 : vector<1x2x8xf32> to vector<2x8xf32>
    %97 = arith.mulf %93, %96 : vector<2x8xf32>
    %98 = tpu.concatenate %97, %64 in 1 : vector<2x8xf32>, vector<2x16xf32> -> vector<2x24xf32>
    %cst_34 = arith.constant dense<0.000000e+00> : vector<2x64xf32>
    %99 = tpu.matmul %98, %7, %cst_34 {dimension_numbers = #tpu.dot_dimension_numbers<[1], [0], [0], [1], [0, 0, 1, 1], [], []>, precision = #tpu.contract_precision<fp32>} : vector<2x24xf32>, vector<24x64xf32>, vector<2x64xf32> -> vector<2x64xf32>
    %100 = vector.broadcast %8 : vector<1x64xf32> to vector<2x64xf32>
    %101 = arith.addf %99, %100 : vector<2x64xf32>
    %102 = vector.extract_strided_slice %101 {offsets = [0, 0], sizes = [2, 16], strides = [1, 1]} : vector<2x64xf32> to vector<2x16xf32>
    %103 = arith.negf %102 : vector<2x16xf32>
    %104 = math.exp %103 : vector<2x16xf32>
    %cst_35 = arith.constant 1.000000e+00 : f32
    %105 = vector.broadcast %cst_35 : f32 to vector<2x16xf32>
    %106 = arith.addf %105, %104 : vector<2x16xf32>
    %107 = arith.divf %105, %106 : vector<2x16xf32>
    %108 = vector.extract_strided_slice %101 {offsets = [0, 16], sizes = [2, 16], strides = [1, 1]} : vector<2x64xf32> to vector<2x16xf32>
    %109 = arith.negf %108 : vector<2x16xf32>
    %110 = math.exp %109 : vector<2x16xf32>
    %cst_36 = arith.constant 1.000000e+00 : f32
    %111 = vector.broadcast %cst_36 : f32 to vector<2x16xf32>
    %112 = arith.addf %111, %110 : vector<2x16xf32>
    %113 = arith.divf %111, %112 : vector<2x16xf32>
    %114 = vector.extract_strided_slice %101 {offsets = [0, 32], sizes = [2, 16], strides = [1, 1]} : vector<2x64xf32> to vector<2x16xf32>
    %115 = math.tanh %114 : vector<2x16xf32>
    %116 = vector.extract_strided_slice %101 {offsets = [0, 48], sizes = [2, 16], strides = [1, 1]} : vector<2x64xf32> to vector<2x16xf32>
    %117 = arith.negf %116 : vector<2x16xf32>
    %118 = math.exp %117 : vector<2x16xf32>
    %cst_37 = arith.constant 1.000000e+00 : f32
    %119 = vector.broadcast %cst_37 : f32 to vector<2x16xf32>
    %120 = arith.addf %119, %118 : vector<2x16xf32>
    %121 = arith.divf %119, %120 : vector<2x16xf32>
    %122 = arith.mulf %113, %62 : vector<2x16xf32>
    %123 = arith.mulf %107, %115 : vector<2x16xf32>
    %124 = arith.addf %122, %123 : vector<2x16xf32>
    %125 = math.tanh %124 : vector<2x16xf32>
    %126 = arith.mulf %121, %125 : vector<2x16xf32>
    %127 = arith.index_cast %c1_i32 : i32 to index
    %c0_38 = arith.constant 0 : index
    %c0_39 = arith.constant 0 : index
    %128 = vector.load %arg8[%127, %c0_38, %c0_39] : memref<10x2x8xf32, #tpu.memory_space<vmem>>, vector<1x2x8xf32>
    %129 = vector.shape_cast %128 : vector<1x2x8xf32> to vector<2x8xf32>
    %130 = vector.shape_cast %97 : vector<2x8xf32> to vector<1x2x8xf32>
    tpu.vector_store %arg8[%127, %c0_38, %c0_39], %130 {strides = array<i32>} : memref<10x2x8xf32, #tpu.memory_space<vmem>>, vector<1x2x8xf32>,
    %131 = arith.index_cast %c1_i32 : i32 to index
    %c0_40 = arith.constant 0 : index
    %c0_41 = arith.constant 0 : index
    %132 = vector.load %arg9[%131, %c0_40, %c0_41] : memref<10x2x16xf32, #tpu.memory_space<vmem>>, vector<1x2x16xf32>
    %133 = vector.shape_cast %132 : vector<1x2x16xf32> to vector<2x16xf32>
    %134 = vector.shape_cast %126 : vector<2x16xf32> to vector<1x2x16xf32>
    tpu.vector_store %arg9[%131, %c0_40, %c0_41], %134 {strides = array<i32>} : memref<10x2x16xf32, #tpu.memory_space<vmem>>, vector<1x2x16xf32>,
    %c2_i32 = arith.constant 2 : i32
    %135 = vector.broadcast %4 : vector<1x16xf32> to vector<2x16xf32>
    %136 = arith.mulf %126, %135 : vector<2x16xf32>
    %137 = vector.broadcast %5 : vector<1x16xf32> to vector<2x16xf32>
    %138 = arith.mulf %124, %137 : vector<2x16xf32>
    %139 = arith.addf %136, %138 : vector<2x16xf32>
    %cst_42 = arith.constant dense<0.000000e+00> : vector<2xf32>
    %140 = vector.multi_reduction <add>, %139, %cst_42 [1] : vector<2x16xf32> to vector<2xf32>
    %141 = vector.shape_cast %140 : vector<2xf32> to vector<2x1xf32>
    %142 = vector.broadcast %6 : vector<1x1xf32> to vector<2x1xf32>
    %143 = arith.addf %141, %142 : vector<2x1xf32>
    %144 = vector.broadcast %143 : vector<2x1xf32> to vector<2x8xf32>
    %145 = arith.addf %144, %3 : vector<2x8xf32>
    %cst_43 = arith.constant dense<0xFF800000> : vector<2xf32>
    %146 = vector.multi_reduction <maximumf>, %145, %cst_43 [1] : vector<2x8xf32> to vector<2xf32>
    %147 = vector.shape_cast %146 : vector<2xf32> to vector<2x1xf32>
    %148 = vector.broadcast %147 : vector<2x1xf32> to vector<2x8xf32>
    %149 = arith.subf %145, %148 : vector<2x8xf32>
    %150 = math.exp %149 : vector<2x8xf32>
    %cst_44 = arith.constant dense<0.000000e+00> : vector<2xf32>
    %151 = vector.multi_reduction <add>, %150, %cst_44 [1] : vector<2x8xf32> to vector<2xf32>
    %152 = vector.shape_cast %151 : vector<2xf32> to vector<2x1xf32>
    %153 = tpu.reciprocal %152 : vector<2x1xf32> -> vector<2x1xf32>
    %154 = vector.broadcast %153 : vector<2x1xf32> to vector<2x8xf32>
    %155 = arith.mulf %150, %154 : vector<2x8xf32>
    %156 = arith.index_cast %c2_i32 : i32 to index
    %c0_45 = arith.constant 0 : index
    %c0_46 = arith.constant 0 : index
    %157 = vector.load %arg1[%156, %c0_45, %c0_46] : memref<10x2x8xf32, #tpu.memory_space<vmem>>, vector<1x2x8xf32>
    %158 = vector.shape_cast %157 : vector<1x2x8xf32> to vector<2x8xf32>
    %159 = arith.mulf %155, %158 : vector<2x8xf32>
    %160 = tpu.concatenate %159, %126 in 1 : vector<2x8xf32>, vector<2x16xf32> -> vector<2x24xf32>
    %cst_47 = arith.constant dense<0.000000e+00> : vector<2x64xf32>
    %161 = tpu.matmul %160, %7, %cst_47 {dimension_numbers = #tpu.dot_dimension_numbers<[1], [0], [0], [1], [0, 0, 1, 1], [], []>, precision = #tpu.contract_precision<fp32>} : vector<2x24xf32>, vector<24x64xf32>, vector<2x64xf32> -> vector<2x64xf32>
    %162 = vector.broadcast %8 : vector<1x64xf32> to vector<2x64xf32>
    %163 = arith.addf %161, %162 : vector<2x64xf32>
    %164 = vector.extract_strided_slice %163 {offsets = [0, 0], sizes = [2, 16], strides = [1, 1]} : vector<2x64xf32> to vector<2x16xf32>
    %165 = arith.negf %164 : vector<2x16xf32>
    %166 = math.exp %165 : vector<2x16xf32>
    %cst_48 = arith.constant 1.000000e+00 : f32
    %167 = vector.broadcast %cst_48 : f32 to vector<2x16xf32>
    %168 = arith.addf %167, %166 : vector<2x16xf32>
    %169 = arith.divf %167, %168 : vector<2x16xf32>
    %170 = vector.extract_strided_slice %163 {offsets = [0, 16], sizes = [2, 16], strides = [1, 1]} : vector<2x64xf32> to vector<2x16xf32>
    %171 = arith.negf %170 : vector<2x16xf32>
    %172 = math.exp %171 : vector<2x16xf32>
    %cst_49 = arith.constant 1.000000e+00 : f32
    %173 = vector.broadcast %cst_49 : f32 to vector<2x16xf32>
    %174 = arith.addf %173, %172 : vector<2x16xf32>
    %175 = arith.divf %173, %174 : vector<2x16xf32>
    %176 = vector.extract_strided_slice %163 {offsets = [0, 32], sizes = [2, 16], strides = [1, 1]} : vector<2x64xf32> to vector<2x16xf32>
    %177 = math.tanh %176 : vector<2x16xf32>
    %178 = vector.extract_strided_slice %163 {offsets = [0, 48], sizes = [2, 16], strides = [1, 1]} : vector<2x64xf32> to vector<2x16xf32>
    %179 = arith.negf %178 : vector<2x16xf32>
    %180 = math.exp %179 : vector<2x16xf32>
    %cst_50 = arith.constant 1.000000e+00 : f32
    %181 = vector.broadcast %cst_50 : f32 to vector<2x16xf32>
    %182 = arith.addf %181, %180 : vector<2x16xf32>
    %183 = arith.divf %181, %182 : vector<2x16xf32>
    %184 = arith.mulf %175, %124 : vector<2x16xf32>
    %185 = arith.mulf %169, %177 : vector<2x16xf32>
    %186 = arith.addf %184, %185 : vector<2x16xf32>
    %187 = math.tanh %186 : vector<2x16xf32>
    %188 = arith.mulf %183, %187 : vector<2x16xf32>
    %189 = arith.index_cast %c2_i32 : i32 to index
    %c0_51 = arith.constant 0 : index
    %c0_52 = arith.constant 0 : index
    %190 = vector.load %arg8[%189, %c0_51, %c0_52] : memref<10x2x8xf32, #tpu.memory_space<vmem>>, vector<1x2x8xf32>
    %191 = vector.shape_cast %190 : vector<1x2x8xf32> to vector<2x8xf32>
    %192 = vector.shape_cast %159 : vector<2x8xf32> to vector<1x2x8xf32>
    tpu.vector_store %arg8[%189, %c0_51, %c0_52], %192 {strides = array<i32>} : memref<10x2x8xf32, #tpu.memory_space<vmem>>, vector<1x2x8xf32>,
    %193 = arith.index_cast %c2_i32 : i32 to index
    %c0_53 = arith.constant 0 : index
    %c0_54 = arith.constant 0 : index
    %194 = vector.load %arg9[%193, %c0_53, %c0_54] : memref<10x2x16xf32, #tpu.memory_space<vmem>>, vector<1x2x16xf32>
    %195 = vector.shape_cast %194 : vector<1x2x16xf32> to vector<2x16xf32>
    %196 = vector.shape_cast %188 : vector<2x16xf32> to vector<1x2x16xf32>
    tpu.vector_store %arg9[%193, %c0_53, %c0_54], %196 {strides = array<i32>} : memref<10x2x16xf32, #tpu.memory_space<vmem>>, vector<1x2x16xf32>,
    %c3_i32 = arith.constant 3 : i32
    %197 = vector.broadcast %4 : vector<1x16xf32> to vector<2x16xf32>
    %198 = arith.mulf %188, %197 : vector<2x16xf32>
    %199 = vector.broadcast %5 : vector<1x16xf32> to vector<2x16xf32>
    %200 = arith.mulf %186, %199 : vector<2x16xf32>
    %201 = arith.addf %198, %200 : vector<2x16xf32>
    %cst_55 = arith.constant dense<0.000000e+00> : vector<2xf32>
    %202 = vector.multi_reduction <add>, %201, %cst_55 [1] : vector<2x16xf32> to vector<2xf32>
    %203 = vector.shape_cast %202 : vector<2xf32> to vector<2x1xf32>
    %204 = vector.broadcast %6 : vector<1x1xf32> to vector<2x1xf32>
    %205 = arith.addf %203, %204 : vector<2x1xf32>
    %206 = vector.broadcast %205 : vector<2x1xf32> to vector<2x8xf32>
    %207 = arith.addf %206, %3 : vector<2x8xf32>
    %cst_56 = arith.constant dense<0xFF800000> : vector<2xf32>
    %208 = vector.multi_reduction <maximumf>, %207, %cst_56 [1] : vector<2x8xf32> to vector<2xf32>
    %209 = vector.shape_cast %208 : vector<2xf32> to vector<2x1xf32>
    %210 = vector.broadcast %209 : vector<2x1xf32> to vector<2x8xf32>
    %211 = arith.subf %207, %210 : vector<2x8xf32>
    %212 = math.exp %211 : vector<2x8xf32>
    %cst_57 = arith.constant dense<0.000000e+00> : vector<2xf32>
    %213 = vector.multi_reduction <add>, %212, %cst_57 [1] : vector<2x8xf32> to vector<2xf32>
    %214 = vector.shape_cast %213 : vector<2xf32> to vector<2x1xf32>
    %215 = tpu.reciprocal %214 : vector<2x1xf32> -> vector<2x1xf32>
    %216 = vector.broadcast %215 : vector<2x1xf32> to vector<2x8xf32>
    %217 = arith.mulf %212, %216 : vector<2x8xf32>
    %218 = arith.index_cast %c3_i32 : i32 to index
    %c0_58 = arith.constant 0 : index
    %c0_59 = arith.constant 0 : index
    %219 = vector.load %arg1[%218, %c0_58, %c0_59] : memref<10x2x8xf32, #tpu.memory_space<vmem>>, vector<1x2x8xf32>
    %220 = vector.shape_cast %219 : vector<1x2x8xf32> to vector<2x8xf32>
    %221 = arith.mulf %217, %220 : vector<2x8xf32>
    %222 = tpu.concatenate %221, %188 in 1 : vector<2x8xf32>, vector<2x16xf32> -> vector<2x24xf32>
    %cst_60 = arith.constant dense<0.000000e+00> : vector<2x64xf32>
    %223 = tpu.matmul %222, %7, %cst_60 {dimension_numbers = #tpu.dot_dimension_numbers<[1], [0], [0], [1], [0, 0, 1, 1], [], []>, precision = #tpu.contract_precision<fp32>} : vector<2x24xf32>, vector<24x64xf32>, vector<2x64xf32> -> vector<2x64xf32>
    %224 = vector.broadcast %8 : vector<1x64xf32> to vector<2x64xf32>
    %225 = arith.addf %223, %224 : vector<2x64xf32>
    %226 = vector.extract_strided_slice %225 {offsets = [0, 0], sizes = [2, 16], strides = [1, 1]} : vector<2x64xf32> to vector<2x16xf32>
    %227 = arith.negf %226 : vector<2x16xf32>
    %228 = math.exp %227 : vector<2x16xf32>
    %cst_61 = arith.constant 1.000000e+00 : f32
    %229 = vector.broadcast %cst_61 : f32 to vector<2x16xf32>
    %230 = arith.addf %229, %228 : vector<2x16xf32>
    %231 = arith.divf %229, %230 : vector<2x16xf32>
    %232 = vector.extract_strided_slice %225 {offsets = [0, 16], sizes = [2, 16], strides = [1, 1]} : vector<2x64xf32> to vector<2x16xf32>
    %233 = arith.negf %232 : vector<2x16xf32>
    %234 = math.exp %233 : vector<2x16xf32>
    %cst_62 = arith.constant 1.000000e+00 : f32
    %235 = vector.broadcast %cst_62 : f32 to vector<2x16xf32>
    %236 = arith.addf %235, %234 : vector<2x16xf32>
    %237 = arith.divf %235, %236 : vector<2x16xf32>
    %238 = vector.extract_strided_slice %225 {offsets = [0, 32], sizes = [2, 16], strides = [1, 1]} : vector<2x64xf32> to vector<2x16xf32>
    %239 = math.tanh %238 : vector<2x16xf32>
    %240 = vector.extract_strided_slice %225 {offsets = [0, 48], sizes = [2, 16], strides = [1, 1]} : vector<2x64xf32> to vector<2x16xf32>
    %241 = arith.negf %240 : vector<2x16xf32>
    %242 = math.exp %241 : vector<2x16xf32>
    %cst_63 = arith.constant 1.000000e+00 : f32
    %243 = vector.broadcast %cst_63 : f32 to vector<2x16xf32>
    %244 = arith.addf %243, %242 : vector<2x16xf32>
    %245 = arith.divf %243, %244 : vector<2x16xf32>
    %246 = arith.mulf %237, %186 : vector<2x16xf32>
    %247 = arith.mulf %231, %239 : vector<2x16xf32>
    %248 = arith.addf %246, %247 : vector<2x16xf32>
    %249 = math.tanh %248 : vector<2x16xf32>
    %250 = arith.mulf %245, %249 : vector<2x16xf32>
    %251 = arith.index_cast %c3_i32 : i32 to index
    %c0_64 = arith.constant 0 : index
    %c0_65 = arith.constant 0 : index
    %252 = vector.load %arg8[%251, %c0_64, %c0_65] : memref<10x2x8xf32, #tpu.memory_space<vmem>>, vector<1x2x8xf32>
    %253 = vector.shape_cast %252 : vector<1x2x8xf32> to vector<2x8xf32>
    %254 = vector.shape_cast %221 : vector<2x8xf32> to vector<1x2x8xf32>
    tpu.vector_store %arg8[%251, %c0_64, %c0_65], %254 {strides = array<i32>} : memref<10x2x8xf32, #tpu.memory_space<vmem>>, vector<1x2x8xf32>,
    %255 = arith.index_cast %c3_i32 : i32 to index
    %c0_66 = arith.constant 0 : index
    %c0_67 = arith.constant 0 : index
    %256 = vector.load %arg9[%255, %c0_66, %c0_67] : memref<10x2x16xf32, #tpu.memory_space<vmem>>, vector<1x2x16xf32>
    %257 = vector.shape_cast %256 : vector<1x2x16xf32> to vector<2x16xf32>
    %258 = vector.shape_cast %250 : vector<2x16xf32> to vector<1x2x16xf32>
    tpu.vector_store %arg9[%255, %c0_66, %c0_67], %258 {strides = array<i32>} : memref<10x2x16xf32, #tpu.memory_space<vmem>>, vector<1x2x16xf32>,
    %c4_i32 = arith.constant 4 : i32
    %259 = vector.broadcast %4 : vector<1x16xf32> to vector<2x16xf32>
    %260 = arith.mulf %250, %259 : vector<2x16xf32>
    %261 = vector.broadcast %5 : vector<1x16xf32> to vector<2x16xf32>
    %262 = arith.mulf %248, %261 : vector<2x16xf32>
    %263 = arith.addf %260, %262 : vector<2x16xf32>
    %cst_68 = arith.constant dense<0.000000e+00> : vector<2xf32>
    %264 = vector.multi_reduction <add>, %263, %cst_68 [1] : vector<2x16xf32> to vector<2xf32>
    %265 = vector.shape_cast %264 : vector<2xf32> to vector<2x1xf32>
    %266 = vector.broadcast %6 : vector<1x1xf32> to vector<2x1xf32>
    %267 = arith.addf %265, %266 : vector<2x1xf32>
    %268 = vector.broadcast %267 : vector<2x1xf32> to vector<2x8xf32>
    %269 = arith.addf %268, %3 : vector<2x8xf32>
    %cst_69 = arith.constant dense<0xFF800000> : vector<2xf32>
    %270 = vector.multi_reduction <maximumf>, %269, %cst_69 [1] : vector<2x8xf32> to vector<2xf32>
    %271 = vector.shape_cast %270 : vector<2xf32> to vector<2x1xf32>
    %272 = vector.broadcast %271 : vector<2x1xf32> to vector<2x8xf32>
    %273 = arith.subf %269, %272 : vector<2x8xf32>
    %274 = math.exp %273 : vector<2x8xf32>
    %cst_70 = arith.constant dense<0.000000e+00> : vector<2xf32>
    %275 = vector.multi_reduction <add>, %274, %cst_70 [1] : vector<2x8xf32> to vector<2xf32>
    %276 = vector.shape_cast %275 : vector<2xf32> to vector<2x1xf32>
    %277 = tpu.reciprocal %276 : vector<2x1xf32> -> vector<2x1xf32>
    %278 = vector.broadcast %277 : vector<2x1xf32> to vector<2x8xf32>
    %279 = arith.mulf %274, %278 : vector<2x8xf32>
    %280 = arith.index_cast %c4_i32 : i32 to index
    %c0_71 = arith.constant 0 : index
    %c0_72 = arith.constant 0 : index
    %281 = vector.load %arg1[%280, %c0_71, %c0_72] : memref<10x2x8xf32, #tpu.memory_space<vmem>>, vector<1x2x8xf32>
    %282 = vector.shape_cast %281 : vector<1x2x8xf32> to vector<2x8xf32>
    %283 = arith.mulf %279, %282 : vector<2x8xf32>
    %284 = tpu.concatenate %283, %250 in 1 : vector<2x8xf32>, vector<2x16xf32> -> vector<2x24xf32>
    %cst_73 = arith.constant dense<0.000000e+00> : vector<2x64xf32>
    %285 = tpu.matmul %284, %7, %cst_73 {dimension_numbers = #tpu.dot_dimension_numbers<[1], [0], [0], [1], [0, 0, 1, 1], [], []>, precision = #tpu.contract_precision<fp32>} : vector<2x24xf32>, vector<24x64xf32>, vector<2x64xf32> -> vector<2x64xf32>
    %286 = vector.broadcast %8 : vector<1x64xf32> to vector<2x64xf32>
    %287 = arith.addf %285, %286 : vector<2x64xf32>
    %288 = vector.extract_strided_slice %287 {offsets = [0, 0], sizes = [2, 16], strides = [1, 1]} : vector<2x64xf32> to vector<2x16xf32>
    %289 = arith.negf %288 : vector<2x16xf32>
    %290 = math.exp %289 : vector<2x16xf32>
    %cst_74 = arith.constant 1.000000e+00 : f32
    %291 = vector.broadcast %cst_74 : f32 to vector<2x16xf32>
    %292 = arith.addf %291, %290 : vector<2x16xf32>
    %293 = arith.divf %291, %292 : vector<2x16xf32>
    %294 = vector.extract_strided_slice %287 {offsets = [0, 16], sizes = [2, 16], strides = [1, 1]} : vector<2x64xf32> to vector<2x16xf32>
    %295 = arith.negf %294 : vector<2x16xf32>
    %296 = math.exp %295 : vector<2x16xf32>
    %cst_75 = arith.constant 1.000000e+00 : f32
    %297 = vector.broadcast %cst_75 : f32 to vector<2x16xf32>
    %298 = arith.addf %297, %296 : vector<2x16xf32>
    %299 = arith.divf %297, %298 : vector<2x16xf32>
    %300 = vector.extract_strided_slice %287 {offsets = [0, 32], sizes = [2, 16], strides = [1, 1]} : vector<2x64xf32> to vector<2x16xf32>
    %301 = math.tanh %300 : vector<2x16xf32>
    %302 = vector.extract_strided_slice %287 {offsets = [0, 48], sizes = [2, 16], strides = [1, 1]} : vector<2x64xf32> to vector<2x16xf32>
    %303 = arith.negf %302 : vector<2x16xf32>
    %304 = math.exp %303 : vector<2x16xf32>
    %cst_76 = arith.constant 1.000000e+00 : f32
    %305 = vector.broadcast %cst_76 : f32 to vector<2x16xf32>
    %306 = arith.addf %305, %304 : vector<2x16xf32>
    %307 = arith.divf %305, %306 : vector<2x16xf32>
    %308 = arith.mulf %299, %248 : vector<2x16xf32>
    %309 = arith.mulf %293, %301 : vector<2x16xf32>
    %310 = arith.addf %308, %309 : vector<2x16xf32>
    %311 = math.tanh %310 : vector<2x16xf32>
    %312 = arith.mulf %307, %311 : vector<2x16xf32>
    %313 = arith.index_cast %c4_i32 : i32 to index
    %c0_77 = arith.constant 0 : index
    %c0_78 = arith.constant 0 : index
    %314 = vector.load %arg8[%313, %c0_77, %c0_78] : memref<10x2x8xf32, #tpu.memory_space<vmem>>, vector<1x2x8xf32>
    %315 = vector.shape_cast %314 : vector<1x2x8xf32> to vector<2x8xf32>
    %316 = vector.shape_cast %283 : vector<2x8xf32> to vector<1x2x8xf32>
    tpu.vector_store %arg8[%313, %c0_77, %c0_78], %316 {strides = array<i32>} : memref<10x2x8xf32, #tpu.memory_space<vmem>>, vector<1x2x8xf32>,
    %317 = arith.index_cast %c4_i32 : i32 to index
    %c0_79 = arith.constant 0 : index
    %c0_80 = arith.constant 0 : index
    %318 = vector.load %arg9[%317, %c0_79, %c0_80] : memref<10x2x16xf32, #tpu.memory_space<vmem>>, vector<1x2x16xf32>
    %319 = vector.shape_cast %318 : vector<1x2x16xf32> to vector<2x16xf32>
    %320 = vector.shape_cast %312 : vector<2x16xf32> to vector<1x2x16xf32>
    tpu.vector_store %arg9[%317, %c0_79, %c0_80], %320 {strides = array<i32>} : memref<10x2x16xf32, #tpu.memory_space<vmem>>, vector<1x2x16xf32>,
    %c5_i32 = arith.constant 5 : i32
    %321 = vector.broadcast %4 : vector<1x16xf32> to vector<2x16xf32>
    %322 = arith.mulf %312, %321 : vector<2x16xf32>
    %323 = vector.broadcast %5 : vector<1x16xf32> to vector<2x16xf32>
    %324 = arith.mulf %310, %323 : vector<2x16xf32>
    %325 = arith.addf %322, %324 : vector<2x16xf32>
    %cst_81 = arith.constant dense<0.000000e+00> : vector<2xf32>
    %326 = vector.multi_reduction <add>, %325, %cst_81 [1] : vector<2x16xf32> to vector<2xf32>
    %327 = vector.shape_cast %326 : vector<2xf32> to vector<2x1xf32>
    %328 = vector.broadcast %6 : vector<1x1xf32> to vector<2x1xf32>
    %329 = arith.addf %327, %328 : vector<2x1xf32>
    %330 = vector.broadcast %329 : vector<2x1xf32> to vector<2x8xf32>
    %331 = arith.addf %330, %3 : vector<2x8xf32>
    %cst_82 = arith.constant dense<0xFF800000> : vector<2xf32>
    %332 = vector.multi_reduction <maximumf>, %331, %cst_82 [1] : vector<2x8xf32> to vector<2xf32>
    %333 = vector.shape_cast %332 : vector<2xf32> to vector<2x1xf32>
    %334 = vector.broadcast %333 : vector<2x1xf32> to vector<2x8xf32>
    %335 = arith.subf %331, %334 : vector<2x8xf32>
    %336 = math.exp %335 : vector<2x8xf32>
    %cst_83 = arith.constant dense<0.000000e+00> : vector<2xf32>
    %337 = vector.multi_reduction <add>, %336, %cst_83 [1] : vector<2x8xf32> to vector<2xf32>
    %338 = vector.shape_cast %337 : vector<2xf32> to vector<2x1xf32>
    %339 = tpu.reciprocal %338 : vector<2x1xf32> -> vector<2x1xf32>
    %340 = vector.broadcast %339 : vector<2x1xf32> to vector<2x8xf32>
    %341 = arith.mulf %336, %340 : vector<2x8xf32>
    %342 = arith.index_cast %c5_i32 : i32 to index
    %c0_84 = arith.constant 0 : index
    %c0_85 = arith.constant 0 : index
    %343 = vector.load %arg1[%342, %c0_84, %c0_85] : memref<10x2x8xf32, #tpu.memory_space<vmem>>, vector<1x2x8xf32>
    %344 = vector.shape_cast %343 : vector<1x2x8xf32> to vector<2x8xf32>
    %345 = arith.mulf %341, %344 : vector<2x8xf32>
    %346 = tpu.concatenate %345, %312 in 1 : vector<2x8xf32>, vector<2x16xf32> -> vector<2x24xf32>
    %cst_86 = arith.constant dense<0.000000e+00> : vector<2x64xf32>
    %347 = tpu.matmul %346, %7, %cst_86 {dimension_numbers = #tpu.dot_dimension_numbers<[1], [0], [0], [1], [0, 0, 1, 1], [], []>, precision = #tpu.contract_precision<fp32>} : vector<2x24xf32>, vector<24x64xf32>, vector<2x64xf32> -> vector<2x64xf32>
    %348 = vector.broadcast %8 : vector<1x64xf32> to vector<2x64xf32>
    %349 = arith.addf %347, %348 : vector<2x64xf32>
    %350 = vector.extract_strided_slice %349 {offsets = [0, 0], sizes = [2, 16], strides = [1, 1]} : vector<2x64xf32> to vector<2x16xf32>
    %351 = arith.negf %350 : vector<2x16xf32>
    %352 = math.exp %351 : vector<2x16xf32>
    %cst_87 = arith.constant 1.000000e+00 : f32
    %353 = vector.broadcast %cst_87 : f32 to vector<2x16xf32>
    %354 = arith.addf %353, %352 : vector<2x16xf32>
    %355 = arith.divf %353, %354 : vector<2x16xf32>
    %356 = vector.extract_strided_slice %349 {offsets = [0, 16], sizes = [2, 16], strides = [1, 1]} : vector<2x64xf32> to vector<2x16xf32>
    %357 = arith.negf %356 : vector<2x16xf32>
    %358 = math.exp %357 : vector<2x16xf32>
    %cst_88 = arith.constant 1.000000e+00 : f32
    %359 = vector.broadcast %cst_88 : f32 to vector<2x16xf32>
    %360 = arith.addf %359, %358 : vector<2x16xf32>
    %361 = arith.divf %359, %360 : vector<2x16xf32>
    %362 = vector.extract_strided_slice %349 {offsets = [0, 32], sizes = [2, 16], strides = [1, 1]} : vector<2x64xf32> to vector<2x16xf32>
    %363 = math.tanh %362 : vector<2x16xf32>
    %364 = vector.extract_strided_slice %349 {offsets = [0, 48], sizes = [2, 16], strides = [1, 1]} : vector<2x64xf32> to vector<2x16xf32>
    %365 = arith.negf %364 : vector<2x16xf32>
    %366 = math.exp %365 : vector<2x16xf32>
    %cst_89 = arith.constant 1.000000e+00 : f32
    %367 = vector.broadcast %cst_89 : f32 to vector<2x16xf32>
    %368 = arith.addf %367, %366 : vector<2x16xf32>
    %369 = arith.divf %367, %368 : vector<2x16xf32>
    %370 = arith.mulf %361, %310 : vector<2x16xf32>
    %371 = arith.mulf %355, %363 : vector<2x16xf32>
    %372 = arith.addf %370, %371 : vector<2x16xf32>
    %373 = math.tanh %372 : vector<2x16xf32>
    %374 = arith.mulf %369, %373 : vector<2x16xf32>
    %375 = arith.index_cast %c5_i32 : i32 to index
    %c0_90 = arith.constant 0 : index
    %c0_91 = arith.constant 0 : index
    %376 = vector.load %arg8[%375, %c0_90, %c0_91] : memref<10x2x8xf32, #tpu.memory_space<vmem>>, vector<1x2x8xf32>
    %377 = vector.shape_cast %376 : vector<1x2x8xf32> to vector<2x8xf32>
    %378 = vector.shape_cast %345 : vector<2x8xf32> to vector<1x2x8xf32>
    tpu.vector_store %arg8[%375, %c0_90, %c0_91], %378 {strides = array<i32>} : memref<10x2x8xf32, #tpu.memory_space<vmem>>, vector<1x2x8xf32>,
    %379 = arith.index_cast %c5_i32 : i32 to index
    %c0_92 = arith.constant 0 : index
    %c0_93 = arith.constant 0 : index
    %380 = vector.load %arg9[%379, %c0_92, %c0_93] : memref<10x2x16xf32, #tpu.memory_space<vmem>>, vector<1x2x16xf32>
    %381 = vector.shape_cast %380 : vector<1x2x16xf32> to vector<2x16xf32>
    %382 = vector.shape_cast %374 : vector<2x16xf32> to vector<1x2x16xf32>
    tpu.vector_store %arg9[%379, %c0_92, %c0_93], %382 {strides = array<i32>} : memref<10x2x16xf32, #tpu.memory_space<vmem>>, vector<1x2x16xf32>,
    %c6_i32 = arith.constant 6 : i32
    %383 = vector.broadcast %4 : vector<1x16xf32> to vector<2x16xf32>
    %384 = arith.mulf %374, %383 : vector<2x16xf32>
    %385 = vector.broadcast %5 : vector<1x16xf32> to vector<2x16xf32>
    %386 = arith.mulf %372, %385 : vector<2x16xf32>
    %387 = arith.addf %384, %386 : vector<2x16xf32>
    %cst_94 = arith.constant dense<0.000000e+00> : vector<2xf32>
    %388 = vector.multi_reduction <add>, %387, %cst_94 [1] : vector<2x16xf32> to vector<2xf32>
    %389 = vector.shape_cast %388 : vector<2xf32> to vector<2x1xf32>
    %390 = vector.broadcast %6 : vector<1x1xf32> to vector<2x1xf32>
    %391 = arith.addf %389, %390 : vector<2x1xf32>
    %392 = vector.broadcast %391 : vector<2x1xf32> to vector<2x8xf32>
    %393 = arith.addf %392, %3 : vector<2x8xf32>
    %cst_95 = arith.constant dense<0xFF800000> : vector<2xf32>
    %394 = vector.multi_reduction <maximumf>, %393, %cst_95 [1] : vector<2x8xf32> to vector<2xf32>
    %395 = vector.shape_cast %394 : vector<2xf32> to vector<2x1xf32>
    %396 = vector.broadcast %395 : vector<2x1xf32> to vector<2x8xf32>
    %397 = arith.subf %393, %396 : vector<2x8xf32>
    %398 = math.exp %397 : vector<2x8xf32>
    %cst_96 = arith.constant dense<0.000000e+00> : vector<2xf32>
    %399 = vector.multi_reduction <add>, %398, %cst_96 [1] : vector<2x8xf32> to vector<2xf32>
    %400 = vector.shape_cast %399 : vector<2xf32> to vector<2x1xf32>
    %401 = tpu.reciprocal %400 : vector<2x1xf32> -> vector<2x1xf32>
    %402 = vector.broadcast %401 : vector<2x1xf32> to vector<2x8xf32>
    %403 = arith.mulf %398, %402 : vector<2x8xf32>
    %404 = arith.index_cast %c6_i32 : i32 to index
    %c0_97 = arith.constant 0 : index
    %c0_98 = arith.constant 0 : index
    %405 = vector.load %arg1[%404, %c0_97, %c0_98] : memref<10x2x8xf32, #tpu.memory_space<vmem>>, vector<1x2x8xf32>
    %406 = vector.shape_cast %405 : vector<1x2x8xf32> to vector<2x8xf32>
    %407 = arith.mulf %403, %406 : vector<2x8xf32>
    %408 = tpu.concatenate %407, %374 in 1 : vector<2x8xf32>, vector<2x16xf32> -> vector<2x24xf32>
    %cst_99 = arith.constant dense<0.000000e+00> : vector<2x64xf32>
    %409 = tpu.matmul %408, %7, %cst_99 {dimension_numbers = #tpu.dot_dimension_numbers<[1], [0], [0], [1], [0, 0, 1, 1], [], []>, precision = #tpu.contract_precision<fp32>} : vector<2x24xf32>, vector<24x64xf32>, vector<2x64xf32> -> vector<2x64xf32>
    %410 = vector.broadcast %8 : vector<1x64xf32> to vector<2x64xf32>
    %411 = arith.addf %409, %410 : vector<2x64xf32>
    %412 = vector.extract_strided_slice %411 {offsets = [0, 0], sizes = [2, 16], strides = [1, 1]} : vector<2x64xf32> to vector<2x16xf32>
    %413 = arith.negf %412 : vector<2x16xf32>
    %414 = math.exp %413 : vector<2x16xf32>
    %cst_100 = arith.constant 1.000000e+00 : f32
    %415 = vector.broadcast %cst_100 : f32 to vector<2x16xf32>
    %416 = arith.addf %415, %414 : vector<2x16xf32>
    %417 = arith.divf %415, %416 : vector<2x16xf32>
    %418 = vector.extract_strided_slice %411 {offsets = [0, 16], sizes = [2, 16], strides = [1, 1]} : vector<2x64xf32> to vector<2x16xf32>
    %419 = arith.negf %418 : vector<2x16xf32>
    %420 = math.exp %419 : vector<2x16xf32>
    %cst_101 = arith.constant 1.000000e+00 : f32
    %421 = vector.broadcast %cst_101 : f32 to vector<2x16xf32>
    %422 = arith.addf %421, %420 : vector<2x16xf32>
    %423 = arith.divf %421, %422 : vector<2x16xf32>
    %424 = vector.extract_strided_slice %411 {offsets = [0, 32], sizes = [2, 16], strides = [1, 1]} : vector<2x64xf32> to vector<2x16xf32>
    %425 = math.tanh %424 : vector<2x16xf32>
    %426 = vector.extract_strided_slice %411 {offsets = [0, 48], sizes = [2, 16], strides = [1, 1]} : vector<2x64xf32> to vector<2x16xf32>
    %427 = arith.negf %426 : vector<2x16xf32>
    %428 = math.exp %427 : vector<2x16xf32>
    %cst_102 = arith.constant 1.000000e+00 : f32
    %429 = vector.broadcast %cst_102 : f32 to vector<2x16xf32>
    %430 = arith.addf %429, %428 : vector<2x16xf32>
    %431 = arith.divf %429, %430 : vector<2x16xf32>
    %432 = arith.mulf %423, %372 : vector<2x16xf32>
    %433 = arith.mulf %417, %425 : vector<2x16xf32>
    %434 = arith.addf %432, %433 : vector<2x16xf32>
    %435 = math.tanh %434 : vector<2x16xf32>
    %436 = arith.mulf %431, %435 : vector<2x16xf32>
    %437 = arith.index_cast %c6_i32 : i32 to index
    %c0_103 = arith.constant 0 : index
    %c0_104 = arith.constant 0 : index
    %438 = vector.load %arg8[%437, %c0_103, %c0_104] : memref<10x2x8xf32, #tpu.memory_space<vmem>>, vector<1x2x8xf32>
    %439 = vector.shape_cast %438 : vector<1x2x8xf32> to vector<2x8xf32>
    %440 = vector.shape_cast %407 : vector<2x8xf32> to vector<1x2x8xf32>
    tpu.vector_store %arg8[%437, %c0_103, %c0_104], %440 {strides = array<i32>} : memref<10x2x8xf32, #tpu.memory_space<vmem>>, vector<1x2x8xf32>,
    %441 = arith.index_cast %c6_i32 : i32 to index
    %c0_105 = arith.constant 0 : index
    %c0_106 = arith.constant 0 : index
    %442 = vector.load %arg9[%441, %c0_105, %c0_106] : memref<10x2x16xf32, #tpu.memory_space<vmem>>, vector<1x2x16xf32>
    %443 = vector.shape_cast %442 : vector<1x2x16xf32> to vector<2x16xf32>
    %444 = vector.shape_cast %436 : vector<2x16xf32> to vector<1x2x16xf32>
    tpu.vector_store %arg9[%441, %c0_105, %c0_106], %444 {strides = array<i32>} : memref<10x2x16xf32, #tpu.memory_space<vmem>>, vector<1x2x16xf32>,
    %c7_i32 = arith.constant 7 : i32
    %445 = vector.broadcast %4 : vector<1x16xf32> to vector<2x16xf32>
    %446 = arith.mulf %436, %445 : vector<2x16xf32>
    %447 = vector.broadcast %5 : vector<1x16xf32> to vector<2x16xf32>
    %448 = arith.mulf %434, %447 : vector<2x16xf32>
    %449 = arith.addf %446, %448 : vector<2x16xf32>
    %cst_107 = arith.constant dense<0.000000e+00> : vector<2xf32>
    %450 = vector.multi_reduction <add>, %449, %cst_107 [1] : vector<2x16xf32> to vector<2xf32>
    %451 = vector.shape_cast %450 : vector<2xf32> to vector<2x1xf32>
    %452 = vector.broadcast %6 : vector<1x1xf32> to vector<2x1xf32>
    %453 = arith.addf %451, %452 : vector<2x1xf32>
    %454 = vector.broadcast %453 : vector<2x1xf32> to vector<2x8xf32>
    %455 = arith.addf %454, %3 : vector<2x8xf32>
    %cst_108 = arith.constant dense<0xFF800000> : vector<2xf32>
    %456 = vector.multi_reduction <maximumf>, %455, %cst_108 [1] : vector<2x8xf32> to vector<2xf32>
    %457 = vector.shape_cast %456 : vector<2xf32> to vector<2x1xf32>
    %458 = vector.broadcast %457 : vector<2x1xf32> to vector<2x8xf32>
    %459 = arith.subf %455, %458 : vector<2x8xf32>
    %460 = math.exp %459 : vector<2x8xf32>
    %cst_109 = arith.constant dense<0.000000e+00> : vector<2xf32>
    %461 = vector.multi_reduction <add>, %460, %cst_109 [1] : vector<2x8xf32> to vector<2xf32>
    %462 = vector.shape_cast %461 : vector<2xf32> to vector<2x1xf32>
    %463 = tpu.reciprocal %462 : vector<2x1xf32> -> vector<2x1xf32>
    %464 = vector.broadcast %463 : vector<2x1xf32> to vector<2x8xf32>
    %465 = arith.mulf %460, %464 : vector<2x8xf32>
    %466 = arith.index_cast %c7_i32 : i32 to index
    %c0_110 = arith.constant 0 : index
    %c0_111 = arith.constant 0 : index
    %467 = vector.load %arg1[%466, %c0_110, %c0_111] : memref<10x2x8xf32, #tpu.memory_space<vmem>>, vector<1x2x8xf32>
    %468 = vector.shape_cast %467 : vector<1x2x8xf32> to vector<2x8xf32>
    %469 = arith.mulf %465, %468 : vector<2x8xf32>
    %470 = tpu.concatenate %469, %436 in 1 : vector<2x8xf32>, vector<2x16xf32> -> vector<2x24xf32>
    %cst_112 = arith.constant dense<0.000000e+00> : vector<2x64xf32>
    %471 = tpu.matmul %470, %7, %cst_112 {dimension_numbers = #tpu.dot_dimension_numbers<[1], [0], [0], [1], [0, 0, 1, 1], [], []>, precision = #tpu.contract_precision<fp32>} : vector<2x24xf32>, vector<24x64xf32>, vector<2x64xf32> -> vector<2x64xf32>
    %472 = vector.broadcast %8 : vector<1x64xf32> to vector<2x64xf32>
    %473 = arith.addf %471, %472 : vector<2x64xf32>
    %474 = vector.extract_strided_slice %473 {offsets = [0, 0], sizes = [2, 16], strides = [1, 1]} : vector<2x64xf32> to vector<2x16xf32>
    %475 = arith.negf %474 : vector<2x16xf32>
    %476 = math.exp %475 : vector<2x16xf32>
    %cst_113 = arith.constant 1.000000e+00 : f32
    %477 = vector.broadcast %cst_113 : f32 to vector<2x16xf32>
    %478 = arith.addf %477, %476 : vector<2x16xf32>
    %479 = arith.divf %477, %478 : vector<2x16xf32>
    %480 = vector.extract_strided_slice %473 {offsets = [0, 16], sizes = [2, 16], strides = [1, 1]} : vector<2x64xf32> to vector<2x16xf32>
    %481 = arith.negf %480 : vector<2x16xf32>
    %482 = math.exp %481 : vector<2x16xf32>
    %cst_114 = arith.constant 1.000000e+00 : f32
    %483 = vector.broadcast %cst_114 : f32 to vector<2x16xf32>
    %484 = arith.addf %483, %482 : vector<2x16xf32>
    %485 = arith.divf %483, %484 : vector<2x16xf32>
    %486 = vector.extract_strided_slice %473 {offsets = [0, 32], sizes = [2, 16], strides = [1, 1]} : vector<2x64xf32> to vector<2x16xf32>
    %487 = math.tanh %486 : vector<2x16xf32>
    %488 = vector.extract_strided_slice %473 {offsets = [0, 48], sizes = [2, 16], strides = [1, 1]} : vector<2x64xf32> to vector<2x16xf32>
    %489 = arith.negf %488 : vector<2x16xf32>
    %490 = math.exp %489 : vector<2x16xf32>
    %cst_115 = arith.constant 1.000000e+00 : f32
    %491 = vector.broadcast %cst_115 : f32 to vector<2x16xf32>
    %492 = arith.addf %491, %490 : vector<2x16xf32>
    %493 = arith.divf %491, %492 : vector<2x16xf32>
    %494 = arith.mulf %485, %434 : vector<2x16xf32>
    %495 = arith.mulf %479, %487 : vector<2x16xf32>
    %496 = arith.addf %494, %495 : vector<2x16xf32>
    %497 = math.tanh %496 : vector<2x16xf32>
    %498 = arith.mulf %493, %497 : vector<2x16xf32>
    %499 = arith.index_cast %c7_i32 : i32 to index
    %c0_116 = arith.constant 0 : index
    %c0_117 = arith.constant 0 : index
    %500 = vector.load %arg8[%499, %c0_116, %c0_117] : memref<10x2x8xf32, #tpu.memory_space<vmem>>, vector<1x2x8xf32>
    %501 = vector.shape_cast %500 : vector<1x2x8xf32> to vector<2x8xf32>
    %502 = vector.shape_cast %469 : vector<2x8xf32> to vector<1x2x8xf32>
    tpu.vector_store %arg8[%499, %c0_116, %c0_117], %502 {strides = array<i32>} : memref<10x2x8xf32, #tpu.memory_space<vmem>>, vector<1x2x8xf32>,
    %503 = arith.index_cast %c7_i32 : i32 to index
    %c0_118 = arith.constant 0 : index
    %c0_119 = arith.constant 0 : index
    %504 = vector.load %arg9[%503, %c0_118, %c0_119] : memref<10x2x16xf32, #tpu.memory_space<vmem>>, vector<1x2x16xf32>
    %505 = vector.shape_cast %504 : vector<1x2x16xf32> to vector<2x16xf32>
    %506 = vector.shape_cast %498 : vector<2x16xf32> to vector<1x2x16xf32>
    tpu.vector_store %arg9[%503, %c0_118, %c0_119], %506 {strides = array<i32>} : memref<10x2x16xf32, #tpu.memory_space<vmem>>, vector<1x2x16xf32>,
    %c8_i32 = arith.constant 8 : i32
    %507 = vector.broadcast %4 : vector<1x16xf32> to vector<2x16xf32>
    %508 = arith.mulf %498, %507 : vector<2x16xf32>
    %509 = vector.broadcast %5 : vector<1x16xf32> to vector<2x16xf32>
    %510 = arith.mulf %496, %509 : vector<2x16xf32>
    %511 = arith.addf %508, %510 : vector<2x16xf32>
    %cst_120 = arith.constant dense<0.000000e+00> : vector<2xf32>
    %512 = vector.multi_reduction <add>, %511, %cst_120 [1] : vector<2x16xf32> to vector<2xf32>
    %513 = vector.shape_cast %512 : vector<2xf32> to vector<2x1xf32>
    %514 = vector.broadcast %6 : vector<1x1xf32> to vector<2x1xf32>
    %515 = arith.addf %513, %514 : vector<2x1xf32>
    %516 = vector.broadcast %515 : vector<2x1xf32> to vector<2x8xf32>
    %517 = arith.addf %516, %3 : vector<2x8xf32>
    %cst_121 = arith.constant dense<0xFF800000> : vector<2xf32>
    %518 = vector.multi_reduction <maximumf>, %517, %cst_121 [1] : vector<2x8xf32> to vector<2xf32>
    %519 = vector.shape_cast %518 : vector<2xf32> to vector<2x1xf32>
    %520 = vector.broadcast %519 : vector<2x1xf32> to vector<2x8xf32>
    %521 = arith.subf %517, %520 : vector<2x8xf32>
    %522 = math.exp %521 : vector<2x8xf32>
    %cst_122 = arith.constant dense<0.000000e+00> : vector<2xf32>
    %523 = vector.multi_reduction <add>, %522, %cst_122 [1] : vector<2x8xf32> to vector<2xf32>
    %524 = vector.shape_cast %523 : vector<2xf32> to vector<2x1xf32>
    %525 = tpu.reciprocal %524 : vector<2x1xf32> -> vector<2x1xf32>
    %526 = vector.broadcast %525 : vector<2x1xf32> to vector<2x8xf32>
    %527 = arith.mulf %522, %526 : vector<2x8xf32>
    %528 = arith.index_cast %c8_i32 : i32 to index
    %c0_123 = arith.constant 0 : index
    %c0_124 = arith.constant 0 : index
    %529 = vector.load %arg1[%528, %c0_123, %c0_124] : memref<10x2x8xf32, #tpu.memory_space<vmem>>, vector<1x2x8xf32>
    %530 = vector.shape_cast %529 : vector<1x2x8xf32> to vector<2x8xf32>
    %531 = arith.mulf %527, %530 : vector<2x8xf32>
    %532 = tpu.concatenate %531, %498 in 1 : vector<2x8xf32>, vector<2x16xf32> -> vector<2x24xf32>
    %cst_125 = arith.constant dense<0.000000e+00> : vector<2x64xf32>
    %533 = tpu.matmul %532, %7, %cst_125 {dimension_numbers = #tpu.dot_dimension_numbers<[1], [0], [0], [1], [0, 0, 1, 1], [], []>, precision = #tpu.contract_precision<fp32>} : vector<2x24xf32>, vector<24x64xf32>, vector<2x64xf32> -> vector<2x64xf32>
    %534 = vector.broadcast %8 : vector<1x64xf32> to vector<2x64xf32>
    %535 = arith.addf %533, %534 : vector<2x64xf32>
    %536 = vector.extract_strided_slice %535 {offsets = [0, 0], sizes = [2, 16], strides = [1, 1]} : vector<2x64xf32> to vector<2x16xf32>
    %537 = arith.negf %536 : vector<2x16xf32>
    %538 = math.exp %537 : vector<2x16xf32>
    %cst_126 = arith.constant 1.000000e+00 : f32
    %539 = vector.broadcast %cst_126 : f32 to vector<2x16xf32>
    %540 = arith.addf %539, %538 : vector<2x16xf32>
    %541 = arith.divf %539, %540 : vector<2x16xf32>
    %542 = vector.extract_strided_slice %535 {offsets = [0, 16], sizes = [2, 16], strides = [1, 1]} : vector<2x64xf32> to vector<2x16xf32>
    %543 = arith.negf %542 : vector<2x16xf32>
    %544 = math.exp %543 : vector<2x16xf32>
    %cst_127 = arith.constant 1.000000e+00 : f32
    %545 = vector.broadcast %cst_127 : f32 to vector<2x16xf32>
    %546 = arith.addf %545, %544 : vector<2x16xf32>
    %547 = arith.divf %545, %546 : vector<2x16xf32>
    %548 = vector.extract_strided_slice %535 {offsets = [0, 32], sizes = [2, 16], strides = [1, 1]} : vector<2x64xf32> to vector<2x16xf32>
    %549 = math.tanh %548 : vector<2x16xf32>
    %550 = vector.extract_strided_slice %535 {offsets = [0, 48], sizes = [2, 16], strides = [1, 1]} : vector<2x64xf32> to vector<2x16xf32>
    %551 = arith.negf %550 : vector<2x16xf32>
    %552 = math.exp %551 : vector<2x16xf32>
    %cst_128 = arith.constant 1.000000e+00 : f32
    %553 = vector.broadcast %cst_128 : f32 to vector<2x16xf32>
    %554 = arith.addf %553, %552 : vector<2x16xf32>
    %555 = arith.divf %553, %554 : vector<2x16xf32>
    %556 = arith.mulf %547, %496 : vector<2x16xf32>
    %557 = arith.mulf %541, %549 : vector<2x16xf32>
    %558 = arith.addf %556, %557 : vector<2x16xf32>
    %559 = math.tanh %558 : vector<2x16xf32>
    %560 = arith.mulf %555, %559 : vector<2x16xf32>
    %561 = arith.index_cast %c8_i32 : i32 to index
    %c0_129 = arith.constant 0 : index
    %c0_130 = arith.constant 0 : index
    %562 = vector.load %arg8[%561, %c0_129, %c0_130] : memref<10x2x8xf32, #tpu.memory_space<vmem>>, vector<1x2x8xf32>
    %563 = vector.shape_cast %562 : vector<1x2x8xf32> to vector<2x8xf32>
    %564 = vector.shape_cast %531 : vector<2x8xf32> to vector<1x2x8xf32>
    tpu.vector_store %arg8[%561, %c0_129, %c0_130], %564 {strides = array<i32>} : memref<10x2x8xf32, #tpu.memory_space<vmem>>, vector<1x2x8xf32>,
    %565 = arith.index_cast %c8_i32 : i32 to index
    %c0_131 = arith.constant 0 : index
    %c0_132 = arith.constant 0 : index
    %566 = vector.load %arg9[%565, %c0_131, %c0_132] : memref<10x2x16xf32, #tpu.memory_space<vmem>>, vector<1x2x16xf32>
    %567 = vector.shape_cast %566 : vector<1x2x16xf32> to vector<2x16xf32>
    %568 = vector.shape_cast %560 : vector<2x16xf32> to vector<1x2x16xf32>
    tpu.vector_store %arg9[%565, %c0_131, %c0_132], %568 {strides = array<i32>} : memref<10x2x16xf32, #tpu.memory_space<vmem>>, vector<1x2x16xf32>,
    %c9_i32 = arith.constant 9 : i32
    %569 = vector.broadcast %4 : vector<1x16xf32> to vector<2x16xf32>
    %570 = arith.mulf %560, %569 : vector<2x16xf32>
    %571 = vector.broadcast %5 : vector<1x16xf32> to vector<2x16xf32>
    %572 = arith.mulf %558, %571 : vector<2x16xf32>
    %573 = arith.addf %570, %572 : vector<2x16xf32>
    %cst_133 = arith.constant dense<0.000000e+00> : vector<2xf32>
    %574 = vector.multi_reduction <add>, %573, %cst_133 [1] : vector<2x16xf32> to vector<2xf32>
    %575 = vector.shape_cast %574 : vector<2xf32> to vector<2x1xf32>
    %576 = vector.broadcast %6 : vector<1x1xf32> to vector<2x1xf32>
    %577 = arith.addf %575, %576 : vector<2x1xf32>
    %578 = vector.broadcast %577 : vector<2x1xf32> to vector<2x8xf32>
    %579 = arith.addf %578, %3 : vector<2x8xf32>
    %cst_134 = arith.constant dense<0xFF800000> : vector<2xf32>
    %580 = vector.multi_reduction <maximumf>, %579, %cst_134 [1] : vector<2x8xf32> to vector<2xf32>
    %581 = vector.shape_cast %580 : vector<2xf32> to vector<2x1xf32>
    %582 = vector.broadcast %581 : vector<2x1xf32> to vector<2x8xf32>
    %583 = arith.subf %579, %582 : vector<2x8xf32>
    %584 = math.exp %583 : vector<2x8xf32>
    %cst_135 = arith.constant dense<0.000000e+00> : vector<2xf32>
    %585 = vector.multi_reduction <add>, %584, %cst_135 [1] : vector<2x8xf32> to vector<2xf32>
    %586 = vector.shape_cast %585 : vector<2xf32> to vector<2x1xf32>
    %587 = tpu.reciprocal %586 : vector<2x1xf32> -> vector<2x1xf32>
    %588 = vector.broadcast %587 : vector<2x1xf32> to vector<2x8xf32>
    %589 = arith.mulf %584, %588 : vector<2x8xf32>
    %590 = arith.index_cast %c9_i32 : i32 to index
    %c0_136 = arith.constant 0 : index
    %c0_137 = arith.constant 0 : index
    %591 = vector.load %arg1[%590, %c0_136, %c0_137] : memref<10x2x8xf32, #tpu.memory_space<vmem>>, vector<1x2x8xf32>
    %592 = vector.shape_cast %591 : vector<1x2x8xf32> to vector<2x8xf32>
    %593 = arith.mulf %589, %592 : vector<2x8xf32>
    %594 = tpu.concatenate %593, %560 in 1 : vector<2x8xf32>, vector<2x16xf32> -> vector<2x24xf32>
    %cst_138 = arith.constant dense<0.000000e+00> : vector<2x64xf32>
    %595 = tpu.matmul %594, %7, %cst_138 {dimension_numbers = #tpu.dot_dimension_numbers<[1], [0], [0], [1], [0, 0, 1, 1], [], []>, precision = #tpu.contract_precision<fp32>} : vector<2x24xf32>, vector<24x64xf32>, vector<2x64xf32> -> vector<2x64xf32>
    %596 = vector.broadcast %8 : vector<1x64xf32> to vector<2x64xf32>
    %597 = arith.addf %595, %596 : vector<2x64xf32>
    %598 = vector.extract_strided_slice %597 {offsets = [0, 0], sizes = [2, 16], strides = [1, 1]} : vector<2x64xf32> to vector<2x16xf32>
    %599 = arith.negf %598 : vector<2x16xf32>
    %600 = math.exp %599 : vector<2x16xf32>
    %cst_139 = arith.constant 1.000000e+00 : f32
    %601 = vector.broadcast %cst_139 : f32 to vector<2x16xf32>
    %602 = arith.addf %601, %600 : vector<2x16xf32>
    %603 = arith.divf %601, %602 : vector<2x16xf32>
    %604 = vector.extract_strided_slice %597 {offsets = [0, 16], sizes = [2, 16], strides = [1, 1]} : vector<2x64xf32> to vector<2x16xf32>
    %605 = arith.negf %604 : vector<2x16xf32>
    %606 = math.exp %605 : vector<2x16xf32>
    %cst_140 = arith.constant 1.000000e+00 : f32
    %607 = vector.broadcast %cst_140 : f32 to vector<2x16xf32>
    %608 = arith.addf %607, %606 : vector<2x16xf32>
    %609 = arith.divf %607, %608 : vector<2x16xf32>
    %610 = vector.extract_strided_slice %597 {offsets = [0, 32], sizes = [2, 16], strides = [1, 1]} : vector<2x64xf32> to vector<2x16xf32>
    %611 = math.tanh %610 : vector<2x16xf32>
    %612 = vector.extract_strided_slice %597 {offsets = [0, 48], sizes = [2, 16], strides = [1, 1]} : vector<2x64xf32> to vector<2x16xf32>
    %613 = arith.negf %612 : vector<2x16xf32>
    %614 = math.exp %613 : vector<2x16xf32>
    %cst_141 = arith.constant 1.000000e+00 : f32
    %615 = vector.broadcast %cst_141 : f32 to vector<2x16xf32>
    %616 = arith.addf %615, %614 : vector<2x16xf32>
    %617 = arith.divf %615, %616 : vector<2x16xf32>
    %618 = arith.mulf %609, %558 : vector<2x16xf32>
    %619 = arith.mulf %603, %611 : vector<2x16xf32>
    %620 = arith.addf %618, %619 : vector<2x16xf32>
    %621 = math.tanh %620 : vector<2x16xf32>
    %622 = arith.mulf %617, %621 : vector<2x16xf32>
    %623 = arith.index_cast %c9_i32 : i32 to index
    %c0_142 = arith.constant 0 : index
    %c0_143 = arith.constant 0 : index
    %624 = vector.load %arg8[%623, %c0_142, %c0_143] : memref<10x2x8xf32, #tpu.memory_space<vmem>>, vector<1x2x8xf32>
    %625 = vector.shape_cast %624 : vector<1x2x8xf32> to vector<2x8xf32>
    %626 = vector.shape_cast %593 : vector<2x8xf32> to vector<1x2x8xf32>
    tpu.vector_store %arg8[%623, %c0_142, %c0_143], %626 {strides = array<i32>} : memref<10x2x8xf32, #tpu.memory_space<vmem>>, vector<1x2x8xf32>,
    %627 = arith.index_cast %c9_i32 : i32 to index
    %c0_144 = arith.constant 0 : index
    %c0_145 = arith.constant 0 : index
    %628 = vector.load %arg9[%627, %c0_144, %c0_145] : memref<10x2x16xf32, #tpu.memory_space<vmem>>, vector<1x2x16xf32>
    %629 = vector.shape_cast %628 : vector<1x2x16xf32> to vector<2x16xf32>
    %630 = vector.shape_cast %622 : vector<2x16xf32> to vector<1x2x16xf32>
    tpu.vector_store %arg9[%627, %c0_144, %c0_145], %630 {strides = array<i32>} : memref<10x2x16xf32, #tpu.memory_space<vmem>>, vector<1x2x16xf32>,
    %c10_i32 = arith.constant 10 : i32
    %c0_146 = arith.constant 0 : index
    %c0_147 = arith.constant 0 : index
    %631 = vector.load %arg10[%c0_146, %c0_147] : memref<2x16xf32, #tpu.memory_space<vmem>>, vector<2x16xf32>
    tpu.vector_store %arg10[%c0_146, %c0_147], %622 {strides = array<i32>} : memref<2x16xf32, #tpu.memory_space<vmem>>, vector<2x16xf32>,
    %c0_148 = arith.constant 0 : index
    %c0_149 = arith.constant 0 : index
    %632 = vector.load %arg11[%c0_148, %c0_149] : memref<2x16xf32, #tpu.memory_space<vmem>>, vector<2x16xf32>
    tpu.vector_store %arg11[%c0_148, %c0_149], %620 {strides = array<i32>} : memref<2x16xf32, #tpu.memory_space<vmem>>, vector<2x16xf32>,
    return
  }
  func.func @transform_0(%arg0: i32) -> (i32, i32, i32) {
    %c0_i32 = arith.constant 0 : i32
    %c0_i32_0 = arith.constant 0 : i32
    %c0_i32_1 = arith.constant 0 : i32
    return %arg0, %c0_i32, %c0_i32_0 : i32, i32, i32
  }
  func.func @transform_1(%arg0: i32) -> (i32, i32) {
    %c0_i32 = arith.constant 0 : i32
    %c0_i32_0 = arith.constant 0 : i32
    %c0_i32_1 = arith.constant 0 : i32
    return %c0_i32, %c0_i32_0 : i32, i32
  }
  func.func @transform_2(%arg0: i32) -> (i32, i32) {
    %c0_i32 = arith.constant 0 : i32
    %c0_i32_0 = arith.constant 0 : i32
    %c0_i32_1 = arith.constant 0 : i32
    return %c0_i32, %c0_i32_0 : i32, i32
  }
  func.func @transform_3(%arg0: i32) -> (i32, i32) {
    %c0_i32 = arith.constant 0 : i32
    %c0_i32_0 = arith.constant 0 : i32
    %c0_i32_1 = arith.constant 0 : i32
    return %c0_i32, %c0_i32_0 : i32, i32
  }
  func.func @transform_4(%arg0: i32) -> (i32, i32) {
    %c0_i32 = arith.constant 0 : i32
    %c0_i32_0 = arith.constant 0 : i32
    %c0_i32_1 = arith.constant 0 : i32
    return %c0_i32, %c0_i32_0 : i32, i32
  }
  func.func @transform_5(%arg0: i32) -> (i32, i32) {
    %c0_i32 = arith.constant 0 : i32
    %c0_i32_0 = arith.constant 0 : i32
    %c0_i32_1 = arith.constant 0 : i32
    return %c0_i32, %c0_i32_0 : i32, i32
  }
  func.func @transform_6(%arg0: i32) -> (i32, i32) {
    %c0_i32 = arith.constant 0 : i32
    %c0_i32_0 = arith.constant 0 : i32
    %c0_i32_1 = arith.constant 0 : i32
    return %c0_i32, %c0_i32_0 : i32, i32
  }
  func.func @transform_7(%arg0: i32) -> (i32, i32, i32) {
    %c0_i32 = arith.constant 0 : i32
    %c0_i32_0 = arith.constant 0 : i32
    %c0_i32_1 = arith.constant 0 : i32
    return %arg0, %c0_i32, %c0_i32_0 : i32, i32, i32
  }
  func.func @transform_8(%arg0: i32) -> (i32, i32, i32) {
    %c0_i32 = arith.constant 0 : i32
    %c0_i32_0 = arith.constant 0 : i32
    %c0_i32_1 = arith.constant 0 : i32
    return %arg0, %c0_i32, %c0_i32_0 : i32, i32, i32
  }
}

</mosaic_0001>

<llo_original>
// kernel: tpu_custom_call.1
$region0: #{tpu_custom_call.1}
  #allocation0 [shape = 'u32[]', space=smem, size = 0x4, offset = 0x4, fixed_abs, tag = 'smem constant byte address 0x4 - core index']
  #allocation1 [shape = 'u32[144,128]{1,0:T(1,128)}', space=vmem, size = 0x12000, scoped, tag = 'internal scratch']
  #allocation2 [shape = 'f32[2,16]{1,0:T(2,128)}', space=vmem, size = 0x400, scoped, tag = 'scratch operand']
  #allocation3 [shape = 'f32[2,16]{1,0:T(2,128)}', space=vmem, size = 0x400, scoped, tag = 'scratch operand']
  #allocation4 [shape = 'f32[1,1]{1,0:T(1,128)S(1)}', space=vmem, size = 0x200, scoped, tag = 'scoped memory for tpu_custom_call.1']
  %s0 = inlined_call_operand.vmem [shape: f32[10,2,8], index: 0, kind: input, shape index: {}]
  %s1 = inlined_call_operand.vmem [shape: f32[2,8], index: 1, kind: input, shape index: {}]
  %s2 = inlined_call_operand.vmem [shape: f32[1,16], index: 2, kind: input, shape index: {}]
  %s3 = inlined_call_operand.vmem [shape: f32[1,16], index: 3, kind: input, shape index: {}]
  %s4 = inlined_call_operand.<no memory space> [shape: f32[1,1], index: 4, kind: input, shape index: {}]
  %s5 = inlined_call_operand.vmem [shape: f32[24,64], index: 5, kind: input, shape index: {}]
  %s6 = inlined_call_operand.vmem [shape: f32[1,64], index: 6, kind: input, shape index: {}]
  %s7 = inlined_call_operand.vmem [shape: f32[10,2,8], index: 7, kind: output, shape index: {0}]
  %s8 = inlined_call_operand.hbm [shape: f32[10,2,16], index: 8, kind: output, shape index: {1}]
  %9 = xla_tuple %s7, %s8
  %s10 = sld [smem:[#allocation0]]
  $region50: #{tpu_custom_call.1} parent=0
    _
  %s12 = ssub.s32 1, %s10
  %s13 = scalar_select 0, %s12, %s10
  %v14 = vstv %s4
  %15 = vst [vmem:[#allocation4] sm:$0x1] %v14
  $region1: #{tpu_custom_call.1} parent=0
    #allocation5 [shape = 'u8[10240]{0}', space=vmem, size = 0x2800, scoped, tag = 'output window, operand 1, single buffered']
    #allocation6 [shape = 's32[1]{0}', space=sflag, size = 0x4, scoped, tag = 'scoped memory for tpu_custom_call.1']
    %16 = vsyncpa [#allocation6], 0
    // Predicated region
    $region2: #{tpu_custom_call.1} parent=1 // pred_check
      _
    $region3: #{tpu_custom_call.1} parent=1 // pred_check_branch
      %18 = sbr.rel (0) target = $region5
    $region4: #{tpu_custom_call.1} parent=1 // pred_region
      _
    $region5: #{tpu_custom_call.1} parent=1 // pred_fallthru
      _
    // Predicated region
    $region6: #{tpu_custom_call.1} parent=1 // pred_check
      _
    $region7: #{tpu_custom_call.1} parent=1 // pred_check_branch
      %20 = sbr.rel (0) target = $region9
    $region8: #{tpu_custom_call.1} parent=1 // pred_region
      _
    $region9: #{tpu_custom_call.1} parent=1 // pred_fallthru
      _
    // Predicated region
    $region10: #{tpu_custom_call.1} parent=1 // pred_check
      _
    $region11: #{tpu_custom_call.1} parent=1 // pred_check_branch
      %22 = sbr.rel (0) target = $region13
    $region12: #{tpu_custom_call.1} parent=1 // pred_region
      _
    $region13: #{tpu_custom_call.1} parent=1 // pred_fallthru
      _
    // Predicated region
    $region14: #{tpu_custom_call.1} parent=1 // pred_check
      _
    $region15: #{tpu_custom_call.1} parent=1 // pred_check_branch
      %24 = sbr.rel (0) target = $region17
    $region16: #{tpu_custom_call.1} parent=1 // pred_region
      _
    $region17: #{tpu_custom_call.1} parent=1 // pred_fallthru
      _
    // Predicated region
    $region18: #{tpu_custom_call.1} parent=1 // pred_check
      _
    $region19: #{tpu_custom_call.1} parent=1 // pred_check_branch
      %26 = sbr.rel (0) target = $region21
    $region20: #{tpu_custom_call.1} parent=1 // pred_region
      _
    $region21: #{tpu_custom_call.1} parent=1 // pred_fallthru
      _
    // Predicated region
    $region22: #{tpu_custom_call.1} parent=1 // pred_check
      _
    $region23: #{tpu_custom_call.1} parent=1 // pred_check_branch
      %28 = sbr.rel (0) target = $region25
    $region24: #{tpu_custom_call.1} parent=1 // pred_region
      _
    $region25: #{tpu_custom_call.1} parent=1 // pred_fallthru
      _
    // Predicated region
    $region26: #{tpu_custom_call.1} parent=1 // pred_check
      _
    $region27: #{tpu_custom_call.1} parent=1 // pred_check_branch
      %30 = sbr.rel (0) target = $region29
    $region28: #{tpu_custom_call.1} parent=1 // pred_region
      _
    $region29: #{tpu_custom_call.1} parent=1 // pred_fallthru
      _
    %p31 = scmp.eq.s32.totalorder 0, 0
    // Predicated region
    $region30: #{tpu_custom_call.1} parent=1 // pred_check
      %p32 = pneg %p31
    $region31: #{tpu_custom_call.1} parent=1 // pred_check_branch
      %34 = sbr.rel (%p32) target = $region33
    $region32: #{tpu_custom_call.1} parent=1 // pred_region
      %vm35 = vcmask 123904
      %36 = vst.msk [vmem:[#allocation2] sm:$0x3] %vm35, 0.0
      %37 = vst.msk [vmem:[#allocation3] sm:$0x3] %vm35, 0.0
    $region33: #{tpu_custom_call.1} parent=1 // pred_fallthru
      _
    %v38 = vld [vmem:[%s1] sm:$0x3]
    %v39 = vld [vmem:[%s2] sm:$0x1]
    %v40 = vld [vmem:[%s3] sm:$0x1]
    %v41 = vld [vmem:[#allocation4] sm:$0x1]
    %v42 = vld [vmem:[%s5] sm:$0xff]
    %v43 = vld [vmem:[%s5 + $0x8] sm:$0xff]
    %v44 = vld [vmem:[%s5 + $0x10] sm:$0xff]
    %v45 = vld [vmem:[%s6] sm:$0x1]
    %v46 = vld [vmem:[#allocation2] sm:$0x3]
    %v47 = vld [vmem:[#allocation3] sm:$0x3]
    %v49 = vlaneseq
    %v50 = vshrl.u32 %v49, 7
    %v51 = vsub.s32 0, %v50
    %v52 = vrot.slane %v39, %v51
    %v54 = vmul.f32 %v46, %v52
    %v56 = vlaneseq
    %v57 = vshrl.u32 %v56, 7
    %v58 = vsub.s32 0, %v57
    %v59 = vrot.slane %v40, %v58
    %v61 = vmul.f32 %v47, %v59
    %v62 = vadd.f32 %v54, %v61
    %vm63 = vcmask 123904
    %v64 = vsel %vm63, %v62, 0.0
    %65 = vadd.xlane.f32.xlu0 %v64
    %v66 = vpop.xlane.xlu0 %65
    %v68 = vlaneseq
    %v69 = vshrl.u32 %v68, 7
    %v70 = vsub.s32 0, %v69
    %v71 = vrot.slane %v41, %v70
    %v73 = vadd.f32 %v66, %v71
    %75 = vset.pattern.permute.xlu0 0
    %76 = vperm.xlu0 %75, %v73
    %v77 = vpop.permute.xlu0 %76
    %v79 = vadd.f32 %v77, %v38
    %vm80 = vcmask 58368
    %v81 = vsel %vm80, %v79, -inf
    %82 = vmax.xlane.f32.xlu0 %v81
    %v83 = vpop.xlane.xlu0 %82
    %v84 = vsub.f32 %v79, %v83
    %v85 = vmul.f32 %v84, 1.442695
    %v86 = vpow.pop %v85
    %v87 = vsel %vm80, %v86, 0.0
    %88 = vadd.xlane.f32.xlu0 %v87
    %v89 = vpop.xlane.xlu0 %88
    %v90 = vrcp.pop %v89
    %v91 = vmul.f32 %v86, %v90
    %v92 = vld [vmem:[%s0] sm:$0x3]
    %v93 = vmul.f32 %v91, %v92
    %95 = vrot.lane.b32.xlu0 %v46, 8
    %v96 = vpop.permute.xlu0 %95
    %vm98 = vcmask 64512
    %v99 = vsel %vm98, %v93, %v96
    %v101 = vlaneseq
    %v102 = vshrl.u32 %v101, 7
    %v103 = vsub.s32 0, %v102
    %v104 = vrot.slane %v45, %v103
    %vm106 = vcmask 195584
    %v108 = vsel %vm106, %v99, 0
    %110 = vmatprep.subr.mxu0 0.0
    %111 = vmatpush1.msra.mxu0 0.0
    %112 = vmatprep.subr.mxu0 0.0
    %113 = vmatpush1.msra.mxu0 0.0
    %114 = vmatprep.subr.mxu0 0.0
    %115 = vmatpush1.msra.mxu0 0.0
    %116 = vmatprep.subr.mxu0 0.0
    %117 = vmatpush1.msra.mxu0 0.0
    %118 = vmatprep.subr.mxu0 0.0
    %119 = vmatpush1.msra.mxu0 0.0
    %120 = vmatprep.subr.mxu0 0.0
    %121 = vmatpush1.msra.mxu0 0.0
    %122 = vmatprep.subr.mxu0 0.0
    %123 = vmatpush1.msra.mxu0 0.0
    %124 = vmatprep.subr.mxu0 0.0
    %125 = vmatpush1.msra.mxu0 0.0
    %126 = vmatprep.subr.mxu0 0.0
    %127 = vmatpush1.msra.mxu0 0.0
    %128 = vmatprep.subr.mxu0 0.0
    %129 = vmatpush1.msra.mxu0 0.0
    %130 = vmatprep.subr.mxu0 0.0
    %131 = vmatpush1.msra.mxu0 0.0
    %132 = vmatprep.subr.mxu0 0.0
    %133 = vmatpush1.msra.mxu0 0.0
    %134 = vmatprep.subr.mxu0 0.0
    %135 = vmatpush1.msra.mxu0 0.0
    %136 = vmatprep.subr.mxu0 0.0
    %v137 = vand.u32 %v44, 4294901760
    %138 = vmatpush1.msra.mxu0 %v137
    %139 = vmatprep.subr.mxu0 0.0
    %v140 = vand.u32 %v43, 4294901760
    %141 = vmatpush1.msra.mxu0 %v140
    %142 = vmatprep.subr.mxu0 0.0
    %v143 = vand.u32 %v42, 4294901760
    %144 = vmatpush1.msra.mxu0 %v143
    %145 = vmatprep.subr.mxu0 0.0
    %146 = vmatpush2.msra.mxu0 0.0
    %147 = vmatprep.subr.mxu0 0.0
    %148 = vmatpush2.msra.mxu0 0.0
    %149 = vmatprep.subr.mxu0 0.0
    %150 = vmatpush2.msra.mxu0 0.0
    %151 = vmatprep.subr.mxu0 0.0
    %152 = vmatpush2.msra.mxu0 0.0
    %153 = vmatprep.subr.mxu0 0.0
    %154 = vmatpush2.msra.mxu0 0.0
    %155 = vmatprep.subr.mxu0 0.0
    %156 = vmatpush2.msra.mxu0 0.0
    %157 = vmatprep.subr.mxu0 0.0
    %158 = vmatpush2.msra.mxu0 0.0
    %159 = vmatprep.subr.mxu0 0.0
    %160 = vmatpush2.msra.mxu0 0.0
    %161 = vmatprep.subr.mxu0 0.0
    %162 = vmatpush2.msra.mxu0 0.0
    %163 = vmatprep.subr.mxu0 0.0
    %164 = vmatpush2.msra.mxu0 0.0
    %165 = vmatprep.subr.mxu0 0.0
    %166 = vmatpush2.msra.mxu0 0.0
    %167 = vmatprep.subr.mxu0 0.0
    %168 = vmatpush2.msra.mxu0 0.0
    %169 = vmatprep.subr.mxu0 0.0
    %170 = vmatpush2.msra.mxu0 0.0
    %171 = vmatprep.subr.mxu0 0.0
    %172 = vmatpush2.msra.mxu0 0.0
    %173 = vmatprep.subr.mxu0 0.0
    %174 = vmatpush2.msra.mxu0 0.0
    %175 = vmatprep.subr.mxu0 0.0
    %176 = vmatpush2.msra.mxu0 0.0
    %177 = vmatprep.mubr.f32.mxu0 0.0
    %v178 = vand.u32 %v108, 4294901760
    %v179 = vsub.f32 %v108, %v178
    %v180 = vand.u32 %v179, 4294901760
    %v181 = vsub.f32 %v179, %v180
    %v182 = vand.u32 %v181, 4294901760
    %183 = vmatmul.mubr.f32.gmra.mxu0 %v182
    %v184 = vpop.f32.mrf.mxu0
    %v185 = vadd.f32 %v104, %v184
    %v186 = vpop.f32.mrf.mxu0
    %187 = vdwg.mxu0
    %188 = vmatprep.subr.mxu0 0.0
    %189 = vmatpush1.msra.mxu0 0.0
    %190 = vmatprep.subr.mxu0 0.0
    %191 = vmatpush1.msra.mxu0 0.0
    %192 = vmatprep.subr.mxu0 0.0
    %193 = vmatpush1.msra.mxu0 0.0
    %194 = vmatprep.subr.mxu0 0.0
    %195 = vmatpush1.msra.mxu0 0.0
    %196 = vmatprep.subr.mxu0 0.0
    %197 = vmatpush1.msra.mxu0 0.0
    %198 = vmatprep.subr.mxu0 0.0
    %199 = vmatpush1.msra.mxu0 0.0
    %200 = vmatprep.subr.mxu0 0.0
    %201 = vmatpush1.msra.mxu0 0.0
    %202 = vmatprep.subr.mxu0 0.0
    %203 = vmatpush1.msra.mxu0 0.0
    %204 = vmatprep.subr.mxu0 0.0
    %205 = vmatpush1.msra.mxu0 0.0
    %206 = vmatprep.subr.mxu0 0.0
    %207 = vmatpush1.msra.mxu0 0.0
    %208 = vmatprep.subr.mxu0 0.0
    %209 = vmatpush1.msra.mxu0 0.0
    %210 = vmatprep.subr.mxu0 0.0
    %211 = vmatpush1.msra.mxu0 0.0
    %212 = vmatprep.subr.mxu0 0.0
    %213 = vmatpush1.msra.mxu0 0.0
    %214 = vmatprep.subr.mxu0 0.0
    %v215 = vand.u32 %v44, 4294901760
    %v216 = vsub.f32 %v44, %v215
    %v217 = vand.u32 %v216, 4294901760
    %v218 = vsub.f32 %v216, %v217
    %v219 = vand.u32 %v218, 4294901760
    %220 = vmatpush1.msra.mxu0 %v219
    %221 = vmatprep.subr.mxu0 0.0
    %v222 = vand.u32 %v43, 4294901760
    %v223 = vsub.f32 %v43, %v222
    %v224 = vand.u32 %v223, 4294901760
    %v225 = vsub.f32 %v223, %v224
    %v226 = vand.u32 %v225, 4294901760
    %227 = vmatpush1.msra.mxu0 %v226
    %228 = vmatprep.subr.mxu0 0.0
    %v229 = vand.u32 %v42, 4294901760
    %v230 = vsub.f32 %v42, %v229
    %v231 = vand.u32 %v230, 4294901760
    %v232 = vsub.f32 %v230, %v231
    %v233 = vand.u32 %v232, 4294901760
    %234 = vmatpush1.msra.mxu0 %v233
    %235 = vmatprep.subr.mxu0 0.0
    %236 = vmatpush2.msra.mxu0 0.0
    %237 = vmatprep.subr.mxu0 0.0
    %238 = vmatpush2.msra.mxu0 0.0
    %239 = vmatprep.subr.mxu0 0.0
    %240 = vmatpush2.msra.mxu0 0.0
    %241 = vmatprep.subr.mxu0 0.0
    %242 = vmatpush2.msra.mxu0 0.0
    %243 = vmatprep.subr.mxu0 0.0
    %244 = vmatpush2.msra.mxu0 0.0
    %245 = vmatprep.subr.mxu0 0.0
    %246 = vmatpush2.msra.mxu0 0.0
    %247 = vmatprep.subr.mxu0 0.0
    %248 = vmatpush2.msra.mxu0 0.0
    %249 = vmatprep.subr.mxu0 0.0
    %250 = vmatpush2.msra.mxu0 0.0
    %251 = vmatprep.subr.mxu0 0.0
    %252 = vmatpush2.msra.mxu0 0.0
    %253 = vmatprep.subr.mxu0 0.0
    %254 = vmatpush2.msra.mxu0 0.0
    %255 = vmatprep.subr.mxu0 0.0
    %256 = vmatpush2.msra.mxu0 0.0
    %257 = vmatprep.subr.mxu0 0.0
    %258 = vmatpush2.msra.mxu0 0.0
    %259 = vmatprep.subr.mxu0 0.0
    %260 = vmatpush2.msra.mxu0 0.0
    %261 = vmatprep.subr.mxu0 0.0
    %262 = vmatpush2.msra.mxu0 0.0
    %263 = vmatprep.subr.mxu0 0.0
    %264 = vmatpush2.msra.mxu0 0.0
    %265 = vmatprep.subr.mxu0 0.0
    %266 = vmatpush2.msra.mxu0 0.0
    %267 = vmatprep.mubr.f32.mxu0 0.0
    %v268 = vand.u32 %v108, 4294901760
    %269 = vmatmul.mubr.f32.gmra.mxu0 %v268
    %v270 = vpop.f32.mrf.mxu0
    %v271 = vadd.f32 %v185, %v270
    %v272 = vpop.f32.mrf.mxu0
    %273 = vdwg.mxu0
    %274 = vmatprep.subr.mxu0 0.0
    %275 = vmatpush1.msra.mxu0 0.0
    %276 = vmatprep.subr.mxu0 0.0
    %277 = vmatpush1.msra.mxu0 0.0
    %278 = vmatprep.subr.mxu0 0.0
    %279 = vmatpush1.msra.mxu0 0.0
    %280 = vmatprep.subr.mxu0 0.0
    %281 = vmatpush1.msra.mxu0 0.0
    %282 = vmatprep.subr.mxu0 0.0
    %283 = vmatpush1.msra.mxu0 0.0
    %284 = vmatprep.subr.mxu0 0.0
    %285 = vmatpush1.msra.mxu0 0.0
    %286 = vmatprep.subr.mxu0 0.0
    %287 = vmatpush1.msra.mxu0 0.0
    %288 = vmatprep.subr.mxu0 0.0
    %289 = vmatpush1.msra.mxu0 0.0
    %290 = vmatprep.subr.mxu0 0.0
    %291 = vmatpush1.msra.mxu0 0.0
    %292 = vmatprep.subr.mxu0 0.0
    %293 = vmatpush1.msra.mxu0 0.0
    %294 = vmatprep.subr.mxu0 0.0
    %295 = vmatpush1.msra.mxu0 0.0
    %296 = vmatprep.subr.mxu0 0.0
    %297 = vmatpush1.msra.mxu0 0.0
    %298 = vmatprep.subr.mxu0 0.0
    %299 = vmatpush1.msra.mxu0 0.0
    %300 = vmatprep.subr.mxu0 0.0
    %v301 = vand.u32 %v44, 4294901760
    %v302 = vsub.f32 %v44, %v301
    %303 = vmatpush1.msra.mxu0 %v302
    %304 = vmatprep.subr.mxu0 0.0
    %v305 = vand.u32 %v43, 4294901760
    %v306 = vsub.f32 %v43, %v305
    %307 = vmatpush1.msra.mxu0 %v306
    %308 = vmatprep.subr.mxu0 0.0
    %v309 = vand.u32 %v42, 4294901760
    %v310 = vsub.f32 %v42, %v309
    %311 = vmatpush1.msra.mxu0 %v310
    %312 = vmatprep.subr.mxu0 0.0
    %313 = vmatpush2.msra.mxu0 0.0
    %314 = vmatprep.subr.mxu0 0.0
    %315 = vmatpush2.msra.mxu0 0.0
    %316 = vmatprep.subr.mxu0 0.0
    %317 = vmatpush2.msra.mxu0 0.0
    %318 = vmatprep.subr.mxu0 0.0
    %319 = vmatpush2.msra.mxu0 0.0
    %320 = vmatprep.subr.mxu0 0.0
    %321 = vmatpush2.msra.mxu0 0.0
    %322 = vmatprep.subr.mxu0 0.0
    %323 = vmatpush2.msra.mxu0 0.0
    %324 = vmatprep.subr.mxu0 0.0
    %325 = vmatpush2.msra.mxu0 0.0
    %326 = vmatprep.subr.mxu0 0.0
    %327 = vmatpush2.msra.mxu0 0.0
    %328 = vmatprep.subr.mxu0 0.0
    %329 = vmatpush2.msra.mxu0 0.0
    %330 = vmatprep.subr.mxu0 0.0
    %331 = vmatpush2.msra.mxu0 0.0
    %332 = vmatprep.subr.mxu0 0.0
    %333 = vmatpush2.msra.mxu0 0.0
    %334 = vmatprep.subr.mxu0 0.0
    %335 = vmatpush2.msra.mxu0 0.0
    %336 = vmatprep.subr.mxu0 0.0
    %337 = vmatpush2.msra.mxu0 0.0
    %338 = vmatprep.subr.mxu0 0.0
    %339 = vmatpush2.msra.mxu0 0.0
    %340 = vmatprep.subr.mxu0 0.0
    %341 = vmatpush2.msra.mxu0 0.0
    %342 = vmatprep.subr.mxu0 0.0
    %343 = vmatpush2.msra.mxu0 0.0
    %344 = vmatprep.mubr.f32.mxu0 0.0
    %v345 = vand.u32 %v108, 4294901760
    %v346 = vsub.f32 %v108, %v345
    %347 = vmatmul.mubr.f32.gmra.mxu0 %v346
    %v348 = vpop.f32.mrf.mxu0
    %v349 = vadd.f32 %v271, %v348
    %v350 = vpop.f32.mrf.mxu0
    %351 = vdwg.mxu0
    %352 = vmatprep.subr.mxu0 0.0
    %353 = vmatpush1.msra.mxu0 0.0
    %354 = vmatprep.subr.mxu0 0.0
    %355 = vmatpush1.msra.mxu0 0.0
    %356 = vmatprep.subr.mxu0 0.0
    %357 = vmatpush1.msra.mxu0 0.0
    %358 = vmatprep.subr.mxu0 0.0
    %359 = vmatpush1.msra.mxu0 0.0
    %360 = vmatprep.subr.mxu0 0.0
    %361 = vmatpush1.msra.mxu0 0.0
    %362 = vmatprep.subr.mxu0 0.0
    %363 = vmatpush1.msra.mxu0 0.0
    %364 = vmatprep.subr.mxu0 0.0
    %365 = vmatpush1.msra.mxu0 0.0
    %366 = vmatprep.subr.mxu0 0.0
    %367 = vmatpush1.msra.mxu0 0.0
    %368 = vmatprep.subr.mxu0 0.0
    %369 = vmatpush1.msra.mxu0 0.0
    %370 = vmatprep.subr.mxu0 0.0
    %371 = vmatpush1.msra.mxu0 0.0
    %372 = vmatprep.subr.mxu0 0.0
    %373 = vmatpush1.msra.mxu0 0.0
    %374 = vmatprep.subr.mxu0 0.0
    %375 = vmatpush1.msra.mxu0 0.0
    %376 = vmatprep.subr.mxu0 0.0
    %377 = vmatpush1.msra.mxu0 0.0
    %378 = vmatprep.subr.mxu0 0.0
    %v379 = vand.u32 %v44, 4294901760
    %380 = vmatpush1.msra.mxu0 %v379
    %381 = vmatprep.subr.mxu0 0.0
    %v382 = vand.u32 %v43, 4294901760
    %383 = vmatpush1.msra.mxu0 %v382
    %384 = vmatprep.subr.mxu0 0.0
    %v385 = vand.u32 %v42, 4294901760
    %386 = vmatpush1.msra.mxu0 %v385
    %387 = vmatprep.subr.mxu0 0.0
    %388 = vmatpush2.msra.mxu0 0.0
    %389 = vmatprep.subr.mxu0 0.0
    %390 = vmatpush2.msra.mxu0 0.0
    %391 = vmatprep.subr.mxu0 0.0
    %392 = vmatpush2.msra.mxu0 0.0
    %393 = vmatprep.subr.mxu0 0.0
    %394 = vmatpush2.msra.mxu0 0.0
    %395 = vmatprep.subr.mxu0 0.0
    %396 = vmatpush2.msra.mxu0 0.0
    %397 = vmatprep.subr.mxu0 0.0
    %398 = vmatpush2.msra.mxu0 0.0
    %399 = vmatprep.subr.mxu0 0.0
    %400 = vmatpush2.msra.mxu0 0.0
    %401 = vmatprep.subr.mxu0 0.0
    %402 = vmatpush2.msra.mxu0 0.0
    %403 = vmatprep.subr.mxu0 0.0
    %404 = vmatpush2.msra.mxu0 0.0
    %405 = vmatprep.subr.mxu0 0.0
    %406 = vmatpush2.msra.mxu0 0.0
    %407 = vmatprep.subr.mxu0 0.0
    %408 = vmatpush2.msra.mxu0 0.0
    %409 = vmatprep.subr.mxu0 0.0
    %410 = vmatpush2.msra.mxu0 0.0
    %411 = vmatprep.subr.mxu0 0.0
    %412 = vmatpush2.msra.mxu0 0.0
    %413 = vmatprep.subr.mxu0 0.0
    %414 = vmatpush2.msra.mxu0 0.0
    %415 = vmatprep.subr.mxu0 0.0
    %416 = vmatpush2.msra.mxu0 0.0
    %417 = vmatprep.subr.mxu0 0.0
    %418 = vmatpush2.msra.mxu0 0.0
    %419 = vmatprep.mubr.f32.mxu0 0.0
    %v420 = vand.u32 %v108, 4294901760
    %v421 = vsub.f32 %v108, %v420
    %v422 = vand.u32 %v421, 4294901760
    %423 = vmatmul.mubr.f32.gmra.mxu0 %v422
    %v424 = vpop.f32.mrf.mxu0
    %v425 = vadd.f32 %v349, %v424
    %v426 = vpop.f32.mrf.mxu0
    %427 = vdwg.mxu0
    %428 = vmatprep.subr.mxu0 0.0
    %429 = vmatpush1.msra.mxu0 0.0
    %430 = vmatprep.subr.mxu0 0.0
    %431 = vmatpush1.msra.mxu0 0.0
    %432 = vmatprep.subr.mxu0 0.0
    %433 = vmatpush1.msra.mxu0 0.0
    %434 = vmatprep.subr.mxu0 0.0
    %435 = vmatpush1.msra.mxu0 0.0
    %436 = vmatprep.subr.mxu0 0.0
    %437 = vmatpush1.msra.mxu0 0.0
    %438 = vmatprep.subr.mxu0 0.0
    %439 = vmatpush1.msra.mxu0 0.0
    %440 = vmatprep.subr.mxu0 0.0
    %441 = vmatpush1.msra.mxu0 0.0
    %442 = vmatprep.subr.mxu0 0.0
    %443 = vmatpush1.msra.mxu0 0.0
    %444 = vmatprep.subr.mxu0 0.0
    %445 = vmatpush1.msra.mxu0 0.0
    %446 = vmatprep.subr.mxu0 0.0
    %447 = vmatpush1.msra.mxu0 0.0
    %448 = vmatprep.subr.mxu0 0.0
    %449 = vmatpush1.msra.mxu0 0.0
    %450 = vmatprep.subr.mxu0 0.0
    %451 = vmatpush1.msra.mxu0 0.0
    %452 = vmatprep.subr.mxu0 0.0
    %453 = vmatpush1.msra.mxu0 0.0
    %454 = vmatprep.subr.mxu0 0.0
    %v455 = vand.u32 %v44, 4294901760
    %v456 = vsub.f32 %v44, %v455
    %v457 = vand.u32 %v456, 4294901760
    %458 = vmatpush1.msra.mxu0 %v457
    %459 = vmatprep.subr.mxu0 0.0
    %v460 = vand.u32 %v43, 4294901760
    %v461 = vsub.f32 %v43, %v460
    %v462 = vand.u32 %v461, 4294901760
    %463 = vmatpush1.msra.mxu0 %v462
    %464 = vmatprep.subr.mxu0 0.0
    %v465 = vand.u32 %v42, 4294901760
    %v466 = vsub.f32 %v42, %v465
    %v467 = vand.u32 %v466, 4294901760
    %468 = vmatpush1.msra.mxu0 %v467
    %469 = vmatprep.subr.mxu0 0.0
    %470 = vmatpush2.msra.mxu0 0.0
    %471 = vmatprep.subr.mxu0 0.0
    %472 = vmatpush2.msra.mxu0 0.0
    %473 = vmatprep.subr.mxu0 0.0
    %474 = vmatpush2.msra.mxu0 0.0
    %475 = vmatprep.subr.mxu0 0.0
    %476 = vmatpush2.msra.mxu0 0.0
    %477 = vmatprep.subr.mxu0 0.0
    %478 = vmatpush2.msra.mxu0 0.0
    %479 = vmatprep.subr.mxu0 0.0
    %480 = vmatpush2.msra.mxu0 0.0
    %481 = vmatprep.subr.mxu0 0.0
    %482 = vmatpush2.msra.mxu0 0.0
    %483 = vmatprep.subr.mxu0 0.0
    %484 = vmatpush2.msra.mxu0 0.0
    %485 = vmatprep.subr.mxu0 0.0
    %486 = vmatpush2.msra.mxu0 0.0
    %487 = vmatprep.subr.mxu0 0.0
    %488 = vmatpush2.msra.mxu0 0.0
    %489 = vmatprep.subr.mxu0 0.0
    %490 = vmatpush2.msra.mxu0 0.0
    %491 = vmatprep.subr.mxu0 0.0
    %492 = vmatpush2.msra.mxu0 0.0
    %493 = vmatprep.subr.mxu0 0.0
    %494 = vmatpush2.msra.mxu0 0.0
    %495 = vmatprep.subr.mxu0 0.0
    %496 = vmatpush2.msra.mxu0 0.0
    %497 = vmatprep.subr.mxu0 0.0
    %498 = vmatpush2.msra.mxu0 0.0
    %499 = vmatprep.subr.mxu0 0.0
    %500 = vmatpush2.msra.mxu0 0.0
    %501 = vmatprep.mubr.f32.mxu0 0.0
    %v502 = vand.u32 %v108, 4294901760
    %503 = vmatmul.mubr.f32.gmra.mxu0 %v502
    %v504 = vpop.f32.mrf.mxu0
    %v505 = vadd.f32 %v425, %v504
    %v506 = vpop.f32.mrf.mxu0
    %507 = vdwg.mxu0
    %508 = vmatprep.subr.mxu0 0.0
    %509 = vmatpush1.msra.mxu0 0.0
    %510 = vmatprep.subr.mxu0 0.0
    %511 = vmatpush1.msra.mxu0 0.0
    %512 = vmatprep.subr.mxu0 0.0
    %513 = vmatpush1.msra.mxu0 0.0
    %514 = vmatprep.subr.mxu0 0.0
    %515 = vmatpush1.msra.mxu0 0.0
    %516 = vmatprep.subr.mxu0 0.0
    %517 = vmatpush1.msra.mxu0 0.0
    %518 = vmatprep.subr.mxu0 0.0
    %519 = vmatpush1.msra.mxu0 0.0
    %520 = vmatprep.subr.mxu0 0.0
    %521 = vmatpush1.msra.mxu0 0.0
    %522 = vmatprep.subr.mxu0 0.0
    %523 = vmatpush1.msra.mxu0 0.0
    %524 = vmatprep.subr.mxu0 0.0
    %525 = vmatpush1.msra.mxu0 0.0
    %526 = vmatprep.subr.mxu0 0.0
    %527 = vmatpush1.msra.mxu0 0.0
    %528 = vmatprep.subr.mxu0 0.0
    %529 = vmatpush1.msra.mxu0 0.0
    %530 = vmatprep.subr.mxu0 0.0
    %531 = vmatpush1.msra.mxu0 0.0
    %532 = vmatprep.subr.mxu0 0.0
    %533 = vmatpush1.msra.mxu0 0.0
    %534 = vmatprep.subr.mxu0 0.0
    %v535 = vand.u32 %v44, 4294901760
    %536 = vmatpush1.msra.mxu0 %v535
    %537 = vmatprep.subr.mxu0 0.0
    %v538 = vand.u32 %v43, 4294901760
    %539 = vmatpush1.msra.mxu0 %v538
    %540 = vmatprep.subr.mxu0 0.0
    %v541 = vand.u32 %v42, 4294901760
    %542 = vmatpush1.msra.mxu0 %v541
    %543 = vmatprep.subr.mxu0 0.0
    %544 = vmatpush2.msra.mxu0 0.0
    %545 = vmatprep.subr.mxu0 0.0
    %546 = vmatpush2.msra.mxu0 0.0
    %547 = vmatprep.subr.mxu0 0.0
    %548 = vmatpush2.msra.mxu0 0.0
    %549 = vmatprep.subr.mxu0 0.0
    %550 = vmatpush2.msra.mxu0 0.0
    %551 = vmatprep.subr.mxu0 0.0
    %552 = vmatpush2.msra.mxu0 0.0
    %553 = vmatprep.subr.mxu0 0.0
    %554 = vmatpush2.msra.mxu0 0.0
    %555 = vmatprep.subr.mxu0 0.0
    %556 = vmatpush2.msra.mxu0 0.0
    %557 = vmatprep.subr.mxu0 0.0
    %558 = vmatpush2.msra.mxu0 0.0
    %559 = vmatprep.subr.mxu0 0.0
    %560 = vmatpush2.msra.mxu0 0.0
    %561 = vmatprep.subr.mxu0 0.0
    %562 = vmatpush2.msra.mxu0 0.0
    %563 = vmatprep.subr.mxu0 0.0
    %564 = vmatpush2.msra.mxu0 0.0
    %565 = vmatprep.subr.mxu0 0.0
    %566 = vmatpush2.msra.mxu0 0.0
    %567 = vmatprep.subr.mxu0 0.0
    %568 = vmatpush2.msra.mxu0 0.0
    %569 = vmatprep.subr.mxu0 0.0
    %570 = vmatpush2.msra.mxu0 0.0
    %571 = vmatprep.subr.mxu0 0.0
    %572 = vmatpush2.msra.mxu0 0.0
    %573 = vmatprep.subr.mxu0 0.0
    %574 = vmatpush2.msra.mxu0 0.0
    %575 = vmatprep.mubr.f32.mxu0 0.0
    %v576 = vand.u32 %v108, 4294901760
    %577 = vmatmul.mubr.f32.gmra.mxu0 %v576
    %v578 = vpop.f32.mrf.mxu0
    %v579 = vadd.f32 %v505, %v578
    %v580 = vpop.f32.mrf.mxu0
    %581 = vdwg.mxu0
    %v582 = vxor.u32 %v579, 2147483648
    %v583 = vmul.f32 %v582, 1.442695
    %v584 = vpow.pop %v583
    %v585 = vadd.f32 %v584, 1.0
    %v586 = vrcp.pop %v585
    %v587 = vmul.f32 1.0, %v586
    %v588 = vtanh.pop %v579
    %590 = vrot.lane.b32.xlu0 %v47, 16
    %v591 = vpop.permute.xlu0 %590
    %v593 = vmul.f32 %v587, %v591
    %595 = vrot.lane.b32.xlu0 %v588, 96
    %v596 = vpop.permute.xlu0 %595
    %v598 = vmul.f32 %v587, %v596
    %600 = vrot.lane.b32.xlu0 %v598, 16
    %v601 = vpop.permute.xlu0 %600
    %v603 = vadd.f32 %v593, %v601
    %v604 = vtanh.pop %v603
    %606 = vrot.lane.b32.xlu0 %v604, 32
    %v607 = vpop.permute.xlu0 %606
    %v609 = vmul.f32 %v587, %v607
    %610 = vst.msk [vmem:[%s7] sm:$0x3] %vm80, %v93
    %612 = vrot.lane.b32.xlu0 %v609, 80
    %v613 = vpop.permute.xlu0 %612
    %615 = vst.msk [vmem:[#allocation5] sm:$0x3] %vm63, %v613
    %616 = vrot.lane.b32.xlu0 %v52, 48
    %v617 = vpop.permute.xlu0 %616
    %v619 = vmul.f32 %v609, %v617
    %620 = vrot.lane.b32.xlu0 %v59, 16
    %v621 = vpop.permute.xlu0 %620
    %v623 = vmul.f32 %v603, %v621
    %625 = vrot.lane.b32.xlu0 %v623, 32
    %v626 = vpop.permute.xlu0 %625
    %v628 = vadd.f32 %v619, %v626
    %630 = vrot.lane.b32.xlu0 %v628, 80
    %v631 = vpop.permute.xlu0 %630
    %v633 = vsel %vm63, %v631, 0.0
    %634 = vadd.xlane.f32.xlu0 %v633
    %v635 = vpop.xlane.xlu0 %634
    %v636 = vadd.f32 %v635, %v71
    %638 = vset.pattern.permute.xlu0 0
    %639 = vperm.xlu0 %638, %v636
    %v640 = vpop.permute.xlu0 %639
    %v642 = vadd.f32 %v640, %v38
    %v643 = vsel %vm80, %v642, -inf
    %644 = vmax.xlane.f32.xlu0 %v643
    %v645 = vpop.xlane.xlu0 %644
    %v646 = vsub.f32 %v642, %v645
    %v647 = vmul.f32 %v646, 1.442695
    %v648 = vpow.pop %v647
    %v649 = vsel %vm80, %v648, 0.0
    %650 = vadd.xlane.f32.xlu0 %v649
    %v651 = vpop.xlane.xlu0 %650
    %v652 = vrcp.pop %v651
    %v653 = vmul.f32 %v648, %v652
    %s654 = scalar_lea.vmem %s0, 2
    %v655 = vld [vmem:[%s654] sm:$0x3]
    %v656 = vmul.f32 %v653, %v655
    %657 = vrot.lane.b32.xlu0 %v609, 88
    %v658 = vpop.permute.xlu0 %657
    %v660 = vsel %vm98, %v656, %v658
    %v662 = vsel %vm106, %v660, 0
    %664 = vmatprep.subr.mxu0 0.0
    %665 = vmatpush1.msra.mxu0 0.0
    %666 = vmatprep.subr.mxu0 0.0
    %667 = vmatpush1.msra.mxu0 0.0
    %668 = vmatprep.subr.mxu0 0.0
    %669 = vmatpush1.msra.mxu0 0.0
    %670 = vmatprep.subr.mxu0 0.0
    %671 = vmatpush1.msra.mxu0 0.0
    %672 = vmatprep.subr.mxu0 0.0
    %673 = vmatpush1.msra.mxu0 0.0
    %674 = vmatprep.subr.mxu0 0.0
    %675 = vmatpush1.msra.mxu0 0.0
    %676 = vmatprep.subr.mxu0 0.0
    %677 = vmatpush1.msra.mxu0 0.0
    %678 = vmatprep.subr.mxu0 0.0
    %679 = vmatpush1.msra.mxu0 0.0
    %680 = vmatprep.subr.mxu0 0.0
    %681 = vmatpush1.msra.mxu0 0.0
    %682 = vmatprep.subr.mxu0 0.0
    %683 = vmatpush1.msra.mxu0 0.0
    %684 = vmatprep.subr.mxu0 0.0
    %685 = vmatpush1.msra.mxu0 0.0
    %686 = vmatprep.subr.mxu0 0.0
    %687 = vmatpush1.msra.mxu0 0.0
    %688 = vmatprep.subr.mxu0 0.0
    %689 = vmatpush1.msra.mxu0 0.0
    %690 = vmatprep.subr.mxu0 0.0
    %v691 = vand.u32 %v44, 4294901760
    %692 = vmatpush1.msra.mxu0 %v691
    %693 = vmatprep.subr.mxu0 0.0
    %v694 = vand.u32 %v43, 4294901760
    %695 = vmatpush1.msra.mxu0 %v694
    %696 = vmatprep.subr.mxu0 0.0
    %v697 = vand.u32 %v42, 4294901760
    %698 = vmatpush1.msra.mxu0 %v697
    %699 = vmatprep.subr.mxu0 0.0
    %700 = vmatpush2.msra.mxu0 0.0
    %701 = vmatprep.subr.mxu0 0.0
    %702 = vmatpush2.msra.mxu0 0.0
    %703 = vmatprep.subr.mxu0 0.0
    %704 = vmatpush2.msra.mxu0 0.0
    %705 = vmatprep.subr.mxu0 0.0
    %706 = vmatpush2.msra.mxu0 0.0
    %707 = vmatprep.subr.mxu0 0.0
    %708 = vmatpush2.msra.mxu0 0.0
    %709 = vmatprep.subr.mxu0 0.0
    %710 = vmatpush2.msra.mxu0 0.0
    %711 = vmatprep.subr.mxu0 0.0
    %712 = vmatpush2.msra.mxu0 0.0
    %713 = vmatprep.subr.mxu0 0.0
    %714 = vmatpush2.msra.mxu0 0.0
    %715 = vmatprep.subr.mxu0 0.0
    %716 = vmatpush2.msra.mxu0 0.0
    %717 = vmatprep.subr.mxu0 0.0
    %718 = vmatpush2.msra.mxu0 0.0
    %719 = vmatprep.subr.mxu0 0.0
    %720 = vmatpush2.msra.mxu0 0.0
    %721 = vmatprep.subr.mxu0 0.0
    %722 = vmatpush2.msra.mxu0 0.0
    %723 = vmatprep.subr.mxu0 0.0
    %724 = vmatpush2.msra.mxu0 0.0
    %725 = vmatprep.subr.mxu0 0.0
    %726 = vmatpush2.msra.mxu0 0.0
    %727 = vmatprep.subr.mxu0 0.0
    %728 = vmatpush2.msra.mxu0 0.0
    %729 = vmatprep.subr.mxu0 0.0
    %730 = vmatpush2.msra.mxu0 0.0
    %731 = vmatprep.mubr.f32.mxu0 0.0
    %v732 = vand.u32 %v662, 4294901760
    %v733 = vsub.f32 %v662, %v732
    %v734 = vand.u32 %v733, 4294901760
    %v735 = vsub.f32 %v733, %v734
    %v736 = vand.u32 %v735, 4294901760
    %737 = vmatmul.mubr.f32.gmra.mxu0 %v736
    %v738 = vpop.f32.mrf.mxu0
    %v739 = vadd.f32 %v104, %v738
    %v740 = vpop.f32.mrf.mxu0
    %741 = vdwg.mxu0
    %742 = vmatprep.subr.mxu0 0.0
    %743 = vmatpush1.msra.mxu0 0.0
    %744 = vmatprep.subr.mxu0 0.0
    %745 = vmatpush1.msra.mxu0 0.0
    %746 = vmatprep.subr.mxu0 0.0
    %747 = vmatpush1.msra.mxu0 0.0
    %748 = vmatprep.subr.mxu0 0.0
    %749 = vmatpush1.msra.mxu0 0.0
    %750 = vmatprep.subr.mxu0 0.0
    %751 = vmatpush1.msra.mxu0 0.0
    %752 = vmatprep.subr.mxu0 0.0
    %753 = vmatpush1.msra.mxu0 0.0
    %754 = vmatprep.subr.mxu0 0.0
    %755 = vmatpush1.msra.mxu0 0.0
    %756 = vmatprep.subr.mxu0 0.0
    %757 = vmatpush1.msra.mxu0 0.0
    %758 = vmatprep.subr.mxu0 0.0
    %759 = vmatpush1.msra.mxu0 0.0
    %760 = vmatprep.subr.mxu0 0.0
    %761 = vmatpush1.msra.mxu0 0.0
    %762 = vmatprep.subr.mxu0 0.0
    %763 = vmatpush1.msra.mxu0 0.0
    %764 = vmatprep.subr.mxu0 0.0
    %765 = vmatpush1.msra.mxu0 0.0
    %766 = vmatprep.subr.mxu0 0.0
    %767 = vmatpush1.msra.mxu0 0.0
    %768 = vmatprep.subr.mxu0 0.0
    %v769 = vand.u32 %v44, 4294901760
    %v770 = vsub.f32 %v44, %v769
    %v771 = vand.u32 %v770, 4294901760
    %v772 = vsub.f32 %v770, %v771
    %v773 = vand.u32 %v772, 4294901760
    %774 = vmatpush1.msra.mxu0 %v773
    %775 = vmatprep.subr.mxu0 0.0
    %v776 = vand.u32 %v43, 4294901760
    %v777 = vsub.f32 %v43, %v776
    %v778 = vand.u32 %v777, 4294901760
    %v779 = vsub.f32 %v777, %v778
    %v780 = vand.u32 %v779, 4294901760
    %781 = vmatpush1.msra.mxu0 %v780
    %782 = vmatprep.subr.mxu0 0.0
    %v783 = vand.u32 %v42, 4294901760
    %v784 = vsub.f32 %v42, %v783
    %v785 = vand.u32 %v784, 4294901760
    %v786 = vsub.f32 %v784, %v785
    %v787 = vand.u32 %v786, 4294901760
    %788 = vmatpush1.msra.mxu0 %v787
    %789 = vmatprep.subr.mxu0 0.0
    %790 = vmatpush2.msra.mxu0 0.0
    %791 = vmatprep.subr.mxu0 0.0
    %792 = vmatpush2.msra.mxu0 0.0
    %793 = vmatprep.subr.mxu0 0.0
    %794 = vmatpush2.msra.mxu0 0.0
    %795 = vmatprep.subr.mxu0 0.0
    %796 = vmatpush2.msra.mxu0 0.0
    %797 = vmatprep.subr.mxu0 0.0
    %798 = vmatpush2.msra.mxu0 0.0
    %799 = vmatprep.subr.mxu0 0.0
    %800 = vmatpush2.msra.mxu0 0.0
    %801 = vmatprep.subr.mxu0 0.0
    %802 = vmatpush2.msra.mxu0 0.0
    %803 = vmatprep.subr.mxu0 0.0
    %804 = vmatpush2.msra.mxu0 0.0
    %805 = vmatprep.subr.mxu0 0.0
    %806 = vmatpush2.msra.mxu0 0.0
    %807 = vmatprep.subr.mxu0 0.0
    %808 = vmatpush2.msra.mxu0 0.0
    %809 = vmatprep.subr.mxu0 0.0
    %810 = vmatpush2.msra.mxu0 0.0
    %811 = vmatprep.subr.mxu0 0.0
    %812 = vmatpush2.msra.mxu0 0.0
    %813 = vmatprep.subr.mxu0 0.0
    %814 = vmatpush2.msra.mxu0 0.0
    %815 = vmatprep.subr.mxu0 0.0
    %816 = vmatpush2.msra.mxu0 0.0
    %817 = vmatprep.subr.mxu0 0.0
    %818 = vmatpush2.msra.mxu0 0.0
    %819 = vmatprep.subr.mxu0 0.0
    %820 = vmatpush2.msra.mxu0 0.0
    %821 = vmatprep.mubr.f32.mxu0 0.0
    %v822 = vand.u32 %v662, 4294901760
    %823 = vmatmul.mubr.f32.gmra.mxu0 %v822
    %v824 = vpop.f32.mrf.mxu0
    %v825 = vadd.f32 %v739, %v824
    %v826 = vpop.f32.mrf.mxu0
    %827 = vdwg.mxu0
    %828 = vmatprep.subr.mxu0 0.0
    %829 = vmatpush1.msra.mxu0 0.0
    %830 = vmatprep.subr.mxu0 0.0
    %831 = vmatpush1.msra.mxu0 0.0
    %832 = vmatprep.subr.mxu0 0.0
    %833 = vmatpush1.msra.mxu0 0.0
    %834 = vmatprep.subr.mxu0 0.0
    %835 = vmatpush1.msra.mxu0 0.0
    %836 = vmatprep.subr.mxu0 0.0
    %837 = vmatpush1.msra.mxu0 0.0
    %838 = vmatprep.subr.mxu0 0.0
    %839 = vmatpush1.msra.mxu0 0.0
    %840 = vmatprep.subr.mxu0 0.0
    %841 = vmatpush1.msra.mxu0 0.0
    %842 = vmatprep.subr.mxu0 0.0
    %843 = vmatpush1.msra.mxu0 0.0
    %844 = vmatprep.subr.mxu0 0.0
    %845 = vmatpush1.msra.mxu0 0.0
    %846 = vmatprep.subr.mxu0 0.0
    %847 = vmatpush1.msra.mxu0 0.0
    %848 = vmatprep.subr.mxu0 0.0
    %849 = vmatpush1.msra.mxu0 0.0
    %850 = vmatprep.subr.mxu0 0.0
    %851 = vmatpush1.msra.mxu0 0.0
    %852 = vmatprep.subr.mxu0 0.0
    %853 = vmatpush1.msra.mxu0 0.0
    %854 = vmatprep.subr.mxu0 0.0
    %v855 = vand.u32 %v44, 4294901760
    %v856 = vsub.f32 %v44, %v855
    %857 = vmatpush1.msra.mxu0 %v856
    %858 = vmatprep.subr.mxu0 0.0
    %v859 = vand.u32 %v43, 4294901760
    %v860 = vsub.f32 %v43, %v859
    %861 = vmatpush1.msra.mxu0 %v860
    %862 = vmatprep.subr.mxu0 0.0
    %v863 = vand.u32 %v42, 4294901760
    %v864 = vsub.f32 %v42, %v863
    %865 = vmatpush1.msra.mxu0 %v864
    %866 = vmatprep.subr.mxu0 0.0
    %867 = vmatpush2.msra.mxu0 0.0
    %868 = vmatprep.subr.mxu0 0.0
    %869 = vmatpush2.msra.mxu0 0.0
    %870 = vmatprep.subr.mxu0 0.0
    %871 = vmatpush2.msra.mxu0 0.0
    %872 = vmatprep.subr.mxu0 0.0
    %873 = vmatpush2.msra.mxu0 0.0
    %874 = vmatprep.subr.mxu0 0.0
    %875 = vmatpush2.msra.mxu0 0.0
    %876 = vmatprep.subr.mxu0 0.0
    %877 = vmatpush2.msra.mxu0 0.0
    %878 = vmatprep.subr.mxu0 0.0
    %879 = vmatpush2.msra.mxu0 0.0
    %880 = vmatprep.subr.mxu0 0.0
    %881 = vmatpush2.msra.mxu0 0.0
    %882 = vmatprep.subr.mxu0 0.0
    %883 = vmatpush2.msra.mxu0 0.0
    %884 = vmatprep.subr.mxu0 0.0
    %885 = vmatpush2.msra.mxu0 0.0
    %886 = vmatprep.subr.mxu0 0.0
    %887 = vmatpush2.msra.mxu0 0.0
    %888 = vmatprep.subr.mxu0 0.0
    %889 = vmatpush2.msra.mxu0 0.0
    %890 = vmatprep.subr.mxu0 0.0
    %891 = vmatpush2.msra.mxu0 0.0
    %892 = vmatprep.subr.mxu0 0.0
    %893 = vmatpush2.msra.mxu0 0.0
    %894 = vmatprep.subr.mxu0 0.0
    %895 = vmatpush2.msra.mxu0 0.0
    %896 = vmatprep.subr.mxu0 0.0
    %897 = vmatpush2.msra.mxu0 0.0
    %898 = vmatprep.mubr.f32.mxu0 0.0
    %v899 = vand.u32 %v662, 4294901760
    %v900 = vsub.f32 %v662, %v899
    %901 = vmatmul.mubr.f32.gmra.mxu0 %v900
    %v902 = vpop.f32.mrf.mxu0
    %v903 = vadd.f32 %v825, %v902
    %v904 = vpop.f32.mrf.mxu0
    %905 = vdwg.mxu0
    %906 = vmatprep.subr.mxu0 0.0
    %907 = vmatpush1.msra.mxu0 0.0
    %908 = vmatprep.subr.mxu0 0.0
    %909 = vmatpush1.msra.mxu0 0.0
    %910 = vmatprep.subr.mxu0 0.0
    %911 = vmatpush1.msra.mxu0 0.0
    %912 = vmatprep.subr.mxu0 0.0
    %913 = vmatpush1.msra.mxu0 0.0
    %914 = vmatprep.subr.mxu0 0.0
    %915 = vmatpush1.msra.mxu0 0.0
    %916 = vmatprep.subr.mxu0 0.0
    %917 = vmatpush1.msra.mxu0 0.0
    %918 = vmatprep.subr.mxu0 0.0
    %919 = vmatpush1.msra.mxu0 0.0
    %920 = vmatprep.subr.mxu0 0.0
    %921 = vmatpush1.msra.mxu0 0.0
    %922 = vmatprep.subr.mxu0 0.0
    %923 = vmatpush1.msra.mxu0 0.0
    %924 = vmatprep.subr.mxu0 0.0
    %925 = vmatpush1.msra.mxu0 0.0
    %926 = vmatprep.subr.mxu0 0.0
    %927 = vmatpush1.msra.mxu0 0.0
    %928 = vmatprep.subr.mxu0 0.0
    %929 = vmatpush1.msra.mxu0 0.0
    %930 = vmatprep.subr.mxu0 0.0
    %931 = vmatpush1.msra.mxu0 0.0
    %932 = vmatprep.subr.mxu0 0.0
    %v933 = vand.u32 %v44, 4294901760
    %934 = vmatpush1.msra.mxu0 %v933
    %935 = vmatprep.subr.mxu0 0.0
    %v936 = vand.u32 %v43, 4294901760
    %937 = vmatpush1.msra.mxu0 %v936
    %938 = vmatprep.subr.mxu0 0.0
    %v939 = vand.u32 %v42, 4294901760
    %940 = vmatpush1.msra.mxu0 %v939
    %941 = vmatprep.subr.mxu0 0.0
    %942 = vmatpush2.msra.mxu0 0.0
    %943 = vmatprep.subr.mxu0 0.0
    %944 = vmatpush2.msra.mxu0 0.0
    %945 = vmatprep.subr.mxu0 0.0
    %946 = vmatpush2.msra.mxu0 0.0
    %947 = vmatprep.subr.mxu0 0.0
    %948 = vmatpush2.msra.mxu0 0.0
    %949 = vmatprep.subr.mxu0 0.0
    %950 = vmatpush2.msra.mxu0 0.0
    %951 = vmatprep.subr.mxu0 0.0
    %952 = vmatpush2.msra.mxu0 0.0
    %953 = vmatprep.subr.mxu0 0.0
    %954 = vmatpush2.msra.mxu0 0.0
    %955 = vmatprep.subr.mxu0 0.0
    %956 = vmatpush2.msra.mxu0 0.0
    %957 = vmatprep.subr.mxu0 0.0
    %958 = vmatpush2.msra.mxu0 0.0
    %959 = vmatprep.subr.mxu0 0.0
    %960 = vmatpush2.msra.mxu0 0.0
    %961 = vmatprep.subr.mxu0 0.0
    %962 = vmatpush2.msra.mxu0 0.0
    %963 = vmatprep.subr.mxu0 0.0
    %964 = vmatpush2.msra.mxu0 0.0
    %965 = vmatprep.subr.mxu0 0.0
    %966 = vmatpush2.msra.mxu0 0.0
    %967 = vmatprep.subr.mxu0 0.0
    %968 = vmatpush2.msra.mxu0 0.0
    %969 = vmatprep.subr.mxu0 0.0
    %970 = vmatpush2.msra.mxu0 0.0
    %971 = vmatprep.subr.mxu0 0.0
    %972 = vmatpush2.msra.mxu0 0.0
    %973 = vmatprep.mubr.f32.mxu0 0.0
    %v974 = vand.u32 %v662, 4294901760
    %v975 = vsub.f32 %v662, %v974
    %v976 = vand.u32 %v975, 4294901760
    %977 = vmatmul.mubr.f32.gmra.mxu0 %v976
    %v978 = vpop.f32.mrf.mxu0
    %v979 = vadd.f32 %v903, %v978
    %v980 = vpop.f32.mrf.mxu0
    %981 = vdwg.mxu0
    %982 = vmatprep.subr.mxu0 0.0
    %983 = vmatpush1.msra.mxu0 0.0
    %984 = vmatprep.subr.mxu0 0.0
    %985 = vmatpush1.msra.mxu0 0.0
    %986 = vmatprep.subr.mxu0 0.0
    %987 = vmatpush1.msra.mxu0 0.0
    %988 = vmatprep.subr.mxu0 0.0
    %989 = vmatpush1.msra.mxu0 0.0
    %990 = vmatprep.subr.mxu0 0.0
    %991 = vmatpush1.msra.mxu0 0.0
    %992 = vmatprep.subr.mxu0 0.0
    %993 = vmatpush1.msra.mxu0 0.0
    %994 = vmatprep.subr.mxu0 0.0
    %995 = vmatpush1.msra.mxu0 0.0
    %996 = vmatprep.subr.mxu0 0.0
    %997 = vmatpush1.msra.mxu0 0.0
    %998 = vmatprep.subr.mxu0 0.0
    %999 = vmatpush1.msra.mxu0 0.0
    %1000 = vmatprep.subr.mxu0 0.0
    %1001 = vmatpush1.msra.mxu0 0.0
    %1002 = vmatprep.subr.mxu0 0.0
    %1003 = vmatpush1.msra.mxu0 0.0
    %1004 = vmatprep.subr.mxu0 0.0
    %1005 = vmatpush1.msra.mxu0 0.0
    %1006 = vmatprep.subr.mxu0 0.0
    %1007 = vmatpush1.msra.mxu0 0.0
    %1008 = vmatprep.subr.mxu0 0.0
    %v1009 = vand.u32 %v44, 4294901760
    %v1010 = vsub.f32 %v44, %v1009
    %v1011 = vand.u32 %v1010, 4294901760
    %1012 = vmatpush1.msra.mxu0 %v1011
    %1013 = vmatprep.subr.mxu0 0.0
    %v1014 = vand.u32 %v43, 4294901760
    %v1015 = vsub.f32 %v43, %v1014
    %v1016 = vand.u32 %v1015, 4294901760
    %1017 = vmatpush1.msra.mxu0 %v1016
    %1018 = vmatprep.subr.mxu0 0.0
    %v1019 = vand.u32 %v42, 4294901760
    %v1020 = vsub.f32 %v42, %v1019
    %v1021 = vand.u32 %v1020, 4294901760
    %1022 = vmatpush1.msra.mxu0 %v1021
    %1023 = vmatprep.subr.mxu0 0.0
    %1024 = vmatpush2.msra.mxu0 0.0
    %1025 = vmatprep.subr.mxu0 0.0
    %1026 = vmatpush2.msra.mxu0 0.0
    %1027 = vmatprep.subr.mxu0 0.0
    %1028 = vmatpush2.msra.mxu0 0.0
    %1029 = vmatprep.subr.mxu0 0.0
    %1030 = vmatpush2.msra.mxu0 0.0
    %1031 = vmatprep.subr.mxu0 0.0
    %1032 = vmatpush2.msra.mxu0 0.0
    %1033 = vmatprep.subr.mxu0 0.0
    %1034 = vmatpush2.msra.mxu0 0.0
    %1035 = vmatprep.subr.mxu0 0.0
    %1036 = vmatpush2.msra.mxu0 0.0
    %1037 = vmatprep.subr.mxu0 0.0
    %1038 = vmatpush2.msra.mxu0 0.0
    %1039 = vmatprep.subr.mxu0 0.0
    %1040 = vmatpush2.msra.mxu0 0.0
    %1041 = vmatprep.subr.mxu0 0.0
    %1042 = vmatpush2.msra.mxu0 0.0
    %1043 = vmatprep.subr.mxu0 0.0
    %1044 = vmatpush2.msra.mxu0 0.0
    %1045 = vmatprep.subr.mxu0 0.0
    %1046 = vmatpush2.msra.mxu0 0.0
    %1047 = vmatprep.subr.mxu0 0.0
    %1048 = vmatpush2.msra.mxu0 0.0
    %1049 = vmatprep.subr.mxu0 0.0
    %1050 = vmatpush2.msra.mxu0 0.0
    %1051 = vmatprep.subr.mxu0 0.0
    %1052 = vmatpush2.msra.mxu0 0.0
    %1053 = vmatprep.subr.mxu0 0.0
    %1054 = vmatpush2.msra.mxu0 0.0
    %1055 = vmatprep.mubr.f32.mxu0 0.0
    %v1056 = vand.u32 %v662, 4294901760
    %1057 = vmatmul.mubr.f32.gmra.mxu0 %v1056
    %v1058 = vpop.f32.mrf.mxu0
    %v1059 = vadd.f32 %v979, %v1058
    %v1060 = vpop.f32.mrf.mxu0
    %1061 = vdwg.mxu0
    %1062 = vmatprep.subr.mxu0 0.0
    %1063 = vmatpush1.msra.mxu0 0.0
    %1064 = vmatprep.subr.mxu0 0.0
    %1065 = vmatpush1.msra.mxu0 0.0
    %1066 = vmatprep.subr.mxu0 0.0
    %1067 = vmatpush1.msra.mxu0 0.0
    %1068 = vmatprep.subr.mxu0 0.0
    %1069 = vmatpush1.msra.mxu0 0.0
    %1070 = vmatprep.subr.mxu0 0.0
    %1071 = vmatpush1.msra.mxu0 0.0
    %1072 = vmatprep.subr.mxu0 0.0
    %1073 = vmatpush1.msra.mxu0 0.0
    %1074 = vmatprep.subr.mxu0 0.0
    %1075 = vmatpush1.msra.mxu0 0.0
    %1076 = vmatprep.subr.mxu0 0.0
    %1077 = vmatpush1.msra.mxu0 0.0
    %1078 = vmatprep.subr.mxu0 0.0
    %1079 = vmatpush1.msra.mxu0 0.0
    %1080 = vmatprep.subr.mxu0 0.0
    %1081 = vmatpush1.msra.mxu0 0.0
    %1082 = vmatprep.subr.mxu0 0.0
    %1083 = vmatpush1.msra.mxu0 0.0
    %1084 = vmatprep.subr.mxu0 0.0
    %1085 = vmatpush1.msra.mxu0 0.0
    %1086 = vmatprep.subr.mxu0 0.0
    %1087 = vmatpush1.msra.mxu0 0.0
    %1088 = vmatprep.subr.mxu0 0.0
    %v1089 = vand.u32 %v44, 4294901760
    %1090 = vmatpush1.msra.mxu0 %v1089
    %1091 = vmatprep.subr.mxu0 0.0
    %v1092 = vand.u32 %v43, 4294901760
    %1093 = vmatpush1.msra.mxu0 %v1092
    %1094 = vmatprep.subr.mxu0 0.0
    %v1095 = vand.u32 %v42, 4294901760
    %1096 = vmatpush1.msra.mxu0 %v1095
    %1097 = vmatprep.subr.mxu0 0.0
    %1098 = vmatpush2.msra.mxu0 0.0
    %1099 = vmatprep.subr.mxu0 0.0
    %1100 = vmatpush2.msra.mxu0 0.0
    %1101 = vmatprep.subr.mxu0 0.0
    %1102 = vmatpush2.msra.mxu0 0.0
    %1103 = vmatprep.subr.mxu0 0.0
    %1104 = vmatpush2.msra.mxu0 0.0
    %1105 = vmatprep.subr.mxu0 0.0
    %1106 = vmatpush2.msra.mxu0 0.0
    %1107 = vmatprep.subr.mxu0 0.0
    %1108 = vmatpush2.msra.mxu0 0.0
    %1109 = vmatprep.subr.mxu0 0.0
    %1110 = vmatpush2.msra.mxu0 0.0
    %1111 = vmatprep.subr.mxu0 0.0
    %1112 = vmatpush2.msra.mxu0 0.0
    %1113 = vmatprep.subr.mxu0 0.0
    %1114 = vmatpush2.msra.mxu0 0.0
    %1115 = vmatprep.subr.mxu0 0.0
    %1116 = vmatpush2.msra.mxu0 0.0
    %1117 = vmatprep.subr.mxu0 0.0
    %1118 = vmatpush2.msra.mxu0 0.0
    %1119 = vmatprep.subr.mxu0 0.0
    %1120 = vmatpush2.msra.mxu0 0.0
    %1121 = vmatprep.subr.mxu0 0.0
    %1122 = vmatpush2.msra.mxu0 0.0
    %1123 = vmatprep.subr.mxu0 0.0
    %1124 = vmatpush2.msra.mxu0 0.0
    %1125 = vmatprep.subr.mxu0 0.0
    %1126 = vmatpush2.msra.mxu0 0.0
    %1127 = vmatprep.subr.mxu0 0.0
    %1128 = vmatpush2.msra.mxu0 0.0
    %1129 = vmatprep.mubr.f32.mxu0 0.0
    %v1130 = vand.u32 %v662, 4294901760
    %1131 = vmatmul.mubr.f32.gmra.mxu0 %v1130
    %v1132 = vpop.f32.mrf.mxu0
    %v1133 = vadd.f32 %v1059, %v1132
    %v1134 = vpop.f32.mrf.mxu0
    %1135 = vdwg.mxu0
    %v1136 = vxor.u32 %v1133, 2147483648
    %v1137 = vmul.f32 %v1136, 1.442695
    %v1138 = vpow.pop %v1137
    %v1139 = vadd.f32 %v1138, 1.0
    %v1140 = vrcp.pop %v1139
    %v1141 = vmul.f32 1.0, %v1140
    %v1142 = vtanh.pop %v1133
    %v1143 = vmul.f32 %v1141, %v603
    %1145 = vrot.lane.b32.xlu0 %v1142, 96
    %v1146 = vpop.permute.xlu0 %1145
    %v1148 = vmul.f32 %v1141, %v1146
    %1150 = vrot.lane.b32.xlu0 %v1148, 16
    %v1151 = vpop.permute.xlu0 %1150
    %v1153 = vadd.f32 %v1143, %v1151
    %v1154 = vtanh.pop %v1153
    %1156 = vrot.lane.b32.xlu0 %v1154, 32
    %v1157 = vpop.permute.xlu0 %1156
    %v1159 = vmul.f32 %v1141, %v1157
    %s1160 = scalar_lea.vmem %s7, 2
    %1161 = vst.msk [vmem:[%s1160] sm:$0x3] %vm80, %v656
    %1163 = vrot.lane.b32.xlu0 %v1159, 80
    %v1164 = vpop.permute.xlu0 %1163
    %s1166 = scalar_lea.vmem [#allocation5], 2
    %1167 = vst.msk [vmem:[%s1166] sm:$0x3] %vm63, %v1164
    %v1168 = vmul.f32 %v1159, %v617
    %v1169 = vmul.f32 %v1153, %v621
    %1171 = vrot.lane.b32.xlu0 %v1169, 32
    %v1172 = vpop.permute.xlu0 %1171
    %v1174 = vadd.f32 %v1168, %v1172
    %1176 = vrot.lane.b32.xlu0 %v1174, 80
    %v1177 = vpop.permute.xlu0 %1176
    %v1179 = vsel %vm63, %v1177, 0.0
    %1180 = vadd.xlane.f32.xlu0 %v1179
    %v1181 = vpop.xlane.xlu0 %1180
    %v1182 = vadd.f32 %v1181, %v71
    %1184 = vset.pattern.permute.xlu0 0
    %1185 = vperm.xlu0 %1184, %v1182
    %v1186 = vpop.permute.xlu0 %1185
    %v1188 = vadd.f32 %v1186, %v38
    %v1189 = vsel %vm80, %v1188, -inf
    %1190 = vmax.xlane.f32.xlu0 %v1189
    %v1191 = vpop.xlane.xlu0 %1190
    %v1192 = vsub.f32 %v1188, %v1191
    %v1193 = vmul.f32 %v1192, 1.442695
    %v1194 = vpow.pop %v1193
    %v1195 = vsel %vm80, %v1194, 0.0
    %1196 = vadd.xlane.f32.xlu0 %v1195
    %v1197 = vpop.xlane.xlu0 %1196
    %v1198 = vrcp.pop %v1197
    %v1199 = vmul.f32 %v1194, %v1198
    %s1200 = scalar_lea.vmem %s0, 4
    %v1201 = vld [vmem:[%s1200] sm:$0x3]
    %v1202 = vmul.f32 %v1199, %v1201
    %1203 = vrot.lane.b32.xlu0 %v1159, 88
    %v1204 = vpop.permute.xlu0 %1203
    %v1206 = vsel %vm98, %v1202, %v1204
    %v1208 = vsel %vm106, %v1206, 0
    %1210 = vmatprep.subr.mxu0 0.0
    %1211 = vmatpush1.msra.mxu0 0.0
    %1212 = vmatprep.subr.mxu0 0.0
    %1213 = vmatpush1.msra.mxu0 0.0
    %1214 = vmatprep.subr.mxu0 0.0
    %1215 = vmatpush1.msra.mxu0 0.0
    %1216 = vmatprep.subr.mxu0 0.0
    %1217 = vmatpush1.msra.mxu0 0.0
    %1218 = vmatprep.subr.mxu0 0.0
    %1219 = vmatpush1.msra.mxu0 0.0
    %1220 = vmatprep.subr.mxu0 0.0
    %1221 = vmatpush1.msra.mxu0 0.0
    %1222 = vmatprep.subr.mxu0 0.0
    %1223 = vmatpush1.msra.mxu0 0.0
    %1224 = vmatprep.subr.mxu0 0.0
    %1225 = vmatpush1.msra.mxu0 0.0
    %1226 = vmatprep.subr.mxu0 0.0
    %1227 = vmatpush1.msra.mxu0 0.0
    %1228 = vmatprep.subr.mxu0 0.0
    %1229 = vmatpush1.msra.mxu0 0.0
    %1230 = vmatprep.subr.mxu0 0.0
    %1231 = vmatpush1.msra.mxu0 0.0
    %1232 = vmatprep.subr.mxu0 0.0
    %1233 = vmatpush1.msra.mxu0 0.0
    %1234 = vmatprep.subr.mxu0 0.0
    %1235 = vmatpush1.msra.mxu0 0.0
    %1236 = vmatprep.subr.mxu0 0.0
    %v1237 = vand.u32 %v44, 4294901760
    %1238 = vmatpush1.msra.mxu0 %v1237
    %1239 = vmatprep.subr.mxu0 0.0
    %v1240 = vand.u32 %v43, 4294901760
    %1241 = vmatpush1.msra.mxu0 %v1240
    %1242 = vmatprep.subr.mxu0 0.0
    %v1243 = vand.u32 %v42, 4294901760
    %1244 = vmatpush1.msra.mxu0 %v1243
    %1245 = vmatprep.subr.mxu0 0.0
    %1246 = vmatpush2.msra.mxu0 0.0
    %1247 = vmatprep.subr.mxu0 0.0
    %1248 = vmatpush2.msra.mxu0 0.0
    %1249 = vmatprep.subr.mxu0 0.0
    %1250 = vmatpush2.msra.mxu0 0.0
    %1251 = vmatprep.subr.mxu0 0.0
    %1252 = vmatpush2.msra.mxu0 0.0
    %1253 = vmatprep.subr.mxu0 0.0
    %1254 = vmatpush2.msra.mxu0 0.0
    %1255 = vmatprep.subr.mxu0 0.0
    %1256 = vmatpush2.msra.mxu0 0.0
    %1257 = vmatprep.subr.mxu0 0.0
    %1258 = vmatpush2.msra.mxu0 0.0
    %1259 = vmatprep.subr.mxu0 0.0
    %1260 = vmatpush2.msra.mxu0 0.0
    %1261 = vmatprep.subr.mxu0 0.0
    %1262 = vmatpush2.msra.mxu0 0.0
    %1263 = vmatprep.subr.mxu0 0.0
    %1264 = vmatpush2.msra.mxu0 0.0
    %1265 = vmatprep.subr.mxu0 0.0
    %1266 = vmatpush2.msra.mxu0 0.0
    %1267 = vmatprep.subr.mxu0 0.0
    %1268 = vmatpush2.msra.mxu0 0.0
    %1269 = vmatprep.subr.mxu0 0.0
    %1270 = vmatpush2.msra.mxu0 0.0
    %1271 = vmatprep.subr.mxu0 0.0
    %1272 = vmatpush2.msra.mxu0 0.0
    %1273 = vmatprep.subr.mxu0 0.0
    %1274 = vmatpush2.msra.mxu0 0.0
    %1275 = vmatprep.subr.mxu0 0.0
    %1276 = vmatpush2.msra.mxu0 0.0
    %1277 = vmatprep.mubr.f32.mxu0 0.0
    %v1278 = vand.u32 %v1208, 4294901760
    %v1279 = vsub.f32 %v1208, %v1278
    %v1280 = vand.u32 %v1279, 4294901760
    %v1281 = vsub.f32 %v1279, %v1280
    %v1282 = vand.u32 %v1281, 4294901760
    %1283 = vmatmul.mubr.f32.gmra.mxu0 %v1282
    %v1284 = vpop.f32.mrf.mxu0
    %v1285 = vadd.f32 %v104, %v1284
    %v1286 = vpop.f32.mrf.mxu0
    %1287 = vdwg.mxu0
    %1288 = vmatprep.subr.mxu0 0.0
    %1289 = vmatpush1.msra.mxu0 0.0
    %1290 = vmatprep.subr.mxu0 0.0
    %1291 = vmatpush1.msra.mxu0 0.0
    %1292 = vmatprep.subr.mxu0 0.0
    %1293 = vmatpush1.msra.mxu0 0.0
    %1294 = vmatprep.subr.mxu0 0.0
    %1295 = vmatpush1.msra.mxu0 0.0
    %1296 = vmatprep.subr.mxu0 0.0
    %1297 = vmatpush1.msra.mxu0 0.0
    %1298 = vmatprep.subr.mxu0 0.0
    %1299 = vmatpush1.msra.mxu0 0.0
    %1300 = vmatprep.subr.mxu0 0.0
    %1301 = vmatpush1.msra.mxu0 0.0
    %1302 = vmatprep.subr.mxu0 0.0
    %1303 = vmatpush1.msra.mxu0 0.0
    %1304 = vmatprep.subr.mxu0 0.0
    %1305 = vmatpush1.msra.mxu0 0.0
    %1306 = vmatprep.subr.mxu0 0.0
    %1307 = vmatpush1.msra.mxu0 0.0
    %1308 = vmatprep.subr.mxu0 0.0
    %1309 = vmatpush1.msra.mxu0 0.0
    %1310 = vmatprep.subr.mxu0 0.0
    %1311 = vmatpush1.msra.mxu0 0.0
    %1312 = vmatprep.subr.mxu0 0.0
    %1313 = vmatpush1.msra.mxu0 0.0
    %1314 = vmatprep.subr.mxu0 0.0
    %v1315 = vand.u32 %v44, 4294901760
    %v1316 = vsub.f32 %v44, %v1315
    %v1317 = vand.u32 %v1316, 4294901760
    %v1318 = vsub.f32 %v1316, %v1317
    %v1319 = vand.u32 %v1318, 4294901760
    %1320 = vmatpush1.msra.mxu0 %v1319
    %1321 = vmatprep.subr.mxu0 0.0
    %v1322 = vand.u32 %v43, 4294901760
    %v1323 = vsub.f32 %v43, %v1322
    %v1324 = vand.u32 %v1323, 4294901760
    %v1325 = vsub.f32 %v1323, %v1324
    %v1326 = vand.u32 %v1325, 4294901760
    %1327 = vmatpush1.msra.mxu0 %v1326
    %1328 = vmatprep.subr.mxu0 0.0
    %v1329 = vand.u32 %v42, 4294901760
    %v1330 = vsub.f32 %v42, %v1329
    %v1331 = vand.u32 %v1330, 4294901760
    %v1332 = vsub.f32 %v1330, %v1331
    %v1333 = vand.u32 %v1332, 4294901760
    %1334 = vmatpush1.msra.mxu0 %v1333
    %1335 = vmatprep.subr.mxu0 0.0
    %1336 = vmatpush2.msra.mxu0 0.0
    %1337 = vmatprep.subr.mxu0 0.0
    %1338 = vmatpush2.msra.mxu0 0.0
    %1339 = vmatprep.subr.mxu0 0.0
    %1340 = vmatpush2.msra.mxu0 0.0
    %1341 = vmatprep.subr.mxu0 0.0
    %1342 = vmatpush2.msra.mxu0 0.0
    %1343 = vmatprep.subr.mxu0 0.0
    %1344 = vmatpush2.msra.mxu0 0.0
    %1345 = vmatprep.subr.mxu0 0.0
    %1346 = vmatpush2.msra.mxu0 0.0
    %1347 = vmatprep.subr.mxu0 0.0
    %1348 = vmatpush2.msra.mxu0 0.0
    %1349 = vmatprep.subr.mxu0 0.0
    %1350 = vmatpush2.msra.mxu0 0.0
    %1351 = vmatprep.subr.mxu0 0.0
    %1352 = vmatpush2.msra.mxu0 0.0
    %1353 = vmatprep.subr.mxu0 0.0
    %1354 = vmatpush2.msra.mxu0 0.0
    %1355 = vmatprep.subr.mxu0 0.0
    %1356 = vmatpush2.msra.mxu0 0.0
    %1357 = vmatprep.subr.mxu0 0.0
    %1358 = vmatpush2.msra.mxu0 0.0
    %1359 = vmatprep.subr.mxu0 0.0
    %1360 = vmatpush2.msra.mxu0 0.0
    %1361 = vmatprep.subr.mxu0 0.0
    %1362 = vmatpush2.msra.mxu0 0.0
    %1363 = vmatprep.subr.mxu0 0.0
    %1364 = vmatpush2.msra.mxu0 0.0
    %1365 = vmatprep.subr.mxu0 0.0
    %1366 = vmatpush2.msra.mxu0 0.0
    %1367 = vmatprep.mubr.f32.mxu0 0.0
    %v1368 = vand.u32 %v1208, 4294901760
    %1369 = vmatmul.mubr.f32.gmra.mxu0 %v1368
    %v1370 = vpop.f32.mrf.mxu0
    %v1371 = vadd.f32 %v1285, %v1370
    %v1372 = vpop.f32.mrf.mxu0
    %1373 = vdwg.mxu0
    %1374 = vmatprep.subr.mxu0 0.0
    %1375 = vmatpush1.msra.mxu0 0.0
    %1376 = vmatprep.subr.mxu0 0.0
    %1377 = vmatpush1.msra.mxu0 0.0
    %1378 = vmatprep.subr.mxu0 0.0
    %1379 = vmatpush1.msra.mxu0 0.0
    %1380 = vmatprep.subr.mxu0 0.0
    %1381 = vmatpush1.msra.mxu0 0.0
    %1382 = vmatprep.subr.mxu0 0.0
    %1383 = vmatpush1.msra.mxu0 0.0
    %1384 = vmatprep.subr.mxu0 0.0
    %1385 = vmatpush1.msra.mxu0 0.0
    %1386 = vmatprep.subr.mxu0 0.0
    %1387 = vmatpush1.msra.mxu0 0.0
    %1388 = vmatprep.subr.mxu0 0.0
    %1389 = vmatpush1.msra.mxu0 0.0
    %1390 = vmatprep.subr.mxu0 0.0
    %1391 = vmatpush1.msra.mxu0 0.0
    %1392 = vmatprep.subr.mxu0 0.0
    %1393 = vmatpush1.msra.mxu0 0.0
    %1394 = vmatprep.subr.mxu0 0.0
    %1395 = vmatpush1.msra.mxu0 0.0
    %1396 = vmatprep.subr.mxu0 0.0
    %1397 = vmatpush1.msra.mxu0 0.0
    %1398 = vmatprep.subr.mxu0 0.0
    %1399 = vmatpush1.msra.mxu0 0.0
    %1400 = vmatprep.subr.mxu0 0.0
    %v1401 = vand.u32 %v44, 4294901760
    %v1402 = vsub.f32 %v44, %v1401
    %1403 = vmatpush1.msra.mxu0 %v1402
    %1404 = vmatprep.subr.mxu0 0.0
    %v1405 = vand.u32 %v43, 4294901760
    %v1406 = vsub.f32 %v43, %v1405
    %1407 = vmatpush1.msra.mxu0 %v1406
    %1408 = vmatprep.subr.mxu0 0.0
    %v1409 = vand.u32 %v42, 4294901760
    %v1410 = vsub.f32 %v42, %v1409
    %1411 = vmatpush1.msra.mxu0 %v1410
    %1412 = vmatprep.subr.mxu0 0.0
    %1413 = vmatpush2.msra.mxu0 0.0
    %1414 = vmatprep.subr.mxu0 0.0
    %1415 = vmatpush2.msra.mxu0 0.0
    %1416 = vmatprep.subr.mxu0 0.0
    %1417 = vmatpush2.msra.mxu0 0.0
    %1418 = vmatprep.subr.mxu0 0.0
    %1419 = vmatpush2.msra.mxu0 0.0
    %1420 = vmatprep.subr.mxu0 0.0
    %1421 = vmatpush2.msra.mxu0 0.0
    %1422 = vmatprep.subr.mxu0 0.0
    %1423 = vmatpush2.msra.mxu0 0.0
    %1424 = vmatprep.subr.mxu0 0.0
    %1425 = vmatpush2.msra.mxu0 0.0
    %1426 = vmatprep.subr.mxu0 0.0
    %1427 = vmatpush2.msra.mxu0 0.0
    %1428 = vmatprep.subr.mxu0 0.0
    %1429 = vmatpush2.msra.mxu0 0.0
    %1430 = vmatprep.subr.mxu0 0.0
    %1431 = vmatpush2.msra.mxu0 0.0
    %1432 = vmatprep.subr.mxu0 0.0
    %1433 = vmatpush2.msra.mxu0 0.0
    %1434 = vmatprep.subr.mxu0 0.0
    %1435 = vmatpush2.msra.mxu0 0.0
    %1436 = vmatprep.subr.mxu0 0.0
    %1437 = vmatpush2.msra.mxu0 0.0
    %1438 = vmatprep.subr.mxu0 0.0
    %1439 = vmatpush2.msra.mxu0 0.0
    %1440 = vmatprep.subr.mxu0 0.0
    %1441 = vmatpush2.msra.mxu0 0.0
    %1442 = vmatprep.subr.mxu0 0.0
    %1443 = vmatpush2.msra.mxu0 0.0
    %1444 = vmatprep.mubr.f32.mxu0 0.0
    %v1445 = vand.u32 %v1208, 4294901760
    %v1446 = vsub.f32 %v1208, %v1445
    %1447 = vmatmul.mubr.f32.gmra.mxu0 %v1446
    %v1448 = vpop.f32.mrf.mxu0
    %v1449 = vadd.f32 %v1371, %v1448
    %v1450 = vpop.f32.mrf.mxu0
    %1451 = vdwg.mxu0
    %1452 = vmatprep.subr.mxu0 0.0
    %1453 = vmatpush1.msra.mxu0 0.0
    %1454 = vmatprep.subr.mxu0 0.0
    %1455 = vmatpush1.msra.mxu0 0.0
    %1456 = vmatprep.subr.mxu0 0.0
    %1457 = vmatpush1.msra.mxu0 0.0
    %1458 = vmatprep.subr.mxu0 0.0
    %1459 = vmatpush1.msra.mxu0 0.0
    %1460 = vmatprep.subr.mxu0 0.0
    %1461 = vmatpush1.msra.mxu0 0.0
    %1462 = vmatprep.subr.mxu0 0.0
    %1463 = vmatpush1.msra.mxu0 0.0
    %1464 = vmatprep.subr.mxu0 0.0
    %1465 = vmatpush1.msra.mxu0 0.0
    %1466 = vmatprep.subr.mxu0 0.0
    %1467 = vmatpush1.msra.mxu0 0.0
    %1468 = vmatprep.subr.mxu0 0.0
    %1469 = vmatpush1.msra.mxu0 0.0
    %1470 = vmatprep.subr.mxu0 0.0
    %1471 = vmatpush1.msra.mxu0 0.0
    %1472 = vmatprep.subr.mxu0 0.0
    %1473 = vmatpush1.msra.mxu0 0.0
    %1474 = vmatprep.subr.mxu0 0.0
    %1475 = vmatpush1.msra.mxu0 0.0
    %1476 = vmatprep.subr.mxu0 0.0
    %1477 = vmatpush1.msra.mxu0 0.0
    %1478 = vmatprep.subr.mxu0 0.0
    %v1479 = vand.u32 %v44, 4294901760
    %1480 = vmatpush1.msra.mxu0 %v1479
    %1481 = vmatprep.subr.mxu0 0.0
    %v1482 = vand.u32 %v43, 4294901760
    %1483 = vmatpush1.msra.mxu0 %v1482
    %1484 = vmatprep.subr.mxu0 0.0
    %v1485 = vand.u32 %v42, 4294901760
    %1486 = vmatpush1.msra.mxu0 %v1485
    %1487 = vmatprep.subr.mxu0 0.0
    %1488 = vmatpush2.msra.mxu0 0.0
    %1489 = vmatprep.subr.mxu0 0.0
    %1490 = vmatpush2.msra.mxu0 0.0
    %1491 = vmatprep.subr.mxu0 0.0
    %1492 = vmatpush2.msra.mxu0 0.0
    %1493 = vmatprep.subr.mxu0 0.0
    %1494 = vmatpush2.msra.mxu0 0.0
    %1495 = vmatprep.subr.mxu0 0.0
    %1496 = vmatpush2.msra.mxu0 0.0
    %1497 = vmatprep.subr.mxu0 0.0
    %1498 = vmatpush2.msra.mxu0 0.0
    %1499 = vmatprep.subr.mxu0 0.0
    %1500 = vmatpush2.msra.mxu0 0.0
    %1501 = vmatprep.subr.mxu0 0.0
    %1502 = vmatpush2.msra.mxu0 0.0
    %1503 = vmatprep.subr.mxu0 0.0
    %1504 = vmatpush2.msra.mxu0 0.0
    %1505 = vmatprep.subr.mxu0 0.0
    %1506 = vmatpush2.msra.mxu0 0.0
    %1507 = vmatprep.subr.mxu0 0.0
    %1508 = vmatpush2.msra.mxu0 0.0
    %1509 = vmatprep.subr.mxu0 0.0
    %1510 = vmatpush2.msra.mxu0 0.0
    %1511 = vmatprep.subr.mxu0 0.0
    %1512 = vmatpush2.msra.mxu0 0.0
    %1513 = vmatprep.subr.mxu0 0.0
    %1514 = vmatpush2.msra.mxu0 0.0
    %1515 = vmatprep.subr.mxu0 0.0
    %1516 = vmatpush2.msra.mxu0 0.0
    %1517 = vmatprep.subr.mxu0 0.0
    %1518 = vmatpush2.msra.mxu0 0.0
    %1519 = vmatprep.mubr.f32.mxu0 0.0
    %v1520 = vand.u32 %v1208, 4294901760
    %v1521 = vsub.f32 %v1208, %v1520
    %v1522 = vand.u32 %v1521, 4294901760
    %1523 = vmatmul.mubr.f32.gmra.mxu0 %v1522
    %v1524 = vpop.f32.mrf.mxu0
    %v1525 = vadd.f32 %v1449, %v1524
    %v1526 = vpop.f32.mrf.mxu0
    %1527 = vdwg.mxu0
    %1528 = vmatprep.subr.mxu0 0.0
    %1529 = vmatpush1.msra.mxu0 0.0
    %1530 = vmatprep.subr.mxu0 0.0
    %1531 = vmatpush1.msra.mxu0 0.0
    %1532 = vmatprep.subr.mxu0 0.0
    %1533 = vmatpush1.msra.mxu0 0.0
    %1534 = vmatprep.subr.mxu0 0.0
    %1535 = vmatpush1.msra.mxu0 0.0
    %1536 = vmatprep.subr.mxu0 0.0
    %1537 = vmatpush1.msra.mxu0 0.0
    %1538 = vmatprep.subr.mxu0 0.0
    %1539 = vmatpush1.msra.mxu0 0.0
    %1540 = vmatprep.subr.mxu0 0.0
    %1541 = vmatpush1.msra.mxu0 0.0
    %1542 = vmatprep.subr.mxu0 0.0
    %1543 = vmatpush1.msra.mxu0 0.0
    %1544 = vmatprep.subr.mxu0 0.0
    %1545 = vmatpush1.msra.mxu0 0.0
    %1546 = vmatprep.subr.mxu0 0.0
    %1547 = vmatpush1.msra.mxu0 0.0
    %1548 = vmatprep.subr.mxu0 0.0
    %1549 = vmatpush1.msra.mxu0 0.0
    %1550 = vmatprep.subr.mxu0 0.0
    %1551 = vmatpush1.msra.mxu0 0.0
    %1552 = vmatprep.subr.mxu0 0.0
    %1553 = vmatpush1.msra.mxu0 0.0
    %1554 = vmatprep.subr.mxu0 0.0
    %v1555 = vand.u32 %v44, 4294901760
    %v1556 = vsub.f32 %v44, %v1555
    %v1557 = vand.u32 %v1556, 4294901760
    %1558 = vmatpush1.msra.mxu0 %v1557
    %1559 = vmatprep.subr.mxu0 0.0
    %v1560 = vand.u32 %v43, 4294901760
    %v1561 = vsub.f32 %v43, %v1560
    %v1562 = vand.u32 %v1561, 4294901760
    %1563 = vmatpush1.msra.mxu0 %v1562
    %1564 = vmatprep.subr.mxu0 0.0
    %v1565 = vand.u32 %v42, 4294901760
    %v1566 = vsub.f32 %v42, %v1565
    %v1567 = vand.u32 %v1566, 4294901760
    %1568 = vmatpush1.msra.mxu0 %v1567
    %1569 = vmatprep.subr.mxu0 0.0
    %1570 = vmatpush2.msra.mxu0 0.0
    %1571 = vmatprep.subr.mxu0 0.0
    %1572 = vmatpush2.msra.mxu0 0.0
    %1573 = vmatprep.subr.mxu0 0.0
    %1574 = vmatpush2.msra.mxu0 0.0
    %1575 = vmatprep.subr.mxu0 0.0
    %1576 = vmatpush2.msra.mxu0 0.0
    %1577 = vmatprep.subr.mxu0 0.0
    %1578 = vmatpush2.msra.mxu0 0.0
    %1579 = vmatprep.subr.mxu0 0.0
    %1580 = vmatpush2.msra.mxu0 0.0
    %1581 = vmatprep.subr.mxu0 0.0
    %1582 = vmatpush2.msra.mxu0 0.0
    %1583 = vmatprep.subr.mxu0 0.0
    %1584 = vmatpush2.msra.mxu0 0.0
    %1585 = vmatprep.subr.mxu0 0.0
    %1586 = vmatpush2.msra.mxu0 0.0
    %1587 = vmatprep.subr.mxu0 0.0
    %1588 = vmatpush2.msra.mxu0 0.0
    %1589 = vmatprep.subr.mxu0 0.0
    %1590 = vmatpush2.msra.mxu0 0.0
    %1591 = vmatprep.subr.mxu0 0.0
    %1592 = vmatpush2.msra.mxu0 0.0
    %1593 = vmatprep.subr.mxu0 0.0
    %1594 = vmatpush2.msra.mxu0 0.0
    %1595 = vmatprep.subr.mxu0 0.0
    %1596 = vmatpush2.msra.mxu0 0.0
    %1597 = vmatprep.subr.mxu0 0.0
    %1598 = vmatpush2.msra.mxu0 0.0
    %1599 = vmatprep.subr.mxu0 0.0
    %1600 = vmatpush2.msra.mxu0 0.0
    %1601 = vmatprep.mubr.f32.mxu0 0.0
    %v1602 = vand.u32 %v1208, 4294901760
    %1603 = vmatmul.mubr.f32.gmra.mxu0 %v1602
    %v1604 = vpop.f32.mrf.mxu0
    %v1605 = vadd.f32 %v1525, %v1604
    %v1606 = vpop.f32.mrf.mxu0
    %1607 = vdwg.mxu0
    %1608 = vmatprep.subr.mxu0 0.0
    %1609 = vmatpush1.msra.mxu0 0.0
    %1610 = vmatprep.subr.mxu0 0.0
    %1611 = vmatpush1.msra.mxu0 0.0
    %1612 = vmatprep.subr.mxu0 0.0
    %1613 = vmatpush1.msra.mxu0 0.0
    %1614 = vmatprep.subr.mxu0 0.0
    %1615 = vmatpush1.msra.mxu0 0.0
    %1616 = vmatprep.subr.mxu0 0.0
    %1617 = vmatpush1.msra.mxu0 0.0
    %1618 = vmatprep.subr.mxu0 0.0
    %1619 = vmatpush1.msra.mxu0 0.0
    %1620 = vmatprep.subr.mxu0 0.0
    %1621 = vmatpush1.msra.mxu0 0.0
    %1622 = vmatprep.subr.mxu0 0.0
    %1623 = vmatpush1.msra.mxu0 0.0
    %1624 = vmatprep.subr.mxu0 0.0
    %1625 = vmatpush1.msra.mxu0 0.0
    %1626 = vmatprep.subr.mxu0 0.0
    %1627 = vmatpush1.msra.mxu0 0.0
    %1628 = vmatprep.subr.mxu0 0.0
    %1629 = vmatpush1.msra.mxu0 0.0
    %1630 = vmatprep.subr.mxu0 0.0
    %1631 = vmatpush1.msra.mxu0 0.0
    %1632 = vmatprep.subr.mxu0 0.0
    %1633 = vmatpush1.msra.mxu0 0.0
    %1634 = vmatprep.subr.mxu0 0.0
    %v1635 = vand.u32 %v44, 4294901760
    %1636 = vmatpush1.msra.mxu0 %v1635
    %1637 = vmatprep.subr.mxu0 0.0
    %v1638 = vand.u32 %v43, 4294901760
    %1639 = vmatpush1.msra.mxu0 %v1638
    %1640 = vmatprep.subr.mxu0 0.0
    %v1641 = vand.u32 %v42, 4294901760
    %1642 = vmatpush1.msra.mxu0 %v1641
    %1643 = vmatprep.subr.mxu0 0.0
    %1644 = vmatpush2.msra.mxu0 0.0
    %1645 = vmatprep.subr.mxu0 0.0
    %1646 = vmatpush2.msra.mxu0 0.0
    %1647 = vmatprep.subr.mxu0 0.0
    %1648 = vmatpush2.msra.mxu0 0.0
    %1649 = vmatprep.subr.mxu0 0.0
    %1650 = vmatpush2.msra.mxu0 0.0
    %1651 = vmatprep.subr.mxu0 0.0
    %1652 = vmatpush2.msra.mxu0 0.0
    %1653 = vmatprep.subr.mxu0 0.0
    %1654 = vmatpush2.msra.mxu0 0.0
    %1655 = vmatprep.subr.mxu0 0.0
    %1656 = vmatpush2.msra.mxu0 0.0
    %1657 = vmatprep.subr.mxu0 0.0
    %1658 = vmatpush2.msra.mxu0 0.0
    %1659 = vmatprep.subr.mxu0 0.0
    %1660 = vmatpush2.msra.mxu0 0.0
    %1661 = vmatprep.subr.mxu0 0.0
    %1662 = vmatpush2.msra.mxu0 0.0
    %1663 = vmatprep.subr.mxu0 0.0
    %1664 = vmatpush2.msra.mxu0 0.0
    %1665 = vmatprep.subr.mxu0 0.0
    %1666 = vmatpush2.msra.mxu0 0.0
    %1667 = vmatprep.subr.mxu0 0.0
    %1668 = vmatpush2.msra.mxu0 0.0
    %1669 = vmatprep.subr.mxu0 0.0
    %1670 = vmatpush2.msra.mxu0 0.0
    %1671 = vmatprep.subr.mxu0 0.0
    %1672 = vmatpush2.msra.mxu0 0.0
    %1673 = vmatprep.subr.mxu0 0.0
    %1674 = vmatpush2.msra.mxu0 0.0
    %1675 = vmatprep.mubr.f32.mxu0 0.0
    %v1676 = vand.u32 %v1208, 4294901760
    %1677 = vmatmul.mubr.f32.gmra.mxu0 %v1676
    %v1678 = vpop.f32.mrf.mxu0
    %v1679 = vadd.f32 %v1605, %v1678
    %v1680 = vpop.f32.mrf.mxu0
    %1681 = vdwg.mxu0
    %v1682 = vxor.u32 %v1679, 2147483648
    %v1683 = vmul.f32 %v1682, 1.442695
    %v1684 = vpow.pop %v1683
    %v1685 = vadd.f32 %v1684, 1.0
    %v1686 = vrcp.pop %v1685
    %v1687 = vmul.f32 1.0, %v1686
    %v1688 = vtanh.pop %v1679
    %v1689 = vmul.f32 %v1687, %v1153
    %1691 = vrot.lane.b32.xlu0 %v1688, 96
    %v1692 = vpop.permute.xlu0 %1691
    %v1694 = vmul.f32 %v1687, %v1692
    %1696 = vrot.lane.b32.xlu0 %v1694, 16
    %v1697 = vpop.permute.xlu0 %1696
    %v1699 = vadd.f32 %v1689, %v1697
    %v1700 = vtanh.pop %v1699
    %1702 = vrot.lane.b32.xlu0 %v1700, 32
    %v1703 = vpop.permute.xlu0 %1702
    %v1705 = vmul.f32 %v1687, %v1703
    %s1706 = scalar_lea.vmem %s7, 4
    %1707 = vst.msk [vmem:[%s1706] sm:$0x3] %vm80, %v1202
    %1709 = vrot.lane.b32.xlu0 %v1705, 80
    %v1710 = vpop.permute.xlu0 %1709
    %s1712 = scalar_lea.vmem [#allocation5], 4
    %1713 = vst.msk [vmem:[%s1712] sm:$0x3] %vm63, %v1710
    %v1714 = vmul.f32 %v1705, %v617
    %v1715 = vmul.f32 %v1699, %v621
    %1717 = vrot.lane.b32.xlu0 %v1715, 32
    %v1718 = vpop.permute.xlu0 %1717
    %v1720 = vadd.f32 %v1714, %v1718
    %1722 = vrot.lane.b32.xlu0 %v1720, 80
    %v1723 = vpop.permute.xlu0 %1722
    %v1725 = vsel %vm63, %v1723, 0.0
    %1726 = vadd.xlane.f32.xlu0 %v1725
    %v1727 = vpop.xlane.xlu0 %1726
    %v1728 = vadd.f32 %v1727, %v71
    %1730 = vset.pattern.permute.xlu0 0
    %1731 = vperm.xlu0 %1730, %v1728
    %v1732 = vpop.permute.xlu0 %1731
    %v1734 = vadd.f32 %v1732, %v38
    %v1735 = vsel %vm80, %v1734, -inf
    %1736 = vmax.xlane.f32.xlu0 %v1735
    %v1737 = vpop.xlane.xlu0 %1736
    %v1738 = vsub.f32 %v1734, %v1737
    %v1739 = vmul.f32 %v1738, 1.442695
    %v1740 = vpow.pop %v1739
    %v1741 = vsel %vm80, %v1740, 0.0
    %1742 = vadd.xlane.f32.xlu0 %v1741
    %v1743 = vpop.xlane.xlu0 %1742
    %v1744 = vrcp.pop %v1743
    %v1745 = vmul.f32 %v1740, %v1744
    %s1746 = scalar_lea.vmem %s0, 6
    %v1747 = vld [vmem:[%s1746] sm:$0x3]
    %v1748 = vmul.f32 %v1745, %v1747
    %1749 = vrot.lane.b32.xlu0 %v1705, 88
    %v1750 = vpop.permute.xlu0 %1749
    %v1752 = vsel %vm98, %v1748, %v1750
    %v1754 = vsel %vm106, %v1752, 0
    %1756 = vmatprep.subr.mxu0 0.0
    %1757 = vmatpush1.msra.mxu0 0.0
    %1758 = vmatprep.subr.mxu0 0.0
    %1759 = vmatpush1.msra.mxu0 0.0
    %1760 = vmatprep.subr.mxu0 0.0
    %1761 = vmatpush1.msra.mxu0 0.0
    %1762 = vmatprep.subr.mxu0 0.0
    %1763 = vmatpush1.msra.mxu0 0.0
    %1764 = vmatprep.subr.mxu0 0.0
    %1765 = vmatpush1.msra.mxu0 0.0
    %1766 = vmatprep.subr.mxu0 0.0
    %1767 = vmatpush1.msra.mxu0 0.0
    %1768 = vmatprep.subr.mxu0 0.0
    %1769 = vmatpush1.msra.mxu0 0.0
    %1770 = vmatprep.subr.mxu0 0.0
    %1771 = vmatpush1.msra.mxu0 0.0
    %1772 = vmatprep.subr.mxu0 0.0
    %1773 = vmatpush1.msra.mxu0 0.0
    %1774 = vmatprep.subr.mxu0 0.0
    %1775 = vmatpush1.msra.mxu0 0.0
    %1776 = vmatprep.subr.mxu0 0.0
    %1777 = vmatpush1.msra.mxu0 0.0
    %1778 = vmatprep.subr.mxu0 0.0
    %1779 = vmatpush1.msra.mxu0 0.0
    %1780 = vmatprep.subr.mxu0 0.0
    %1781 = vmatpush1.msra.mxu0 0.0
    %1782 = vmatprep.subr.mxu0 0.0
    %v1783 = vand.u32 %v44, 4294901760
    %1784 = vmatpush1.msra.mxu0 %v1783
    %1785 = vmatprep.subr.mxu0 0.0
    %v1786 = vand.u32 %v43, 4294901760
    %1787 = vmatpush1.msra.mxu0 %v1786
    %1788 = vmatprep.subr.mxu0 0.0
    %v1789 = vand.u32 %v42, 4294901760
    %1790 = vmatpush1.msra.mxu0 %v1789
    %1791 = vmatprep.subr.mxu0 0.0
    %1792 = vmatpush2.msra.mxu0 0.0
    %1793 = vmatprep.subr.mxu0 0.0
    %1794 = vmatpush2.msra.mxu0 0.0
    %1795 = vmatprep.subr.mxu0 0.0
    %1796 = vmatpush2.msra.mxu0 0.0
    %1797 = vmatprep.subr.mxu0 0.0
    %1798 = vmatpush2.msra.mxu0 0.0
    %1799 = vmatprep.subr.mxu0 0.0
    %1800 = vmatpush2.msra.mxu0 0.0
    %1801 = vmatprep.subr.mxu0 0.0
    %1802 = vmatpush2.msra.mxu0 0.0
    %1803 = vmatprep.subr.mxu0 0.0
    %1804 = vmatpush2.msra.mxu0 0.0
    %1805 = vmatprep.subr.mxu0 0.0
    %1806 = vmatpush2.msra.mxu0 0.0
    %1807 = vmatprep.subr.mxu0 0.0
    %1808 = vmatpush2.msra.mxu0 0.0
    %1809 = vmatprep.subr.mxu0 0.0
    %1810 = vmatpush2.msra.mxu0 0.0
    %1811 = vmatprep.subr.mxu0 0.0
    %1812 = vmatpush2.msra.mxu0 0.0
    %1813 = vmatprep.subr.mxu0 0.0
    %1814 = vmatpush2.msra.mxu0 0.0
    %1815 = vmatprep.subr.mxu0 0.0
    %1816 = vmatpush2.msra.mxu0 0.0
    %1817 = vmatprep.subr.mxu0 0.0
    %1818 = vmatpush2.msra.mxu0 0.0
    %1819 = vmatprep.subr.mxu0 0.0
    %1820 = vmatpush2.msra.mxu0 0.0
    %1821 = vmatprep.subr.mxu0 0.0
    %1822 = vmatpush2.msra.mxu0 0.0
    %1823 = vmatprep.mubr.f32.mxu0 0.0
    %v1824 = vand.u32 %v1754, 4294901760
    %v1825 = vsub.f32 %v1754, %v1824
    %v1826 = vand.u32 %v1825, 4294901760
    %v1827 = vsub.f32 %v1825, %v1826
    %v1828 = vand.u32 %v1827, 4294901760
    %1829 = vmatmul.mubr.f32.gmra.mxu0 %v1828
    %v1830 = vpop.f32.mrf.mxu0
    %v1831 = vadd.f32 %v104, %v1830
    %v1832 = vpop.f32.mrf.mxu0
    %1833 = vdwg.mxu0
    %1834 = vmatprep.subr.mxu0 0.0
    %1835 = vmatpush1.msra.mxu0 0.0
    %1836 = vmatprep.subr.mxu0 0.0
    %1837 = vmatpush1.msra.mxu0 0.0
    %1838 = vmatprep.subr.mxu0 0.0
    %1839 = vmatpush1.msra.mxu0 0.0
    %1840 = vmatprep.subr.mxu0 0.0
    %1841 = vmatpush1.msra.mxu0 0.0
    %1842 = vmatprep.subr.mxu0 0.0
    %1843 = vmatpush1.msra.mxu0 0.0
    %1844 = vmatprep.subr.mxu0 0.0
    %1845 = vmatpush1.msra.mxu0 0.0
    %1846 = vmatprep.subr.mxu0 0.0
    %1847 = vmatpush1.msra.mxu0 0.0
    %1848 = vmatprep.subr.mxu0 0.0
    %1849 = vmatpush1.msra.mxu0 0.0
    %1850 = vmatprep.subr.mxu0 0.0
    %1851 = vmatpush1.msra.mxu0 0.0
    %1852 = vmatprep.subr.mxu0 0.0
    %1853 = vmatpush1.msra.mxu0 0.0
    %1854 = vmatprep.subr.mxu0 0.0
    %1855 = vmatpush1.msra.mxu0 0.0
    %1856 = vmatprep.subr.mxu0 0.0
    %1857 = vmatpush1.msra.mxu0 0.0
    %1858 = vmatprep.subr.mxu0 0.0
    %1859 = vmatpush1.msra.mxu0 0.0
    %1860 = vmatprep.subr.mxu0 0.0
    %v1861 = vand.u32 %v44, 4294901760
    %v1862 = vsub.f32 %v44, %v1861
    %v1863 = vand.u32 %v1862, 4294901760
    %v1864 = vsub.f32 %v1862, %v1863
    %v1865 = vand.u32 %v1864, 4294901760
    %1866 = vmatpush1.msra.mxu0 %v1865
    %1867 = vmatprep.subr.mxu0 0.0
    %v1868 = vand.u32 %v43, 4294901760
    %v1869 = vsub.f32 %v43, %v1868
    %v1870 = vand.u32 %v1869, 4294901760
    %v1871 = vsub.f32 %v1869, %v1870
    %v1872 = vand.u32 %v1871, 4294901760
    %1873 = vmatpush1.msra.mxu0 %v1872
    %1874 = vmatprep.subr.mxu0 0.0
    %v1875 = vand.u32 %v42, 4294901760
    %v1876 = vsub.f32 %v42, %v1875
    %v1877 = vand.u32 %v1876, 4294901760
    %v1878 = vsub.f32 %v1876, %v1877
    %v1879 = vand.u32 %v1878, 4294901760
    %1880 = vmatpush1.msra.mxu0 %v1879
    %1881 = vmatprep.subr.mxu0 0.0
    %1882 = vmatpush2.msra.mxu0 0.0
    %1883 = vmatprep.subr.mxu0 0.0
    %1884 = vmatpush2.msra.mxu0 0.0
    %1885 = vmatprep.subr.mxu0 0.0
    %1886 = vmatpush2.msra.mxu0 0.0
    %1887 = vmatprep.subr.mxu0 0.0
    %1888 = vmatpush2.msra.mxu0 0.0
    %1889 = vmatprep.subr.mxu0 0.0
    %1890 = vmatpush2.msra.mxu0 0.0
    %1891 = vmatprep.subr.mxu0 0.0
    %1892 = vmatpush2.msra.mxu0 0.0
    %1893 = vmatprep.subr.mxu0 0.0
    %1894 = vmatpush2.msra.mxu0 0.0
    %1895 = vmatprep.subr.mxu0 0.0
    %1896 = vmatpush2.msra.mxu0 0.0
    %1897 = vmatprep.subr.mxu0 0.0
    %1898 = vmatpush2.msra.mxu0 0.0
    %1899 = vmatprep.subr.mxu0 0.0
    %1900 = vmatpush2.msra.mxu0 0.0
    %1901 = vmatprep.subr.mxu0 0.0
    %1902 = vmatpush2.msra.mxu0 0.0
    %1903 = vmatprep.subr.mxu0 0.0
    %1904 = vmatpush2.msra.mxu0 0.0
    %1905 = vmatprep.subr.mxu0 0.0
    %1906 = vmatpush2.msra.mxu0 0.0
    %1907 = vmatprep.subr.mxu0 0.0
    %1908 = vmatpush2.msra.mxu0 0.0
    %1909 = vmatprep.subr.mxu0 0.0
    %1910 = vmatpush2.msra.mxu0 0.0
    %1911 = vmatprep.subr.mxu0 0.0
    %1912 = vmatpush2.msra.mxu0 0.0
    %1913 = vmatprep.mubr.f32.mxu0 0.0
    %v1914 = vand.u32 %v1754, 4294901760
    %1915 = vmatmul.mubr.f32.gmra.mxu0 %v1914
    %v1916 = vpop.f32.mrf.mxu0
    %v1917 = vadd.f32 %v1831, %v1916
    %v1918 = vpop.f32.mrf.mxu0
    %1919 = vdwg.mxu0
    %1920 = vmatprep.subr.mxu0 0.0
    %1921 = vmatpush1.msra.mxu0 0.0
    %1922 = vmatprep.subr.mxu0 0.0
    %1923 = vmatpush1.msra.mxu0 0.0
    %1924 = vmatprep.subr.mxu0 0.0
    %1925 = vmatpush1.msra.mxu0 0.0
    %1926 = vmatprep.subr.mxu0 0.0
    %1927 = vmatpush1.msra.mxu0 0.0
    %1928 = vmatprep.subr.mxu0 0.0
    %1929 = vmatpush1.msra.mxu0 0.0
    %1930 = vmatprep.subr.mxu0 0.0
    %1931 = vmatpush1.msra.mxu0 0.0
    %1932 = vmatprep.subr.mxu0 0.0
    %1933 = vmatpush1.msra.mxu0 0.0
    %1934 = vmatprep.subr.mxu0 0.0
    %1935 = vmatpush1.msra.mxu0 0.0
    %1936 = vmatprep.subr.mxu0 0.0
    %1937 = vmatpush1.msra.mxu0 0.0
    %1938 = vmatprep.subr.mxu0 0.0
    %1939 = vmatpush1.msra.mxu0 0.0
    %1940 = vmatprep.subr.mxu0 0.0
    %1941 = vmatpush1.msra.mxu0 0.0
    %1942 = vmatprep.subr.mxu0 0.0
    %1943 = vmatpush1.msra.mxu0 0.0
    %1944 = vmatprep.subr.mxu0 0.0
    %1945 = vmatpush1.msra.mxu0 0.0
    %1946 = vmatprep.subr.mxu0 0.0
    %v1947 = vand.u32 %v44, 4294901760
    %v1948 = vsub.f32 %v44, %v1947
    %1949 = vmatpush1.msra.mxu0 %v1948
    %1950 = vmatprep.subr.mxu0 0.0
    %v1951 = vand.u32 %v43, 4294901760
    %v1952 = vsub.f32 %v43, %v1951
    %1953 = vmatpush1.msra.mxu0 %v1952
    %1954 = vmatprep.subr.mxu0 0.0
    %v1955 = vand.u32 %v42, 4294901760
    %v1956 = vsub.f32 %v42, %v1955
    %1957 = vmatpush1.msra.mxu0 %v1956
    %1958 = vmatprep.subr.mxu0 0.0
    %1959 = vmatpush2.msra.mxu0 0.0
    %1960 = vmatprep.subr.mxu0 0.0
    %1961 = vmatpush2.msra.mxu0 0.0
    %1962 = vmatprep.subr.mxu0 0.0
    %1963 = vmatpush2.msra.mxu0 0.0
    %1964 = vmatprep.subr.mxu0 0.0
    %1965 = vmatpush2.msra.mxu0 0.0
    %1966 = vmatprep.subr.mxu0 0.0
    %1967 = vmatpush2.msra.mxu0 0.0
    %1968 = vmatprep.subr.mxu0 0.0
    %1969 = vmatpush2.msra.mxu0 0.0
    %1970 = vmatprep.subr.mxu0 0.0
    %1971 = vmatpush2.msra.mxu0 0.0
    %1972 = vmatprep.subr.mxu0 0.0
    %1973 = vmatpush2.msra.mxu0 0.0
    %1974 = vmatprep.subr.mxu0 0.0
    %1975 = vmatpush2.msra.mxu0 0.0
    %1976 = vmatprep.subr.mxu0 0.0
    %1977 = vmatpush2.msra.mxu0 0.0
    %1978 = vmatprep.subr.mxu0 0.0
    %1979 = vmatpush2.msra.mxu0 0.0
    %1980 = vmatprep.subr.mxu0 0.0
    %1981 = vmatpush2.msra.mxu0 0.0
    %1982 = vmatprep.subr.mxu0 0.0
    %1983 = vmatpush2.msra.mxu0 0.0
    %1984 = vmatprep.subr.mxu0 0.0
    %1985 = vmatpush2.msra.mxu0 0.0
    %1986 = vmatprep.subr.mxu0 0.0
    %1987 = vmatpush2.msra.mxu0 0.0
    %1988 = vmatprep.subr.mxu0 0.0
    %1989 = vmatpush2.msra.mxu0 0.0
    %1990 = vmatprep.mubr.f32.mxu0 0.0
    %v1991 = vand.u32 %v1754, 4294901760
    %v1992 = vsub.f32 %v1754, %v1991
    %1993 = vmatmul.mubr.f32.gmra.mxu0 %v1992
    %v1994 = vpop.f32.mrf.mxu0
    %v1995 = vadd.f32 %v1917, %v1994
    %v1996 = vpop.f32.mrf.mxu0
    %1997 = vdwg.mxu0
    %1998 = vmatprep.subr.mxu0 0.0
    %1999 = vmatpush1.msra.mxu0 0.0
    %2000 = vmatprep.subr.mxu0 0.0
    %2001 = vmatpush1.msra.mxu0 0.0
    %2002 = vmatprep.subr.mxu0 0.0
    %2003 = vmatpush1.msra.mxu0 0.0
    %2004 = vmatprep.subr.mxu0 0.0
    %2005 = vmatpush1.msra.mxu0 0.0
    %2006 = vmatprep.subr.mxu0 0.0
    %2007 = vmatpush1.msra.mxu0 0.0
    %2008 = vmatprep.subr.mxu0 0.0
    %2009 = vmatpush1.msra.mxu0 0.0
    %2010 = vmatprep.subr.mxu0 0.0
    %2011 = vmatpush1.msra.mxu0 0.0
    %2012 = vmatprep.subr.mxu0 0.0
    %2013 = vmatpush1.msra.mxu0 0.0
    %2014 = vmatprep.subr.mxu0 0.0
    %2015 = vmatpush1.msra.mxu0 0.0
    %2016 = vmatprep.subr.mxu0 0.0
    %2017 = vmatpush1.msra.mxu0 0.0
    %2018 = vmatprep.subr.mxu0 0.0
    %2019 = vmatpush1.msra.mxu0 0.0
    %2020 = vmatprep.subr.mxu0 0.0
    %2021 = vmatpush1.msra.mxu0 0.0
    %2022 = vmatprep.subr.mxu0 0.0
    %2023 = vmatpush1.msra.mxu0 0.0
    %2024 = vmatprep.subr.mxu0 0.0
    %v2025 = vand.u32 %v44, 4294901760
    %2026 = vmatpush1.msra.mxu0 %v2025
    %2027 = vmatprep.subr.mxu0 0.0
    %v2028 = vand.u32 %v43, 4294901760
    %2029 = vmatpush1.msra.mxu0 %v2028
    %2030 = vmatprep.subr.mxu0 0.0
    %v2031 = vand.u32 %v42, 4294901760
    %2032 = vmatpush1.msra.mxu0 %v2031
    %2033 = vmatprep.subr.mxu0 0.0
    %2034 = vmatpush2.msra.mxu0 0.0
    %2035 = vmatprep.subr.mxu0 0.0
    %2036 = vmatpush2.msra.mxu0 0.0
    %2037 = vmatprep.subr.mxu0 0.0
    %2038 = vmatpush2.msra.mxu0 0.0
    %2039 = vmatprep.subr.mxu0 0.0
    %2040 = vmatpush2.msra.mxu0 0.0
    %2041 = vmatprep.subr.mxu0 0.0
    %2042 = vmatpush2.msra.mxu0 0.0
    %2043 = vmatprep.subr.mxu0 0.0
    %2044 = vmatpush2.msra.mxu0 0.0
    %2045 = vmatprep.subr.mxu0 0.0
    %2046 = vmatpush2.msra.mxu0 0.0
    %2047 = vmatprep.subr.mxu0 0.0
    %2048 = vmatpush2.msra.mxu0 0.0
    %2049 = vmatprep.subr.mxu0 0.0
    %2050 = vmatpush2.msra.mxu0 0.0
    %2051 = vmatprep.subr.mxu0 0.0
    %2052 = vmatpush2.msra.mxu0 0.0
    %2053 = vmatprep.subr.mxu0 0.0
    %2054 = vmatpush2.msra.mxu0 0.0
    %2055 = vmatprep.subr.mxu0 0.0
    %2056 = vmatpush2.msra.mxu0 0.0
    %2057 = vmatprep.subr.mxu0 0.0
    %2058 = vmatpush2.msra.mxu0 0.0
    %2059 = vmatprep.subr.mxu0 0.0
    %2060 = vmatpush2.msra.mxu0 0.0
    %2061 = vmatprep.subr.mxu0 0.0
    %2062 = vmatpush2.msra.mxu0 0.0
    %2063 = vmatprep.subr.mxu0 0.0
    %2064 = vmatpush2.msra.mxu0 0.0
    %2065 = vmatprep.mubr.f32.mxu0 0.0
    %v2066 = vand.u32 %v1754, 4294901760
    %v2067 = vsub.f32 %v1754, %v2066
    %v2068 = vand.u32 %v2067, 4294901760
    %2069 = vmatmul.mubr.f32.gmra.mxu0 %v2068
    %v2070 = vpop.f32.mrf.mxu0
    %v2071 = vadd.f32 %v1995, %v2070
    %v2072 = vpop.f32.mrf.mxu0
    %2073 = vdwg.mxu0
    %2074 = vmatprep.subr.mxu0 0.0
    %2075 = vmatpush1.msra.mxu0 0.0
    %2076 = vmatprep.subr.mxu0 0.0
    %2077 = vmatpush1.msra.mxu0 0.0
    %2078 = vmatprep.subr.mxu0 0.0
    %2079 = vmatpush1.msra.mxu0 0.0
    %2080 = vmatprep.subr.mxu0 0.0
    %2081 = vmatpush1.msra.mxu0 0.0
    %2082 = vmatprep.subr.mxu0 0.0
    %2083 = vmatpush1.msra.mxu0 0.0
    %2084 = vmatprep.subr.mxu0 0.0
    %2085 = vmatpush1.msra.mxu0 0.0
    %2086 = vmatprep.subr.mxu0 0.0
    %2087 = vmatpush1.msra.mxu0 0.0
    %2088 = vmatprep.subr.mxu0 0.0
    %2089 = vmatpush1.msra.mxu0 0.0
    %2090 = vmatprep.subr.mxu0 0.0
    %2091 = vmatpush1.msra.mxu0 0.0
    %2092 = vmatprep.subr.mxu0 0.0
    %2093 = vmatpush1.msra.mxu0 0.0
    %2094 = vmatprep.subr.mxu0 0.0
    %2095 = vmatpush1.msra.mxu0 0.0
    %2096 = vmatprep.subr.mxu0 0.0
    %2097 = vmatpush1.msra.mxu0 0.0
    %2098 = vmatprep.subr.mxu0 0.0
    %2099 = vmatpush1.msra.mxu0 0.0
    %2100 = vmatprep.subr.mxu0 0.0
    %v2101 = vand.u32 %v44, 4294901760
    %v2102 = vsub.f32 %v44, %v2101
    %v2103 = vand.u32 %v2102, 4294901760
    %2104 = vmatpush1.msra.mxu0 %v2103
    %2105 = vmatprep.subr.mxu0 0.0
    %v2106 = vand.u32 %v43, 4294901760
    %v2107 = vsub.f32 %v43, %v2106
    %v2108 = vand.u32 %v2107, 4294901760
    %2109 = vmatpush1.msra.mxu0 %v2108
    %2110 = vmatprep.subr.mxu0 0.0
    %v2111 = vand.u32 %v42, 4294901760
    %v2112 = vsub.f32 %v42, %v2111
    %v2113 = vand.u32 %v2112, 4294901760
    %2114 = vmatpush1.msra.mxu0 %v2113
    %2115 = vmatprep.subr.mxu0 0.0
    %2116 = vmatpush2.msra.mxu0 0.0
    %2117 = vmatprep.subr.mxu0 0.0
    %2118 = vmatpush2.msra.mxu0 0.0
    %2119 = vmatprep.subr.mxu0 0.0
    %2120 = vmatpush2.msra.mxu0 0.0
    %2121 = vmatprep.subr.mxu0 0.0
    %2122 = vmatpush2.msra.mxu0 0.0
    %2123 = vmatprep.subr.mxu0 0.0
    %2124 = vmatpush2.msra.mxu0 0.0
    %2125 = vmatprep.subr.mxu0 0.0
    %2126 = vmatpush2.msra.mxu0 0.0
    %2127 = vmatprep.subr.mxu0 0.0
    %2128 = vmatpush2.msra.mxu0 0.0
    %2129 = vmatprep.subr.mxu0 0.0
    %2130 = vmatpush2.msra.mxu0 0.0
    %2131 = vmatprep.subr.mxu0 0.0
    %2132 = vmatpush2.msra.mxu0 0.0
    %2133 = vmatprep.subr.mxu0 0.0
    %2134 = vmatpush2.msra.mxu0 0.0
    %2135 = vmatprep.subr.mxu0 0.0
    %2136 = vmatpush2.msra.mxu0 0.0
    %2137 = vmatprep.subr.mxu0 0.0
    %2138 = vmatpush2.msra.mxu0 0.0
    %2139 = vmatprep.subr.mxu0 0.0
    %2140 = vmatpush2.msra.mxu0 0.0
    %2141 = vmatprep.subr.mxu0 0.0
    %2142 = vmatpush2.msra.mxu0 0.0
    %2143 = vmatprep.subr.mxu0 0.0
    %2144 = vmatpush2.msra.mxu0 0.0
    %2145 = vmatprep.subr.mxu0 0.0
    %2146 = vmatpush2.msra.mxu0 0.0
    %2147 = vmatprep.mubr.f32.mxu0 0.0
    %v2148 = vand.u32 %v1754, 4294901760
    %2149 = vmatmul.mubr.f32.gmra.mxu0 %v2148
    %v2150 = vpop.f32.mrf.mxu0
    %v2151 = vadd.f32 %v2071, %v2150
    %v2152 = vpop.f32.mrf.mxu0
    %2153 = vdwg.mxu0
    %2154 = vmatprep.subr.mxu0 0.0
    %2155 = vmatpush1.msra.mxu0 0.0
    %2156 = vmatprep.subr.mxu0 0.0
    %2157 = vmatpush1.msra.mxu0 0.0
    %2158 = vmatprep.subr.mxu0 0.0
    %2159 = vmatpush1.msra.mxu0 0.0
    %2160 = vmatprep.subr.mxu0 0.0
    %2161 = vmatpush1.msra.mxu0 0.0
    %2162 = vmatprep.subr.mxu0 0.0
    %2163 = vmatpush1.msra.mxu0 0.0
    %2164 = vmatprep.subr.mxu0 0.0
    %2165 = vmatpush1.msra.mxu0 0.0
    %2166 = vmatprep.subr.mxu0 0.0
    %2167 = vmatpush1.msra.mxu0 0.0
    %2168 = vmatprep.subr.mxu0 0.0
    %2169 = vmatpush1.msra.mxu0 0.0
    %2170 = vmatprep.subr.mxu0 0.0
    %2171 = vmatpush1.msra.mxu0 0.0
    %2172 = vmatprep.subr.mxu0 0.0
    %2173 = vmatpush1.msra.mxu0 0.0
    %2174 = vmatprep.subr.mxu0 0.0
    %2175 = vmatpush1.msra.mxu0 0.0
    %2176 = vmatprep.subr.mxu0 0.0
    %2177 = vmatpush1.msra.mxu0 0.0
    %2178 = vmatprep.subr.mxu0 0.0
    %2179 = vmatpush1.msra.mxu0 0.0
    %2180 = vmatprep.subr.mxu0 0.0
    %v2181 = vand.u32 %v44, 4294901760
    %2182 = vmatpush1.msra.mxu0 %v2181
    %2183 = vmatprep.subr.mxu0 0.0
    %v2184 = vand.u32 %v43, 4294901760
    %2185 = vmatpush1.msra.mxu0 %v2184
    %2186 = vmatprep.subr.mxu0 0.0
    %v2187 = vand.u32 %v42, 4294901760
    %2188 = vmatpush1.msra.mxu0 %v2187
    %2189 = vmatprep.subr.mxu0 0.0
    %2190 = vmatpush2.msra.mxu0 0.0
    %2191 = vmatprep.subr.mxu0 0.0
    %2192 = vmatpush2.msra.mxu0 0.0
    %2193 = vmatprep.subr.mxu0 0.0
    %2194 = vmatpush2.msra.mxu0 0.0
    %2195 = vmatprep.subr.mxu0 0.0
    %2196 = vmatpush2.msra.mxu0 0.0
    %2197 = vmatprep.subr.mxu0 0.0
    %2198 = vmatpush2.msra.mxu0 0.0
    %2199 = vmatprep.subr.mxu0 0.0
    %2200 = vmatpush2.msra.mxu0 0.0
    %2201 = vmatprep.subr.mxu0 0.0
    %2202 = vmatpush2.msra.mxu0 0.0
    %2203 = vmatprep.subr.mxu0 0.0
    %2204 = vmatpush2.msra.mxu0 0.0
    %2205 = vmatprep.subr.mxu0 0.0
    %2206 = vmatpush2.msra.mxu0 0.0
    %2207 = vmatprep.subr.mxu0 0.0
    %2208 = vmatpush2.msra.mxu0 0.0
    %2209 = vmatprep.subr.mxu0 0.0
    %2210 = vmatpush2.msra.mxu0 0.0
    %2211 = vmatprep.subr.mxu0 0.0
    %2212 = vmatpush2.msra.mxu0 0.0
    %2213 = vmatprep.subr.mxu0 0.0
    %2214 = vmatpush2.msra.mxu0 0.0
    %2215 = vmatprep.subr.mxu0 0.0
    %2216 = vmatpush2.msra.mxu0 0.0
    %2217 = vmatprep.subr.mxu0 0.0
    %2218 = vmatpush2.msra.mxu0 0.0
    %2219 = vmatprep.subr.mxu0 0.0
    %2220 = vmatpush2.msra.mxu0 0.0
    %2221 = vmatprep.mubr.f32.mxu0 0.0
    %v2222 = vand.u32 %v1754, 4294901760
    %2223 = vmatmul.mubr.f32.gmra.mxu0 %v2222
    %v2224 = vpop.f32.mrf.mxu0
    %v2225 = vadd.f32 %v2151, %v2224
    %v2226 = vpop.f32.mrf.mxu0
    %2227 = vdwg.mxu0
    %v2228 = vxor.u32 %v2225, 2147483648
    %v2229 = vmul.f32 %v2228, 1.442695
    %v2230 = vpow.pop %v2229
    %v2231 = vadd.f32 %v2230, 1.0
    %v2232 = vrcp.pop %v2231
    %v2233 = vmul.f32 1.0, %v2232
    %v2234 = vtanh.pop %v2225
    %v2235 = vmul.f32 %v2233, %v1699
    %2237 = vrot.lane.b32.xlu0 %v2234, 96
    %v2238 = vpop.permute.xlu0 %2237
    %v2240 = vmul.f32 %v2233, %v2238
    %2242 = vrot.lane.b32.xlu0 %v2240, 16
    %v2243 = vpop.permute.xlu0 %2242
    %v2245 = vadd.f32 %v2235, %v2243
    %v2246 = vtanh.pop %v2245
    %2248 = vrot.lane.b32.xlu0 %v2246, 32
    %v2249 = vpop.permute.xlu0 %2248
    %v2251 = vmul.f32 %v2233, %v2249
    %s2252 = scalar_lea.vmem %s7, 6
    %2253 = vst.msk [vmem:[%s2252] sm:$0x3] %vm80, %v1748
    %2255 = vrot.lane.b32.xlu0 %v2251, 80
    %v2256 = vpop.permute.xlu0 %2255
    %s2258 = scalar_lea.vmem [#allocation5], 6
    %2259 = vst.msk [vmem:[%s2258] sm:$0x3] %vm63, %v2256
    %v2260 = vmul.f32 %v2251, %v617
    %v2261 = vmul.f32 %v2245, %v621
    %2263 = vrot.lane.b32.xlu0 %v2261, 32
    %v2264 = vpop.permute.xlu0 %2263
    %v2266 = vadd.f32 %v2260, %v2264
    %2268 = vrot.lane.b32.xlu0 %v2266, 80
    %v2269 = vpop.permute.xlu0 %2268
    %v2271 = vsel %vm63, %v2269, 0.0
    %2272 = vadd.xlane.f32.xlu0 %v2271
    %v2273 = vpop.xlane.xlu0 %2272
    %v2274 = vadd.f32 %v2273, %v71
    %2276 = vset.pattern.permute.xlu0 0
    %2277 = vperm.xlu0 %2276, %v2274
    %v2278 = vpop.permute.xlu0 %2277
    %v2280 = vadd.f32 %v2278, %v38
    %v2281 = vsel %vm80, %v2280, -inf
    %2282 = vmax.xlane.f32.xlu0 %v2281
    %v2283 = vpop.xlane.xlu0 %2282
    %v2284 = vsub.f32 %v2280, %v2283
    %v2285 = vmul.f32 %v2284, 1.442695
    %v2286 = vpow.pop %v2285
    %v2287 = vsel %vm80, %v2286, 0.0
    %2288 = vadd.xlane.f32.xlu0 %v2287
    %v2289 = vpop.xlane.xlu0 %2288
    %v2290 = vrcp.pop %v2289
    %v2291 = vmul.f32 %v2286, %v2290
    %s2292 = scalar_lea.vmem %s0, 8
    %v2293 = vld [vmem:[%s2292] sm:$0x3]
    %v2294 = vmul.f32 %v2291, %v2293
    %2295 = vrot.lane.b32.xlu0 %v2251, 88
    %v2296 = vpop.permute.xlu0 %2295
    %v2298 = vsel %vm98, %v2294, %v2296
    %v2300 = vsel %vm106, %v2298, 0
    %2302 = vmatprep.subr.mxu0 0.0
    %2303 = vmatpush1.msra.mxu0 0.0
    %2304 = vmatprep.subr.mxu0 0.0
    %2305 = vmatpush1.msra.mxu0 0.0
    %2306 = vmatprep.subr.mxu0 0.0
    %2307 = vmatpush1.msra.mxu0 0.0
    %2308 = vmatprep.subr.mxu0 0.0
    %2309 = vmatpush1.msra.mxu0 0.0
    %2310 = vmatprep.subr.mxu0 0.0
    %2311 = vmatpush1.msra.mxu0 0.0
    %2312 = vmatprep.subr.mxu0 0.0
    %2313 = vmatpush1.msra.mxu0 0.0
    %2314 = vmatprep.subr.mxu0 0.0
    %2315 = vmatpush1.msra.mxu0 0.0
    %2316 = vmatprep.subr.mxu0 0.0
    %2317 = vmatpush1.msra.mxu0 0.0
    %2318 = vmatprep.subr.mxu0 0.0
    %2319 = vmatpush1.msra.mxu0 0.0
    %2320 = vmatprep.subr.mxu0 0.0
    %2321 = vmatpush1.msra.mxu0 0.0
    %2322 = vmatprep.subr.mxu0 0.0
    %2323 = vmatpush1.msra.mxu0 0.0
    %2324 = vmatprep.subr.mxu0 0.0
    %2325 = vmatpush1.msra.mxu0 0.0
    %2326 = vmatprep.subr.mxu0 0.0
    %2327 = vmatpush1.msra.mxu0 0.0
    %2328 = vmatprep.subr.mxu0 0.0
    %v2329 = vand.u32 %v44, 4294901760
    %2330 = vmatpush1.msra.mxu0 %v2329
    %2331 = vmatprep.subr.mxu0 0.0
    %v2332 = vand.u32 %v43, 4294901760
    %2333 = vmatpush1.msra.mxu0 %v2332
    %2334 = vmatprep.subr.mxu0 0.0
    %v2335 = vand.u32 %v42, 4294901760
    %2336 = vmatpush1.msra.mxu0 %v2335
    %2337 = vmatprep.subr.mxu0 0.0
    %2338 = vmatpush2.msra.mxu0 0.0
    %2339 = vmatprep.subr.mxu0 0.0
    %2340 = vmatpush2.msra.mxu0 0.0
    %2341 = vmatprep.subr.mxu0 0.0
    %2342 = vmatpush2.msra.mxu0 0.0
    %2343 = vmatprep.subr.mxu0 0.0
    %2344 = vmatpush2.msra.mxu0 0.0
    %2345 = vmatprep.subr.mxu0 0.0
    %2346 = vmatpush2.msra.mxu0 0.0
    %2347 = vmatprep.subr.mxu0 0.0
    %2348 = vmatpush2.msra.mxu0 0.0
    %2349 = vmatprep.subr.mxu0 0.0
    %2350 = vmatpush2.msra.mxu0 0.0
    %2351 = vmatprep.subr.mxu0 0.0
    %2352 = vmatpush2.msra.mxu0 0.0
    %2353 = vmatprep.subr.mxu0 0.0
    %2354 = vmatpush2.msra.mxu0 0.0
    %2355 = vmatprep.subr.mxu0 0.0
    %2356 = vmatpush2.msra.mxu0 0.0
    %2357 = vmatprep.subr.mxu0 0.0
    %2358 = vmatpush2.msra.mxu0 0.0
    %2359 = vmatprep.subr.mxu0 0.0
    %2360 = vmatpush2.msra.mxu0 0.0
    %2361 = vmatprep.subr.mxu0 0.0
    %2362 = vmatpush2.msra.mxu0 0.0
    %2363 = vmatprep.subr.mxu0 0.0
    %2364 = vmatpush2.msra.mxu0 0.0
    %2365 = vmatprep.subr.mxu0 0.0
    %2366 = vmatpush2.msra.mxu0 0.0
    %2367 = vmatprep.subr.mxu0 0.0
    %2368 = vmatpush2.msra.mxu0 0.0
    %2369 = vmatprep.mubr.f32.mxu0 0.0
    %v2370 = vand.u32 %v2300, 4294901760
    %v2371 = vsub.f32 %v2300, %v2370
    %v2372 = vand.u32 %v2371, 4294901760
    %v2373 = vsub.f32 %v2371, %v2372
    %v2374 = vand.u32 %v2373, 4294901760
    %2375 = vmatmul.mubr.f32.gmra.mxu0 %v2374
    %v2376 = vpop.f32.mrf.mxu0
    %v2377 = vadd.f32 %v104, %v2376
    %v2378 = vpop.f32.mrf.mxu0
    %2379 = vdwg.mxu0
    %2380 = vmatprep.subr.mxu0 0.0
    %2381 = vmatpush1.msra.mxu0 0.0
    %2382 = vmatprep.subr.mxu0 0.0
    %2383 = vmatpush1.msra.mxu0 0.0
    %2384 = vmatprep.subr.mxu0 0.0
    %2385 = vmatpush1.msra.mxu0 0.0
    %2386 = vmatprep.subr.mxu0 0.0
    %2387 = vmatpush1.msra.mxu0 0.0
    %2388 = vmatprep.subr.mxu0 0.0
    %2389 = vmatpush1.msra.mxu0 0.0
    %2390 = vmatprep.subr.mxu0 0.0
    %2391 = vmatpush1.msra.mxu0 0.0
    %2392 = vmatprep.subr.mxu0 0.0
    %2393 = vmatpush1.msra.mxu0 0.0
    %2394 = vmatprep.subr.mxu0 0.0
    %2395 = vmatpush1.msra.mxu0 0.0
    %2396 = vmatprep.subr.mxu0 0.0
    %2397 = vmatpush1.msra.mxu0 0.0
    %2398 = vmatprep.subr.mxu0 0.0
    %2399 = vmatpush1.msra.mxu0 0.0
    %2400 = vmatprep.subr.mxu0 0.0
    %2401 = vmatpush1.msra.mxu0 0.0
    %2402 = vmatprep.subr.mxu0 0.0
    %2403 = vmatpush1.msra.mxu0 0.0
    %2404 = vmatprep.subr.mxu0 0.0
    %2405 = vmatpush1.msra.mxu0 0.0
    %2406 = vmatprep.subr.mxu0 0.0
    %v2407 = vand.u32 %v44, 4294901760
    %v2408 = vsub.f32 %v44, %v2407
    %v2409 = vand.u32 %v2408, 4294901760
    %v2410 = vsub.f32 %v2408, %v2409
    %v2411 = vand.u32 %v2410, 4294901760
    %2412 = vmatpush1.msra.mxu0 %v2411
    %2413 = vmatprep.subr.mxu0 0.0
    %v2414 = vand.u32 %v43, 4294901760
    %v2415 = vsub.f32 %v43, %v2414
    %v2416 = vand.u32 %v2415, 4294901760
    %v2417 = vsub.f32 %v2415, %v2416
    %v2418 = vand.u32 %v2417, 4294901760
    %2419 = vmatpush1.msra.mxu0 %v2418
    %2420 = vmatprep.subr.mxu0 0.0
    %v2421 = vand.u32 %v42, 4294901760
    %v2422 = vsub.f32 %v42, %v2421
    %v2423 = vand.u32 %v2422, 4294901760
    %v2424 = vsub.f32 %v2422, %v2423
    %v2425 = vand.u32 %v2424, 4294901760
    %2426 = vmatpush1.msra.mxu0 %v2425
    %2427 = vmatprep.subr.mxu0 0.0
    %2428 = vmatpush2.msra.mxu0 0.0
    %2429 = vmatprep.subr.mxu0 0.0
    %2430 = vmatpush2.msra.mxu0 0.0
    %2431 = vmatprep.subr.mxu0 0.0
    %2432 = vmatpush2.msra.mxu0 0.0
    %2433 = vmatprep.subr.mxu0 0.0
    %2434 = vmatpush2.msra.mxu0 0.0
    %2435 = vmatprep.subr.mxu0 0.0
    %2436 = vmatpush2.msra.mxu0 0.0
    %2437 = vmatprep.subr.mxu0 0.0
    %2438 = vmatpush2.msra.mxu0 0.0
    %2439 = vmatprep.subr.mxu0 0.0
    %2440 = vmatpush2.msra.mxu0 0.0
    %2441 = vmatprep.subr.mxu0 0.0
    %2442 = vmatpush2.msra.mxu0 0.0
    %2443 = vmatprep.subr.mxu0 0.0
    %2444 = vmatpush2.msra.mxu0 0.0
    %2445 = vmatprep.subr.mxu0 0.0
    %2446 = vmatpush2.msra.mxu0 0.0
    %2447 = vmatprep.subr.mxu0 0.0
    %2448 = vmatpush2.msra.mxu0 0.0
    %2449 = vmatprep.subr.mxu0 0.0
    %2450 = vmatpush2.msra.mxu0 0.0
    %2451 = vmatprep.subr.mxu0 0.0
    %2452 = vmatpush2.msra.mxu0 0.0
    %2453 = vmatprep.subr.mxu0 0.0
    %2454 = vmatpush2.msra.mxu0 0.0
    %2455 = vmatprep.subr.mxu0 0.0
    %2456 = vmatpush2.msra.mxu0 0.0
    %2457 = vmatprep.subr.mxu0 0.0
    %2458 = vmatpush2.msra.mxu0 0.0
    %2459 = vmatprep.mubr.f32.mxu0 0.0
    %v2460 = vand.u32 %v2300, 4294901760
    %2461 = vmatmul.mubr.f32.gmra.mxu0 %v2460
    %v2462 = vpop.f32.mrf.mxu0
    %v2463 = vadd.f32 %v2377, %v2462
    %v2464 = vpop.f32.mrf.mxu0
    %2465 = vdwg.mxu0
    %2466 = vmatprep.subr.mxu0 0.0
    %2467 = vmatpush1.msra.mxu0 0.0
    %2468 = vmatprep.subr.mxu0 0.0
    %2469 = vmatpush1.msra.mxu0 0.0
    %2470 = vmatprep.subr.mxu0 0.0
    %2471 = vmatpush1.msra.mxu0 0.0
    %2472 = vmatprep.subr.mxu0 0.0
    %2473 = vmatpush1.msra.mxu0 0.0
    %2474 = vmatprep.subr.mxu0 0.0
    %2475 = vmatpush1.msra.mxu0 0.0
    %2476 = vmatprep.subr.mxu0 0.0
    %2477 = vmatpush1.msra.mxu0 0.0
    %2478 = vmatprep.subr.mxu0 0.0
    %2479 = vmatpush1.msra.mxu0 0.0
    %2480 = vmatprep.subr.mxu0 0.0
    %2481 = vmatpush1.msra.mxu0 0.0
    %2482 = vmatprep.subr.mxu0 0.0
    %2483 = vmatpush1.msra.mxu0 0.0
    %2484 = vmatprep.subr.mxu0 0.0
    %2485 = vmatpush1.msra.mxu0 0.0
    %2486 = vmatprep.subr.mxu0 0.0
    %2487 = vmatpush1.msra.mxu0 0.0
    %2488 = vmatprep.subr.mxu0 0.0
    %2489 = vmatpush1.msra.mxu0 0.0
    %2490 = vmatprep.subr.mxu0 0.0
    %2491 = vmatpush1.msra.mxu0 0.0
    %2492 = vmatprep.subr.mxu0 0.0
    %v2493 = vand.u32 %v44, 4294901760
    %v2494 = vsub.f32 %v44, %v2493
    %2495 = vmatpush1.msra.mxu0 %v2494
    %2496 = vmatprep.subr.mxu0 0.0
    %v2497 = vand.u32 %v43, 4294901760
    %v2498 = vsub.f32 %v43, %v2497
    %2499 = vmatpush1.msra.mxu0 %v2498
    %2500 = vmatprep.subr.mxu0 0.0
    %v2501 = vand.u32 %v42, 4294901760
    %v2502 = vsub.f32 %v42, %v2501
    %2503 = vmatpush1.msra.mxu0 %v2502
    %2504 = vmatprep.subr.mxu0 0.0
    %2505 = vmatpush2.msra.mxu0 0.0
    %2506 = vmatprep.subr.mxu0 0.0
    %2507 = vmatpush2.msra.mxu0 0.0
    %2508 = vmatprep.subr.mxu0 0.0
    %2509 = vmatpush2.msra.mxu0 0.0
    %2510 = vmatprep.subr.mxu0 0.0
    %2511 = vmatpush2.msra.mxu0 0.0
    %2512 = vmatprep.subr.mxu0 0.0
    %2513 = vmatpush2.msra.mxu0 0.0
    %2514 = vmatprep.subr.mxu0 0.0
    %2515 = vmatpush2.msra.mxu0 0.0
    %2516 = vmatprep.subr.mxu0 0.0
    %2517 = vmatpush2.msra.mxu0 0.0
    %2518 = vmatprep.subr.mxu0 0.0
    %2519 = vmatpush2.msra.mxu0 0.0
    %2520 = vmatprep.subr.mxu0 0.0
    %2521 = vmatpush2.msra.mxu0 0.0
    %2522 = vmatprep.subr.mxu0 0.0
    %2523 = vmatpush2.msra.mxu0 0.0
    %2524 = vmatprep.subr.mxu0 0.0
    %2525 = vmatpush2.msra.mxu0 0.0
    %2526 = vmatprep.subr.mxu0 0.0
    %2527 = vmatpush2.msra.mxu0 0.0
    %2528 = vmatprep.subr.mxu0 0.0
    %2529 = vmatpush2.msra.mxu0 0.0
    %2530 = vmatprep.subr.mxu0 0.0
    %2531 = vmatpush2.msra.mxu0 0.0
    %2532 = vmatprep.subr.mxu0 0.0
    %2533 = vmatpush2.msra.mxu0 0.0
    %2534 = vmatprep.subr.mxu0 0.0
    %2535 = vmatpush2.msra.mxu0 0.0
    %2536 = vmatprep.mubr.f32.mxu0 0.0
    %v2537 = vand.u32 %v2300, 4294901760
    %v2538 = vsub.f32 %v2300, %v2537
    %2539 = vmatmul.mubr.f32.gmra.mxu0 %v2538
    %v2540 = vpop.f32.mrf.mxu0
    %v2541 = vadd.f32 %v2463, %v2540
    %v2542 = vpop.f32.mrf.mxu0
    %2543 = vdwg.mxu0
    %2544 = vmatprep.subr.mxu0 0.0
    %2545 = vmatpush1.msra.mxu0 0.0
    %2546 = vmatprep.subr.mxu0 0.0
    %2547 = vmatpush1.msra.mxu0 0.0
    %2548 = vmatprep.subr.mxu0 0.0
    %2549 = vmatpush1.msra.mxu0 0.0
    %2550 = vmatprep.subr.mxu0 0.0
    %2551 = vmatpush1.msra.mxu0 0.0
    %2552 = vmatprep.subr.mxu0 0.0
    %2553 = vmatpush1.msra.mxu0 0.0
    %2554 = vmatprep.subr.mxu0 0.0
    %2555 = vmatpush1.msra.mxu0 0.0
    %2556 = vmatprep.subr.mxu0 0.0
    %2557 = vmatpush1.msra.mxu0 0.0
    %2558 = vmatprep.subr.mxu0 0.0
    %2559 = vmatpush1.msra.mxu0 0.0
    %2560 = vmatprep.subr.mxu0 0.0
    %2561 = vmatpush1.msra.mxu0 0.0
    %2562 = vmatprep.subr.mxu0 0.0
    %2563 = vmatpush1.msra.mxu0 0.0
    %2564 = vmatprep.subr.mxu0 0.0
    %2565 = vmatpush1.msra.mxu0 0.0
    %2566 = vmatprep.subr.mxu0 0.0
    %2567 = vmatpush1.msra.mxu0 0.0
    %2568 = vmatprep.subr.mxu0 0.0
    %2569 = vmatpush1.msra.mxu0 0.0
    %2570 = vmatprep.subr.mxu0 0.0
    %v2571 = vand.u32 %v44, 4294901760
    %2572 = vmatpush1.msra.mxu0 %v2571
    %2573 = vmatprep.subr.mxu0 0.0
    %v2574 = vand.u32 %v43, 4294901760
    %2575 = vmatpush1.msra.mxu0 %v2574
    %2576 = vmatprep.subr.mxu0 0.0
    %v2577 = vand.u32 %v42, 4294901760
    %2578 = vmatpush1.msra.mxu0 %v2577
    %2579 = vmatprep.subr.mxu0 0.0
    %2580 = vmatpush2.msra.mxu0 0.0
    %2581 = vmatprep.subr.mxu0 0.0
    %2582 = vmatpush2.msra.mxu0 0.0
    %2583 = vmatprep.subr.mxu0 0.0
    %2584 = vmatpush2.msra.mxu0 0.0
    %2585 = vmatprep.subr.mxu0 0.0
    %2586 = vmatpush2.msra.mxu0 0.0
    %2587 = vmatprep.subr.mxu0 0.0
    %2588 = vmatpush2.msra.mxu0 0.0
    %2589 = vmatprep.subr.mxu0 0.0
    %2590 = vmatpush2.msra.mxu0 0.0
    %2591 = vmatprep.subr.mxu0 0.0
    %2592 = vmatpush2.msra.mxu0 0.0
    %2593 = vmatprep.subr.mxu0 0.0
    %2594 = vmatpush2.msra.mxu0 0.0
    %2595 = vmatprep.subr.mxu0 0.0
    %2596 = vmatpush2.msra.mxu0 0.0
    %2597 = vmatprep.subr.mxu0 0.0
    %2598 = vmatpush2.msra.mxu0 0.0
    %2599 = vmatprep.subr.mxu0 0.0
    %2600 = vmatpush2.msra.mxu0 0.0
    %2601 = vmatprep.subr.mxu0 0.0
    %2602 = vmatpush2.msra.mxu0 0.0
    %2603 = vmatprep.subr.mxu0 0.0
    %2604 = vmatpush2.msra.mxu0 0.0
    %2605 = vmatprep.subr.mxu0 0.0
    %2606 = vmatpush2.msra.mxu0 0.0
    %2607 = vmatprep.subr.mxu0 0.0
    %2608 = vmatpush2.msra.mxu0 0.0
    %2609 = vmatprep.subr.mxu0 0.0
    %2610 = vmatpush2.msra.mxu0 0.0
    %2611 = vmatprep.mubr.f32.mxu0 0.0
    %v2612 = vand.u32 %v2300, 4294901760
    %v2613 = vsub.f32 %v2300, %v2612
    %v2614 = vand.u32 %v2613, 4294901760
    %2615 = vmatmul.mubr.f32.gmra.mxu0 %v2614
    %v2616 = vpop.f32.mrf.mxu0
    %v2617 = vadd.f32 %v2541, %v2616
    %v2618 = vpop.f32.mrf.mxu0
    %2619 = vdwg.mxu0
    %2620 = vmatprep.subr.mxu0 0.0
    %2621 = vmatpush1.msra.mxu0 0.0
    %2622 = vmatprep.subr.mxu0 0.0
    %2623 = vmatpush1.msra.mxu0 0.0
    %2624 = vmatprep.subr.mxu0 0.0
    %2625 = vmatpush1.msra.mxu0 0.0
    %2626 = vmatprep.subr.mxu0 0.0
    %2627 = vmatpush1.msra.mxu0 0.0
    %2628 = vmatprep.subr.mxu0 0.0
    %2629 = vmatpush1.msra.mxu0 0.0
    %2630 = vmatprep.subr.mxu0 0.0
    %2631 = vmatpush1.msra.mxu0 0.0
    %2632 = vmatprep.subr.mxu0 0.0
    %2633 = vmatpush1.msra.mxu0 0.0
    %2634 = vmatprep.subr.mxu0 0.0
    %2635 = vmatpush1.msra.mxu0 0.0
    %2636 = vmatprep.subr.mxu0 0.0
    %2637 = vmatpush1.msra.mxu0 0.0
    %2638 = vmatprep.subr.mxu0 0.0
    %2639 = vmatpush1.msra.mxu0 0.0
    %2640 = vmatprep.subr.mxu0 0.0
    %2641 = vmatpush1.msra.mxu0 0.0
    %2642 = vmatprep.subr.mxu0 0.0
    %2643 = vmatpush1.msra.mxu0 0.0
    %2644 = vmatprep.subr.mxu0 0.0
    %2645 = vmatpush1.msra.mxu0 0.0
    %2646 = vmatprep.subr.mxu0 0.0
    %v2647 = vand.u32 %v44, 4294901760
    %v2648 = vsub.f32 %v44, %v2647
    %v2649 = vand.u32 %v2648, 4294901760
    %2650 = vmatpush1.msra.mxu0 %v2649
    %2651 = vmatprep.subr.mxu0 0.0
    %v2652 = vand.u32 %v43, 4294901760
    %v2653 = vsub.f32 %v43, %v2652
    %v2654 = vand.u32 %v2653, 4294901760
    %2655 = vmatpush1.msra.mxu0 %v2654
    %2656 = vmatprep.subr.mxu0 0.0
    %v2657 = vand.u32 %v42, 4294901760
    %v2658 = vsub.f32 %v42, %v2657
    %v2659 = vand.u32 %v2658, 4294901760
    %2660 = vmatpush1.msra.mxu0 %v2659
    %2661 = vmatprep.subr.mxu0 0.0
    %2662 = vmatpush2.msra.mxu0 0.0
    %2663 = vmatprep.subr.mxu0 0.0
    %2664 = vmatpush2.msra.mxu0 0.0
    %2665 = vmatprep.subr.mxu0 0.0
    %2666 = vmatpush2.msra.mxu0 0.0
    %2667 = vmatprep.subr.mxu0 0.0
    %2668 = vmatpush2.msra.mxu0 0.0
    %2669 = vmatprep.subr.mxu0 0.0
    %2670 = vmatpush2.msra.mxu0 0.0
    %2671 = vmatprep.subr.mxu0 0.0
    %2672 = vmatpush2.msra.mxu0 0.0
    %2673 = vmatprep.subr.mxu0 0.0
    %2674 = vmatpush2.msra.mxu0 0.0
    %2675 = vmatprep.subr.mxu0 0.0
    %2676 = vmatpush2.msra.mxu0 0.0
    %2677 = vmatprep.subr.mxu0 0.0
    %2678 = vmatpush2.msra.mxu0 0.0
    %2679 = vmatprep.subr.mxu0 0.0
    %2680 = vmatpush2.msra.mxu0 0.0
    %2681 = vmatprep.subr.mxu0 0.0
    %2682 = vmatpush2.msra.mxu0 0.0
    %2683 = vmatprep.subr.mxu0 0.0
    %2684 = vmatpush2.msra.mxu0 0.0
    %2685 = vmatprep.subr.mxu0 0.0
    %2686 = vmatpush2.msra.mxu0 0.0
    %2687 = vmatprep.subr.mxu0 0.0
    %2688 = vmatpush2.msra.mxu0 0.0
    %2689 = vmatprep.subr.mxu0 0.0
    %2690 = vmatpush2.msra.mxu0 0.0
    %2691 = vmatprep.subr.mxu0 0.0
    %2692 = vmatpush2.msra.mxu0 0.0
    %2693 = vmatprep.mubr.f32.mxu0 0.0
    %v2694 = vand.u32 %v2300, 4294901760
    %2695 = vmatmul.mubr.f32.gmra.mxu0 %v2694
    %v2696 = vpop.f32.mrf.mxu0
    %v2697 = vadd.f32 %v2617, %v2696
    %v2698 = vpop.f32.mrf.mxu0
    %2699 = vdwg.mxu0
    %2700 = vmatprep.subr.mxu0 0.0
    %2701 = vmatpush1.msra.mxu0 0.0
    %2702 = vmatprep.subr.mxu0 0.0
    %2703 = vmatpush1.msra.mxu0 0.0
    %2704 = vmatprep.subr.mxu0 0.0
    %2705 = vmatpush1.msra.mxu0 0.0
    %2706 = vmatprep.subr.mxu0 0.0
    %2707 = vmatpush1.msra.mxu0 0.0
    %2708 = vmatprep.subr.mxu0 0.0
    %2709 = vmatpush1.msra.mxu0 0.0
    %2710 = vmatprep.subr.mxu0 0.0
    %2711 = vmatpush1.msra.mxu0 0.0
    %2712 = vmatprep.subr.mxu0 0.0
    %2713 = vmatpush1.msra.mxu0 0.0
    %2714 = vmatprep.subr.mxu0 0.0
    %2715 = vmatpush1.msra.mxu0 0.0
    %2716 = vmatprep.subr.mxu0 0.0
    %2717 = vmatpush1.msra.mxu0 0.0
    %2718 = vmatprep.subr.mxu0 0.0
    %2719 = vmatpush1.msra.mxu0 0.0
    %2720 = vmatprep.subr.mxu0 0.0
    %2721 = vmatpush1.msra.mxu0 0.0
    %2722 = vmatprep.subr.mxu0 0.0
    %2723 = vmatpush1.msra.mxu0 0.0
    %2724 = vmatprep.subr.mxu0 0.0
    %2725 = vmatpush1.msra.mxu0 0.0
    %2726 = vmatprep.subr.mxu0 0.0
    %v2727 = vand.u32 %v44, 4294901760
    %2728 = vmatpush1.msra.mxu0 %v2727
    %2729 = vmatprep.subr.mxu0 0.0
    %v2730 = vand.u32 %v43, 4294901760
    %2731 = vmatpush1.msra.mxu0 %v2730
    %2732 = vmatprep.subr.mxu0 0.0
    %v2733 = vand.u32 %v42, 4294901760
    %2734 = vmatpush1.msra.mxu0 %v2733
    %2735 = vmatprep.subr.mxu0 0.0
    %2736 = vmatpush2.msra.mxu0 0.0
    %2737 = vmatprep.subr.mxu0 0.0
    %2738 = vmatpush2.msra.mxu0 0.0
    %2739 = vmatprep.subr.mxu0 0.0
    %2740 = vmatpush2.msra.mxu0 0.0
    %2741 = vmatprep.subr.mxu0 0.0
    %2742 = vmatpush2.msra.mxu0 0.0
    %2743 = vmatprep.subr.mxu0 0.0
    %2744 = vmatpush2.msra.mxu0 0.0
    %2745 = vmatprep.subr.mxu0 0.0
    %2746 = vmatpush2.msra.mxu0 0.0
    %2747 = vmatprep.subr.mxu0 0.0
    %2748 = vmatpush2.msra.mxu0 0.0
    %2749 = vmatprep.subr.mxu0 0.0
    %2750 = vmatpush2.msra.mxu0 0.0
    %2751 = vmatprep.subr.mxu0 0.0
    %2752 = vmatpush2.msra.mxu0 0.0
    %2753 = vmatprep.subr.mxu0 0.0
    %2754 = vmatpush2.msra.mxu0 0.0
    %2755 = vmatprep.subr.mxu0 0.0
    %2756 = vmatpush2.msra.mxu0 0.0
    %2757 = vmatprep.subr.mxu0 0.0
    %2758 = vmatpush2.msra.mxu0 0.0
    %2759 = vmatprep.subr.mxu0 0.0
    %2760 = vmatpush2.msra.mxu0 0.0
    %2761 = vmatprep.subr.mxu0 0.0
    %2762 = vmatpush2.msra.mxu0 0.0
    %2763 = vmatprep.subr.mxu0 0.0
    %2764 = vmatpush2.msra.mxu0 0.0
    %2765 = vmatprep.subr.mxu0 0.0
    %2766 = vmatpush2.msra.mxu0 0.0
    %2767 = vmatprep.mubr.f32.mxu0 0.0
    %v2768 = vand.u32 %v2300, 4294901760
    %2769 = vmatmul.mubr.f32.gmra.mxu0 %v2768
    %v2770 = vpop.f32.mrf.mxu0
    %v2771 = vadd.f32 %v2697, %v2770
    %v2772 = vpop.f32.mrf.mxu0
    %2773 = vdwg.mxu0
    %v2774 = vxor.u32 %v2771, 2147483648
    %v2775 = vmul.f32 %v2774, 1.442695
    %v2776 = vpow.pop %v2775
    %v2777 = vadd.f32 %v2776, 1.0
    %v2778 = vrcp.pop %v2777
    %v2779 = vmul.f32 1.0, %v2778
    %v2780 = vtanh.pop %v2771
    %v2781 = vmul.f32 %v2779, %v2245
    %2783 = vrot.lane.b32.xlu0 %v2780, 96
    %v2784 = vpop.permute.xlu0 %2783
    %v2786 = vmul.f32 %v2779, %v2784
    %2788 = vrot.lane.b32.xlu0 %v2786, 16
    %v2789 = vpop.permute.xlu0 %2788
    %v2791 = vadd.f32 %v2781, %v2789
    %v2792 = vtanh.pop %v2791
    %2794 = vrot.lane.b32.xlu0 %v2792, 32
    %v2795 = vpop.permute.xlu0 %2794
    %v2797 = vmul.f32 %v2779, %v2795
    %s2798 = scalar_lea.vmem %s7, 8
    %2799 = vst.msk [vmem:[%s2798] sm:$0x3] %vm80, %v2294
    %2801 = vrot.lane.b32.xlu0 %v2797, 80
    %v2802 = vpop.permute.xlu0 %2801
    %s2804 = scalar_lea.vmem [#allocation5], 8
    %2805 = vst.msk [vmem:[%s2804] sm:$0x3] %vm63, %v2802
    %v2806 = vmul.f32 %v2797, %v617
    %v2807 = vmul.f32 %v2791, %v621
    %2809 = vrot.lane.b32.xlu0 %v2807, 32
    %v2810 = vpop.permute.xlu0 %2809
    %v2812 = vadd.f32 %v2806, %v2810
    %2814 = vrot.lane.b32.xlu0 %v2812, 80
    %v2815 = vpop.permute.xlu0 %2814
    %v2817 = vsel %vm63, %v2815, 0.0
    %2818 = vadd.xlane.f32.xlu0 %v2817
    %v2819 = vpop.xlane.xlu0 %2818
    %v2820 = vadd.f32 %v2819, %v71
    %2822 = vset.pattern.permute.xlu0 0
    %2823 = vperm.xlu0 %2822, %v2820
    %v2824 = vpop.permute.xlu0 %2823
    %v2826 = vadd.f32 %v2824, %v38
    %v2827 = vsel %vm80, %v2826, -inf
    %2828 = vmax.xlane.f32.xlu0 %v2827
    %v2829 = vpop.xlane.xlu0 %2828
    %v2830 = vsub.f32 %v2826, %v2829
    %v2831 = vmul.f32 %v2830, 1.442695
    %v2832 = vpow.pop %v2831
    %v2833 = vsel %vm80, %v2832, 0.0
    %2834 = vadd.xlane.f32.xlu0 %v2833
    %v2835 = vpop.xlane.xlu0 %2834
    %v2836 = vrcp.pop %v2835
    %v2837 = vmul.f32 %v2832, %v2836
    %s2838 = scalar_lea.vmem %s0, 10
    %v2839 = vld [vmem:[%s2838] sm:$0x3]
    %v2840 = vmul.f32 %v2837, %v2839
    %2841 = vrot.lane.b32.xlu0 %v2797, 88
    %v2842 = vpop.permute.xlu0 %2841
    %v2844 = vsel %vm98, %v2840, %v2842
    %v2846 = vsel %vm106, %v2844, 0
    %2848 = vmatprep.subr.mxu0 0.0
    %2849 = vmatpush1.msra.mxu0 0.0
    %2850 = vmatprep.subr.mxu0 0.0
    %2851 = vmatpush1.msra.mxu0 0.0
    %2852 = vmatprep.subr.mxu0 0.0
    %2853 = vmatpush1.msra.mxu0 0.0
    %2854 = vmatprep.subr.mxu0 0.0
    %2855 = vmatpush1.msra.mxu0 0.0
    %2856 = vmatprep.subr.mxu0 0.0
    %2857 = vmatpush1.msra.mxu0 0.0
    %2858 = vmatprep.subr.mxu0 0.0
    %2859 = vmatpush1.msra.mxu0 0.0
    %2860 = vmatprep.subr.mxu0 0.0
    %2861 = vmatpush1.msra.mxu0 0.0
    %2862 = vmatprep.subr.mxu0 0.0
    %2863 = vmatpush1.msra.mxu0 0.0
    %2864 = vmatprep.subr.mxu0 0.0
    %2865 = vmatpush1.msra.mxu0 0.0
    %2866 = vmatprep.subr.mxu0 0.0
    %2867 = vmatpush1.msra.mxu0 0.0
    %2868 = vmatprep.subr.mxu0 0.0
    %2869 = vmatpush1.msra.mxu0 0.0
    %2870 = vmatprep.subr.mxu0 0.0
    %2871 = vmatpush1.msra.mxu0 0.0
    %2872 = vmatprep.subr.mxu0 0.0
    %2873 = vmatpush1.msra.mxu0 0.0
    %2874 = vmatprep.subr.mxu0 0.0
    %v2875 = vand.u32 %v44, 4294901760
    %2876 = vmatpush1.msra.mxu0 %v2875
    %2877 = vmatprep.subr.mxu0 0.0
    %v2878 = vand.u32 %v43, 4294901760
    %2879 = vmatpush1.msra.mxu0 %v2878
    %2880 = vmatprep.subr.mxu0 0.0
    %v2881 = vand.u32 %v42, 4294901760
    %2882 = vmatpush1.msra.mxu0 %v2881
    %2883 = vmatprep.subr.mxu0 0.0
    %2884 = vmatpush2.msra.mxu0 0.0
    %2885 = vmatprep.subr.mxu0 0.0
    %2886 = vmatpush2.msra.mxu0 0.0
    %2887 = vmatprep.subr.mxu0 0.0
    %2888 = vmatpush2.msra.mxu0 0.0
    %2889 = vmatprep.subr.mxu0 0.0
    %2890 = vmatpush2.msra.mxu0 0.0
    %2891 = vmatprep.subr.mxu0 0.0
    %2892 = vmatpush2.msra.mxu0 0.0
    %2893 = vmatprep.subr.mxu0 0.0
    %2894 = vmatpush2.msra.mxu0 0.0
    %2895 = vmatprep.subr.mxu0 0.0
    %2896 = vmatpush2.msra.mxu0 0.0
    %2897 = vmatprep.subr.mxu0 0.0
    %2898 = vmatpush2.msra.mxu0 0.0
    %2899 = vmatprep.subr.mxu0 0.0
    %2900 = vmatpush2.msra.mxu0 0.0
    %2901 = vmatprep.subr.mxu0 0.0
    %2902 = vmatpush2.msra.mxu0 0.0
    %2903 = vmatprep.subr.mxu0 0.0
    %2904 = vmatpush2.msra.mxu0 0.0
    %2905 = vmatprep.subr.mxu0 0.0
    %2906 = vmatpush2.msra.mxu0 0.0
    %2907 = vmatprep.subr.mxu0 0.0
    %2908 = vmatpush2.msra.mxu0 0.0
    %2909 = vmatprep.subr.mxu0 0.0
    %2910 = vmatpush2.msra.mxu0 0.0
    %2911 = vmatprep.subr.mxu0 0.0
    %2912 = vmatpush2.msra.mxu0 0.0
    %2913 = vmatprep.subr.mxu0 0.0
    %2914 = vmatpush2.msra.mxu0 0.0
    %2915 = vmatprep.mubr.f32.mxu0 0.0
    %v2916 = vand.u32 %v2846, 4294901760
    %v2917 = vsub.f32 %v2846, %v2916
    %v2918 = vand.u32 %v2917, 4294901760
    %v2919 = vsub.f32 %v2917, %v2918
    %v2920 = vand.u32 %v2919, 4294901760
    %2921 = vmatmul.mubr.f32.gmra.mxu0 %v2920
    %v2922 = vpop.f32.mrf.mxu0
    %v2923 = vadd.f32 %v104, %v2922
    %v2924 = vpop.f32.mrf.mxu0
    %2925 = vdwg.mxu0
    %2926 = vmatprep.subr.mxu0 0.0
    %2927 = vmatpush1.msra.mxu0 0.0
    %2928 = vmatprep.subr.mxu0 0.0
    %2929 = vmatpush1.msra.mxu0 0.0
    %2930 = vmatprep.subr.mxu0 0.0
    %2931 = vmatpush1.msra.mxu0 0.0
    %2932 = vmatprep.subr.mxu0 0.0
    %2933 = vmatpush1.msra.mxu0 0.0
    %2934 = vmatprep.subr.mxu0 0.0
    %2935 = vmatpush1.msra.mxu0 0.0
    %2936 = vmatprep.subr.mxu0 0.0
    %2937 = vmatpush1.msra.mxu0 0.0
    %2938 = vmatprep.subr.mxu0 0.0
    %2939 = vmatpush1.msra.mxu0 0.0
    %2940 = vmatprep.subr.mxu0 0.0
    %2941 = vmatpush1.msra.mxu0 0.0
    %2942 = vmatprep.subr.mxu0 0.0
    %2943 = vmatpush1.msra.mxu0 0.0
    %2944 = vmatprep.subr.mxu0 0.0
    %2945 = vmatpush1.msra.mxu0 0.0
    %2946 = vmatprep.subr.mxu0 0.0
    %2947 = vmatpush1.msra.mxu0 0.0
    %2948 = vmatprep.subr.mxu0 0.0
    %2949 = vmatpush1.msra.mxu0 0.0
    %2950 = vmatprep.subr.mxu0 0.0
    %2951 = vmatpush1.msra.mxu0 0.0
    %2952 = vmatprep.subr.mxu0 0.0
    %v2953 = vand.u32 %v44, 4294901760
    %v2954 = vsub.f32 %v44, %v2953
    %v2955 = vand.u32 %v2954, 4294901760
    %v2956 = vsub.f32 %v2954, %v2955
    %v2957 = vand.u32 %v2956, 4294901760
    %2958 = vmatpush1.msra.mxu0 %v2957
    %2959 = vmatprep.subr.mxu0 0.0
    %v2960 = vand.u32 %v43, 4294901760
    %v2961 = vsub.f32 %v43, %v2960
    %v2962 = vand.u32 %v2961, 4294901760
    %v2963 = vsub.f32 %v2961, %v2962
    %v2964 = vand.u32 %v2963, 4294901760
    %2965 = vmatpush1.msra.mxu0 %v2964
    %2966 = vmatprep.subr.mxu0 0.0
    %v2967 = vand.u32 %v42, 4294901760
    %v2968 = vsub.f32 %v42, %v2967
    %v2969 = vand.u32 %v2968, 4294901760
    %v2970 = vsub.f32 %v2968, %v2969
    %v2971 = vand.u32 %v2970, 4294901760
    %2972 = vmatpush1.msra.mxu0 %v2971
    %2973 = vmatprep.subr.mxu0 0.0
    %2974 = vmatpush2.msra.mxu0 0.0
    %2975 = vmatprep.subr.mxu0 0.0
    %2976 = vmatpush2.msra.mxu0 0.0
    %2977 = vmatprep.subr.mxu0 0.0
    %2978 = vmatpush2.msra.mxu0 0.0
    %2979 = vmatprep.subr.mxu0 0.0
    %2980 = vmatpush2.msra.mxu0 0.0
    %2981 = vmatprep.subr.mxu0 0.0
    %2982 = vmatpush2.msra.mxu0 0.0
    %2983 = vmatprep.subr.mxu0 0.0
    %2984 = vmatpush2.msra.mxu0 0.0
    %2985 = vmatprep.subr.mxu0 0.0
    %2986 = vmatpush2.msra.mxu0 0.0
    %2987 = vmatprep.subr.mxu0 0.0
    %2988 = vmatpush2.msra.mxu0 0.0
    %2989 = vmatprep.subr.mxu0 0.0
    %2990 = vmatpush2.msra.mxu0 0.0
    %2991 = vmatprep.subr.mxu0 0.0
    %2992 = vmatpush2.msra.mxu0 0.0
    %2993 = vmatprep.subr.mxu0 0.0
    %2994 = vmatpush2.msra.mxu0 0.0
    %2995 = vmatprep.subr.mxu0 0.0
    %2996 = vmatpush2.msra.mxu0 0.0
    %2997 = vmatprep.subr.mxu0 0.0
    %2998 = vmatpush2.msra.mxu0 0.0
    %2999 = vmatprep.subr.mxu0 0.0
    %3000 = vmatpush2.msra.mxu0 0.0
    %3001 = vmatprep.subr.mxu0 0.0
    %3002 = vmatpush2.msra.mxu0 0.0
    %3003 = vmatprep.subr.mxu0 0.0
    %3004 = vmatpush2.msra.mxu0 0.0
    %3005 = vmatprep.mubr.f32.mxu0 0.0
    %v3006 = vand.u32 %v2846, 4294901760
    %3007 = vmatmul.mubr.f32.gmra.mxu0 %v3006
    %v3008 = vpop.f32.mrf.mxu0
    %v3009 = vadd.f32 %v2923, %v3008
    %v3010 = vpop.f32.mrf.mxu0
    %3011 = vdwg.mxu0
    %3012 = vmatprep.subr.mxu0 0.0
    %3013 = vmatpush1.msra.mxu0 0.0
    %3014 = vmatprep.subr.mxu0 0.0
    %3015 = vmatpush1.msra.mxu0 0.0
    %3016 = vmatprep.subr.mxu0 0.0
    %3017 = vmatpush1.msra.mxu0 0.0
    %3018 = vmatprep.subr.mxu0 0.0
    %3019 = vmatpush1.msra.mxu0 0.0
    %3020 = vmatprep.subr.mxu0 0.0
    %3021 = vmatpush1.msra.mxu0 0.0
    %3022 = vmatprep.subr.mxu0 0.0
    %3023 = vmatpush1.msra.mxu0 0.0
    %3024 = vmatprep.subr.mxu0 0.0
    %3025 = vmatpush1.msra.mxu0 0.0
    %3026 = vmatprep.subr.mxu0 0.0
    %3027 = vmatpush1.msra.mxu0 0.0
    %3028 = vmatprep.subr.mxu0 0.0
    %3029 = vmatpush1.msra.mxu0 0.0
    %3030 = vmatprep.subr.mxu0 0.0
    %3031 = vmatpush1.msra.mxu0 0.0
    %3032 = vmatprep.subr.mxu0 0.0
    %3033 = vmatpush1.msra.mxu0 0.0
    %3034 = vmatprep.subr.mxu0 0.0
    %3035 = vmatpush1.msra.mxu0 0.0
    %3036 = vmatprep.subr.mxu0 0.0
    %3037 = vmatpush1.msra.mxu0 0.0
    %3038 = vmatprep.subr.mxu0 0.0
    %v3039 = vand.u32 %v44, 4294901760
    %v3040 = vsub.f32 %v44, %v3039
    %3041 = vmatpush1.msra.mxu0 %v3040
    %3042 = vmatprep.subr.mxu0 0.0
    %v3043 = vand.u32 %v43, 4294901760
    %v3044 = vsub.f32 %v43, %v3043
    %3045 = vmatpush1.msra.mxu0 %v3044
    %3046 = vmatprep.subr.mxu0 0.0
    %v3047 = vand.u32 %v42, 4294901760
    %v3048 = vsub.f32 %v42, %v3047
    %3049 = vmatpush1.msra.mxu0 %v3048
    %3050 = vmatprep.subr.mxu0 0.0
    %3051 = vmatpush2.msra.mxu0 0.0
    %3052 = vmatprep.subr.mxu0 0.0
    %3053 = vmatpush2.msra.mxu0 0.0
    %3054 = vmatprep.subr.mxu0 0.0
    %3055 = vmatpush2.msra.mxu0 0.0
    %3056 = vmatprep.subr.mxu0 0.0
    %3057 = vmatpush2.msra.mxu0 0.0
    %3058 = vmatprep.subr.mxu0 0.0
    %3059 = vmatpush2.msra.mxu0 0.0
    %3060 = vmatprep.subr.mxu0 0.0
    %3061 = vmatpush2.msra.mxu0 0.0
    %3062 = vmatprep.subr.mxu0 0.0
    %3063 = vmatpush2.msra.mxu0 0.0
    %3064 = vmatprep.subr.mxu0 0.0
    %3065 = vmatpush2.msra.mxu0 0.0
    %3066 = vmatprep.subr.mxu0 0.0
    %3067 = vmatpush2.msra.mxu0 0.0
    %3068 = vmatprep.subr.mxu0 0.0
    %3069 = vmatpush2.msra.mxu0 0.0
    %3070 = vmatprep.subr.mxu0 0.0
    %3071 = vmatpush2.msra.mxu0 0.0
    %3072 = vmatprep.subr.mxu0 0.0
    %3073 = vmatpush2.msra.mxu0 0.0
    %3074 = vmatprep.subr.mxu0 0.0
    %3075 = vmatpush2.msra.mxu0 0.0
    %3076 = vmatprep.subr.mxu0 0.0
    %3077 = vmatpush2.msra.mxu0 0.0
    %3078 = vmatprep.subr.mxu0 0.0
    %3079 = vmatpush2.msra.mxu0 0.0
    %3080 = vmatprep.subr.mxu0 0.0
    %3081 = vmatpush2.msra.mxu0 0.0
    %3082 = vmatprep.mubr.f32.mxu0 0.0
    %v3083 = vand.u32 %v2846, 4294901760
    %v3084 = vsub.f32 %v2846, %v3083
    %3085 = vmatmul.mubr.f32.gmra.mxu0 %v3084
    %v3086 = vpop.f32.mrf.mxu0
    %v3087 = vadd.f32 %v3009, %v3086
    %v3088 = vpop.f32.mrf.mxu0
    %3089 = vdwg.mxu0
    %3090 = vmatprep.subr.mxu0 0.0
    %3091 = vmatpush1.msra.mxu0 0.0
    %3092 = vmatprep.subr.mxu0 0.0
    %3093 = vmatpush1.msra.mxu0 0.0
    %3094 = vmatprep.subr.mxu0 0.0
    %3095 = vmatpush1.msra.mxu0 0.0
    %3096 = vmatprep.subr.mxu0 0.0
    %3097 = vmatpush1.msra.mxu0 0.0
    %3098 = vmatprep.subr.mxu0 0.0
    %3099 = vmatpush1.msra.mxu0 0.0
    %3100 = vmatprep.subr.mxu0 0.0
    %3101 = vmatpush1.msra.mxu0 0.0
    %3102 = vmatprep.subr.mxu0 0.0
    %3103 = vmatpush1.msra.mxu0 0.0
    %3104 = vmatprep.subr.mxu0 0.0
    %3105 = vmatpush1.msra.mxu0 0.0
    %3106 = vmatprep.subr.mxu0 0.0
    %3107 = vmatpush1.msra.mxu0 0.0
    %3108 = vmatprep.subr.mxu0 0.0
    %3109 = vmatpush1.msra.mxu0 0.0
    %3110 = vmatprep.subr.mxu0 0.0
    %3111 = vmatpush1.msra.mxu0 0.0
    %3112 = vmatprep.subr.mxu0 0.0
    %3113 = vmatpush1.msra.mxu0 0.0
    %3114 = vmatprep.subr.mxu0 0.0
    %3115 = vmatpush1.msra.mxu0 0.0
    %3116 = vmatprep.subr.mxu0 0.0
    %v3117 = vand.u32 %v44, 4294901760
    %3118 = vmatpush1.msra.mxu0 %v3117
    %3119 = vmatprep.subr.mxu0 0.0
    %v3120 = vand.u32 %v43, 4294901760
    %3121 = vmatpush1.msra.mxu0 %v3120
    %3122 = vmatprep.subr.mxu0 0.0
    %v3123 = vand.u32 %v42, 4294901760
    %3124 = vmatpush1.msra.mxu0 %v3123
    %3125 = vmatprep.subr.mxu0 0.0
    %3126 = vmatpush2.msra.mxu0 0.0
    %3127 = vmatprep.subr.mxu0 0.0
    %3128 = vmatpush2.msra.mxu0 0.0
    %3129 = vmatprep.subr.mxu0 0.0
    %3130 = vmatpush2.msra.mxu0 0.0
    %3131 = vmatprep.subr.mxu0 0.0
    %3132 = vmatpush2.msra.mxu0 0.0
    %3133 = vmatprep.subr.mxu0 0.0
    %3134 = vmatpush2.msra.mxu0 0.0
    %3135 = vmatprep.subr.mxu0 0.0
    %3136 = vmatpush2.msra.mxu0 0.0
    %3137 = vmatprep.subr.mxu0 0.0
    %3138 = vmatpush2.msra.mxu0 0.0
    %3139 = vmatprep.subr.mxu0 0.0
    %3140 = vmatpush2.msra.mxu0 0.0
    %3141 = vmatprep.subr.mxu0 0.0
    %3142 = vmatpush2.msra.mxu0 0.0
    %3143 = vmatprep.subr.mxu0 0.0
    %3144 = vmatpush2.msra.mxu0 0.0
    %3145 = vmatprep.subr.mxu0 0.0
    %3146 = vmatpush2.msra.mxu0 0.0
    %3147 = vmatprep.subr.mxu0 0.0
    %3148 = vmatpush2.msra.mxu0 0.0
    %3149 = vmatprep.subr.mxu0 0.0
    %3150 = vmatpush2.msra.mxu0 0.0
    %3151 = vmatprep.subr.mxu0 0.0
    %3152 = vmatpush2.msra.mxu0 0.0
    %3153 = vmatprep.subr.mxu0 0.0
    %3154 = vmatpush2.msra.mxu0 0.0
    %3155 = vmatprep.subr.mxu0 0.0
    %3156 = vmatpush2.msra.mxu0 0.0
    %3157 = vmatprep.mubr.f32.mxu0 0.0
    %v3158 = vand.u32 %v2846, 4294901760
    %v3159 = vsub.f32 %v2846, %v3158
    %v3160 = vand.u32 %v3159, 4294901760
    %3161 = vmatmul.mubr.f32.gmra.mxu0 %v3160
    %v3162 = vpop.f32.mrf.mxu0
    %v3163 = vadd.f32 %v3087, %v3162
    %v3164 = vpop.f32.mrf.mxu0
    %3165 = vdwg.mxu0
    %3166 = vmatprep.subr.mxu0 0.0
    %3167 = vmatpush1.msra.mxu0 0.0
    %3168 = vmatprep.subr.mxu0 0.0
    %3169 = vmatpush1.msra.mxu0 0.0
    %3170 = vmatprep.subr.mxu0 0.0
    %3171 = vmatpush1.msra.mxu0 0.0
    %3172 = vmatprep.subr.mxu0 0.0
    %3173 = vmatpush1.msra.mxu0 0.0
    %3174 = vmatprep.subr.mxu0 0.0
    %3175 = vmatpush1.msra.mxu0 0.0
    %3176 = vmatprep.subr.mxu0 0.0
    %3177 = vmatpush1.msra.mxu0 0.0
    %3178 = vmatprep.subr.mxu0 0.0
    %3179 = vmatpush1.msra.mxu0 0.0
    %3180 = vmatprep.subr.mxu0 0.0
    %3181 = vmatpush1.msra.mxu0 0.0
    %3182 = vmatprep.subr.mxu0 0.0
    %3183 = vmatpush1.msra.mxu0 0.0
    %3184 = vmatprep.subr.mxu0 0.0
    %3185 = vmatpush1.msra.mxu0 0.0
    %3186 = vmatprep.subr.mxu0 0.0
    %3187 = vmatpush1.msra.mxu0 0.0
    %3188 = vmatprep.subr.mxu0 0.0
    %3189 = vmatpush1.msra.mxu0 0.0
    %3190 = vmatprep.subr.mxu0 0.0
    %3191 = vmatpush1.msra.mxu0 0.0
    %3192 = vmatprep.subr.mxu0 0.0
    %v3193 = vand.u32 %v44, 4294901760
    %v3194 = vsub.f32 %v44, %v3193
    %v3195 = vand.u32 %v3194, 4294901760
    %3196 = vmatpush1.msra.mxu0 %v3195
    %3197 = vmatprep.subr.mxu0 0.0
    %v3198 = vand.u32 %v43, 4294901760
    %v3199 = vsub.f32 %v43, %v3198
    %v3200 = vand.u32 %v3199, 4294901760
    %3201 = vmatpush1.msra.mxu0 %v3200
    %3202 = vmatprep.subr.mxu0 0.0
    %v3203 = vand.u32 %v42, 4294901760
    %v3204 = vsub.f32 %v42, %v3203
    %v3205 = vand.u32 %v3204, 4294901760
    %3206 = vmatpush1.msra.mxu0 %v3205
    %3207 = vmatprep.subr.mxu0 0.0
    %3208 = vmatpush2.msra.mxu0 0.0
    %3209 = vmatprep.subr.mxu0 0.0
    %3210 = vmatpush2.msra.mxu0 0.0
    %3211 = vmatprep.subr.mxu0 0.0
    %3212 = vmatpush2.msra.mxu0 0.0
    %3213 = vmatprep.subr.mxu0 0.0
    %3214 = vmatpush2.msra.mxu0 0.0
    %3215 = vmatprep.subr.mxu0 0.0
    %3216 = vmatpush2.msra.mxu0 0.0
    %3217 = vmatprep.subr.mxu0 0.0
    %3218 = vmatpush2.msra.mxu0 0.0
    %3219 = vmatprep.subr.mxu0 0.0
    %3220 = vmatpush2.msra.mxu0 0.0
    %3221 = vmatprep.subr.mxu0 0.0
    %3222 = vmatpush2.msra.mxu0 0.0
    %3223 = vmatprep.subr.mxu0 0.0
    %3224 = vmatpush2.msra.mxu0 0.0
    %3225 = vmatprep.subr.mxu0 0.0
    %3226 = vmatpush2.msra.mxu0 0.0
    %3227 = vmatprep.subr.mxu0 0.0
    %3228 = vmatpush2.msra.mxu0 0.0
    %3229 = vmatprep.subr.mxu0 0.0
    %3230 = vmatpush2.msra.mxu0 0.0
    %3231 = vmatprep.subr.mxu0 0.0
    %3232 = vmatpush2.msra.mxu0 0.0
    %3233 = vmatprep.subr.mxu0 0.0
    %3234 = vmatpush2.msra.mxu0 0.0
    %3235 = vmatprep.subr.mxu0 0.0
    %3236 = vmatpush2.msra.mxu0 0.0
    %3237 = vmatprep.subr.mxu0 0.0
    %3238 = vmatpush2.msra.mxu0 0.0
    %3239 = vmatprep.mubr.f32.mxu0 0.0
    %v3240 = vand.u32 %v2846, 4294901760
    %3241 = vmatmul.mubr.f32.gmra.mxu0 %v3240
    %v3242 = vpop.f32.mrf.mxu0
    %v3243 = vadd.f32 %v3163, %v3242
    %v3244 = vpop.f32.mrf.mxu0
    %3245 = vdwg.mxu0
    %3246 = vmatprep.subr.mxu0 0.0
    %3247 = vmatpush1.msra.mxu0 0.0
    %3248 = vmatprep.subr.mxu0 0.0
    %3249 = vmatpush1.msra.mxu0 0.0
    %3250 = vmatprep.subr.mxu0 0.0
    %3251 = vmatpush1.msra.mxu0 0.0
    %3252 = vmatprep.subr.mxu0 0.0
    %3253 = vmatpush1.msra.mxu0 0.0
    %3254 = vmatprep.subr.mxu0 0.0
    %3255 = vmatpush1.msra.mxu0 0.0
    %3256 = vmatprep.subr.mxu0 0.0
    %3257 = vmatpush1.msra.mxu0 0.0
    %3258 = vmatprep.subr.mxu0 0.0
    %3259 = vmatpush1.msra.mxu0 0.0
    %3260 = vmatprep.subr.mxu0 0.0
    %3261 = vmatpush1.msra.mxu0 0.0
    %3262 = vmatprep.subr.mxu0 0.0
    %3263 = vmatpush1.msra.mxu0 0.0
    %3264 = vmatprep.subr.mxu0 0.0
    %3265 = vmatpush1.msra.mxu0 0.0
    %3266 = vmatprep.subr.mxu0 0.0
    %3267 = vmatpush1.msra.mxu0 0.0
    %3268 = vmatprep.subr.mxu0 0.0
    %3269 = vmatpush1.msra.mxu0 0.0
    %3270 = vmatprep.subr.mxu0 0.0
    %3271 = vmatpush1.msra.mxu0 0.0
    %3272 = vmatprep.subr.mxu0 0.0
    %v3273 = vand.u32 %v44, 4294901760
    %3274 = vmatpush1.msra.mxu0 %v3273
    %3275 = vmatprep.subr.mxu0 0.0
    %v3276 = vand.u32 %v43, 4294901760
    %3277 = vmatpush1.msra.mxu0 %v3276
    %3278 = vmatprep.subr.mxu0 0.0
    %v3279 = vand.u32 %v42, 4294901760
    %3280 = vmatpush1.msra.mxu0 %v3279
    %3281 = vmatprep.subr.mxu0 0.0
    %3282 = vmatpush2.msra.mxu0 0.0
    %3283 = vmatprep.subr.mxu0 0.0
    %3284 = vmatpush2.msra.mxu0 0.0
    %3285 = vmatprep.subr.mxu0 0.0
    %3286 = vmatpush2.msra.mxu0 0.0
    %3287 = vmatprep.subr.mxu0 0.0
    %3288 = vmatpush2.msra.mxu0 0.0
    %3289 = vmatprep.subr.mxu0 0.0
    %3290 = vmatpush2.msra.mxu0 0.0
    %3291 = vmatprep.subr.mxu0 0.0
    %3292 = vmatpush2.msra.mxu0 0.0
    %3293 = vmatprep.subr.mxu0 0.0
    %3294 = vmatpush2.msra.mxu0 0.0
    %3295 = vmatprep.subr.mxu0 0.0
    %3296 = vmatpush2.msra.mxu0 0.0
    %3297 = vmatprep.subr.mxu0 0.0
    %3298 = vmatpush2.msra.mxu0 0.0
    %3299 = vmatprep.subr.mxu0 0.0
    %3300 = vmatpush2.msra.mxu0 0.0
    %3301 = vmatprep.subr.mxu0 0.0
    %3302 = vmatpush2.msra.mxu0 0.0
    %3303 = vmatprep.subr.mxu0 0.0
    %3304 = vmatpush2.msra.mxu0 0.0
    %3305 = vmatprep.subr.mxu0 0.0
    %3306 = vmatpush2.msra.mxu0 0.0
    %3307 = vmatprep.subr.mxu0 0.0
    %3308 = vmatpush2.msra.mxu0 0.0
    %3309 = vmatprep.subr.mxu0 0.0
    %3310 = vmatpush2.msra.mxu0 0.0
    %3311 = vmatprep.subr.mxu0 0.0
    %3312 = vmatpush2.msra.mxu0 0.0
    %3313 = vmatprep.mubr.f32.mxu0 0.0
    %v3314 = vand.u32 %v2846, 4294901760
    %3315 = vmatmul.mubr.f32.gmra.mxu0 %v3314
    %v3316 = vpop.f32.mrf.mxu0
    %v3317 = vadd.f32 %v3243, %v3316
    %v3318 = vpop.f32.mrf.mxu0
    %3319 = vdwg.mxu0
    %v3320 = vxor.u32 %v3317, 2147483648
    %v3321 = vmul.f32 %v3320, 1.442695
    %v3322 = vpow.pop %v3321
    %v3323 = vadd.f32 %v3322, 1.0
    %v3324 = vrcp.pop %v3323
    %v3325 = vmul.f32 1.0, %v3324
    %v3326 = vtanh.pop %v3317
    %v3327 = vmul.f32 %v3325, %v2791
    %3329 = vrot.lane.b32.xlu0 %v3326, 96
    %v3330 = vpop.permute.xlu0 %3329
    %v3332 = vmul.f32 %v3325, %v3330
    %3334 = vrot.lane.b32.xlu0 %v3332, 16
    %v3335 = vpop.permute.xlu0 %3334
    %v3337 = vadd.f32 %v3327, %v3335
    %v3338 = vtanh.pop %v3337
    %3340 = vrot.lane.b32.xlu0 %v3338, 32
    %v3341 = vpop.permute.xlu0 %3340
    %v3343 = vmul.f32 %v3325, %v3341
    %s3344 = scalar_lea.vmem %s7, 10
    %3345 = vst.msk [vmem:[%s3344] sm:$0x3] %vm80, %v2840
    %3347 = vrot.lane.b32.xlu0 %v3343, 80
    %v3348 = vpop.permute.xlu0 %3347
    %s3350 = scalar_lea.vmem [#allocation5], 10
    %3351 = vst.msk [vmem:[%s3350] sm:$0x3] %vm63, %v3348
    %v3352 = vmul.f32 %v3343, %v617
    %v3353 = vmul.f32 %v3337, %v621
    %3355 = vrot.lane.b32.xlu0 %v3353, 32
    %v3356 = vpop.permute.xlu0 %3355
    %v3358 = vadd.f32 %v3352, %v3356
    %3360 = vrot.lane.b32.xlu0 %v3358, 80
    %v3361 = vpop.permute.xlu0 %3360
    %v3363 = vsel %vm63, %v3361, 0.0
    %3364 = vadd.xlane.f32.xlu0 %v3363
    %v3365 = vpop.xlane.xlu0 %3364
    %v3366 = vadd.f32 %v3365, %v71
    %3368 = vset.pattern.permute.xlu0 0
    %3369 = vperm.xlu0 %3368, %v3366
    %v3370 = vpop.permute.xlu0 %3369
    %v3372 = vadd.f32 %v3370, %v38
    %v3373 = vsel %vm80, %v3372, -inf
    %3374 = vmax.xlane.f32.xlu0 %v3373
    %v3375 = vpop.xlane.xlu0 %3374
    %v3376 = vsub.f32 %v3372, %v3375
    %v3377 = vmul.f32 %v3376, 1.442695
    %v3378 = vpow.pop %v3377
    %v3379 = vsel %vm80, %v3378, 0.0
    %3380 = vadd.xlane.f32.xlu0 %v3379
    %v3381 = vpop.xlane.xlu0 %3380
    %v3382 = vrcp.pop %v3381
    %v3383 = vmul.f32 %v3378, %v3382
    %s3384 = scalar_lea.vmem %s0, 12
    %v3385 = vld [vmem:[%s3384] sm:$0x3]
    %v3386 = vmul.f32 %v3383, %v3385
    %3387 = vrot.lane.b32.xlu0 %v3343, 88
    %v3388 = vpop.permute.xlu0 %3387
    %v3390 = vsel %vm98, %v3386, %v3388
    %v3392 = vsel %vm106, %v3390, 0
    %3394 = vmatprep.subr.mxu0 0.0
    %3395 = vmatpush1.msra.mxu0 0.0
    %3396 = vmatprep.subr.mxu0 0.0
    %3397 = vmatpush1.msra.mxu0 0.0
    %3398 = vmatprep.subr.mxu0 0.0
    %3399 = vmatpush1.msra.mxu0 0.0
    %3400 = vmatprep.subr.mxu0 0.0
    %3401 = vmatpush1.msra.mxu0 0.0
    %3402 = vmatprep.subr.mxu0 0.0
    %3403 = vmatpush1.msra.mxu0 0.0
    %3404 = vmatprep.subr.mxu0 0.0
    %3405 = vmatpush1.msra.mxu0 0.0
    %3406 = vmatprep.subr.mxu0 0.0
    %3407 = vmatpush1.msra.mxu0 0.0
    %3408 = vmatprep.subr.mxu0 0.0
    %3409 = vmatpush1.msra.mxu0 0.0
    %3410 = vmatprep.subr.mxu0 0.0
    %3411 = vmatpush1.msra.mxu0 0.0
    %3412 = vmatprep.subr.mxu0 0.0
    %3413 = vmatpush1.msra.mxu0 0.0
    %3414 = vmatprep.subr.mxu0 0.0
    %3415 = vmatpush1.msra.mxu0 0.0
    %3416 = vmatprep.subr.mxu0 0.0
    %3417 = vmatpush1.msra.mxu0 0.0
    %3418 = vmatprep.subr.mxu0 0.0
    %3419 = vmatpush1.msra.mxu0 0.0
    %3420 = vmatprep.subr.mxu0 0.0
    %v3421 = vand.u32 %v44, 4294901760
    %3422 = vmatpush1.msra.mxu0 %v3421
    %3423 = vmatprep.subr.mxu0 0.0
    %v3424 = vand.u32 %v43, 4294901760
    %3425 = vmatpush1.msra.mxu0 %v3424
    %3426 = vmatprep.subr.mxu0 0.0
    %v3427 = vand.u32 %v42, 4294901760
    %3428 = vmatpush1.msra.mxu0 %v3427
    %3429 = vmatprep.subr.mxu0 0.0
    %3430 = vmatpush2.msra.mxu0 0.0
    %3431 = vmatprep.subr.mxu0 0.0
    %3432 = vmatpush2.msra.mxu0 0.0
    %3433 = vmatprep.subr.mxu0 0.0
    %3434 = vmatpush2.msra.mxu0 0.0
    %3435 = vmatprep.subr.mxu0 0.0
    %3436 = vmatpush2.msra.mxu0 0.0
    %3437 = vmatprep.subr.mxu0 0.0
    %3438 = vmatpush2.msra.mxu0 0.0
    %3439 = vmatprep.subr.mxu0 0.0
    %3440 = vmatpush2.msra.mxu0 0.0
    %3441 = vmatprep.subr.mxu0 0.0
    %3442 = vmatpush2.msra.mxu0 0.0
    %3443 = vmatprep.subr.mxu0 0.0
    %3444 = vmatpush2.msra.mxu0 0.0
    %3445 = vmatprep.subr.mxu0 0.0
    %3446 = vmatpush2.msra.mxu0 0.0
    %3447 = vmatprep.subr.mxu0 0.0
    %3448 = vmatpush2.msra.mxu0 0.0
    %3449 = vmatprep.subr.mxu0 0.0
    %3450 = vmatpush2.msra.mxu0 0.0
    %3451 = vmatprep.subr.mxu0 0.0
    %3452 = vmatpush2.msra.mxu0 0.0
    %3453 = vmatprep.subr.mxu0 0.0
    %3454 = vmatpush2.msra.mxu0 0.0
    %3455 = vmatprep.subr.mxu0 0.0
    %3456 = vmatpush2.msra.mxu0 0.0
    %3457 = vmatprep.subr.mxu0 0.0
    %3458 = vmatpush2.msra.mxu0 0.0
    %3459 = vmatprep.subr.mxu0 0.0
    %3460 = vmatpush2.msra.mxu0 0.0
    %3461 = vmatprep.mubr.f32.mxu0 0.0
    %v3462 = vand.u32 %v3392, 4294901760
    %v3463 = vsub.f32 %v3392, %v3462
    %v3464 = vand.u32 %v3463, 4294901760
    %v3465 = vsub.f32 %v3463, %v3464
    %v3466 = vand.u32 %v3465, 4294901760
    %3467 = vmatmul.mubr.f32.gmra.mxu0 %v3466
    %v3468 = vpop.f32.mrf.mxu0
    %v3469 = vadd.f32 %v104, %v3468
    %v3470 = vpop.f32.mrf.mxu0
    %3471 = vdwg.mxu0
    %3472 = vmatprep.subr.mxu0 0.0
    %3473 = vmatpush1.msra.mxu0 0.0
    %3474 = vmatprep.subr.mxu0 0.0
    %3475 = vmatpush1.msra.mxu0 0.0
    %3476 = vmatprep.subr.mxu0 0.0
    %3477 = vmatpush1.msra.mxu0 0.0
    %3478 = vmatprep.subr.mxu0 0.0
    %3479 = vmatpush1.msra.mxu0 0.0
    %3480 = vmatprep.subr.mxu0 0.0
    %3481 = vmatpush1.msra.mxu0 0.0
    %3482 = vmatprep.subr.mxu0 0.0
    %3483 = vmatpush1.msra.mxu0 0.0
    %3484 = vmatprep.subr.mxu0 0.0
    %3485 = vmatpush1.msra.mxu0 0.0
    %3486 = vmatprep.subr.mxu0 0.0
    %3487 = vmatpush1.msra.mxu0 0.0
    %3488 = vmatprep.subr.mxu0 0.0
    %3489 = vmatpush1.msra.mxu0 0.0
    %3490 = vmatprep.subr.mxu0 0.0
    %3491 = vmatpush1.msra.mxu0 0.0
    %3492 = vmatprep.subr.mxu0 0.0
    %3493 = vmatpush1.msra.mxu0 0.0
    %3494 = vmatprep.subr.mxu0 0.0
    %3495 = vmatpush1.msra.mxu0 0.0
    %3496 = vmatprep.subr.mxu0 0.0
    %3497 = vmatpush1.msra.mxu0 0.0
    %3498 = vmatprep.subr.mxu0 0.0
    %v3499 = vand.u32 %v44, 4294901760
    %v3500 = vsub.f32 %v44, %v3499
    %v3501 = vand.u32 %v3500, 4294901760
    %v3502 = vsub.f32 %v3500, %v3501
    %v3503 = vand.u32 %v3502, 4294901760
    %3504 = vmatpush1.msra.mxu0 %v3503
    %3505 = vmatprep.subr.mxu0 0.0
    %v3506 = vand.u32 %v43, 4294901760
    %v3507 = vsub.f32 %v43, %v3506
    %v3508 = vand.u32 %v3507, 4294901760
    %v3509 = vsub.f32 %v3507, %v3508
    %v3510 = vand.u32 %v3509, 4294901760
    %3511 = vmatpush1.msra.mxu0 %v3510
    %3512 = vmatprep.subr.mxu0 0.0
    %v3513 = vand.u32 %v42, 4294901760
    %v3514 = vsub.f32 %v42, %v3513
    %v3515 = vand.u32 %v3514, 4294901760
    %v3516 = vsub.f32 %v3514, %v3515
    %v3517 = vand.u32 %v3516, 4294901760
    %3518 = vmatpush1.msra.mxu0 %v3517
    %3519 = vmatprep.subr.mxu0 0.0
    %3520 = vmatpush2.msra.mxu0 0.0
    %3521 = vmatprep.subr.mxu0 0.0
    %3522 = vmatpush2.msra.mxu0 0.0
    %3523 = vmatprep.subr.mxu0 0.0
    %3524 = vmatpush2.msra.mxu0 0.0
    %3525 = vmatprep.subr.mxu0 0.0
    %3526 = vmatpush2.msra.mxu0 0.0
    %3527 = vmatprep.subr.mxu0 0.0
    %3528 = vmatpush2.msra.mxu0 0.0
    %3529 = vmatprep.subr.mxu0 0.0
    %3530 = vmatpush2.msra.mxu0 0.0
    %3531 = vmatprep.subr.mxu0 0.0
    %3532 = vmatpush2.msra.mxu0 0.0
    %3533 = vmatprep.subr.mxu0 0.0
    %3534 = vmatpush2.msra.mxu0 0.0
    %3535 = vmatprep.subr.mxu0 0.0
    %3536 = vmatpush2.msra.mxu0 0.0
    %3537 = vmatprep.subr.mxu0 0.0
    %3538 = vmatpush2.msra.mxu0 0.0
    %3539 = vmatprep.subr.mxu0 0.0
    %3540 = vmatpush2.msra.mxu0 0.0
    %3541 = vmatprep.subr.mxu0 0.0
    %3542 = vmatpush2.msra.mxu0 0.0
    %3543 = vmatprep.subr.mxu0 0.0
    %3544 = vmatpush2.msra.mxu0 0.0
    %3545 = vmatprep.subr.mxu0 0.0
    %3546 = vmatpush2.msra.mxu0 0.0
    %3547 = vmatprep.subr.mxu0 0.0
    %3548 = vmatpush2.msra.mxu0 0.0
    %3549 = vmatprep.subr.mxu0 0.0
    %3550 = vmatpush2.msra.mxu0 0.0
    %3551 = vmatprep.mubr.f32.mxu0 0.0
    %v3552 = vand.u32 %v3392, 4294901760
    %3553 = vmatmul.mubr.f32.gmra.mxu0 %v3552
    %v3554 = vpop.f32.mrf.mxu0
    %v3555 = vadd.f32 %v3469, %v3554
    %v3556 = vpop.f32.mrf.mxu0
    %3557 = vdwg.mxu0
    %3558 = vmatprep.subr.mxu0 0.0
    %3559 = vmatpush1.msra.mxu0 0.0
    %3560 = vmatprep.subr.mxu0 0.0
    %3561 = vmatpush1.msra.mxu0 0.0
    %3562 = vmatprep.subr.mxu0 0.0
    %3563 = vmatpush1.msra.mxu0 0.0
    %3564 = vmatprep.subr.mxu0 0.0
    %3565 = vmatpush1.msra.mxu0 0.0
    %3566 = vmatprep.subr.mxu0 0.0
    %3567 = vmatpush1.msra.mxu0 0.0
    %3568 = vmatprep.subr.mxu0 0.0
    %3569 = vmatpush1.msra.mxu0 0.0
    %3570 = vmatprep.subr.mxu0 0.0
    %3571 = vmatpush1.msra.mxu0 0.0
    %3572 = vmatprep.subr.mxu0 0.0
    %3573 = vmatpush1.msra.mxu0 0.0
    %3574 = vmatprep.subr.mxu0 0.0
    %3575 = vmatpush1.msra.mxu0 0.0
    %3576 = vmatprep.subr.mxu0 0.0
    %3577 = vmatpush1.msra.mxu0 0.0
    %3578 = vmatprep.subr.mxu0 0.0
    %3579 = vmatpush1.msra.mxu0 0.0
    %3580 = vmatprep.subr.mxu0 0.0
    %3581 = vmatpush1.msra.mxu0 0.0
    %3582 = vmatprep.subr.mxu0 0.0
    %3583 = vmatpush1.msra.mxu0 0.0
    %3584 = vmatprep.subr.mxu0 0.0
    %v3585 = vand.u32 %v44, 4294901760
    %v3586 = vsub.f32 %v44, %v3585
    %3587 = vmatpush1.msra.mxu0 %v3586
    %3588 = vmatprep.subr.mxu0 0.0
    %v3589 = vand.u32 %v43, 4294901760
    %v3590 = vsub.f32 %v43, %v3589
    %3591 = vmatpush1.msra.mxu0 %v3590
    %3592 = vmatprep.subr.mxu0 0.0
    %v3593 = vand.u32 %v42, 4294901760
    %v3594 = vsub.f32 %v42, %v3593
    %3595 = vmatpush1.msra.mxu0 %v3594
    %3596 = vmatprep.subr.mxu0 0.0
    %3597 = vmatpush2.msra.mxu0 0.0
    %3598 = vmatprep.subr.mxu0 0.0
    %3599 = vmatpush2.msra.mxu0 0.0
    %3600 = vmatprep.subr.mxu0 0.0
    %3601 = vmatpush2.msra.mxu0 0.0
    %3602 = vmatprep.subr.mxu0 0.0
    %3603 = vmatpush2.msra.mxu0 0.0
    %3604 = vmatprep.subr.mxu0 0.0
    %3605 = vmatpush2.msra.mxu0 0.0
    %3606 = vmatprep.subr.mxu0 0.0
    %3607 = vmatpush2.msra.mxu0 0.0
    %3608 = vmatprep.subr.mxu0 0.0
    %3609 = vmatpush2.msra.mxu0 0.0
    %3610 = vmatprep.subr.mxu0 0.0
    %3611 = vmatpush2.msra.mxu0 0.0
    %3612 = vmatprep.subr.mxu0 0.0
    %3613 = vmatpush2.msra.mxu0 0.0
    %3614 = vmatprep.subr.mxu0 0.0
    %3615 = vmatpush2.msra.mxu0 0.0
    %3616 = vmatprep.subr.mxu0 0.0
    %3617 = vmatpush2.msra.mxu0 0.0
    %3618 = vmatprep.subr.mxu0 0.0
    %3619 = vmatpush2.msra.mxu0 0.0
    %3620 = vmatprep.subr.mxu0 0.0
    %3621 = vmatpush2.msra.mxu0 0.0
    %3622 = vmatprep.subr.mxu0 0.0
    %3623 = vmatpush2.msra.mxu0 0.0
    %3624 = vmatprep.subr.mxu0 0.0
    %3625 = vmatpush2.msra.mxu0 0.0
    %3626 = vmatprep.subr.mxu0 0.0
    %3627 = vmatpush2.msra.mxu0 0.0
    %3628 = vmatprep.mubr.f32.mxu0 0.0
    %v3629 = vand.u32 %v3392, 4294901760
    %v3630 = vsub.f32 %v3392, %v3629
    %3631 = vmatmul.mubr.f32.gmra.mxu0 %v3630
    %v3632 = vpop.f32.mrf.mxu0
    %v3633 = vadd.f32 %v3555, %v3632
    %v3634 = vpop.f32.mrf.mxu0
    %3635 = vdwg.mxu0
    %3636 = vmatprep.subr.mxu0 0.0
    %3637 = vmatpush1.msra.mxu0 0.0
    %3638 = vmatprep.subr.mxu0 0.0
    %3639 = vmatpush1.msra.mxu0 0.0
    %3640 = vmatprep.subr.mxu0 0.0
    %3641 = vmatpush1.msra.mxu0 0.0
    %3642 = vmatprep.subr.mxu0 0.0
    %3643 = vmatpush1.msra.mxu0 0.0
    %3644 = vmatprep.subr.mxu0 0.0
    %3645 = vmatpush1.msra.mxu0 0.0
    %3646 = vmatprep.subr.mxu0 0.0
    %3647 = vmatpush1.msra.mxu0 0.0
    %3648 = vmatprep.subr.mxu0 0.0
    %3649 = vmatpush1.msra.mxu0 0.0
    %3650 = vmatprep.subr.mxu0 0.0
    %3651 = vmatpush1.msra.mxu0 0.0
    %3652 = vmatprep.subr.mxu0 0.0
    %3653 = vmatpush1.msra.mxu0 0.0
    %3654 = vmatprep.subr.mxu0 0.0
    %3655 = vmatpush1.msra.mxu0 0.0
    %3656 = vmatprep.subr.mxu0 0.0
    %3657 = vmatpush1.msra.mxu0 0.0
    %3658 = vmatprep.subr.mxu0 0.0
    %3659 = vmatpush1.msra.mxu0 0.0
    %3660 = vmatprep.subr.mxu0 0.0
    %3661 = vmatpush1.msra.mxu0 0.0
    %3662 = vmatprep.subr.mxu0 0.0
    %v3663 = vand.u32 %v44, 4294901760
    %3664 = vmatpush1.msra.mxu0 %v3663
    %3665 = vmatprep.subr.mxu0 0.0
    %v3666 = vand.u32 %v43, 4294901760
    %3667 = vmatpush1.msra.mxu0 %v3666
    %3668 = vmatprep.subr.mxu0 0.0
    %v3669 = vand.u32 %v42, 4294901760
    %3670 = vmatpush1.msra.mxu0 %v3669
    %3671 = vmatprep.subr.mxu0 0.0
    %3672 = vmatpush2.msra.mxu0 0.0
    %3673 = vmatprep.subr.mxu0 0.0
    %3674 = vmatpush2.msra.mxu0 0.0
    %3675 = vmatprep.subr.mxu0 0.0
    %3676 = vmatpush2.msra.mxu0 0.0
    %3677 = vmatprep.subr.mxu0 0.0
    %3678 = vmatpush2.msra.mxu0 0.0
    %3679 = vmatprep.subr.mxu0 0.0
    %3680 = vmatpush2.msra.mxu0 0.0
    %3681 = vmatprep.subr.mxu0 0.0
    %3682 = vmatpush2.msra.mxu0 0.0
    %3683 = vmatprep.subr.mxu0 0.0
    %3684 = vmatpush2.msra.mxu0 0.0
    %3685 = vmatprep.subr.mxu0 0.0
    %3686 = vmatpush2.msra.mxu0 0.0
    %3687 = vmatprep.subr.mxu0 0.0
    %3688 = vmatpush2.msra.mxu0 0.0
    %3689 = vmatprep.subr.mxu0 0.0
    %3690 = vmatpush2.msra.mxu0 0.0
    %3691 = vmatprep.subr.mxu0 0.0
    %3692 = vmatpush2.msra.mxu0 0.0
    %3693 = vmatprep.subr.mxu0 0.0
    %3694 = vmatpush2.msra.mxu0 0.0
    %3695 = vmatprep.subr.mxu0 0.0
    %3696 = vmatpush2.msra.mxu0 0.0
    %3697 = vmatprep.subr.mxu0 0.0
    %3698 = vmatpush2.msra.mxu0 0.0
    %3699 = vmatprep.subr.mxu0 0.0
    %3700 = vmatpush2.msra.mxu0 0.0
    %3701 = vmatprep.subr.mxu0 0.0
    %3702 = vmatpush2.msra.mxu0 0.0
    %3703 = vmatprep.mubr.f32.mxu0 0.0
    %v3704 = vand.u32 %v3392, 4294901760
    %v3705 = vsub.f32 %v3392, %v3704
    %v3706 = vand.u32 %v3705, 4294901760
    %3707 = vmatmul.mubr.f32.gmra.mxu0 %v3706
    %v3708 = vpop.f32.mrf.mxu0
    %v3709 = vadd.f32 %v3633, %v3708
    %v3710 = vpop.f32.mrf.mxu0
    %3711 = vdwg.mxu0
    %3712 = vmatprep.subr.mxu0 0.0
    %3713 = vmatpush1.msra.mxu0 0.0
    %3714 = vmatprep.subr.mxu0 0.0
    %3715 = vmatpush1.msra.mxu0 0.0
    %3716 = vmatprep.subr.mxu0 0.0
    %3717 = vmatpush1.msra.mxu0 0.0
    %3718 = vmatprep.subr.mxu0 0.0
    %3719 = vmatpush1.msra.mxu0 0.0
    %3720 = vmatprep.subr.mxu0 0.0
    %3721 = vmatpush1.msra.mxu0 0.0
    %3722 = vmatprep.subr.mxu0 0.0
    %3723 = vmatpush1.msra.mxu0 0.0
    %3724 = vmatprep.subr.mxu0 0.0
    %3725 = vmatpush1.msra.mxu0 0.0
    %3726 = vmatprep.subr.mxu0 0.0
    %3727 = vmatpush1.msra.mxu0 0.0
    %3728 = vmatprep.subr.mxu0 0.0
    %3729 = vmatpush1.msra.mxu0 0.0
    %3730 = vmatprep.subr.mxu0 0.0
    %3731 = vmatpush1.msra.mxu0 0.0
    %3732 = vmatprep.subr.mxu0 0.0
    %3733 = vmatpush1.msra.mxu0 0.0
    %3734 = vmatprep.subr.mxu0 0.0
    %3735 = vmatpush1.msra.mxu0 0.0
    %3736 = vmatprep.subr.mxu0 0.0
    %3737 = vmatpush1.msra.mxu0 0.0
    %3738 = vmatprep.subr.mxu0 0.0
    %v3739 = vand.u32 %v44, 4294901760
    %v3740 = vsub.f32 %v44, %v3739
    %v3741 = vand.u32 %v3740, 4294901760
    %3742 = vmatpush1.msra.mxu0 %v3741
    %3743 = vmatprep.subr.mxu0 0.0
    %v3744 = vand.u32 %v43, 4294901760
    %v3745 = vsub.f32 %v43, %v3744
    %v3746 = vand.u32 %v3745, 4294901760
    %3747 = vmatpush1.msra.mxu0 %v3746
    %3748 = vmatprep.subr.mxu0 0.0
    %v3749 = vand.u32 %v42, 4294901760
    %v3750 = vsub.f32 %v42, %v3749
    %v3751 = vand.u32 %v3750, 4294901760
    %3752 = vmatpush1.msra.mxu0 %v3751
    %3753 = vmatprep.subr.mxu0 0.0
    %3754 = vmatpush2.msra.mxu0 0.0
    %3755 = vmatprep.subr.mxu0 0.0
    %3756 = vmatpush2.msra.mxu0 0.0
    %3757 = vmatprep.subr.mxu0 0.0
    %3758 = vmatpush2.msra.mxu0 0.0
    %3759 = vmatprep.subr.mxu0 0.0
    %3760 = vmatpush2.msra.mxu0 0.0
    %3761 = vmatprep.subr.mxu0 0.0
    %3762 = vmatpush2.msra.mxu0 0.0
    %3763 = vmatprep.subr.mxu0 0.0
    %3764 = vmatpush2.msra.mxu0 0.0
    %3765 = vmatprep.subr.mxu0 0.0
    %3766 = vmatpush2.msra.mxu0 0.0
    %3767 = vmatprep.subr.mxu0 0.0
    %3768 = vmatpush2.msra.mxu0 0.0
    %3769 = vmatprep.subr.mxu0 0.0
    %3770 = vmatpush2.msra.mxu0 0.0
    %3771 = vmatprep.subr.mxu0 0.0
    %3772 = vmatpush2.msra.mxu0 0.0
    %3773 = vmatprep.subr.mxu0 0.0
    %3774 = vmatpush2.msra.mxu0 0.0
    %3775 = vmatprep.subr.mxu0 0.0
    %3776 = vmatpush2.msra.mxu0 0.0
    %3777 = vmatprep.subr.mxu0 0.0
    %3778 = vmatpush2.msra.mxu0 0.0
    %3779 = vmatprep.subr.mxu0 0.0
    %3780 = vmatpush2.msra.mxu0 0.0
    %3781 = vmatprep.subr.mxu0 0.0
    %3782 = vmatpush2.msra.mxu0 0.0
    %3783 = vmatprep.subr.mxu0 0.0
    %3784 = vmatpush2.msra.mxu0 0.0
    %3785 = vmatprep.mubr.f32.mxu0 0.0
    %v3786 = vand.u32 %v3392, 4294901760
    %3787 = vmatmul.mubr.f32.gmra.mxu0 %v3786
    %v3788 = vpop.f32.mrf.mxu0
    %v3789 = vadd.f32 %v3709, %v3788
    %v3790 = vpop.f32.mrf.mxu0
    %3791 = vdwg.mxu0
    %3792 = vmatprep.subr.mxu0 0.0
    %3793 = vmatpush1.msra.mxu0 0.0
    %3794 = vmatprep.subr.mxu0 0.0
    %3795 = vmatpush1.msra.mxu0 0.0
    %3796 = vmatprep.subr.mxu0 0.0
    %3797 = vmatpush1.msra.mxu0 0.0
    %3798 = vmatprep.subr.mxu0 0.0
    %3799 = vmatpush1.msra.mxu0 0.0
    %3800 = vmatprep.subr.mxu0 0.0
    %3801 = vmatpush1.msra.mxu0 0.0
    %3802 = vmatprep.subr.mxu0 0.0
    %3803 = vmatpush1.msra.mxu0 0.0
    %3804 = vmatprep.subr.mxu0 0.0
    %3805 = vmatpush1.msra.mxu0 0.0
    %3806 = vmatprep.subr.mxu0 0.0
    %3807 = vmatpush1.msra.mxu0 0.0
    %3808 = vmatprep.subr.mxu0 0.0
    %3809 = vmatpush1.msra.mxu0 0.0
    %3810 = vmatprep.subr.mxu0 0.0
    %3811 = vmatpush1.msra.mxu0 0.0
    %3812 = vmatprep.subr.mxu0 0.0
    %3813 = vmatpush1.msra.mxu0 0.0
    %3814 = vmatprep.subr.mxu0 0.0
    %3815 = vmatpush1.msra.mxu0 0.0
    %3816 = vmatprep.subr.mxu0 0.0
    %3817 = vmatpush1.msra.mxu0 0.0
    %3818 = vmatprep.subr.mxu0 0.0
    %v3819 = vand.u32 %v44, 4294901760
    %3820 = vmatpush1.msra.mxu0 %v3819
    %3821 = vmatprep.subr.mxu0 0.0
    %v3822 = vand.u32 %v43, 4294901760
    %3823 = vmatpush1.msra.mxu0 %v3822
    %3824 = vmatprep.subr.mxu0 0.0
    %v3825 = vand.u32 %v42, 4294901760
    %3826 = vmatpush1.msra.mxu0 %v3825
    %3827 = vmatprep.subr.mxu0 0.0
    %3828 = vmatpush2.msra.mxu0 0.0
    %3829 = vmatprep.subr.mxu0 0.0
    %3830 = vmatpush2.msra.mxu0 0.0
    %3831 = vmatprep.subr.mxu0 0.0
    %3832 = vmatpush2.msra.mxu0 0.0
    %3833 = vmatprep.subr.mxu0 0.0
    %3834 = vmatpush2.msra.mxu0 0.0
    %3835 = vmatprep.subr.mxu0 0.0
    %3836 = vmatpush2.msra.mxu0 0.0
    %3837 = vmatprep.subr.mxu0 0.0
    %3838 = vmatpush2.msra.mxu0 0.0
    %3839 = vmatprep.subr.mxu0 0.0
    %3840 = vmatpush2.msra.mxu0 0.0
    %3841 = vmatprep.subr.mxu0 0.0
    %3842 = vmatpush2.msra.mxu0 0.0
    %3843 = vmatprep.subr.mxu0 0.0
    %3844 = vmatpush2.msra.mxu0 0.0
    %3845 = vmatprep.subr.mxu0 0.0
    %3846 = vmatpush2.msra.mxu0 0.0
    %3847 = vmatprep.subr.mxu0 0.0
    %3848 = vmatpush2.msra.mxu0 0.0
    %3849 = vmatprep.subr.mxu0 0.0
    %3850 = vmatpush2.msra.mxu0 0.0
    %3851 = vmatprep.subr.mxu0 0.0
    %3852 = vmatpush2.msra.mxu0 0.0
    %3853 = vmatprep.subr.mxu0 0.0
    %3854 = vmatpush2.msra.mxu0 0.0
    %3855 = vmatprep.subr.mxu0 0.0
    %3856 = vmatpush2.msra.mxu0 0.0
    %3857 = vmatprep.subr.mxu0 0.0
    %3858 = vmatpush2.msra.mxu0 0.0
    %3859 = vmatprep.mubr.f32.mxu0 0.0
    %v3860 = vand.u32 %v3392, 4294901760
    %3861 = vmatmul.mubr.f32.gmra.mxu0 %v3860
    %v3862 = vpop.f32.mrf.mxu0
    %v3863 = vadd.f32 %v3789, %v3862
    %v3864 = vpop.f32.mrf.mxu0
    %3865 = vdwg.mxu0
    %v3866 = vxor.u32 %v3863, 2147483648
    %v3867 = vmul.f32 %v3866, 1.442695
    %v3868 = vpow.pop %v3867
    %v3869 = vadd.f32 %v3868, 1.0
    %v3870 = vrcp.pop %v3869
    %v3871 = vmul.f32 1.0, %v3870
    %v3872 = vtanh.pop %v3863
    %v3873 = vmul.f32 %v3871, %v3337
    %3875 = vrot.lane.b32.xlu0 %v3872, 96
    %v3876 = vpop.permute.xlu0 %3875
    %v3878 = vmul.f32 %v3871, %v3876
    %3880 = vrot.lane.b32.xlu0 %v3878, 16
    %v3881 = vpop.permute.xlu0 %3880
    %v3883 = vadd.f32 %v3873, %v3881
    %v3884 = vtanh.pop %v3883
    %3886 = vrot.lane.b32.xlu0 %v3884, 32
    %v3887 = vpop.permute.xlu0 %3886
    %v3889 = vmul.f32 %v3871, %v3887
    %s3890 = scalar_lea.vmem %s7, 12
    %3891 = vst.msk [vmem:[%s3890] sm:$0x3] %vm80, %v3386
    %3893 = vrot.lane.b32.xlu0 %v3889, 80
    %v3894 = vpop.permute.xlu0 %3893
    %s3896 = scalar_lea.vmem [#allocation5], 12
    %3897 = vst.msk [vmem:[%s3896] sm:$0x3] %vm63, %v3894
    %v3898 = vmul.f32 %v3889, %v617
    %v3899 = vmul.f32 %v3883, %v621
    %3901 = vrot.lane.b32.xlu0 %v3899, 32
    %v3902 = vpop.permute.xlu0 %3901
    %v3904 = vadd.f32 %v3898, %v3902
    %3906 = vrot.lane.b32.xlu0 %v3904, 80
    %v3907 = vpop.permute.xlu0 %3906
    %v3909 = vsel %vm63, %v3907, 0.0
    %3910 = vadd.xlane.f32.xlu0 %v3909
    %v3911 = vpop.xlane.xlu0 %3910
    %v3912 = vadd.f32 %v3911, %v71
    %3914 = vset.pattern.permute.xlu0 0
    %3915 = vperm.xlu0 %3914, %v3912
    %v3916 = vpop.permute.xlu0 %3915
    %v3918 = vadd.f32 %v3916, %v38
    %v3919 = vsel %vm80, %v3918, -inf
    %3920 = vmax.xlane.f32.xlu0 %v3919
    %v3921 = vpop.xlane.xlu0 %3920
    %v3922 = vsub.f32 %v3918, %v3921
    %v3923 = vmul.f32 %v3922, 1.442695
    %v3924 = vpow.pop %v3923
    %v3925 = vsel %vm80, %v3924, 0.0
    %3926 = vadd.xlane.f32.xlu0 %v3925
    %v3927 = vpop.xlane.xlu0 %3926
    %v3928 = vrcp.pop %v3927
    %v3929 = vmul.f32 %v3924, %v3928
    %s3930 = scalar_lea.vmem %s0, 14
    %v3931 = vld [vmem:[%s3930] sm:$0x3]
    %v3932 = vmul.f32 %v3929, %v3931
    %3933 = vrot.lane.b32.xlu0 %v3889, 88
    %v3934 = vpop.permute.xlu0 %3933
    %v3936 = vsel %vm98, %v3932, %v3934
    %v3938 = vsel %vm106, %v3936, 0
    %3940 = vmatprep.subr.mxu0 0.0
    %3941 = vmatpush1.msra.mxu0 0.0
    %3942 = vmatprep.subr.mxu0 0.0
    %3943 = vmatpush1.msra.mxu0 0.0
    %3944 = vmatprep.subr.mxu0 0.0
    %3945 = vmatpush1.msra.mxu0 0.0
    %3946 = vmatprep.subr.mxu0 0.0
    %3947 = vmatpush1.msra.mxu0 0.0
    %3948 = vmatprep.subr.mxu0 0.0
    %3949 = vmatpush1.msra.mxu0 0.0
    %3950 = vmatprep.subr.mxu0 0.0
    %3951 = vmatpush1.msra.mxu0 0.0
    %3952 = vmatprep.subr.mxu0 0.0
    %3953 = vmatpush1.msra.mxu0 0.0
    %3954 = vmatprep.subr.mxu0 0.0
    %3955 = vmatpush1.msra.mxu0 0.0
    %3956 = vmatprep.subr.mxu0 0.0
    %3957 = vmatpush1.msra.mxu0 0.0
    %3958 = vmatprep.subr.mxu0 0.0
    %3959 = vmatpush1.msra.mxu0 0.0
    %3960 = vmatprep.subr.mxu0 0.0
    %3961 = vmatpush1.msra.mxu0 0.0
    %3962 = vmatprep.subr.mxu0 0.0
    %3963 = vmatpush1.msra.mxu0 0.0
    %3964 = vmatprep.subr.mxu0 0.0
    %3965 = vmatpush1.msra.mxu0 0.0
    %3966 = vmatprep.subr.mxu0 0.0
    %v3967 = vand.u32 %v44, 4294901760
    %3968 = vmatpush1.msra.mxu0 %v3967
    %3969 = vmatprep.subr.mxu0 0.0
    %v3970 = vand.u32 %v43, 4294901760
    %3971 = vmatpush1.msra.mxu0 %v3970
    %3972 = vmatprep.subr.mxu0 0.0
    %v3973 = vand.u32 %v42, 4294901760
    %3974 = vmatpush1.msra.mxu0 %v3973
    %3975 = vmatprep.subr.mxu0 0.0
    %3976 = vmatpush2.msra.mxu0 0.0
    %3977 = vmatprep.subr.mxu0 0.0
    %3978 = vmatpush2.msra.mxu0 0.0
    %3979 = vmatprep.subr.mxu0 0.0
    %3980 = vmatpush2.msra.mxu0 0.0
    %3981 = vmatprep.subr.mxu0 0.0
    %3982 = vmatpush2.msra.mxu0 0.0
    %3983 = vmatprep.subr.mxu0 0.0
    %3984 = vmatpush2.msra.mxu0 0.0
    %3985 = vmatprep.subr.mxu0 0.0
    %3986 = vmatpush2.msra.mxu0 0.0
    %3987 = vmatprep.subr.mxu0 0.0
    %3988 = vmatpush2.msra.mxu0 0.0
    %3989 = vmatprep.subr.mxu0 0.0
    %3990 = vmatpush2.msra.mxu0 0.0
    %3991 = vmatprep.subr.mxu0 0.0
    %3992 = vmatpush2.msra.mxu0 0.0
    %3993 = vmatprep.subr.mxu0 0.0
    %3994 = vmatpush2.msra.mxu0 0.0
    %3995 = vmatprep.subr.mxu0 0.0
    %3996 = vmatpush2.msra.mxu0 0.0
    %3997 = vmatprep.subr.mxu0 0.0
    %3998 = vmatpush2.msra.mxu0 0.0
    %3999 = vmatprep.subr.mxu0 0.0
    %4000 = vmatpush2.msra.mxu0 0.0
    %4001 = vmatprep.subr.mxu0 0.0
    %4002 = vmatpush2.msra.mxu0 0.0
    %4003 = vmatprep.subr.mxu0 0.0
    %4004 = vmatpush2.msra.mxu0 0.0
    %4005 = vmatprep.subr.mxu0 0.0
    %4006 = vmatpush2.msra.mxu0 0.0
    %4007 = vmatprep.mubr.f32.mxu0 0.0
    %v4008 = vand.u32 %v3938, 4294901760
    %v4009 = vsub.f32 %v3938, %v4008
    %v4010 = vand.u32 %v4009, 4294901760
    %v4011 = vsub.f32 %v4009, %v4010
    %v4012 = vand.u32 %v4011, 4294901760
    %4013 = vmatmul.mubr.f32.gmra.mxu0 %v4012
    %v4014 = vpop.f32.mrf.mxu0
    %v4015 = vadd.f32 %v104, %v4014
    %v4016 = vpop.f32.mrf.mxu0
    %4017 = vdwg.mxu0
    %4018 = vmatprep.subr.mxu0 0.0
    %4019 = vmatpush1.msra.mxu0 0.0
    %4020 = vmatprep.subr.mxu0 0.0
    %4021 = vmatpush1.msra.mxu0 0.0
    %4022 = vmatprep.subr.mxu0 0.0
    %4023 = vmatpush1.msra.mxu0 0.0
    %4024 = vmatprep.subr.mxu0 0.0
    %4025 = vmatpush1.msra.mxu0 0.0
    %4026 = vmatprep.subr.mxu0 0.0
    %4027 = vmatpush1.msra.mxu0 0.0
    %4028 = vmatprep.subr.mxu0 0.0
    %4029 = vmatpush1.msra.mxu0 0.0
    %4030 = vmatprep.subr.mxu0 0.0
    %4031 = vmatpush1.msra.mxu0 0.0
    %4032 = vmatprep.subr.mxu0 0.0
    %4033 = vmatpush1.msra.mxu0 0.0
    %4034 = vmatprep.subr.mxu0 0.0
    %4035 = vmatpush1.msra.mxu0 0.0
    %4036 = vmatprep.subr.mxu0 0.0
    %4037 = vmatpush1.msra.mxu0 0.0
    %4038 = vmatprep.subr.mxu0 0.0
    %4039 = vmatpush1.msra.mxu0 0.0
    %4040 = vmatprep.subr.mxu0 0.0
    %4041 = vmatpush1.msra.mxu0 0.0
    %4042 = vmatprep.subr.mxu0 0.0
    %4043 = vmatpush1.msra.mxu0 0.0
    %4044 = vmatprep.subr.mxu0 0.0
    %v4045 = vand.u32 %v44, 4294901760
    %v4046 = vsub.f32 %v44, %v4045
    %v4047 = vand.u32 %v4046, 4294901760
    %v4048 = vsub.f32 %v4046, %v4047
    %v4049 = vand.u32 %v4048, 4294901760
    %4050 = vmatpush1.msra.mxu0 %v4049
    %4051 = vmatprep.subr.mxu0 0.0
    %v4052 = vand.u32 %v43, 4294901760
    %v4053 = vsub.f32 %v43, %v4052
    %v4054 = vand.u32 %v4053, 4294901760
    %v4055 = vsub.f32 %v4053, %v4054
    %v4056 = vand.u32 %v4055, 4294901760
    %4057 = vmatpush1.msra.mxu0 %v4056
    %4058 = vmatprep.subr.mxu0 0.0
    %v4059 = vand.u32 %v42, 4294901760
    %v4060 = vsub.f32 %v42, %v4059
    %v4061 = vand.u32 %v4060, 4294901760
    %v4062 = vsub.f32 %v4060, %v4061
    %v4063 = vand.u32 %v4062, 4294901760
    %4064 = vmatpush1.msra.mxu0 %v4063
    %4065 = vmatprep.subr.mxu0 0.0
    %4066 = vmatpush2.msra.mxu0 0.0
    %4067 = vmatprep.subr.mxu0 0.0
    %4068 = vmatpush2.msra.mxu0 0.0
    %4069 = vmatprep.subr.mxu0 0.0
    %4070 = vmatpush2.msra.mxu0 0.0
    %4071 = vmatprep.subr.mxu0 0.0
    %4072 = vmatpush2.msra.mxu0 0.0
    %4073 = vmatprep.subr.mxu0 0.0
    %4074 = vmatpush2.msra.mxu0 0.0
    %4075 = vmatprep.subr.mxu0 0.0
    %4076 = vmatpush2.msra.mxu0 0.0
    %4077 = vmatprep.subr.mxu0 0.0
    %4078 = vmatpush2.msra.mxu0 0.0
    %4079 = vmatprep.subr.mxu0 0.0
    %4080 = vmatpush2.msra.mxu0 0.0
    %4081 = vmatprep.subr.mxu0 0.0
    %4082 = vmatpush2.msra.mxu0 0.0
    %4083 = vmatprep.subr.mxu0 0.0
    %4084 = vmatpush2.msra.mxu0 0.0
    %4085 = vmatprep.subr.mxu0 0.0
    %4086 = vmatpush2.msra.mxu0 0.0
    %4087 = vmatprep.subr.mxu0 0.0
    %4088 = vmatpush2.msra.mxu0 0.0
    %4089 = vmatprep.subr.mxu0 0.0
    %4090 = vmatpush2.msra.mxu0 0.0
    %4091 = vmatprep.subr.mxu0 0.0
    %4092 = vmatpush2.msra.mxu0 0.0
    %4093 = vmatprep.subr.mxu0 0.0
    %4094 = vmatpush2.msra.mxu0 0.0
    %4095 = vmatprep.subr.mxu0 0.0
    %4096 = vmatpush2.msra.mxu0 0.0
    %4097 = vmatprep.mubr.f32.mxu0 0.0
    %v4098 = vand.u32 %v3938, 4294901760
    %4099 = vmatmul.mubr.f32.gmra.mxu0 %v4098
    %v4100 = vpop.f32.mrf.mxu0
    %v4101 = vadd.f32 %v4015, %v4100
    %v4102 = vpop.f32.mrf.mxu0
    %4103 = vdwg.mxu0
    %4104 = vmatprep.subr.mxu0 0.0
    %4105 = vmatpush1.msra.mxu0 0.0
    %4106 = vmatprep.subr.mxu0 0.0
    %4107 = vmatpush1.msra.mxu0 0.0
    %4108 = vmatprep.subr.mxu0 0.0
    %4109 = vmatpush1.msra.mxu0 0.0
    %4110 = vmatprep.subr.mxu0 0.0
    %4111 = vmatpush1.msra.mxu0 0.0
    %4112 = vmatprep.subr.mxu0 0.0
    %4113 = vmatpush1.msra.mxu0 0.0
    %4114 = vmatprep.subr.mxu0 0.0
    %4115 = vmatpush1.msra.mxu0 0.0
    %4116 = vmatprep.subr.mxu0 0.0
    %4117 = vmatpush1.msra.mxu0 0.0
    %4118 = vmatprep.subr.mxu0 0.0
    %4119 = vmatpush1.msra.mxu0 0.0
    %4120 = vmatprep.subr.mxu0 0.0
    %4121 = vmatpush1.msra.mxu0 0.0
    %4122 = vmatprep.subr.mxu0 0.0
    %4123 = vmatpush1.msra.mxu0 0.0
    %4124 = vmatprep.subr.mxu0 0.0
    %4125 = vmatpush1.msra.mxu0 0.0
    %4126 = vmatprep.subr.mxu0 0.0
    %4127 = vmatpush1.msra.mxu0 0.0
    %4128 = vmatprep.subr.mxu0 0.0
    %4129 = vmatpush1.msra.mxu0 0.0
    %4130 = vmatprep.subr.mxu0 0.0
    %v4131 = vand.u32 %v44, 4294901760
    %v4132 = vsub.f32 %v44, %v4131
    %4133 = vmatpush1.msra.mxu0 %v4132
    %4134 = vmatprep.subr.mxu0 0.0
    %v4135 = vand.u32 %v43, 4294901760
    %v4136 = vsub.f32 %v43, %v4135
    %4137 = vmatpush1.msra.mxu0 %v4136
    %4138 = vmatprep.subr.mxu0 0.0
    %v4139 = vand.u32 %v42, 4294901760
    %v4140 = vsub.f32 %v42, %v4139
    %4141 = vmatpush1.msra.mxu0 %v4140
    %4142 = vmatprep.subr.mxu0 0.0
    %4143 = vmatpush2.msra.mxu0 0.0
    %4144 = vmatprep.subr.mxu0 0.0
    %4145 = vmatpush2.msra.mxu0 0.0
    %4146 = vmatprep.subr.mxu0 0.0
    %4147 = vmatpush2.msra.mxu0 0.0
    %4148 = vmatprep.subr.mxu0 0.0
    %4149 = vmatpush2.msra.mxu0 0.0
    %4150 = vmatprep.subr.mxu0 0.0
    %4151 = vmatpush2.msra.mxu0 0.0
    %4152 = vmatprep.subr.mxu0 0.0
    %4153 = vmatpush2.msra.mxu0 0.0
    %4154 = vmatprep.subr.mxu0 0.0
    %4155 = vmatpush2.msra.mxu0 0.0
    %4156 = vmatprep.subr.mxu0 0.0
    %4157 = vmatpush2.msra.mxu0 0.0
    %4158 = vmatprep.subr.mxu0 0.0
    %4159 = vmatpush2.msra.mxu0 0.0
    %4160 = vmatprep.subr.mxu0 0.0
    %4161 = vmatpush2.msra.mxu0 0.0
    %4162 = vmatprep.subr.mxu0 0.0
    %4163 = vmatpush2.msra.mxu0 0.0
    %4164 = vmatprep.subr.mxu0 0.0
    %4165 = vmatpush2.msra.mxu0 0.0
    %4166 = vmatprep.subr.mxu0 0.0
    %4167 = vmatpush2.msra.mxu0 0.0
    %4168 = vmatprep.subr.mxu0 0.0
    %4169 = vmatpush2.msra.mxu0 0.0
    %4170 = vmatprep.subr.mxu0 0.0
    %4171 = vmatpush2.msra.mxu0 0.0
    %4172 = vmatprep.subr.mxu0 0.0
    %4173 = vmatpush2.msra.mxu0 0.0
    %4174 = vmatprep.mubr.f32.mxu0 0.0
    %v4175 = vand.u32 %v3938, 4294901760
    %v4176 = vsub.f32 %v3938, %v4175
    %4177 = vmatmul.mubr.f32.gmra.mxu0 %v4176
    %v4178 = vpop.f32.mrf.mxu0
    %v4179 = vadd.f32 %v4101, %v4178
    %v4180 = vpop.f32.mrf.mxu0
    %4181 = vdwg.mxu0
    %4182 = vmatprep.subr.mxu0 0.0
    %4183 = vmatpush1.msra.mxu0 0.0
    %4184 = vmatprep.subr.mxu0 0.0
    %4185 = vmatpush1.msra.mxu0 0.0
    %4186 = vmatprep.subr.mxu0 0.0
    %4187 = vmatpush1.msra.mxu0 0.0
    %4188 = vmatprep.subr.mxu0 0.0
    %4189 = vmatpush1.msra.mxu0 0.0
    %4190 = vmatprep.subr.mxu0 0.0
    %4191 = vmatpush1.msra.mxu0 0.0
    %4192 = vmatprep.subr.mxu0 0.0
    %4193 = vmatpush1.msra.mxu0 0.0
    %4194 = vmatprep.subr.mxu0 0.0
    %4195 = vmatpush1.msra.mxu0 0.0
    %4196 = vmatprep.subr.mxu0 0.0
    %4197 = vmatpush1.msra.mxu0 0.0
    %4198 = vmatprep.subr.mxu0 0.0
    %4199 = vmatpush1.msra.mxu0 0.0
    %4200 = vmatprep.subr.mxu0 0.0
    %4201 = vmatpush1.msra.mxu0 0.0
    %4202 = vmatprep.subr.mxu0 0.0
    %4203 = vmatpush1.msra.mxu0 0.0
    %4204 = vmatprep.subr.mxu0 0.0
    %4205 = vmatpush1.msra.mxu0 0.0
    %4206 = vmatprep.subr.mxu0 0.0
    %4207 = vmatpush1.msra.mxu0 0.0
    %4208 = vmatprep.subr.mxu0 0.0
    %v4209 = vand.u32 %v44, 4294901760
    %4210 = vmatpush1.msra.mxu0 %v4209
    %4211 = vmatprep.subr.mxu0 0.0
    %v4212 = vand.u32 %v43, 4294901760
    %4213 = vmatpush1.msra.mxu0 %v4212
    %4214 = vmatprep.subr.mxu0 0.0
    %v4215 = vand.u32 %v42, 4294901760
    %4216 = vmatpush1.msra.mxu0 %v4215
    %4217 = vmatprep.subr.mxu0 0.0
    %4218 = vmatpush2.msra.mxu0 0.0
    %4219 = vmatprep.subr.mxu0 0.0
    %4220 = vmatpush2.msra.mxu0 0.0
    %4221 = vmatprep.subr.mxu0 0.0
    %4222 = vmatpush2.msra.mxu0 0.0
    %4223 = vmatprep.subr.mxu0 0.0
    %4224 = vmatpush2.msra.mxu0 0.0
    %4225 = vmatprep.subr.mxu0 0.0
    %4226 = vmatpush2.msra.mxu0 0.0
    %4227 = vmatprep.subr.mxu0 0.0
    %4228 = vmatpush2.msra.mxu0 0.0
    %4229 = vmatprep.subr.mxu0 0.0
    %4230 = vmatpush2.msra.mxu0 0.0
    %4231 = vmatprep.subr.mxu0 0.0
    %4232 = vmatpush2.msra.mxu0 0.0
    %4233 = vmatprep.subr.mxu0 0.0
    %4234 = vmatpush2.msra.mxu0 0.0
    %4235 = vmatprep.subr.mxu0 0.0
    %4236 = vmatpush2.msra.mxu0 0.0
    %4237 = vmatprep.subr.mxu0 0.0
    %4238 = vmatpush2.msra.mxu0 0.0
    %4239 = vmatprep.subr.mxu0 0.0
    %4240 = vmatpush2.msra.mxu0 0.0
    %4241 = vmatprep.subr.mxu0 0.0
    %4242 = vmatpush2.msra.mxu0 0.0
    %4243 = vmatprep.subr.mxu0 0.0
    %4244 = vmatpush2.msra.mxu0 0.0
    %4245 = vmatprep.subr.mxu0 0.0
    %4246 = vmatpush2.msra.mxu0 0.0
    %4247 = vmatprep.subr.mxu0 0.0
    %4248 = vmatpush2.msra.mxu0 0.0
    %4249 = vmatprep.mubr.f32.mxu0 0.0
    %v4250 = vand.u32 %v3938, 4294901760
    %v4251 = vsub.f32 %v3938, %v4250
    %v4252 = vand.u32 %v4251, 4294901760
    %4253 = vmatmul.mubr.f32.gmra.mxu0 %v4252
    %v4254 = vpop.f32.mrf.mxu0
    %v4255 = vadd.f32 %v4179, %v4254
    %v4256 = vpop.f32.mrf.mxu0
    %4257 = vdwg.mxu0
    %4258 = vmatprep.subr.mxu0 0.0
    %4259 = vmatpush1.msra.mxu0 0.0
    %4260 = vmatprep.subr.mxu0 0.0
    %4261 = vmatpush1.msra.mxu0 0.0
    %4262 = vmatprep.subr.mxu0 0.0
    %4263 = vmatpush1.msra.mxu0 0.0
    %4264 = vmatprep.subr.mxu0 0.0
    %4265 = vmatpush1.msra.mxu0 0.0
    %4266 = vmatprep.subr.mxu0 0.0
    %4267 = vmatpush1.msra.mxu0 0.0
    %4268 = vmatprep.subr.mxu0 0.0
    %4269 = vmatpush1.msra.mxu0 0.0
    %4270 = vmatprep.subr.mxu0 0.0
    %4271 = vmatpush1.msra.mxu0 0.0
    %4272 = vmatprep.subr.mxu0 0.0
    %4273 = vmatpush1.msra.mxu0 0.0
    %4274 = vmatprep.subr.mxu0 0.0
    %4275 = vmatpush1.msra.mxu0 0.0
    %4276 = vmatprep.subr.mxu0 0.0
    %4277 = vmatpush1.msra.mxu0 0.0
    %4278 = vmatprep.subr.mxu0 0.0
    %4279 = vmatpush1.msra.mxu0 0.0
    %4280 = vmatprep.subr.mxu0 0.0
    %4281 = vmatpush1.msra.mxu0 0.0
    %4282 = vmatprep.subr.mxu0 0.0
    %4283 = vmatpush1.msra.mxu0 0.0
    %4284 = vmatprep.subr.mxu0 0.0
    %v4285 = vand.u32 %v44, 4294901760
    %v4286 = vsub.f32 %v44, %v4285
    %v4287 = vand.u32 %v4286, 4294901760
    %4288 = vmatpush1.msra.mxu0 %v4287
    %4289 = vmatprep.subr.mxu0 0.0
    %v4290 = vand.u32 %v43, 4294901760
    %v4291 = vsub.f32 %v43, %v4290
    %v4292 = vand.u32 %v4291, 4294901760
    %4293 = vmatpush1.msra.mxu0 %v4292
    %4294 = vmatprep.subr.mxu0 0.0
    %v4295 = vand.u32 %v42, 4294901760
    %v4296 = vsub.f32 %v42, %v4295
    %v4297 = vand.u32 %v4296, 4294901760
    %4298 = vmatpush1.msra.mxu0 %v4297
    %4299 = vmatprep.subr.mxu0 0.0
    %4300 = vmatpush2.msra.mxu0 0.0
    %4301 = vmatprep.subr.mxu0 0.0
    %4302 = vmatpush2.msra.mxu0 0.0
    %4303 = vmatprep.subr.mxu0 0.0
    %4304 = vmatpush2.msra.mxu0 0.0
    %4305 = vmatprep.subr.mxu0 0.0
    %4306 = vmatpush2.msra.mxu0 0.0
    %4307 = vmatprep.subr.mxu0 0.0
    %4308 = vmatpush2.msra.mxu0 0.0
    %4309 = vmatprep.subr.mxu0 0.0
    %4310 = vmatpush2.msra.mxu0 0.0
    %4311 = vmatprep.subr.mxu0 0.0
    %4312 = vmatpush2.msra.mxu0 0.0
    %4313 = vmatprep.subr.mxu0 0.0
    %4314 = vmatpush2.msra.mxu0 0.0
    %4315 = vmatprep.subr.mxu0 0.0
    %4316 = vmatpush2.msra.mxu0 0.0
    %4317 = vmatprep.subr.mxu0 0.0
    %4318 = vmatpush2.msra.mxu0 0.0
    %4319 = vmatprep.subr.mxu0 0.0
    %4320 = vmatpush2.msra.mxu0 0.0
    %4321 = vmatprep.subr.mxu0 0.0
    %4322 = vmatpush2.msra.mxu0 0.0
    %4323 = vmatprep.subr.mxu0 0.0
    %4324 = vmatpush2.msra.mxu0 0.0
    %4325 = vmatprep.subr.mxu0 0.0
    %4326 = vmatpush2.msra.mxu0 0.0
    %4327 = vmatprep.subr.mxu0 0.0
    %4328 = vmatpush2.msra.mxu0 0.0
    %4329 = vmatprep.subr.mxu0 0.0
    %4330 = vmatpush2.msra.mxu0 0.0
    %4331 = vmatprep.mubr.f32.mxu0 0.0
    %v4332 = vand.u32 %v3938, 4294901760
    %4333 = vmatmul.mubr.f32.gmra.mxu0 %v4332
    %v4334 = vpop.f32.mrf.mxu0
    %v4335 = vadd.f32 %v4255, %v4334
    %v4336 = vpop.f32.mrf.mxu0
    %4337 = vdwg.mxu0
    %4338 = vmatprep.subr.mxu0 0.0
    %4339 = vmatpush1.msra.mxu0 0.0
    %4340 = vmatprep.subr.mxu0 0.0
    %4341 = vmatpush1.msra.mxu0 0.0
    %4342 = vmatprep.subr.mxu0 0.0
    %4343 = vmatpush1.msra.mxu0 0.0
    %4344 = vmatprep.subr.mxu0 0.0
    %4345 = vmatpush1.msra.mxu0 0.0
    %4346 = vmatprep.subr.mxu0 0.0
    %4347 = vmatpush1.msra.mxu0 0.0
    %4348 = vmatprep.subr.mxu0 0.0
    %4349 = vmatpush1.msra.mxu0 0.0
    %4350 = vmatprep.subr.mxu0 0.0
    %4351 = vmatpush1.msra.mxu0 0.0
    %4352 = vmatprep.subr.mxu0 0.0
    %4353 = vmatpush1.msra.mxu0 0.0
    %4354 = vmatprep.subr.mxu0 0.0
    %4355 = vmatpush1.msra.mxu0 0.0
    %4356 = vmatprep.subr.mxu0 0.0
    %4357 = vmatpush1.msra.mxu0 0.0
    %4358 = vmatprep.subr.mxu0 0.0
    %4359 = vmatpush1.msra.mxu0 0.0
    %4360 = vmatprep.subr.mxu0 0.0
    %4361 = vmatpush1.msra.mxu0 0.0
    %4362 = vmatprep.subr.mxu0 0.0
    %4363 = vmatpush1.msra.mxu0 0.0
    %4364 = vmatprep.subr.mxu0 0.0
    %v4365 = vand.u32 %v44, 4294901760
    %4366 = vmatpush1.msra.mxu0 %v4365
    %4367 = vmatprep.subr.mxu0 0.0
    %v4368 = vand.u32 %v43, 4294901760
    %4369 = vmatpush1.msra.mxu0 %v4368
    %4370 = vmatprep.subr.mxu0 0.0
    %v4371 = vand.u32 %v42, 4294901760
    %4372 = vmatpush1.msra.mxu0 %v4371
    %4373 = vmatprep.subr.mxu0 0.0
    %4374 = vmatpush2.msra.mxu0 0.0
    %4375 = vmatprep.subr.mxu0 0.0
    %4376 = vmatpush2.msra.mxu0 0.0
    %4377 = vmatprep.subr.mxu0 0.0
    %4378 = vmatpush2.msra.mxu0 0.0
    %4379 = vmatprep.subr.mxu0 0.0
    %4380 = vmatpush2.msra.mxu0 0.0
    %4381 = vmatprep.subr.mxu0 0.0
    %4382 = vmatpush2.msra.mxu0 0.0
    %4383 = vmatprep.subr.mxu0 0.0
    %4384 = vmatpush2.msra.mxu0 0.0
    %4385 = vmatprep.subr.mxu0 0.0
    %4386 = vmatpush2.msra.mxu0 0.0
    %4387 = vmatprep.subr.mxu0 0.0
    %4388 = vmatpush2.msra.mxu0 0.0
    %4389 = vmatprep.subr.mxu0 0.0
    %4390 = vmatpush2.msra.mxu0 0.0
    %4391 = vmatprep.subr.mxu0 0.0
    %4392 = vmatpush2.msra.mxu0 0.0
    %4393 = vmatprep.subr.mxu0 0.0
    %4394 = vmatpush2.msra.mxu0 0.0
    %4395 = vmatprep.subr.mxu0 0.0
    %4396 = vmatpush2.msra.mxu0 0.0
    %4397 = vmatprep.subr.mxu0 0.0
    %4398 = vmatpush2.msra.mxu0 0.0
    %4399 = vmatprep.subr.mxu0 0.0
    %4400 = vmatpush2.msra.mxu0 0.0
    %4401 = vmatprep.subr.mxu0 0.0
    %4402 = vmatpush2.msra.mxu0 0.0
    %4403 = vmatprep.subr.mxu0 0.0
    %4404 = vmatpush2.msra.mxu0 0.0
    %4405 = vmatprep.mubr.f32.mxu0 0.0
    %v4406 = vand.u32 %v3938, 4294901760
    %4407 = vmatmul.mubr.f32.gmra.mxu0 %v4406
    %v4408 = vpop.f32.mrf.mxu0
    %v4409 = vadd.f32 %v4335, %v4408
    %v4410 = vpop.f32.mrf.mxu0
    %4411 = vdwg.mxu0
    %v4412 = vxor.u32 %v4409, 2147483648
    %v4413 = vmul.f32 %v4412, 1.442695
    %v4414 = vpow.pop %v4413
    %v4415 = vadd.f32 %v4414, 1.0
    %v4416 = vrcp.pop %v4415
    %v4417 = vmul.f32 1.0, %v4416
    %v4418 = vtanh.pop %v4409
    %v4419 = vmul.f32 %v4417, %v3883
    %4421 = vrot.lane.b32.xlu0 %v4418, 96
    %v4422 = vpop.permute.xlu0 %4421
    %v4424 = vmul.f32 %v4417, %v4422
    %4426 = vrot.lane.b32.xlu0 %v4424, 16
    %v4427 = vpop.permute.xlu0 %4426
    %v4429 = vadd.f32 %v4419, %v4427
    %v4430 = vtanh.pop %v4429
    %4432 = vrot.lane.b32.xlu0 %v4430, 32
    %v4433 = vpop.permute.xlu0 %4432
    %v4435 = vmul.f32 %v4417, %v4433
    %s4436 = scalar_lea.vmem %s7, 14
    %4437 = vst.msk [vmem:[%s4436] sm:$0x3] %vm80, %v3932
    %4439 = vrot.lane.b32.xlu0 %v4435, 80
    %v4440 = vpop.permute.xlu0 %4439
    %s4442 = scalar_lea.vmem [#allocation5], 14
    %4443 = vst.msk [vmem:[%s4442] sm:$0x3] %vm63, %v4440
    %v4444 = vmul.f32 %v4435, %v617
    %v4445 = vmul.f32 %v4429, %v621
    %4447 = vrot.lane.b32.xlu0 %v4445, 32
    %v4448 = vpop.permute.xlu0 %4447
    %v4450 = vadd.f32 %v4444, %v4448
    %4452 = vrot.lane.b32.xlu0 %v4450, 80
    %v4453 = vpop.permute.xlu0 %4452
    %v4455 = vsel %vm63, %v4453, 0.0
    %4456 = vadd.xlane.f32.xlu0 %v4455
    %v4457 = vpop.xlane.xlu0 %4456
    %v4458 = vadd.f32 %v4457, %v71
    %4460 = vset.pattern.permute.xlu0 0
    %4461 = vperm.xlu0 %4460, %v4458
    %v4462 = vpop.permute.xlu0 %4461
    %v4464 = vadd.f32 %v4462, %v38
    %v4465 = vsel %vm80, %v4464, -inf
    %4466 = vmax.xlane.f32.xlu0 %v4465
    %v4467 = vpop.xlane.xlu0 %4466
    %v4468 = vsub.f32 %v4464, %v4467
    %v4469 = vmul.f32 %v4468, 1.442695
    %v4470 = vpow.pop %v4469
    %v4471 = vsel %vm80, %v4470, 0.0
    %4472 = vadd.xlane.f32.xlu0 %v4471
    %v4473 = vpop.xlane.xlu0 %4472
    %v4474 = vrcp.pop %v4473
    %v4475 = vmul.f32 %v4470, %v4474
    %s4476 = scalar_lea.vmem %s0, 16
    %v4477 = vld [vmem:[%s4476] sm:$0x3]
    %v4478 = vmul.f32 %v4475, %v4477
    %4479 = vrot.lane.b32.xlu0 %v4435, 88
    %v4480 = vpop.permute.xlu0 %4479
    %v4482 = vsel %vm98, %v4478, %v4480
    %v4484 = vsel %vm106, %v4482, 0
    %4486 = vmatprep.subr.mxu0 0.0
    %4487 = vmatpush1.msra.mxu0 0.0
    %4488 = vmatprep.subr.mxu0 0.0
    %4489 = vmatpush1.msra.mxu0 0.0
    %4490 = vmatprep.subr.mxu0 0.0
    %4491 = vmatpush1.msra.mxu0 0.0
    %4492 = vmatprep.subr.mxu0 0.0
    %4493 = vmatpush1.msra.mxu0 0.0
    %4494 = vmatprep.subr.mxu0 0.0
    %4495 = vmatpush1.msra.mxu0 0.0
    %4496 = vmatprep.subr.mxu0 0.0
    %4497 = vmatpush1.msra.mxu0 0.0
    %4498 = vmatprep.subr.mxu0 0.0
    %4499 = vmatpush1.msra.mxu0 0.0
    %4500 = vmatprep.subr.mxu0 0.0
    %4501 = vmatpush1.msra.mxu0 0.0
    %4502 = vmatprep.subr.mxu0 0.0
    %4503 = vmatpush1.msra.mxu0 0.0
    %4504 = vmatprep.subr.mxu0 0.0
    %4505 = vmatpush1.msra.mxu0 0.0
    %4506 = vmatprep.subr.mxu0 0.0
    %4507 = vmatpush1.msra.mxu0 0.0
    %4508 = vmatprep.subr.mxu0 0.0
    %4509 = vmatpush1.msra.mxu0 0.0
    %4510 = vmatprep.subr.mxu0 0.0
    %4511 = vmatpush1.msra.mxu0 0.0
    %4512 = vmatprep.subr.mxu0 0.0
    %v4513 = vand.u32 %v44, 4294901760
    %4514 = vmatpush1.msra.mxu0 %v4513
    %4515 = vmatprep.subr.mxu0 0.0
    %v4516 = vand.u32 %v43, 4294901760
    %4517 = vmatpush1.msra.mxu0 %v4516
    %4518 = vmatprep.subr.mxu0 0.0
    %v4519 = vand.u32 %v42, 4294901760
    %4520 = vmatpush1.msra.mxu0 %v4519
    %4521 = vmatprep.subr.mxu0 0.0
    %4522 = vmatpush2.msra.mxu0 0.0
    %4523 = vmatprep.subr.mxu0 0.0
    %4524 = vmatpush2.msra.mxu0 0.0
    %4525 = vmatprep.subr.mxu0 0.0
    %4526 = vmatpush2.msra.mxu0 0.0
    %4527 = vmatprep.subr.mxu0 0.0
    %4528 = vmatpush2.msra.mxu0 0.0
    %4529 = vmatprep.subr.mxu0 0.0
    %4530 = vmatpush2.msra.mxu0 0.0
    %4531 = vmatprep.subr.mxu0 0.0
    %4532 = vmatpush2.msra.mxu0 0.0
    %4533 = vmatprep.subr.mxu0 0.0
    %4534 = vmatpush2.msra.mxu0 0.0
    %4535 = vmatprep.subr.mxu0 0.0
    %4536 = vmatpush2.msra.mxu0 0.0
    %4537 = vmatprep.subr.mxu0 0.0
    %4538 = vmatpush2.msra.mxu0 0.0
    %4539 = vmatprep.subr.mxu0 0.0
    %4540 = vmatpush2.msra.mxu0 0.0
    %4541 = vmatprep.subr.mxu0 0.0
    %4542 = vmatpush2.msra.mxu0 0.0
    %4543 = vmatprep.subr.mxu0 0.0
    %4544 = vmatpush2.msra.mxu0 0.0
    %4545 = vmatprep.subr.mxu0 0.0
    %4546 = vmatpush2.msra.mxu0 0.0
    %4547 = vmatprep.subr.mxu0 0.0
    %4548 = vmatpush2.msra.mxu0 0.0
    %4549 = vmatprep.subr.mxu0 0.0
    %4550 = vmatpush2.msra.mxu0 0.0
    %4551 = vmatprep.subr.mxu0 0.0
    %4552 = vmatpush2.msra.mxu0 0.0
    %4553 = vmatprep.mubr.f32.mxu0 0.0
    %v4554 = vand.u32 %v4484, 4294901760
    %v4555 = vsub.f32 %v4484, %v4554
    %v4556 = vand.u32 %v4555, 4294901760
    %v4557 = vsub.f32 %v4555, %v4556
    %v4558 = vand.u32 %v4557, 4294901760
    %4559 = vmatmul.mubr.f32.gmra.mxu0 %v4558
    %v4560 = vpop.f32.mrf.mxu0
    %v4561 = vadd.f32 %v104, %v4560
    %v4562 = vpop.f32.mrf.mxu0
    %4563 = vdwg.mxu0
    %4564 = vmatprep.subr.mxu0 0.0
    %4565 = vmatpush1.msra.mxu0 0.0
    %4566 = vmatprep.subr.mxu0 0.0
    %4567 = vmatpush1.msra.mxu0 0.0
    %4568 = vmatprep.subr.mxu0 0.0
    %4569 = vmatpush1.msra.mxu0 0.0
    %4570 = vmatprep.subr.mxu0 0.0
    %4571 = vmatpush1.msra.mxu0 0.0
    %4572 = vmatprep.subr.mxu0 0.0
    %4573 = vmatpush1.msra.mxu0 0.0
    %4574 = vmatprep.subr.mxu0 0.0
    %4575 = vmatpush1.msra.mxu0 0.0
    %4576 = vmatprep.subr.mxu0 0.0
    %4577 = vmatpush1.msra.mxu0 0.0
    %4578 = vmatprep.subr.mxu0 0.0
    %4579 = vmatpush1.msra.mxu0 0.0
    %4580 = vmatprep.subr.mxu0 0.0
    %4581 = vmatpush1.msra.mxu0 0.0
    %4582 = vmatprep.subr.mxu0 0.0
    %4583 = vmatpush1.msra.mxu0 0.0
    %4584 = vmatprep.subr.mxu0 0.0
    %4585 = vmatpush1.msra.mxu0 0.0
    %4586 = vmatprep.subr.mxu0 0.0
    %4587 = vmatpush1.msra.mxu0 0.0
    %4588 = vmatprep.subr.mxu0 0.0
    %4589 = vmatpush1.msra.mxu0 0.0
    %4590 = vmatprep.subr.mxu0 0.0
    %v4591 = vand.u32 %v44, 4294901760
    %v4592 = vsub.f32 %v44, %v4591
    %v4593 = vand.u32 %v4592, 4294901760
    %v4594 = vsub.f32 %v4592, %v4593
    %v4595 = vand.u32 %v4594, 4294901760
    %4596 = vmatpush1.msra.mxu0 %v4595
    %4597 = vmatprep.subr.mxu0 0.0
    %v4598 = vand.u32 %v43, 4294901760
    %v4599 = vsub.f32 %v43, %v4598
    %v4600 = vand.u32 %v4599, 4294901760
    %v4601 = vsub.f32 %v4599, %v4600
    %v4602 = vand.u32 %v4601, 4294901760
    %4603 = vmatpush1.msra.mxu0 %v4602
    %4604 = vmatprep.subr.mxu0 0.0
    %v4605 = vand.u32 %v42, 4294901760
    %v4606 = vsub.f32 %v42, %v4605
    %v4607 = vand.u32 %v4606, 4294901760
    %v4608 = vsub.f32 %v4606, %v4607
    %v4609 = vand.u32 %v4608, 4294901760
    %4610 = vmatpush1.msra.mxu0 %v4609
    %4611 = vmatprep.subr.mxu0 0.0
    %4612 = vmatpush2.msra.mxu0 0.0
    %4613 = vmatprep.subr.mxu0 0.0
    %4614 = vmatpush2.msra.mxu0 0.0
    %4615 = vmatprep.subr.mxu0 0.0
    %4616 = vmatpush2.msra.mxu0 0.0
    %4617 = vmatprep.subr.mxu0 0.0
    %4618 = vmatpush2.msra.mxu0 0.0
    %4619 = vmatprep.subr.mxu0 0.0
    %4620 = vmatpush2.msra.mxu0 0.0
    %4621 = vmatprep.subr.mxu0 0.0
    %4622 = vmatpush2.msra.mxu0 0.0
    %4623 = vmatprep.subr.mxu0 0.0
    %4624 = vmatpush2.msra.mxu0 0.0
    %4625 = vmatprep.subr.mxu0 0.0
    %4626 = vmatpush2.msra.mxu0 0.0
    %4627 = vmatprep.subr.mxu0 0.0
    %4628 = vmatpush2.msra.mxu0 0.0
    %4629 = vmatprep.subr.mxu0 0.0
    %4630 = vmatpush2.msra.mxu0 0.0
    %4631 = vmatprep.subr.mxu0 0.0
    %4632 = vmatpush2.msra.mxu0 0.0
    %4633 = vmatprep.subr.mxu0 0.0
    %4634 = vmatpush2.msra.mxu0 0.0
    %4635 = vmatprep.subr.mxu0 0.0
    %4636 = vmatpush2.msra.mxu0 0.0
    %4637 = vmatprep.subr.mxu0 0.0
    %4638 = vmatpush2.msra.mxu0 0.0
    %4639 = vmatprep.subr.mxu0 0.0
    %4640 = vmatpush2.msra.mxu0 0.0
    %4641 = vmatprep.subr.mxu0 0.0
    %4642 = vmatpush2.msra.mxu0 0.0
    %4643 = vmatprep.mubr.f32.mxu0 0.0
    %v4644 = vand.u32 %v4484, 4294901760
    %4645 = vmatmul.mubr.f32.gmra.mxu0 %v4644
    %v4646 = vpop.f32.mrf.mxu0
    %v4647 = vadd.f32 %v4561, %v4646
    %v4648 = vpop.f32.mrf.mxu0
    %4649 = vdwg.mxu0
    %4650 = vmatprep.subr.mxu0 0.0
    %4651 = vmatpush1.msra.mxu0 0.0
    %4652 = vmatprep.subr.mxu0 0.0
    %4653 = vmatpush1.msra.mxu0 0.0
    %4654 = vmatprep.subr.mxu0 0.0
    %4655 = vmatpush1.msra.mxu0 0.0
    %4656 = vmatprep.subr.mxu0 0.0
    %4657 = vmatpush1.msra.mxu0 0.0
    %4658 = vmatprep.subr.mxu0 0.0
    %4659 = vmatpush1.msra.mxu0 0.0
    %4660 = vmatprep.subr.mxu0 0.0
    %4661 = vmatpush1.msra.mxu0 0.0
    %4662 = vmatprep.subr.mxu0 0.0
    %4663 = vmatpush1.msra.mxu0 0.0
    %4664 = vmatprep.subr.mxu0 0.0
    %4665 = vmatpush1.msra.mxu0 0.0
    %4666 = vmatprep.subr.mxu0 0.0
    %4667 = vmatpush1.msra.mxu0 0.0
    %4668 = vmatprep.subr.mxu0 0.0
    %4669 = vmatpush1.msra.mxu0 0.0
    %4670 = vmatprep.subr.mxu0 0.0
    %4671 = vmatpush1.msra.mxu0 0.0
    %4672 = vmatprep.subr.mxu0 0.0
    %4673 = vmatpush1.msra.mxu0 0.0
    %4674 = vmatprep.subr.mxu0 0.0
    %4675 = vmatpush1.msra.mxu0 0.0
    %4676 = vmatprep.subr.mxu0 0.0
    %v4677 = vand.u32 %v44, 4294901760
    %v4678 = vsub.f32 %v44, %v4677
    %4679 = vmatpush1.msra.mxu0 %v4678
    %4680 = vmatprep.subr.mxu0 0.0
    %v4681 = vand.u32 %v43, 4294901760
    %v4682 = vsub.f32 %v43, %v4681
    %4683 = vmatpush1.msra.mxu0 %v4682
    %4684 = vmatprep.subr.mxu0 0.0
    %v4685 = vand.u32 %v42, 4294901760
    %v4686 = vsub.f32 %v42, %v4685
    %4687 = vmatpush1.msra.mxu0 %v4686
    %4688 = vmatprep.subr.mxu0 0.0
    %4689 = vmatpush2.msra.mxu0 0.0
    %4690 = vmatprep.subr.mxu0 0.0
    %4691 = vmatpush2.msra.mxu0 0.0
    %4692 = vmatprep.subr.mxu0 0.0
    %4693 = vmatpush2.msra.mxu0 0.0
    %4694 = vmatprep.subr.mxu0 0.0
    %4695 = vmatpush2.msra.mxu0 0.0
    %4696 = vmatprep.subr.mxu0 0.0
    %4697 = vmatpush2.msra.mxu0 0.0
    %4698 = vmatprep.subr.mxu0 0.0
    %4699 = vmatpush2.msra.mxu0 0.0
    %4700 = vmatprep.subr.mxu0 0.0
    %4701 = vmatpush2.msra.mxu0 0.0
    %4702 = vmatprep.subr.mxu0 0.0
    %4703 = vmatpush2.msra.mxu0 0.0
    %4704 = vmatprep.subr.mxu0 0.0
    %4705 = vmatpush2.msra.mxu0 0.0
    %4706 = vmatprep.subr.mxu0 0.0
    %4707 = vmatpush2.msra.mxu0 0.0
    %4708 = vmatprep.subr.mxu0 0.0
    %4709 = vmatpush2.msra.mxu0 0.0
    %4710 = vmatprep.subr.mxu0 0.0
    %4711 = vmatpush2.msra.mxu0 0.0
    %4712 = vmatprep.subr.mxu0 0.0
    %4713 = vmatpush2.msra.mxu0 0.0
    %4714 = vmatprep.subr.mxu0 0.0
    %4715 = vmatpush2.msra.mxu0 0.0
    %4716 = vmatprep.subr.mxu0 0.0
    %4717 = vmatpush2.msra.mxu0 0.0
    %4718 = vmatprep.subr.mxu0 0.0
    %4719 = vmatpush2.msra.mxu0 0.0
    %4720 = vmatprep.mubr.f32.mxu0 0.0
    %v4721 = vand.u32 %v4484, 4294901760
    %v4722 = vsub.f32 %v4484, %v4721
    %4723 = vmatmul.mubr.f32.gmra.mxu0 %v4722
    %v4724 = vpop.f32.mrf.mxu0
    %v4725 = vadd.f32 %v4647, %v4724
    %v4726 = vpop.f32.mrf.mxu0
    %4727 = vdwg.mxu0
    %4728 = vmatprep.subr.mxu0 0.0
    %4729 = vmatpush1.msra.mxu0 0.0
    %4730 = vmatprep.subr.mxu0 0.0
    %4731 = vmatpush1.msra.mxu0 0.0
    %4732 = vmatprep.subr.mxu0 0.0
    %4733 = vmatpush1.msra.mxu0 0.0
    %4734 = vmatprep.subr.mxu0 0.0
    %4735 = vmatpush1.msra.mxu0 0.0
    %4736 = vmatprep.subr.mxu0 0.0
    %4737 = vmatpush1.msra.mxu0 0.0
    %4738 = vmatprep.subr.mxu0 0.0
    %4739 = vmatpush1.msra.mxu0 0.0
    %4740 = vmatprep.subr.mxu0 0.0
    %4741 = vmatpush1.msra.mxu0 0.0
    %4742 = vmatprep.subr.mxu0 0.0
    %4743 = vmatpush1.msra.mxu0 0.0
    %4744 = vmatprep.subr.mxu0 0.0
    %4745 = vmatpush1.msra.mxu0 0.0
    %4746 = vmatprep.subr.mxu0 0.0
    %4747 = vmatpush1.msra.mxu0 0.0
    %4748 = vmatprep.subr.mxu0 0.0
    %4749 = vmatpush1.msra.mxu0 0.0
    %4750 = vmatprep.subr.mxu0 0.0
    %4751 = vmatpush1.msra.mxu0 0.0
    %4752 = vmatprep.subr.mxu0 0.0
    %4753 = vmatpush1.msra.mxu0 0.0
    %4754 = vmatprep.subr.mxu0 0.0
    %v4755 = vand.u32 %v44, 4294901760
    %4756 = vmatpush1.msra.mxu0 %v4755
    %4757 = vmatprep.subr.mxu0 0.0
    %v4758 = vand.u32 %v43, 4294901760
    %4759 = vmatpush1.msra.mxu0 %v4758
    %4760 = vmatprep.subr.mxu0 0.0
    %v4761 = vand.u32 %v42, 4294901760
    %4762 = vmatpush1.msra.mxu0 %v4761
    %4763 = vmatprep.subr.mxu0 0.0
    %4764 = vmatpush2.msra.mxu0 0.0
    %4765 = vmatprep.subr.mxu0 0.0
    %4766 = vmatpush2.msra.mxu0 0.0
    %4767 = vmatprep.subr.mxu0 0.0
    %4768 = vmatpush2.msra.mxu0 0.0
    %4769 = vmatprep.subr.mxu0 0.0
    %4770 = vmatpush2.msra.mxu0 0.0
    %4771 = vmatprep.subr.mxu0 0.0
    %4772 = vmatpush2.msra.mxu0 0.0
    %4773 = vmatprep.subr.mxu0 0.0
    %4774 = vmatpush2.msra.mxu0 0.0
    %4775 = vmatprep.subr.mxu0 0.0
    %4776 = vmatpush2.msra.mxu0 0.0
    %4777 = vmatprep.subr.mxu0 0.0
    %4778 = vmatpush2.msra.mxu0 0.0
    %4779 = vmatprep.subr.mxu0 0.0
    %4780 = vmatpush2.msra.mxu0 0.0
    %4781 = vmatprep.subr.mxu0 0.0
    %4782 = vmatpush2.msra.mxu0 0.0
    %4783 = vmatprep.subr.mxu0 0.0
    %4784 = vmatpush2.msra.mxu0 0.0
    %4785 = vmatprep.subr.mxu0 0.0
    %4786 = vmatpush2.msra.mxu0 0.0
    %4787 = vmatprep.subr.mxu0 0.0
    %4788 = vmatpush2.msra.mxu0 0.0
    %4789 = vmatprep.subr.mxu0 0.0
    %4790 = vmatpush2.msra.mxu0 0.0
    %4791 = vmatprep.subr.mxu0 0.0
    %4792 = vmatpush2.msra.mxu0 0.0
    %4793 = vmatprep.subr.mxu0 0.0
    %4794 = vmatpush2.msra.mxu0 0.0
    %4795 = vmatprep.mubr.f32.mxu0 0.0
    %v4796 = vand.u32 %v4484, 4294901760
    %v4797 = vsub.f32 %v4484, %v4796
    %v4798 = vand.u32 %v4797, 4294901760
    %4799 = vmatmul.mubr.f32.gmra.mxu0 %v4798
    %v4800 = vpop.f32.mrf.mxu0
    %v4801 = vadd.f32 %v4725, %v4800
    %v4802 = vpop.f32.mrf.mxu0
    %4803 = vdwg.mxu0
    %4804 = vmatprep.subr.mxu0 0.0
    %4805 = vmatpush1.msra.mxu0 0.0
    %4806 = vmatprep.subr.mxu0 0.0
    %4807 = vmatpush1.msra.mxu0 0.0
    %4808 = vmatprep.subr.mxu0 0.0
    %4809 = vmatpush1.msra.mxu0 0.0
    %4810 = vmatprep.subr.mxu0 0.0
    %4811 = vmatpush1.msra.mxu0 0.0
    %4812 = vmatprep.subr.mxu0 0.0
    %4813 = vmatpush1.msra.mxu0 0.0
    %4814 = vmatprep.subr.mxu0 0.0
    %4815 = vmatpush1.msra.mxu0 0.0
    %4816 = vmatprep.subr.mxu0 0.0
    %4817 = vmatpush1.msra.mxu0 0.0
    %4818 = vmatprep.subr.mxu0 0.0
    %4819 = vmatpush1.msra.mxu0 0.0
    %4820 = vmatprep.subr.mxu0 0.0
    %4821 = vmatpush1.msra.mxu0 0.0
    %4822 = vmatprep.subr.mxu0 0.0
    %4823 = vmatpush1.msra.mxu0 0.0
    %4824 = vmatprep.subr.mxu0 0.0
    %4825 = vmatpush1.msra.mxu0 0.0
    %4826 = vmatprep.subr.mxu0 0.0
    %4827 = vmatpush1.msra.mxu0 0.0
    %4828 = vmatprep.subr.mxu0 0.0
    %4829 = vmatpush1.msra.mxu0 0.0
    %4830 = vmatprep.subr.mxu0 0.0
    %v4831 = vand.u32 %v44, 4294901760
    %v4832 = vsub.f32 %v44, %v4831
    %v4833 = vand.u32 %v4832, 4294901760
    %4834 = vmatpush1.msra.mxu0 %v4833
    %4835 = vmatprep.subr.mxu0 0.0
    %v4836 = vand.u32 %v43, 4294901760
    %v4837 = vsub.f32 %v43, %v4836
    %v4838 = vand.u32 %v4837, 4294901760
    %4839 = vmatpush1.msra.mxu0 %v4838
    %4840 = vmatprep.subr.mxu0 0.0
    %v4841 = vand.u32 %v42, 4294901760
    %v4842 = vsub.f32 %v42, %v4841
    %v4843 = vand.u32 %v4842, 4294901760
    %4844 = vmatpush1.msra.mxu0 %v4843
    %4845 = vmatprep.subr.mxu0 0.0
    %4846 = vmatpush2.msra.mxu0 0.0
    %4847 = vmatprep.subr.mxu0 0.0
    %4848 = vmatpush2.msra.mxu0 0.0
    %4849 = vmatprep.subr.mxu0 0.0
    %4850 = vmatpush2.msra.mxu0 0.0
    %4851 = vmatprep.subr.mxu0 0.0
    %4852 = vmatpush2.msra.mxu0 0.0
    %4853 = vmatprep.subr.mxu0 0.0
    %4854 = vmatpush2.msra.mxu0 0.0
    %4855 = vmatprep.subr.mxu0 0.0
    %4856 = vmatpush2.msra.mxu0 0.0
    %4857 = vmatprep.subr.mxu0 0.0
    %4858 = vmatpush2.msra.mxu0 0.0
    %4859 = vmatprep.subr.mxu0 0.0
    %4860 = vmatpush2.msra.mxu0 0.0
    %4861 = vmatprep.subr.mxu0 0.0
    %4862 = vmatpush2.msra.mxu0 0.0
    %4863 = vmatprep.subr.mxu0 0.0
    %4864 = vmatpush2.msra.mxu0 0.0
    %4865 = vmatprep.subr.mxu0 0.0
    %4866 = vmatpush2.msra.mxu0 0.0
    %4867 = vmatprep.subr.mxu0 0.0
    %4868 = vmatpush2.msra.mxu0 0.0
    %4869 = vmatprep.subr.mxu0 0.0
    %4870 = vmatpush2.msra.mxu0 0.0
    %4871 = vmatprep.subr.mxu0 0.0
    %4872 = vmatpush2.msra.mxu0 0.0
    %4873 = vmatprep.subr.mxu0 0.0
    %4874 = vmatpush2.msra.mxu0 0.0
    %4875 = vmatprep.subr.mxu0 0.0
    %4876 = vmatpush2.msra.mxu0 0.0
    %4877 = vmatprep.mubr.f32.mxu0 0.0
    %v4878 = vand.u32 %v4484, 4294901760
    %4879 = vmatmul.mubr.f32.gmra.mxu0 %v4878
    %v4880 = vpop.f32.mrf.mxu0
    %v4881 = vadd.f32 %v4801, %v4880
    %v4882 = vpop.f32.mrf.mxu0
    %4883 = vdwg.mxu0
    %4884 = vmatprep.subr.mxu0 0.0
    %4885 = vmatpush1.msra.mxu0 0.0
    %4886 = vmatprep.subr.mxu0 0.0
    %4887 = vmatpush1.msra.mxu0 0.0
    %4888 = vmatprep.subr.mxu0 0.0
    %4889 = vmatpush1.msra.mxu0 0.0
    %4890 = vmatprep.subr.mxu0 0.0
    %4891 = vmatpush1.msra.mxu0 0.0
    %4892 = vmatprep.subr.mxu0 0.0
    %4893 = vmatpush1.msra.mxu0 0.0
    %4894 = vmatprep.subr.mxu0 0.0
    %4895 = vmatpush1.msra.mxu0 0.0
    %4896 = vmatprep.subr.mxu0 0.0
    %4897 = vmatpush1.msra.mxu0 0.0
    %4898 = vmatprep.subr.mxu0 0.0
    %4899 = vmatpush1.msra.mxu0 0.0
    %4900 = vmatprep.subr.mxu0 0.0
    %4901 = vmatpush1.msra.mxu0 0.0
    %4902 = vmatprep.subr.mxu0 0.0
    %4903 = vmatpush1.msra.mxu0 0.0
    %4904 = vmatprep.subr.mxu0 0.0
    %4905 = vmatpush1.msra.mxu0 0.0
    %4906 = vmatprep.subr.mxu0 0.0
    %4907 = vmatpush1.msra.mxu0 0.0
    %4908 = vmatprep.subr.mxu0 0.0
    %4909 = vmatpush1.msra.mxu0 0.0
    %4910 = vmatprep.subr.mxu0 0.0
    %v4911 = vand.u32 %v44, 4294901760
    %4912 = vmatpush1.msra.mxu0 %v4911
    %4913 = vmatprep.subr.mxu0 0.0
    %v4914 = vand.u32 %v43, 4294901760
    %4915 = vmatpush1.msra.mxu0 %v4914
    %4916 = vmatprep.subr.mxu0 0.0
    %v4917 = vand.u32 %v42, 4294901760
    %4918 = vmatpush1.msra.mxu0 %v4917
    %4919 = vmatprep.subr.mxu0 0.0
    %4920 = vmatpush2.msra.mxu0 0.0
    %4921 = vmatprep.subr.mxu0 0.0
    %4922 = vmatpush2.msra.mxu0 0.0
    %4923 = vmatprep.subr.mxu0 0.0
    %4924 = vmatpush2.msra.mxu0 0.0
    %4925 = vmatprep.subr.mxu0 0.0
    %4926 = vmatpush2.msra.mxu0 0.0
    %4927 = vmatprep.subr.mxu0 0.0
    %4928 = vmatpush2.msra.mxu0 0.0
    %4929 = vmatprep.subr.mxu0 0.0
    %4930 = vmatpush2.msra.mxu0 0.0
    %4931 = vmatprep.subr.mxu0 0.0
    %4932 = vmatpush2.msra.mxu0 0.0
    %4933 = vmatprep.subr.mxu0 0.0
    %4934 = vmatpush2.msra.mxu0 0.0
    %4935 = vmatprep.subr.mxu0 0.0
    %4936 = vmatpush2.msra.mxu0 0.0
    %4937 = vmatprep.subr.mxu0 0.0
    %4938 = vmatpush2.msra.mxu0 0.0
    %4939 = vmatprep.subr.mxu0 0.0
    %4940 = vmatpush2.msra.mxu0 0.0
    %4941 = vmatprep.subr.mxu0 0.0
    %4942 = vmatpush2.msra.mxu0 0.0
    %4943 = vmatprep.subr.mxu0 0.0
    %4944 = vmatpush2.msra.mxu0 0.0
    %4945 = vmatprep.subr.mxu0 0.0
    %4946 = vmatpush2.msra.mxu0 0.0
    %4947 = vmatprep.subr.mxu0 0.0
    %4948 = vmatpush2.msra.mxu0 0.0
    %4949 = vmatprep.subr.mxu0 0.0
    %4950 = vmatpush2.msra.mxu0 0.0
    %4951 = vmatprep.mubr.f32.mxu0 0.0
    %v4952 = vand.u32 %v4484, 4294901760
    %4953 = vmatmul.mubr.f32.gmra.mxu0 %v4952
    %v4954 = vpop.f32.mrf.mxu0
    %v4955 = vadd.f32 %v4881, %v4954
    %v4956 = vpop.f32.mrf.mxu0
    %4957 = vdwg.mxu0
    %v4958 = vxor.u32 %v4955, 2147483648
    %v4959 = vmul.f32 %v4958, 1.442695
    %v4960 = vpow.pop %v4959
    %v4961 = vadd.f32 %v4960, 1.0
    %v4962 = vrcp.pop %v4961
    %v4963 = vmul.f32 1.0, %v4962
    %v4964 = vtanh.pop %v4955
    %v4965 = vmul.f32 %v4963, %v4429
    %4967 = vrot.lane.b32.xlu0 %v4964, 96
    %v4968 = vpop.permute.xlu0 %4967
    %v4970 = vmul.f32 %v4963, %v4968
    %4972 = vrot.lane.b32.xlu0 %v4970, 16
    %v4973 = vpop.permute.xlu0 %4972
    %v4975 = vadd.f32 %v4965, %v4973
    %v4976 = vtanh.pop %v4975
    %4978 = vrot.lane.b32.xlu0 %v4976, 32
    %v4979 = vpop.permute.xlu0 %4978
    %v4981 = vmul.f32 %v4963, %v4979
    %s4982 = scalar_lea.vmem %s7, 16
    %4983 = vst.msk [vmem:[%s4982] sm:$0x3] %vm80, %v4478
    %4985 = vrot.lane.b32.xlu0 %v4981, 80
    %v4986 = vpop.permute.xlu0 %4985
    %s4988 = scalar_lea.vmem [#allocation5], 16
    %4989 = vst.msk [vmem:[%s4988] sm:$0x3] %vm63, %v4986
    %v4990 = vmul.f32 %v4981, %v617
    %v4991 = vmul.f32 %v4975, %v621
    %4993 = vrot.lane.b32.xlu0 %v4991, 32
    %v4994 = vpop.permute.xlu0 %4993
    %v4996 = vadd.f32 %v4990, %v4994
    %4998 = vrot.lane.b32.xlu0 %v4996, 80
    %v4999 = vpop.permute.xlu0 %4998
    %v5001 = vsel %vm63, %v4999, 0.0
    %5002 = vadd.xlane.f32.xlu0 %v5001
    %v5003 = vpop.xlane.xlu0 %5002
    %v5004 = vadd.f32 %v5003, %v71
    %5006 = vset.pattern.permute.xlu0 0
    %5007 = vperm.xlu0 %5006, %v5004
    %v5008 = vpop.permute.xlu0 %5007
    %v5010 = vadd.f32 %v5008, %v38
    %v5011 = vsel %vm80, %v5010, -inf
    %5012 = vmax.xlane.f32.xlu0 %v5011
    %v5013 = vpop.xlane.xlu0 %5012
    %v5014 = vsub.f32 %v5010, %v5013
    %v5015 = vmul.f32 %v5014, 1.442695
    %v5016 = vpow.pop %v5015
    %v5017 = vsel %vm80, %v5016, 0.0
    %5018 = vadd.xlane.f32.xlu0 %v5017
    %v5019 = vpop.xlane.xlu0 %5018
    %v5020 = vrcp.pop %v5019
    %v5021 = vmul.f32 %v5016, %v5020
    %s5022 = scalar_lea.vmem %s0, 18
    %v5023 = vld [vmem:[%s5022] sm:$0x3]
    %v5024 = vmul.f32 %v5021, %v5023
    %5025 = vrot.lane.b32.xlu0 %v4981, 88
    %v5026 = vpop.permute.xlu0 %5025
    %v5028 = vsel %vm98, %v5024, %v5026
    %v5030 = vsel %vm106, %v5028, 0
    %5032 = vmatprep.subr.mxu0 0.0
    %5033 = vmatpush1.msra.mxu0 0.0
    %5034 = vmatprep.subr.mxu0 0.0
    %5035 = vmatpush1.msra.mxu0 0.0
    %5036 = vmatprep.subr.mxu0 0.0
    %5037 = vmatpush1.msra.mxu0 0.0
    %5038 = vmatprep.subr.mxu0 0.0
    %5039 = vmatpush1.msra.mxu0 0.0
    %5040 = vmatprep.subr.mxu0 0.0
    %5041 = vmatpush1.msra.mxu0 0.0
    %5042 = vmatprep.subr.mxu0 0.0
    %5043 = vmatpush1.msra.mxu0 0.0
    %5044 = vmatprep.subr.mxu0 0.0
    %5045 = vmatpush1.msra.mxu0 0.0
    %5046 = vmatprep.subr.mxu0 0.0
    %5047 = vmatpush1.msra.mxu0 0.0
    %5048 = vmatprep.subr.mxu0 0.0
    %5049 = vmatpush1.msra.mxu0 0.0
    %5050 = vmatprep.subr.mxu0 0.0
    %5051 = vmatpush1.msra.mxu0 0.0
    %5052 = vmatprep.subr.mxu0 0.0
    %5053 = vmatpush1.msra.mxu0 0.0
    %5054 = vmatprep.subr.mxu0 0.0
    %5055 = vmatpush1.msra.mxu0 0.0
    %5056 = vmatprep.subr.mxu0 0.0
    %5057 = vmatpush1.msra.mxu0 0.0
    %5058 = vmatprep.subr.mxu0 0.0
    %v5059 = vand.u32 %v44, 4294901760
    %5060 = vmatpush1.msra.mxu0 %v5059
    %5061 = vmatprep.subr.mxu0 0.0
    %v5062 = vand.u32 %v43, 4294901760
    %5063 = vmatpush1.msra.mxu0 %v5062
    %5064 = vmatprep.subr.mxu0 0.0
    %v5065 = vand.u32 %v42, 4294901760
    %5066 = vmatpush1.msra.mxu0 %v5065
    %5067 = vmatprep.subr.mxu0 0.0
    %5068 = vmatpush2.msra.mxu0 0.0
    %5069 = vmatprep.subr.mxu0 0.0
    %5070 = vmatpush2.msra.mxu0 0.0
    %5071 = vmatprep.subr.mxu0 0.0
    %5072 = vmatpush2.msra.mxu0 0.0
    %5073 = vmatprep.subr.mxu0 0.0
    %5074 = vmatpush2.msra.mxu0 0.0
    %5075 = vmatprep.subr.mxu0 0.0
    %5076 = vmatpush2.msra.mxu0 0.0
    %5077 = vmatprep.subr.mxu0 0.0
    %5078 = vmatpush2.msra.mxu0 0.0
    %5079 = vmatprep.subr.mxu0 0.0
    %5080 = vmatpush2.msra.mxu0 0.0
    %5081 = vmatprep.subr.mxu0 0.0
    %5082 = vmatpush2.msra.mxu0 0.0
    %5083 = vmatprep.subr.mxu0 0.0
    %5084 = vmatpush2.msra.mxu0 0.0
    %5085 = vmatprep.subr.mxu0 0.0
    %5086 = vmatpush2.msra.mxu0 0.0
    %5087 = vmatprep.subr.mxu0 0.0
    %5088 = vmatpush2.msra.mxu0 0.0
    %5089 = vmatprep.subr.mxu0 0.0
    %5090 = vmatpush2.msra.mxu0 0.0
    %5091 = vmatprep.subr.mxu0 0.0
    %5092 = vmatpush2.msra.mxu0 0.0
    %5093 = vmatprep.subr.mxu0 0.0
    %5094 = vmatpush2.msra.mxu0 0.0
    %5095 = vmatprep.subr.mxu0 0.0
    %5096 = vmatpush2.msra.mxu0 0.0
    %5097 = vmatprep.subr.mxu0 0.0
    %5098 = vmatpush2.msra.mxu0 0.0
    %5099 = vmatprep.mubr.f32.mxu0 0.0
    %v5100 = vand.u32 %v5030, 4294901760
    %v5101 = vsub.f32 %v5030, %v5100
    %v5102 = vand.u32 %v5101, 4294901760
    %v5103 = vsub.f32 %v5101, %v5102
    %v5104 = vand.u32 %v5103, 4294901760
    %5105 = vmatmul.mubr.f32.gmra.mxu0 %v5104
    %v5106 = vpop.f32.mrf.mxu0
    %v5107 = vadd.f32 %v104, %v5106
    %v5108 = vpop.f32.mrf.mxu0
    %5109 = vdwg.mxu0
    %5110 = vmatprep.subr.mxu0 0.0
    %5111 = vmatpush1.msra.mxu0 0.0
    %5112 = vmatprep.subr.mxu0 0.0
    %5113 = vmatpush1.msra.mxu0 0.0
    %5114 = vmatprep.subr.mxu0 0.0
    %5115 = vmatpush1.msra.mxu0 0.0
    %5116 = vmatprep.subr.mxu0 0.0
    %5117 = vmatpush1.msra.mxu0 0.0
    %5118 = vmatprep.subr.mxu0 0.0
    %5119 = vmatpush1.msra.mxu0 0.0
    %5120 = vmatprep.subr.mxu0 0.0
    %5121 = vmatpush1.msra.mxu0 0.0
    %5122 = vmatprep.subr.mxu0 0.0
    %5123 = vmatpush1.msra.mxu0 0.0
    %5124 = vmatprep.subr.mxu0 0.0
    %5125 = vmatpush1.msra.mxu0 0.0
    %5126 = vmatprep.subr.mxu0 0.0
    %5127 = vmatpush1.msra.mxu0 0.0
    %5128 = vmatprep.subr.mxu0 0.0
    %5129 = vmatpush1.msra.mxu0 0.0
    %5130 = vmatprep.subr.mxu0 0.0
    %5131 = vmatpush1.msra.mxu0 0.0
    %5132 = vmatprep.subr.mxu0 0.0
    %5133 = vmatpush1.msra.mxu0 0.0
    %5134 = vmatprep.subr.mxu0 0.0
    %5135 = vmatpush1.msra.mxu0 0.0
    %5136 = vmatprep.subr.mxu0 0.0
    %v5137 = vand.u32 %v44, 4294901760
    %v5138 = vsub.f32 %v44, %v5137
    %v5139 = vand.u32 %v5138, 4294901760
    %v5140 = vsub.f32 %v5138, %v5139
    %v5141 = vand.u32 %v5140, 4294901760
    %5142 = vmatpush1.msra.mxu0 %v5141
    %5143 = vmatprep.subr.mxu0 0.0
    %v5144 = vand.u32 %v43, 4294901760
    %v5145 = vsub.f32 %v43, %v5144
    %v5146 = vand.u32 %v5145, 4294901760
    %v5147 = vsub.f32 %v5145, %v5146
    %v5148 = vand.u32 %v5147, 4294901760
    %5149 = vmatpush1.msra.mxu0 %v5148
    %5150 = vmatprep.subr.mxu0 0.0
    %v5151 = vand.u32 %v42, 4294901760
    %v5152 = vsub.f32 %v42, %v5151
    %v5153 = vand.u32 %v5152, 4294901760
    %v5154 = vsub.f32 %v5152, %v5153
    %v5155 = vand.u32 %v5154, 4294901760
    %5156 = vmatpush1.msra.mxu0 %v5155
    %5157 = vmatprep.subr.mxu0 0.0
    %5158 = vmatpush2.msra.mxu0 0.0
    %5159 = vmatprep.subr.mxu0 0.0
    %5160 = vmatpush2.msra.mxu0 0.0
    %5161 = vmatprep.subr.mxu0 0.0
    %5162 = vmatpush2.msra.mxu0 0.0
    %5163 = vmatprep.subr.mxu0 0.0
    %5164 = vmatpush2.msra.mxu0 0.0
    %5165 = vmatprep.subr.mxu0 0.0
    %5166 = vmatpush2.msra.mxu0 0.0
    %5167 = vmatprep.subr.mxu0 0.0
    %5168 = vmatpush2.msra.mxu0 0.0
    %5169 = vmatprep.subr.mxu0 0.0
    %5170 = vmatpush2.msra.mxu0 0.0
    %5171 = vmatprep.subr.mxu0 0.0
    %5172 = vmatpush2.msra.mxu0 0.0
    %5173 = vmatprep.subr.mxu0 0.0
    %5174 = vmatpush2.msra.mxu0 0.0
    %5175 = vmatprep.subr.mxu0 0.0
    %5176 = vmatpush2.msra.mxu0 0.0
    %5177 = vmatprep.subr.mxu0 0.0
    %5178 = vmatpush2.msra.mxu0 0.0
    %5179 = vmatprep.subr.mxu0 0.0
    %5180 = vmatpush2.msra.mxu0 0.0
    %5181 = vmatprep.subr.mxu0 0.0
    %5182 = vmatpush2.msra.mxu0 0.0
    %5183 = vmatprep.subr.mxu0 0.0
    %5184 = vmatpush2.msra.mxu0 0.0
    %5185 = vmatprep.subr.mxu0 0.0
    %5186 = vmatpush2.msra.mxu0 0.0
    %5187 = vmatprep.subr.mxu0 0.0
    %5188 = vmatpush2.msra.mxu0 0.0
    %5189 = vmatprep.mubr.f32.mxu0 0.0
    %v5190 = vand.u32 %v5030, 4294901760
    %5191 = vmatmul.mubr.f32.gmra.mxu0 %v5190
    %v5192 = vpop.f32.mrf.mxu0
    %v5193 = vadd.f32 %v5107, %v5192
    %v5194 = vpop.f32.mrf.mxu0
    %5195 = vdwg.mxu0
    %5196 = vmatprep.subr.mxu0 0.0
    %5197 = vmatpush1.msra.mxu0 0.0
    %5198 = vmatprep.subr.mxu0 0.0
    %5199 = vmatpush1.msra.mxu0 0.0
    %5200 = vmatprep.subr.mxu0 0.0
    %5201 = vmatpush1.msra.mxu0 0.0
    %5202 = vmatprep.subr.mxu0 0.0
    %5203 = vmatpush1.msra.mxu0 0.0
    %5204 = vmatprep.subr.mxu0 0.0
    %5205 = vmatpush1.msra.mxu0 0.0
    %5206 = vmatprep.subr.mxu0 0.0
    %5207 = vmatpush1.msra.mxu0 0.0
    %5208 = vmatprep.subr.mxu0 0.0
    %5209 = vmatpush1.msra.mxu0 0.0
    %5210 = vmatprep.subr.mxu0 0.0
    %5211 = vmatpush1.msra.mxu0 0.0
    %5212 = vmatprep.subr.mxu0 0.0
    %5213 = vmatpush1.msra.mxu0 0.0
    %5214 = vmatprep.subr.mxu0 0.0
    %5215 = vmatpush1.msra.mxu0 0.0
    %5216 = vmatprep.subr.mxu0 0.0
    %5217 = vmatpush1.msra.mxu0 0.0
    %5218 = vmatprep.subr.mxu0 0.0
    %5219 = vmatpush1.msra.mxu0 0.0
    %5220 = vmatprep.subr.mxu0 0.0
    %5221 = vmatpush1.msra.mxu0 0.0
    %5222 = vmatprep.subr.mxu0 0.0
    %v5223 = vand.u32 %v44, 4294901760
    %v5224 = vsub.f32 %v44, %v5223
    %5225 = vmatpush1.msra.mxu0 %v5224
    %5226 = vmatprep.subr.mxu0 0.0
    %v5227 = vand.u32 %v43, 4294901760
    %v5228 = vsub.f32 %v43, %v5227
    %5229 = vmatpush1.msra.mxu0 %v5228
    %5230 = vmatprep.subr.mxu0 0.0
    %v5231 = vand.u32 %v42, 4294901760
    %v5232 = vsub.f32 %v42, %v5231
    %5233 = vmatpush1.msra.mxu0 %v5232
    %5234 = vmatprep.subr.mxu0 0.0
    %5235 = vmatpush2.msra.mxu0 0.0
    %5236 = vmatprep.subr.mxu0 0.0
    %5237 = vmatpush2.msra.mxu0 0.0
    %5238 = vmatprep.subr.mxu0 0.0
    %5239 = vmatpush2.msra.mxu0 0.0
    %5240 = vmatprep.subr.mxu0 0.0
    %5241 = vmatpush2.msra.mxu0 0.0
    %5242 = vmatprep.subr.mxu0 0.0
    %5243 = vmatpush2.msra.mxu0 0.0
    %5244 = vmatprep.subr.mxu0 0.0
    %5245 = vmatpush2.msra.mxu0 0.0
    %5246 = vmatprep.subr.mxu0 0.0
    %5247 = vmatpush2.msra.mxu0 0.0
    %5248 = vmatprep.subr.mxu0 0.0
    %5249 = vmatpush2.msra.mxu0 0.0
    %5250 = vmatprep.subr.mxu0 0.0
    %5251 = vmatpush2.msra.mxu0 0.0
    %5252 = vmatprep.subr.mxu0 0.0
    %5253 = vmatpush2.msra.mxu0 0.0
    %5254 = vmatprep.subr.mxu0 0.0
    %5255 = vmatpush2.msra.mxu0 0.0
    %5256 = vmatprep.subr.mxu0 0.0
    %5257 = vmatpush2.msra.mxu0 0.0
    %5258 = vmatprep.subr.mxu0 0.0
    %5259 = vmatpush2.msra.mxu0 0.0
    %5260 = vmatprep.subr.mxu0 0.0
    %5261 = vmatpush2.msra.mxu0 0.0
    %5262 = vmatprep.subr.mxu0 0.0
    %5263 = vmatpush2.msra.mxu0 0.0
    %5264 = vmatprep.subr.mxu0 0.0
    %5265 = vmatpush2.msra.mxu0 0.0
    %5266 = vmatprep.mubr.f32.mxu0 0.0
    %v5267 = vand.u32 %v5030, 4294901760
    %v5268 = vsub.f32 %v5030, %v5267
    %5269 = vmatmul.mubr.f32.gmra.mxu0 %v5268
    %v5270 = vpop.f32.mrf.mxu0
    %v5271 = vadd.f32 %v5193, %v5270
    %v5272 = vpop.f32.mrf.mxu0
    %5273 = vdwg.mxu0
    %5274 = vmatprep.subr.mxu0 0.0
    %5275 = vmatpush1.msra.mxu0 0.0
    %5276 = vmatprep.subr.mxu0 0.0
    %5277 = vmatpush1.msra.mxu0 0.0
    %5278 = vmatprep.subr.mxu0 0.0
    %5279 = vmatpush1.msra.mxu0 0.0
    %5280 = vmatprep.subr.mxu0 0.0
    %5281 = vmatpush1.msra.mxu0 0.0
    %5282 = vmatprep.subr.mxu0 0.0
    %5283 = vmatpush1.msra.mxu0 0.0
    %5284 = vmatprep.subr.mxu0 0.0
    %5285 = vmatpush1.msra.mxu0 0.0
    %5286 = vmatprep.subr.mxu0 0.0
    %5287 = vmatpush1.msra.mxu0 0.0
    %5288 = vmatprep.subr.mxu0 0.0
    %5289 = vmatpush1.msra.mxu0 0.0
    %5290 = vmatprep.subr.mxu0 0.0
    %5291 = vmatpush1.msra.mxu0 0.0
    %5292 = vmatprep.subr.mxu0 0.0
    %5293 = vmatpush1.msra.mxu0 0.0
    %5294 = vmatprep.subr.mxu0 0.0
    %5295 = vmatpush1.msra.mxu0 0.0
    %5296 = vmatprep.subr.mxu0 0.0
    %5297 = vmatpush1.msra.mxu0 0.0
    %5298 = vmatprep.subr.mxu0 0.0
    %5299 = vmatpush1.msra.mxu0 0.0
    %5300 = vmatprep.subr.mxu0 0.0
    %v5301 = vand.u32 %v44, 4294901760
    %5302 = vmatpush1.msra.mxu0 %v5301
    %5303 = vmatprep.subr.mxu0 0.0
    %v5304 = vand.u32 %v43, 4294901760
    %5305 = vmatpush1.msra.mxu0 %v5304
    %5306 = vmatprep.subr.mxu0 0.0
    %v5307 = vand.u32 %v42, 4294901760
    %5308 = vmatpush1.msra.mxu0 %v5307
    %5309 = vmatprep.subr.mxu0 0.0
    %5310 = vmatpush2.msra.mxu0 0.0
    %5311 = vmatprep.subr.mxu0 0.0
    %5312 = vmatpush2.msra.mxu0 0.0
    %5313 = vmatprep.subr.mxu0 0.0
    %5314 = vmatpush2.msra.mxu0 0.0
    %5315 = vmatprep.subr.mxu0 0.0
    %5316 = vmatpush2.msra.mxu0 0.0
    %5317 = vmatprep.subr.mxu0 0.0
    %5318 = vmatpush2.msra.mxu0 0.0
    %5319 = vmatprep.subr.mxu0 0.0
    %5320 = vmatpush2.msra.mxu0 0.0
    %5321 = vmatprep.subr.mxu0 0.0
    %5322 = vmatpush2.msra.mxu0 0.0
    %5323 = vmatprep.subr.mxu0 0.0
    %5324 = vmatpush2.msra.mxu0 0.0
    %5325 = vmatprep.subr.mxu0 0.0
    %5326 = vmatpush2.msra.mxu0 0.0
    %5327 = vmatprep.subr.mxu0 0.0
    %5328 = vmatpush2.msra.mxu0 0.0
    %5329 = vmatprep.subr.mxu0 0.0
    %5330 = vmatpush2.msra.mxu0 0.0
    %5331 = vmatprep.subr.mxu0 0.0
    %5332 = vmatpush2.msra.mxu0 0.0
    %5333 = vmatprep.subr.mxu0 0.0
    %5334 = vmatpush2.msra.mxu0 0.0
    %5335 = vmatprep.subr.mxu0 0.0
    %5336 = vmatpush2.msra.mxu0 0.0
    %5337 = vmatprep.subr.mxu0 0.0
    %5338 = vmatpush2.msra.mxu0 0.0
    %5339 = vmatprep.subr.mxu0 0.0
    %5340 = vmatpush2.msra.mxu0 0.0
    %5341 = vmatprep.mubr.f32.mxu0 0.0
    %v5342 = vand.u32 %v5030, 4294901760
    %v5343 = vsub.f32 %v5030, %v5342
    %v5344 = vand.u32 %v5343, 4294901760
    %5345 = vmatmul.mubr.f32.gmra.mxu0 %v5344
    %v5346 = vpop.f32.mrf.mxu0
    %v5347 = vadd.f32 %v5271, %v5346
    %v5348 = vpop.f32.mrf.mxu0
    %5349 = vdwg.mxu0
    %5350 = vmatprep.subr.mxu0 0.0
    %5351 = vmatpush1.msra.mxu0 0.0
    %5352 = vmatprep.subr.mxu0 0.0
    %5353 = vmatpush1.msra.mxu0 0.0
    %5354 = vmatprep.subr.mxu0 0.0
    %5355 = vmatpush1.msra.mxu0 0.0
    %5356 = vmatprep.subr.mxu0 0.0
    %5357 = vmatpush1.msra.mxu0 0.0
    %5358 = vmatprep.subr.mxu0 0.0
    %5359 = vmatpush1.msra.mxu0 0.0
    %5360 = vmatprep.subr.mxu0 0.0
    %5361 = vmatpush1.msra.mxu0 0.0
    %5362 = vmatprep.subr.mxu0 0.0
    %5363 = vmatpush1.msra.mxu0 0.0
    %5364 = vmatprep.subr.mxu0 0.0
    %5365 = vmatpush1.msra.mxu0 0.0
    %5366 = vmatprep.subr.mxu0 0.0
    %5367 = vmatpush1.msra.mxu0 0.0
    %5368 = vmatprep.subr.mxu0 0.0
    %5369 = vmatpush1.msra.mxu0 0.0
    %5370 = vmatprep.subr.mxu0 0.0
    %5371 = vmatpush1.msra.mxu0 0.0
    %5372 = vmatprep.subr.mxu0 0.0
    %5373 = vmatpush1.msra.mxu0 0.0
    %5374 = vmatprep.subr.mxu0 0.0
    %5375 = vmatpush1.msra.mxu0 0.0
    %5376 = vmatprep.subr.mxu0 0.0
    %v5377 = vand.u32 %v44, 4294901760
    %v5378 = vsub.f32 %v44, %v5377
    %v5379 = vand.u32 %v5378, 4294901760
    %5380 = vmatpush1.msra.mxu0 %v5379
    %5381 = vmatprep.subr.mxu0 0.0
    %v5382 = vand.u32 %v43, 4294901760
    %v5383 = vsub.f32 %v43, %v5382
    %v5384 = vand.u32 %v5383, 4294901760
    %5385 = vmatpush1.msra.mxu0 %v5384
    %5386 = vmatprep.subr.mxu0 0.0
    %v5387 = vand.u32 %v42, 4294901760
    %v5388 = vsub.f32 %v42, %v5387
    %v5389 = vand.u32 %v5388, 4294901760
    %5390 = vmatpush1.msra.mxu0 %v5389
    %5391 = vmatprep.subr.mxu0 0.0
    %5392 = vmatpush2.msra.mxu0 0.0
    %5393 = vmatprep.subr.mxu0 0.0
    %5394 = vmatpush2.msra.mxu0 0.0
    %5395 = vmatprep.subr.mxu0 0.0
    %5396 = vmatpush2.msra.mxu0 0.0
    %5397 = vmatprep.subr.mxu0 0.0
    %5398 = vmatpush2.msra.mxu0 0.0
    %5399 = vmatprep.subr.mxu0 0.0
    %5400 = vmatpush2.msra.mxu0 0.0
    %5401 = vmatprep.subr.mxu0 0.0
    %5402 = vmatpush2.msra.mxu0 0.0
    %5403 = vmatprep.subr.mxu0 0.0
    %5404 = vmatpush2.msra.mxu0 0.0
    %5405 = vmatprep.subr.mxu0 0.0
    %5406 = vmatpush2.msra.mxu0 0.0
    %5407 = vmatprep.subr.mxu0 0.0
    %5408 = vmatpush2.msra.mxu0 0.0
    %5409 = vmatprep.subr.mxu0 0.0
    %5410 = vmatpush2.msra.mxu0 0.0
    %5411 = vmatprep.subr.mxu0 0.0
    %5412 = vmatpush2.msra.mxu0 0.0
    %5413 = vmatprep.subr.mxu0 0.0
    %5414 = vmatpush2.msra.mxu0 0.0
    %5415 = vmatprep.subr.mxu0 0.0
    %5416 = vmatpush2.msra.mxu0 0.0
    %5417 = vmatprep.subr.mxu0 0.0
    %5418 = vmatpush2.msra.mxu0 0.0
    %5419 = vmatprep.subr.mxu0 0.0
    %5420 = vmatpush2.msra.mxu0 0.0
    %5421 = vmatprep.subr.mxu0 0.0
    %5422 = vmatpush2.msra.mxu0 0.0
    %5423 = vmatprep.mubr.f32.mxu0 0.0
    %v5424 = vand.u32 %v5030, 4294901760
    %5425 = vmatmul.mubr.f32.gmra.mxu0 %v5424
    %v5426 = vpop.f32.mrf.mxu0
    %v5427 = vadd.f32 %v5347, %v5426
    %v5428 = vpop.f32.mrf.mxu0
    %5429 = vdwg.mxu0
    %5430 = vmatprep.subr.mxu0 0.0
    %5431 = vmatpush1.msra.mxu0 0.0
    %5432 = vmatprep.subr.mxu0 0.0
    %5433 = vmatpush1.msra.mxu0 0.0
    %5434 = vmatprep.subr.mxu0 0.0
    %5435 = vmatpush1.msra.mxu0 0.0
    %5436 = vmatprep.subr.mxu0 0.0
    %5437 = vmatpush1.msra.mxu0 0.0
    %5438 = vmatprep.subr.mxu0 0.0
    %5439 = vmatpush1.msra.mxu0 0.0
    %5440 = vmatprep.subr.mxu0 0.0
    %5441 = vmatpush1.msra.mxu0 0.0
    %5442 = vmatprep.subr.mxu0 0.0
    %5443 = vmatpush1.msra.mxu0 0.0
    %5444 = vmatprep.subr.mxu0 0.0
    %5445 = vmatpush1.msra.mxu0 0.0
    %5446 = vmatprep.subr.mxu0 0.0
    %5447 = vmatpush1.msra.mxu0 0.0
    %5448 = vmatprep.subr.mxu0 0.0
    %5449 = vmatpush1.msra.mxu0 0.0
    %5450 = vmatprep.subr.mxu0 0.0
    %5451 = vmatpush1.msra.mxu0 0.0
    %5452 = vmatprep.subr.mxu0 0.0
    %5453 = vmatpush1.msra.mxu0 0.0
    %5454 = vmatprep.subr.mxu0 0.0
    %5455 = vmatpush1.msra.mxu0 0.0
    %5456 = vmatprep.subr.mxu0 0.0
    %v5457 = vand.u32 %v44, 4294901760
    %5458 = vmatpush1.msra.mxu0 %v5457
    %5459 = vmatprep.subr.mxu0 0.0
    %v5460 = vand.u32 %v43, 4294901760
    %5461 = vmatpush1.msra.mxu0 %v5460
    %5462 = vmatprep.subr.mxu0 0.0
    %v5463 = vand.u32 %v42, 4294901760
    %5464 = vmatpush1.msra.mxu0 %v5463
    %5465 = vmatprep.subr.mxu0 0.0
    %5466 = vmatpush2.msra.mxu0 0.0
    %5467 = vmatprep.subr.mxu0 0.0
    %5468 = vmatpush2.msra.mxu0 0.0
    %5469 = vmatprep.subr.mxu0 0.0
    %5470 = vmatpush2.msra.mxu0 0.0
    %5471 = vmatprep.subr.mxu0 0.0
    %5472 = vmatpush2.msra.mxu0 0.0
    %5473 = vmatprep.subr.mxu0 0.0
    %5474 = vmatpush2.msra.mxu0 0.0
    %5475 = vmatprep.subr.mxu0 0.0
    %5476 = vmatpush2.msra.mxu0 0.0
    %5477 = vmatprep.subr.mxu0 0.0
    %5478 = vmatpush2.msra.mxu0 0.0
    %5479 = vmatprep.subr.mxu0 0.0
    %5480 = vmatpush2.msra.mxu0 0.0
    %5481 = vmatprep.subr.mxu0 0.0
    %5482 = vmatpush2.msra.mxu0 0.0
    %5483 = vmatprep.subr.mxu0 0.0
    %5484 = vmatpush2.msra.mxu0 0.0
    %5485 = vmatprep.subr.mxu0 0.0
    %5486 = vmatpush2.msra.mxu0 0.0
    %5487 = vmatprep.subr.mxu0 0.0
    %5488 = vmatpush2.msra.mxu0 0.0
    %5489 = vmatprep.subr.mxu0 0.0
    %5490 = vmatpush2.msra.mxu0 0.0
    %5491 = vmatprep.subr.mxu0 0.0
    %5492 = vmatpush2.msra.mxu0 0.0
    %5493 = vmatprep.subr.mxu0 0.0
    %5494 = vmatpush2.msra.mxu0 0.0
    %5495 = vmatprep.subr.mxu0 0.0
    %5496 = vmatpush2.msra.mxu0 0.0
    %5497 = vmatprep.mubr.f32.mxu0 0.0
    %v5498 = vand.u32 %v5030, 4294901760
    %5499 = vmatmul.mubr.f32.gmra.mxu0 %v5498
    %v5500 = vpop.f32.mrf.mxu0
    %v5501 = vadd.f32 %v5427, %v5500
    %v5502 = vpop.f32.mrf.mxu0
    %5503 = vdwg.mxu0
    %v5504 = vxor.u32 %v5501, 2147483648
    %v5505 = vmul.f32 %v5504, 1.442695
    %v5506 = vpow.pop %v5505
    %v5507 = vadd.f32 %v5506, 1.0
    %v5508 = vrcp.pop %v5507
    %v5509 = vmul.f32 1.0, %v5508
    %v5510 = vtanh.pop %v5501
    %v5511 = vmul.f32 %v5509, %v4975
    %5513 = vrot.lane.b32.xlu0 %v5510, 96
    %v5514 = vpop.permute.xlu0 %5513
    %v5516 = vmul.f32 %v5509, %v5514
    %5518 = vrot.lane.b32.xlu0 %v5516, 16
    %v5519 = vpop.permute.xlu0 %5518
    %v5521 = vadd.f32 %v5511, %v5519
    %v5522 = vtanh.pop %v5521
    %5524 = vrot.lane.b32.xlu0 %v5522, 32
    %v5525 = vpop.permute.xlu0 %5524
    %v5527 = vmul.f32 %v5509, %v5525
    %s5528 = scalar_lea.vmem %s7, 18
    %5529 = vst.msk [vmem:[%s5528] sm:$0x3] %vm80, %v5024
    %5531 = vrot.lane.b32.xlu0 %v5527, 80
    %v5532 = vpop.permute.xlu0 %5531
    %s5534 = scalar_lea.vmem [#allocation5], 18
    %5535 = vst.msk [vmem:[%s5534] sm:$0x3] %vm63, %v5532
    %5536 = vst.msk [vmem:[#allocation2] sm:$0x3] %vm63, %v5532
    %5538 = vrot.lane.b32.xlu0 %v5521, 112
    %v5539 = vpop.permute.xlu0 %5538
    %5541 = vst.msk [vmem:[#allocation3] sm:$0x3] %vm63, %v5539
    // Predicated region
    $region34: #{tpu_custom_call.1} parent=1 // pred_check
      _
    $region35: #{tpu_custom_call.1} parent=1 // pred_check_branch
      %5543 = sbr.rel (0) target = $region37
    $region36: #{tpu_custom_call.1} parent=1 // pred_region
      _
    $region37: #{tpu_custom_call.1} parent=1 // pred_fallthru
      _
    // Predicated region
    $region38: #{tpu_custom_call.1} parent=1 // pred_check
      _
    $region39: #{tpu_custom_call.1} parent=1 // pred_check_branch
      %5545 = sbr.rel (0) target = $region41
    $region40: #{tpu_custom_call.1} parent=1 // pred_region
      %s5547 = ssub.s32 320, 320
      %5548 = vsyncadd [#allocation6], %s5547
      %s5549 = sshll.u32 [#allocation5], 4
      %s5550 = int_to_ptr.vmem [resolvable:$true] %s5549
      %5555 = dma.vmem_to_hbm [thread:$0]  %s5550, 320, %s8, [#allocation6], 32, 32, 2
    $region41: #{tpu_custom_call.1} parent=1 // pred_fallthru
      _
    // Predicated region
    $region42: #{tpu_custom_call.1} parent=1 // pred_check
      _
    $region43: #{tpu_custom_call.1} parent=1 // pred_check_branch
      %5557 = sbr.rel (0) target = $region45
    $region44: #{tpu_custom_call.1} parent=1 // pred_region
      _
    $region45: #{tpu_custom_call.1} parent=1 // pred_fallthru
      _
    // Predicated region
    $region46: #{tpu_custom_call.1} parent=1 // pred_check
      _
    $region47: #{tpu_custom_call.1} parent=1 // pred_check_branch
      %5559 = sbr.rel (0) target = $region49
    $region48: #{tpu_custom_call.1} parent=1 // pred_region
      %5560 = dma.done [#allocation6], 320
    $region49: #{tpu_custom_call.1} parent=1 // pred_fallthru
      _
    %5561 = vsyncpa [#allocation6], 1

</llo_original>
